<compile_context>
chip_gen: v7x
topology: tpu7x:2x2x1
jax: 0.10.0
libtpu: 0.0.40
codegen_flags: <defaults>
</compile_context>

<pallas_src>
from functools import partial

import numpy as np
import jax
import jax.numpy as jnp
from jax import lax
from jax.experimental import pallas as pl
from jax.experimental.pallas import tpu as pltpu

F32 = jnp.float32
NEG_BIG = 1e30          # finite additive mask (avoids exp(-inf - -inf) NaN corner case)


def _round_up(x, m):
    return ((x + m - 1) // m) * m


def _vmem_specs(n):
    return [pl.BlockSpec(memory_space=pltpu.MemorySpace.VMEM) for _ in range(n)]


# ----------------------------------------------------------------------------------
# Fused encoder kernel: bidirectional GRU recurrence + hid_lin (+ folded attn enc-proj)
# ----------------------------------------------------------------------------------

def _encoder_kernel(n_steps, xs_ref,
                    wih_fb_ref, bih_fb_ref,
                    whhf_ref, bhhf_ref, whhb_ref, bhhb_ref,
                    wf_cat_ref, wb_cat_ref, b_cat_ref,
                    enc_ref, pe_ref,
                    gif_scr, gib_scr, fwd_scr, bwd_scr):
    TR = xs_ref.shape[0]
    R = TR // n_steps                  # rows per recurrence slab (= padded src_len)
    H = whhf_ref.shape[0]
    G = 3 * H
    Gp = wih_fb_ref.shape[1] // 2      # per-direction gate block, padded to a lane tile

    # One fused input->gate matmul for both directions.  Each direction's 3H block is
    # padded to a 128-lane tile in the weights so the split below is tile-aligned, and
    # the split is paid once at store time => per-step slices are lane-0 based.
    xs = xs_ref[...]
    gi_fb = jnp.dot(xs, wih_fb_ref[...], preferred_element_type=F32) + bih_fb_ref[...]
    gif_scr[...] = gi_fb[:, :G]
    gib_scr[...] = gi_fb[:, Gp:Gp + G]

    def gru_step(gi, h, whh, bhh):
        gh = jnp.dot(h, whh, preferred_element_type=F32) + bhh
        r = jax.nn.sigmoid(gi[:, :H] + gh[:, :H])
        z = jax.nn.sigmoid(gi[:, H:2 * H] + gh[:, H:2 * H])
        n = jnp.tanh(gi[:, 2 * H:] + r * gh[:, 2 * H:])
        return (1.0 - z) * n + z * h

    whh_f = whhf_ref[...]; bhh_f = bhhf_ref[...]
    whh_b = whhb_ref[...]; bhh_b = bhhb_ref[...]

    h_f = jnp.zeros((R, H), F32)
    h_b = jnp.zeros((R, H), F32)
    # Short static trip count (n_steps = batch); R is a multiple of 8 so every slab slice
    # is a static, 8-sublane-aligned window.
    for t in range(n_steps):
        lo_f = t * R
        h_f = gru_step(gif_scr[pl.ds(lo_f, R), :], h_f, whh_f, bhh_f)
        fwd_scr[pl.ds(lo_f, R), :] = h_f
        lo_b = (n_steps - 1 - t) * R
        h_b = gru_step(gib_scr[pl.ds(lo_b, R), :], h_b, whh_b, bhh_b)
        bwd_scr[pl.ds(lo_b, R), :] = h_b

    # hid_lin and its attention enc-projection fused along N (folded at init):
    #   out[:, :H] = enc_seq,  out[:, H:] = enc_seq @ Wa0_enc + ba0
    out = (jnp.dot(fwd_scr[...], wf_cat_ref[...], preferred_element_type=F32)
           + jnp.dot(bwd_scr[...], wb_cat_ref[...], preferred_element_type=F32)
           + b_cat_ref[...])
    enc_ref[...] = out[:, :H]
    pe_ref[...] = out[:, H:]


def encoder_pallas(xs_flat, n_steps, p):
    H = p['hid_size']
    TR = xs_flat.shape[0]
    G = 3 * H
    out_shape = (jax.ShapeDtypeStruct((TR, H), F32),
                 jax.ShapeDtypeStruct((TR, H), F32))
    return pl.pallas_call(
        partial(_encoder_kernel, n_steps),
        out_shape=out_shape,
        in_specs=_vmem_specs(10),
        out_specs=(pl.BlockSpec(memory_space=pltpu.MemorySpace.VMEM),
                   pl.BlockSpec(memory_space=pltpu.MemorySpace.VMEM)),
        scratch_shapes=[pltpu.VMEM((TR, G), F32),
                        pltpu.VMEM((TR, G), F32),
                        pltpu.VMEM((TR, H), F32),
                        pltpu.VMEM((TR, H), F32)],
    )(xs_flat,
      p['wih_fb_t'], p['bih_fb'],
      p['enc_whh_f_t'], p['enc_bhh_f'].reshape(1, -1),
      p['enc_whh_b_t'], p['enc_bhh_b'].reshape(1, -1),
      p['wenc_f_cat'], p['wenc_b_cat'], p['benc_cat'])


# ----------------------------------------------------------------------------------
# Fused decoder kernel: single invocation (grid=()), unrolled loop over target steps
# ----------------------------------------------------------------------------------

def _decoder_kernel(gi_ref, state0_ref, enc_ref, pe_ref, maskb_ref,
                    whh_ref, bhh_ref, w_hp_ref, b_hp_ref, wa1_ref,
                    logits_ref):
    T_dec = gi_ref.shape[0]
    B, L, H = enc_ref.shape
    VP = logits_ref.shape[-1]

    # Everything is resident in VMEM; load step-invariant operands once (hoisted).
    enc = enc_ref[...]
    pe = pe_ref[...]
    maskb = maskb_ref[...]
    whh = whh_ref[...]
    bhh = bhh_ref[...]
    w_hp = w_hp_ref[...]
    b_hp = b_hp_ref[...]
    wa1_b = jnp.broadcast_to(wa1_ref[...][None], (B, L, H))   # hoisted broadcast

    h = state0_ref[...]
    for t in range(T_dec):                    # static unroll: no grid-step overhead
        gi = gi_ref[t]                        # [B, 3H]; x@W_ih + b_ih precomputed outside
        gh = jnp.dot(h, whh, preferred_element_type=F32) + bhh
        r = jax.nn.sigmoid(gi[:, :H] + gh[:, :H])
        z = jax.nn.sigmoid(gi[:, H:2 * H] + gh[:, H:2 * H])
        n = jnp.tanh(gi[:, 2 * H:] + r * gh[:, 2 * H:])
        h_new = (1.0 - z) * n + z * h                                   # [B, H]

        # Fused (logits | attention hidden projection): one MXU push per step;
        # logits half is lane-padded to 128 for dense stores.
        hp = jnp.dot(h_new, w_hp, preferred_element_type=F32) + b_hp    # [B, VP+H]
        logits_ref[t] = hp[:, :VP]            # dense (8,128) store
        ph = hp[:, VP:]                       # [B, H]

        # Additive attention; enc projection (pe) was hoisted into the encoder kernel,
        # mask is an additive bias that also folds in the scalar ba1.
        tt = jnp.tanh(pe + ph[:, None, :])                              # [B, L, H]
        scores = jnp.sum(tt * wa1_b, axis=-1) + maskb                   # [B, L]
        m = jnp.max(scores, axis=-1, keepdims=True)
        e = jnp.exp(scores - m)
        w = e * pl.reciprocal(jnp.sum(e, axis=-1, keepdims=True), approx=True)
        attn = jnp.sum(w[:, :, None] * enc, axis=1)                     # [B, H]
        h = h_new + attn


def decoder_pallas(gi_all, state0, enc_b, pe, mask_add, p):
    T_dec, B, _ = gi_all.shape
    VP = p['v_pad']
    return pl.pallas_call(
        _decoder_kernel,
        out_shape=jax.ShapeDtypeStruct((T_dec, B, VP), F32),
        in_specs=_vmem_specs(10),
        out_specs=pl.BlockSpec(memory_space=pltpu.MemorySpace.VMEM),
    )(gi_all, state0, enc_b, pe, mask_add,
      p['dec_whh_t'], p['dec_bhh'].reshape(1, -1),
      p['w_hp_t'], p['b_hp'], p['wa1'].reshape(1, -1))


# ----------------------------------------------------------------------------------
# Pure-JAX reference (used only to validate the Pallas path)
# ----------------------------------------------------------------------------------

def _gru_cell_ref(x, h, w_ih_t, w_hh_t, b_ih, b_hh):
    H = h.shape[-1]
    gi = x @ w_ih_t + b_ih
    gh = h @ w_hh_t + b_hh
    r = jax.nn.sigmoid(gi[:, :H] + gh[:, :H])
    z = jax.nn.sigmoid(gi[:, H:2 * H] + gh[:, H:2 * H])
    n = jnp.tanh(gi[:, 2 * H:] + r * gh[:, 2 * H:])
    return (1.0 - z) * n + z * h


def _forward_ref(source_sent, target_sent, p):
    H = p['hid_size']
    x = p['en_emb'][source_sent]                 # [L, B, E]
    xs = jnp.swapaxes(x, 0, 1)                   # recurrence over the batch axis (torch quirk)
    _, R, _ = xs.shape
    h0 = jnp.zeros((R, H), F32)

    def make_step(wih_t, whh_t, bih, bhh):
        def step(h, x_t):
            h_new = _gru_cell_ref(x_t, h, wih_t, whh_t, bih, bhh)
            return h_new, h_new
        return step

    _, fwd = lax.scan(make_step(p['enc_wih_f_t'], p['enc_whh_f_t'],
                                p['enc_bih_f'], p['enc_bhh_f']), h0, xs)
    _, bwd = lax.scan(make_step(p['enc_wih_b_t'], p['enc_whh_b_t'],
                                p['enc_bih_b'], p['enc_bhh_b']), h0, xs[::-1])
    bwd = bwd[::-1]
    enc_b = jnp.concatenate([fwd, bwd], axis=-1) @ p['hid_lin_w_t'] + p['hid_lin_b']   # [B, L, H]

    mask = (source_sent != p['pad_id']).T        # [B, L]
    lengths = jnp.sum(mask.astype(jnp.int32), axis=1) - 1
    B = enc_b.shape[0]
    state = enc_b[jnp.arange(B), lengths]

    logits_seq = []
    for i in range(target_sent.shape[0] - 1):
        x_t = p['de_emb'][target_sent[i]]
        h_new = _gru_cell_ref(x_t, state, p['dec_wih_t'], p['dec_whh_t'],
                              p['dec_bih'], p['dec_bhh'])
        logits = h_new @ p['w_out_t'] + p['b_out']
        t = jnp.tanh(jnp.einsum('blh,hk->blk', enc_b, p['wa0_enc_t'])
                     + (h_new @ p['wa0_hid_t'])[:, None, :] + p['ba0'])
        scores = jnp.sum(t * p['wa1'], axis=-1) + p['ba1'][0]
        scores = jnp.where(mask, scores, -jnp.inf)
        w = jax.nn.softmax(scores, axis=-1)
        attn = jnp.einsum('bl,blh->bh', w, enc_b)
        state = h_new + attn
        logits_seq.append(logits)
    return jnp.stack(logits_seq, axis=1)


# ----------------------------------------------------------------------------------
# Model forward (glue in JAX, hot paths fused in two Pallas kernels)
# ----------------------------------------------------------------------------------

def text2emoji_forward(source_sent, target_sent, p, *, use_pallas=True):
    if not use_pallas:
        return _forward_ref(source_sent, target_sent, p)

    L, B = source_sent.shape
    H = p['hid_size']
    V = p['w_out_t'].shape[1]
    T_dec = target_sent.shape[0] - 1
    Lp = _round_up(L, 8)          # src positions padded so recurrence slabs are 8-aligned
    Bp = _round_up(B, 8)          # batch padded to a full sublane tile for the decoder

    # ---- encoder (embedding gather = glue, recurrence fused in one kernel) ----
    x_emb = p['en_emb'][source_sent]                                   # [L, B, E]
    xs = jnp.transpose(x_emb, (1, 0, 2))                               # [B, L, E]
    xs = jnp.pad(xs, ((0, 0), (0, Lp - L), (0, 0)))                    # zero-pad src axis
    xs_flat = xs.reshape(B * Lp, -1)                                   # rows ordered (b, l)
    enc_flat, pe_flat = encoder_pallas(xs_flat, B, p)
    enc_b = enc_flat.reshape(B, Lp, H)                                 # [batch, Lp, H]
    pe_b = pe_flat.reshape(B, Lp, H)

    # ---- decoder prologue (glue) ----
    valid = source_sent != p['pad_id']                                 # [L, B]
    lengths = jnp.sum(valid.astype(jnp.int32), axis=0) - 1
    state0 = enc_b[jnp.arange(B), lengths]                             # [B, H]

    valid_p = jnp.zeros((Bp, Lp), F32).at[:B, :L].set(valid.T.astype(F32))
    mask_add = (valid_p - 1.0) * NEG_BIG + p['ba1'][0]                 # additive mask + attn bias

    # sup_unsup_ratio == 1.0 -> torch.multinomial([1,0]) always picks 0 -> pure teacher
    # forcing, so the decoder input gates can be precomputed in one batched matmul.
    # TODO(synk): stochastic scheduled-sampling branch (ratio < 1) not reproduced.
    x_dec = p['de_emb'][target_sent[:T_dec]]                           # [T_dec, B, E]
    gi_all = jnp.einsum('tbe,eg->tbg', x_dec, p['dec_wih_t']) + p['dec_bih']

    # pad batch to 8 rows so decoder vector ops / stores / DMAs use full (8,128) tiles
    state0 = jnp.pad(state0, ((0, Bp - B), (0, 0)))
    enc_p = jnp.pad(enc_b, ((0, Bp - B), (0, 0), (0, 0)))
    pe_p = jnp.pad(pe_b, ((0, Bp - B), (0, 0), (0, 0)))
    gi_all = jnp.pad(gi_all, ((0, 0), (0, Bp - B), (0, 0)))

    # ---- fused decoder: single pallas_call, unrolled loop over target steps ----
    logits_pad = decoder_pallas(gi_all, state0, enc_p, pe_p, mask_add, p)  # [T_dec, Bp, Vpad]
    return jnp.transpose(logits_pad, (1, 0, 2))[:B, :, :V]             # [batch, tgt_len-1, de_vocab]


# ----------------------------------------------------------------------------------
# Deterministic parameter init (shapes follow the PyTorch module __init__)
# ----------------------------------------------------------------------------------

def init_params(key, en_vocab, de_vocab, emb, hid, pad_id, lane=128):
    ks = jax.random.split(key, 22)
    w = lambda k, shape, s=0.1: jax.random.normal(k, shape, F32) * s

    en_emb = w(ks[0], (en_vocab, emb), 0.5).at[pad_id].set(0.0)
    de_emb = w(ks[1], (de_vocab, emb), 0.5).at[pad_id].set(0.0)

    # Encoder bidirectional GRU, 1 layer: weight_ih [3H, E], weight_hh [3H, H], biases [3H]
    enc_wih_f, enc_whh_f = w(ks[2], (3 * hid, emb)), w(ks[3], (3 * hid, hid))
    enc_bih_f, enc_bhh_f = w(ks[4], (3 * hid,)), w(ks[5], (3 * hid,))
    enc_wih_b, enc_whh_b = w(ks[6], (3 * hid, emb)), w(ks[7], (3 * hid, hid))
    enc_bih_b, enc_bhh_b = w(ks[8], (3 * hid,)), w(ks[9], (3 * hid,))
    hid_lin_w, hid_lin_b = w(ks[10], (hid, 2 * hid)), w(ks[11], (hid,))

    # Decoder GRUCell + output linear
    dec_wih, dec_whh = w(ks[12], (3 * hid, emb)), w(ks[13], (3 * hid, hid))
    dec_bih, dec_bhh = w(ks[14], (3 * hid,)), w(ks[15], (3 * hid,))
    w_out, b_out = w(ks[16], (de_vocab, hid)), w(ks[17], (de_vocab,))

    # Attention: linear0 [H, 2H], linear1 [1, H]
    wa0, ba0 = w(ks[18], (hid, 2 * hid)), w(ks[19], (hid,))
    wa1, ba1 = w(ks[20], (1, hid)), w(ks[21], (1,))

    p = {
        'en_emb': en_emb, 'de_emb': de_emb,
        'enc_wih_f_t': enc_wih_f.T, 'enc_whh_f_t': enc_whh_f.T,
        'enc_bih_f': enc_bih_f, 'enc_bhh_f': enc_bhh_f,
        'enc_wih_b_t': enc_wih_b.T, 'enc_whh_b_t': enc_whh_b.T,
        'enc_bih_b': enc_bih_b, 'enc_bhh_b': enc_bhh_b,
        'hid_lin_w_t': hid_lin_w.T, 'hid_lin_b': hid_lin_b,
        'dec_wih_t': dec_wih.T, 'dec_whh_t': dec_whh.T,
        'dec_bih': dec_bih, 'dec_bhh': dec_bhh,
        'w_out_t': w_out.T, 'b_out': b_out,
        'wa0_enc_t': wa0[:, :hid].T, 'wa0_hid_t': wa0[:, hid:].T, 'ba0': ba0,
        'wa1': wa1[0], 'ba1': ba1,
        'pad_id': pad_id, 'hid_size': hid,
    }

    # ---- derived, kernel-ready tensors (built once, not per forward call) ----
    G = 3 * hid
    Gp = _round_up(G, lane)                                        # per-direction gate block, lane-tile padded
    # fused encoder input->gate weights: xs @ [W_ih_f(pad) | W_ih_b(pad)]
    p['wih_fb_t'] = jnp.concatenate(
        [jnp.pad(p['enc_wih_f_t'], ((0, 0), (0, Gp - G))),
         jnp.pad(p['enc_wih_b_t'], ((0, 0), (0, Gp - G)))], axis=1)            # [E, 2*Gp]
    p['bih_fb'] = jnp.concatenate(
        [jnp.pad(enc_bih_f, (0, Gp - G)), jnp.pad(enc_bih_b, (0, Gp - G))]).reshape(1, -1)

    # hid_lin with the attention enc-projection folded in along N:
    #   fwd @ [hwf | hwf@Wa0_enc] + bwd @ [hwb | hwb@Wa0_enc] + [hb | hb@Wa0_enc + ba0]
    hwf_t = p['hid_lin_w_t'][:hid]
    hwb_t = p['hid_lin_w_t'][hid:]
    wa0e_t = p['wa0_enc_t']
    p['wenc_f_cat'] = jnp.concatenate([hwf_t, hwf_t @ wa0e_t], axis=1)          # [H, 2H]
    p['wenc_b_cat'] = jnp.concatenate([hwb_t, hwb_t @ wa0e_t], axis=1)          # [H, 2H]
    p['benc_cat'] = jnp.concatenate([hid_lin_b, hid_lin_b @ wa0e_t + ba0]).reshape(1, -1)

    # fused decoder (logits | attention hidden projection), logits lane-padded to 128
    v_pad = _round_up(de_vocab, lane)
    w_out_pad_t = jnp.pad(p['w_out_t'], ((0, 0), (0, v_pad - de_vocab)))
    b_out_pad = jnp.pad(p['b_out'], (0, v_pad - de_vocab))
    p['v_pad'] = v_pad
    p['w_hp_t'] = jnp.concatenate([w_out_pad_t, p['wa0_hid_t']], axis=1)        # [H, v_pad+H]
    p['b_hp'] = jnp.concatenate([b_out_pad, jnp.zeros((hid,), F32)]).reshape(1, -1)
    return p


if __name__ == "__main__":
    en_vocab, de_vocab = 24, 18
    emb_size, hid_size = 16, 32
    pad_id, sos_id, eos_id = 0, 1, 2
    src_len, batch, tgt_len = 10, 4, 7

    key = jax.random.PRNGKey(0)
    kp, ksrc, ktgt = jax.random.split(key, 3)
    params = init_params(kp, en_vocab, de_vocab, emb_size, hid_size, pad_id)

    # source sentences: seq-first [src_len, batch], padded with pad_id at the tail
    seq_lens = jnp.array([10, 7, 5, 9], jnp.int32)
    tokens = jax.random.randint(ksrc, (src_len, batch), 3, en_vocab)
    pos = jnp.arange(src_len)[:, None]
    source_sent = jnp.where(pos < seq_lens[None, :], tokens, pad_id).astype(jnp.int32)
    target_sent = jax.random.randint(ktgt, (tgt_len, batch), 3, de_vocab).astype(jnp.int32)

    fwd_pallas = jax.jit(lambda s, t: text2emoji_forward(s, t, params, use_pallas=True))
    fwd_ref = jax.jit(lambda s, t: text2emoji_forward(s, t, params, use_pallas=False))

    out = jax.block_until_ready(fwd_pallas(source_sent, target_sent))
    assert out.shape == (batch, tgt_len - 1, de_vocab)

    ref = jax.block_until_ready(fwd_ref(source_sent, target_sent))
    np.testing.assert_allclose(np.asarray(out), np.asarray(ref), rtol=5e-2, atol=1e-2)

    print("KERNEL_OK")
</pallas_src>

<mosaic_0001>
module attributes {stable_mosaic.version = 11 : i64} {
  func.func @_encoder_kernel(%arg0: memref<64x16xf32, #tpu.memory_space<vmem>>, %arg1: memref<16x256xf32, #tpu.memory_space<vmem>>, %arg2: memref<1x256xf32, #tpu.memory_space<vmem>>, %arg3: memref<32x96xf32, #tpu.memory_space<vmem>>, %arg4: memref<1x96xf32, #tpu.memory_space<vmem>>, %arg5: memref<32x96xf32, #tpu.memory_space<vmem>>, %arg6: memref<1x96xf32, #tpu.memory_space<vmem>>, %arg7: memref<32x64xf32, #tpu.memory_space<vmem>>, %arg8: memref<32x64xf32, #tpu.memory_space<vmem>>, %arg9: memref<1x64xf32, #tpu.memory_space<vmem>>, %arg10: memref<64x32xf32, #tpu.memory_space<vmem>>, %arg11: memref<64x32xf32, #tpu.memory_space<vmem>>, %arg12: memref<64x96xf32, #tpu.memory_space<vmem>>, %arg13: memref<64x96xf32, #tpu.memory_space<vmem>>, %arg14: memref<64x32xf32, #tpu.memory_space<vmem>>, %arg15: memref<64x32xf32, #tpu.memory_space<vmem>>) attributes {dimension_semantics = [], scalar_prefetch = 0 : i64, scratch_operands = 4 : i64, tpu.core_type = #tpu.core_type<tc>} {
    %c0 = arith.constant 0 : index
    %c0_0 = arith.constant 0 : index
    %0 = vector.load %arg0[%c0, %c0_0] : memref<64x16xf32, #tpu.memory_space<vmem>>, vector<64x16xf32>
    %c0_1 = arith.constant 0 : index
    %c0_2 = arith.constant 0 : index
    %1 = vector.load %arg1[%c0_1, %c0_2] : memref<16x256xf32, #tpu.memory_space<vmem>>, vector<16x256xf32>
    %cst = arith.constant dense<0.000000e+00> : vector<64x256xf32>
    %2 = tpu.matmul %0, %1, %cst {dimension_numbers = #tpu.dot_dimension_numbers<[1], [0], [0], [1], [0, 0, 1, 1], [], []>} : vector<64x16xf32>, vector<16x256xf32>, vector<64x256xf32> -> vector<64x256xf32>
    %c0_3 = arith.constant 0 : index
    %c0_4 = arith.constant 0 : index
    %3 = vector.load %arg2[%c0_3, %c0_4] : memref<1x256xf32, #tpu.memory_space<vmem>>, vector<1x256xf32>
    %4 = vector.broadcast %3 : vector<1x256xf32> to vector<64x256xf32>
    %5 = arith.addf %2, %4 : vector<64x256xf32>
    %6 = vector.extract_strided_slice %5 {offsets = [0, 0], sizes = [64, 96], strides = [1, 1]} : vector<64x256xf32> to vector<64x96xf32>
    %c0_5 = arith.constant 0 : index
    %c0_6 = arith.constant 0 : index
    %7 = vector.load %arg12[%c0_5, %c0_6] : memref<64x96xf32, #tpu.memory_space<vmem>>, vector<64x96xf32>
    tpu.vector_store %arg12[%c0_5, %c0_6], %6 {strides = array<i32>} : memref<64x96xf32, #tpu.memory_space<vmem>>, vector<64x96xf32>,
    %8 = vector.extract_strided_slice %5 {offsets = [0, 128], sizes = [64, 96], strides = [1, 1]} : vector<64x256xf32> to vector<64x96xf32>
    %c0_7 = arith.constant 0 : index
    %c0_8 = arith.constant 0 : index
    %9 = vector.load %arg13[%c0_7, %c0_8] : memref<64x96xf32, #tpu.memory_space<vmem>>, vector<64x96xf32>
    tpu.vector_store %arg13[%c0_7, %c0_8], %8 {strides = array<i32>} : memref<64x96xf32, #tpu.memory_space<vmem>>, vector<64x96xf32>,
    %c0_9 = arith.constant 0 : index
    %c0_10 = arith.constant 0 : index
    %10 = vector.load %arg3[%c0_9, %c0_10] : memref<32x96xf32, #tpu.memory_space<vmem>>, vector<32x96xf32>
    %c0_11 = arith.constant 0 : index
    %c0_12 = arith.constant 0 : index
    %11 = vector.load %arg4[%c0_11, %c0_12] : memref<1x96xf32, #tpu.memory_space<vmem>>, vector<1x96xf32>
    %c0_13 = arith.constant 0 : index
    %c0_14 = arith.constant 0 : index
    %12 = vector.load %arg5[%c0_13, %c0_14] : memref<32x96xf32, #tpu.memory_space<vmem>>, vector<32x96xf32>
    %c0_15 = arith.constant 0 : index
    %c0_16 = arith.constant 0 : index
    %13 = vector.load %arg6[%c0_15, %c0_16] : memref<1x96xf32, #tpu.memory_space<vmem>>, vector<1x96xf32>
    %cst_17 = arith.constant 0.000000e+00 : f32
    %14 = vector.broadcast %cst_17 : f32 to vector<16x32xf32>
    %cst_18 = arith.constant 0.000000e+00 : f32
    %15 = vector.broadcast %cst_18 : f32 to vector<16x32xf32>
    %c0_19 = arith.constant 0 : index
    %c0_20 = arith.constant 0 : index
    %16 = vector.load %arg12[%c0_19, %c0_20] : memref<64x96xf32, #tpu.memory_space<vmem>>, vector<16x96xf32>
    %cst_21 = arith.constant dense<0.000000e+00> : vector<16x96xf32>
    %17 = tpu.matmul %14, %10, %cst_21 {dimension_numbers = #tpu.dot_dimension_numbers<[1], [0], [0], [1], [0, 0, 1, 1], [], []>} : vector<16x32xf32>, vector<32x96xf32>, vector<16x96xf32> -> vector<16x96xf32>
    %18 = vector.broadcast %11 : vector<1x96xf32> to vector<16x96xf32>
    %19 = arith.addf %17, %18 : vector<16x96xf32>
    %20 = vector.extract_strided_slice %16 {offsets = [0, 0], sizes = [16, 32], strides = [1, 1]} : vector<16x96xf32> to vector<16x32xf32>
    %21 = vector.extract_strided_slice %19 {offsets = [0, 0], sizes = [16, 32], strides = [1, 1]} : vector<16x96xf32> to vector<16x32xf32>
    %22 = arith.addf %20, %21 : vector<16x32xf32>
    %23 = arith.negf %22 : vector<16x32xf32>
    %24 = math.exp %23 : vector<16x32xf32>
    %cst_22 = arith.constant 1.000000e+00 : f32
    %25 = vector.broadcast %cst_22 : f32 to vector<16x32xf32>
    %26 = arith.addf %25, %24 : vector<16x32xf32>
    %27 = arith.divf %25, %26 : vector<16x32xf32>
    %28 = vector.extract_strided_slice %16 {offsets = [0, 32], sizes = [16, 32], strides = [1, 1]} : vector<16x96xf32> to vector<16x32xf32>
    %29 = vector.extract_strided_slice %19 {offsets = [0, 32], sizes = [16, 32], strides = [1, 1]} : vector<16x96xf32> to vector<16x32xf32>
    %30 = arith.addf %28, %29 : vector<16x32xf32>
    %31 = arith.negf %30 : vector<16x32xf32>
    %32 = math.exp %31 : vector<16x32xf32>
    %cst_23 = arith.constant 1.000000e+00 : f32
    %33 = vector.broadcast %cst_23 : f32 to vector<16x32xf32>
    %34 = arith.addf %33, %32 : vector<16x32xf32>
    %35 = arith.divf %33, %34 : vector<16x32xf32>
    %36 = vector.extract_strided_slice %16 {offsets = [0, 64], sizes = [16, 32], strides = [1, 1]} : vector<16x96xf32> to vector<16x32xf32>
    %37 = vector.extract_strided_slice %19 {offsets = [0, 64], sizes = [16, 32], strides = [1, 1]} : vector<16x96xf32> to vector<16x32xf32>
    %38 = arith.mulf %27, %37 : vector<16x32xf32>
    %39 = arith.addf %36, %38 : vector<16x32xf32>
    %40 = math.tanh %39 : vector<16x32xf32>
    %cst_24 = arith.constant 1.000000e+00 : f32
    %41 = vector.broadcast %cst_24 : f32 to vector<16x32xf32>
    %42 = arith.subf %41, %35 : vector<16x32xf32>
    %43 = arith.mulf %42, %40 : vector<16x32xf32>
    %44 = arith.mulf %35, %14 : vector<16x32xf32>
    %45 = arith.addf %43, %44 : vector<16x32xf32>
    %c0_25 = arith.constant 0 : index
    %c0_26 = arith.constant 0 : index
    %46 = vector.load %arg14[%c0_25, %c0_26] : memref<64x32xf32, #tpu.memory_space<vmem>>, vector<16x32xf32>
    tpu.vector_store %arg14[%c0_25, %c0_26], %45 {strides = array<i32>} : memref<64x32xf32, #tpu.memory_space<vmem>>, vector<16x32xf32>,
    %c48 = arith.constant 48 : index
    %c0_27 = arith.constant 0 : index
    %47 = vector.load %arg13[%c48, %c0_27] : memref<64x96xf32, #tpu.memory_space<vmem>>, vector<16x96xf32>
    %cst_28 = arith.constant dense<0.000000e+00> : vector<16x96xf32>
    %48 = tpu.matmul %15, %12, %cst_28 {dimension_numbers = #tpu.dot_dimension_numbers<[1], [0], [0], [1], [0, 0, 1, 1], [], []>} : vector<16x32xf32>, vector<32x96xf32>, vector<16x96xf32> -> vector<16x96xf32>
    %49 = vector.broadcast %13 : vector<1x96xf32> to vector<16x96xf32>
    %50 = arith.addf %48, %49 : vector<16x96xf32>
    %51 = vector.extract_strided_slice %47 {offsets = [0, 0], sizes = [16, 32], strides = [1, 1]} : vector<16x96xf32> to vector<16x32xf32>
    %52 = vector.extract_strided_slice %50 {offsets = [0, 0], sizes = [16, 32], strides = [1, 1]} : vector<16x96xf32> to vector<16x32xf32>
    %53 = arith.addf %51, %52 : vector<16x32xf32>
    %54 = arith.negf %53 : vector<16x32xf32>
    %55 = math.exp %54 : vector<16x32xf32>
    %cst_29 = arith.constant 1.000000e+00 : f32
    %56 = vector.broadcast %cst_29 : f32 to vector<16x32xf32>
    %57 = arith.addf %56, %55 : vector<16x32xf32>
    %58 = arith.divf %56, %57 : vector<16x32xf32>
    %59 = vector.extract_strided_slice %47 {offsets = [0, 32], sizes = [16, 32], strides = [1, 1]} : vector<16x96xf32> to vector<16x32xf32>
    %60 = vector.extract_strided_slice %50 {offsets = [0, 32], sizes = [16, 32], strides = [1, 1]} : vector<16x96xf32> to vector<16x32xf32>
    %61 = arith.addf %59, %60 : vector<16x32xf32>
    %62 = arith.negf %61 : vector<16x32xf32>
    %63 = math.exp %62 : vector<16x32xf32>
    %cst_30 = arith.constant 1.000000e+00 : f32
    %64 = vector.broadcast %cst_30 : f32 to vector<16x32xf32>
    %65 = arith.addf %64, %63 : vector<16x32xf32>
    %66 = arith.divf %64, %65 : vector<16x32xf32>
    %67 = vector.extract_strided_slice %47 {offsets = [0, 64], sizes = [16, 32], strides = [1, 1]} : vector<16x96xf32> to vector<16x32xf32>
    %68 = vector.extract_strided_slice %50 {offsets = [0, 64], sizes = [16, 32], strides = [1, 1]} : vector<16x96xf32> to vector<16x32xf32>
    %69 = arith.mulf %58, %68 : vector<16x32xf32>
    %70 = arith.addf %67, %69 : vector<16x32xf32>
    %71 = math.tanh %70 : vector<16x32xf32>
    %cst_31 = arith.constant 1.000000e+00 : f32
    %72 = vector.broadcast %cst_31 : f32 to vector<16x32xf32>
    %73 = arith.subf %72, %66 : vector<16x32xf32>
    %74 = arith.mulf %73, %71 : vector<16x32xf32>
    %75 = arith.mulf %66, %15 : vector<16x32xf32>
    %76 = arith.addf %74, %75 : vector<16x32xf32>
    %c48_32 = arith.constant 48 : index
    %c0_33 = arith.constant 0 : index
    %77 = vector.load %arg15[%c48_32, %c0_33] : memref<64x32xf32, #tpu.memory_space<vmem>>, vector<16x32xf32>
    tpu.vector_store %arg15[%c48_32, %c0_33], %76 {strides = array<i32>} : memref<64x32xf32, #tpu.memory_space<vmem>>, vector<16x32xf32>,
    %c16 = arith.constant 16 : index
    %c0_34 = arith.constant 0 : index
    %78 = vector.load %arg12[%c16, %c0_34] : memref<64x96xf32, #tpu.memory_space<vmem>>, vector<16x96xf32>
    %cst_35 = arith.constant dense<0.000000e+00> : vector<16x96xf32>
    %79 = tpu.matmul %45, %10, %cst_35 {dimension_numbers = #tpu.dot_dimension_numbers<[1], [0], [0], [1], [0, 0, 1, 1], [], []>} : vector<16x32xf32>, vector<32x96xf32>, vector<16x96xf32> -> vector<16x96xf32>
    %80 = vector.broadcast %11 : vector<1x96xf32> to vector<16x96xf32>
    %81 = arith.addf %79, %80 : vector<16x96xf32>
    %82 = vector.extract_strided_slice %78 {offsets = [0, 0], sizes = [16, 32], strides = [1, 1]} : vector<16x96xf32> to vector<16x32xf32>
    %83 = vector.extract_strided_slice %81 {offsets = [0, 0], sizes = [16, 32], strides = [1, 1]} : vector<16x96xf32> to vector<16x32xf32>
    %84 = arith.addf %82, %83 : vector<16x32xf32>
    %85 = arith.negf %84 : vector<16x32xf32>
    %86 = math.exp %85 : vector<16x32xf32>
    %cst_36 = arith.constant 1.000000e+00 : f32
    %87 = vector.broadcast %cst_36 : f32 to vector<16x32xf32>
    %88 = arith.addf %87, %86 : vector<16x32xf32>
    %89 = arith.divf %87, %88 : vector<16x32xf32>
    %90 = vector.extract_strided_slice %78 {offsets = [0, 32], sizes = [16, 32], strides = [1, 1]} : vector<16x96xf32> to vector<16x32xf32>
    %91 = vector.extract_strided_slice %81 {offsets = [0, 32], sizes = [16, 32], strides = [1, 1]} : vector<16x96xf32> to vector<16x32xf32>
    %92 = arith.addf %90, %91 : vector<16x32xf32>
    %93 = arith.negf %92 : vector<16x32xf32>
    %94 = math.exp %93 : vector<16x32xf32>
    %cst_37 = arith.constant 1.000000e+00 : f32
    %95 = vector.broadcast %cst_37 : f32 to vector<16x32xf32>
    %96 = arith.addf %95, %94 : vector<16x32xf32>
    %97 = arith.divf %95, %96 : vector<16x32xf32>
    %98 = vector.extract_strided_slice %78 {offsets = [0, 64], sizes = [16, 32], strides = [1, 1]} : vector<16x96xf32> to vector<16x32xf32>
    %99 = vector.extract_strided_slice %81 {offsets = [0, 64], sizes = [16, 32], strides = [1, 1]} : vector<16x96xf32> to vector<16x32xf32>
    %100 = arith.mulf %89, %99 : vector<16x32xf32>
    %101 = arith.addf %98, %100 : vector<16x32xf32>
    %102 = math.tanh %101 : vector<16x32xf32>
    %cst_38 = arith.constant 1.000000e+00 : f32
    %103 = vector.broadcast %cst_38 : f32 to vector<16x32xf32>
    %104 = arith.subf %103, %97 : vector<16x32xf32>
    %105 = arith.mulf %104, %102 : vector<16x32xf32>
    %106 = arith.mulf %97, %45 : vector<16x32xf32>
    %107 = arith.addf %105, %106 : vector<16x32xf32>
    %c16_39 = arith.constant 16 : index
    %c0_40 = arith.constant 0 : index
    %108 = vector.load %arg14[%c16_39, %c0_40] : memref<64x32xf32, #tpu.memory_space<vmem>>, vector<16x32xf32>
    tpu.vector_store %arg14[%c16_39, %c0_40], %107 {strides = array<i32>} : memref<64x32xf32, #tpu.memory_space<vmem>>, vector<16x32xf32>,
    %c32 = arith.constant 32 : index
    %c0_41 = arith.constant 0 : index
    %109 = vector.load %arg13[%c32, %c0_41] : memref<64x96xf32, #tpu.memory_space<vmem>>, vector<16x96xf32>
    %cst_42 = arith.constant dense<0.000000e+00> : vector<16x96xf32>
    %110 = tpu.matmul %76, %12, %cst_42 {dimension_numbers = #tpu.dot_dimension_numbers<[1], [0], [0], [1], [0, 0, 1, 1], [], []>} : vector<16x32xf32>, vector<32x96xf32>, vector<16x96xf32> -> vector<16x96xf32>
    %111 = vector.broadcast %13 : vector<1x96xf32> to vector<16x96xf32>
    %112 = arith.addf %110, %111 : vector<16x96xf32>
    %113 = vector.extract_strided_slice %109 {offsets = [0, 0], sizes = [16, 32], strides = [1, 1]} : vector<16x96xf32> to vector<16x32xf32>
    %114 = vector.extract_strided_slice %112 {offsets = [0, 0], sizes = [16, 32], strides = [1, 1]} : vector<16x96xf32> to vector<16x32xf32>
    %115 = arith.addf %113, %114 : vector<16x32xf32>
    %116 = arith.negf %115 : vector<16x32xf32>
    %117 = math.exp %116 : vector<16x32xf32>
    %cst_43 = arith.constant 1.000000e+00 : f32
    %118 = vector.broadcast %cst_43 : f32 to vector<16x32xf32>
    %119 = arith.addf %118, %117 : vector<16x32xf32>
    %120 = arith.divf %118, %119 : vector<16x32xf32>
    %121 = vector.extract_strided_slice %109 {offsets = [0, 32], sizes = [16, 32], strides = [1, 1]} : vector<16x96xf32> to vector<16x32xf32>
    %122 = vector.extract_strided_slice %112 {offsets = [0, 32], sizes = [16, 32], strides = [1, 1]} : vector<16x96xf32> to vector<16x32xf32>
    %123 = arith.addf %121, %122 : vector<16x32xf32>
    %124 = arith.negf %123 : vector<16x32xf32>
    %125 = math.exp %124 : vector<16x32xf32>
    %cst_44 = arith.constant 1.000000e+00 : f32
    %126 = vector.broadcast %cst_44 : f32 to vector<16x32xf32>
    %127 = arith.addf %126, %125 : vector<16x32xf32>
    %128 = arith.divf %126, %127 : vector<16x32xf32>
    %129 = vector.extract_strided_slice %109 {offsets = [0, 64], sizes = [16, 32], strides = [1, 1]} : vector<16x96xf32> to vector<16x32xf32>
    %130 = vector.extract_strided_slice %112 {offsets = [0, 64], sizes = [16, 32], strides = [1, 1]} : vector<16x96xf32> to vector<16x32xf32>
    %131 = arith.mulf %120, %130 : vector<16x32xf32>
    %132 = arith.addf %129, %131 : vector<16x32xf32>
    %133 = math.tanh %132 : vector<16x32xf32>
    %cst_45 = arith.constant 1.000000e+00 : f32
    %134 = vector.broadcast %cst_45 : f32 to vector<16x32xf32>
    %135 = arith.subf %134, %128 : vector<16x32xf32>
    %136 = arith.mulf %135, %133 : vector<16x32xf32>
    %137 = arith.mulf %128, %76 : vector<16x32xf32>
    %138 = arith.addf %136, %137 : vector<16x32xf32>
    %c32_46 = arith.constant 32 : index
    %c0_47 = arith.constant 0 : index
    %139 = vector.load %arg15[%c32_46, %c0_47] : memref<64x32xf32, #tpu.memory_space<vmem>>, vector<16x32xf32>
    tpu.vector_store %arg15[%c32_46, %c0_47], %138 {strides = array<i32>} : memref<64x32xf32, #tpu.memory_space<vmem>>, vector<16x32xf32>,
    %c32_48 = arith.constant 32 : index
    %c0_49 = arith.constant 0 : index
    %140 = vector.load %arg12[%c32_48, %c0_49] : memref<64x96xf32, #tpu.memory_space<vmem>>, vector<16x96xf32>
    %cst_50 = arith.constant dense<0.000000e+00> : vector<16x96xf32>
    %141 = tpu.matmul %107, %10, %cst_50 {dimension_numbers = #tpu.dot_dimension_numbers<[1], [0], [0], [1], [0, 0, 1, 1], [], []>} : vector<16x32xf32>, vector<32x96xf32>, vector<16x96xf32> -> vector<16x96xf32>
    %142 = vector.broadcast %11 : vector<1x96xf32> to vector<16x96xf32>
    %143 = arith.addf %141, %142 : vector<16x96xf32>
    %144 = vector.extract_strided_slice %140 {offsets = [0, 0], sizes = [16, 32], strides = [1, 1]} : vector<16x96xf32> to vector<16x32xf32>
    %145 = vector.extract_strided_slice %143 {offsets = [0, 0], sizes = [16, 32], strides = [1, 1]} : vector<16x96xf32> to vector<16x32xf32>
    %146 = arith.addf %144, %145 : vector<16x32xf32>
    %147 = arith.negf %146 : vector<16x32xf32>
    %148 = math.exp %147 : vector<16x32xf32>
    %cst_51 = arith.constant 1.000000e+00 : f32
    %149 = vector.broadcast %cst_51 : f32 to vector<16x32xf32>
    %150 = arith.addf %149, %148 : vector<16x32xf32>
    %151 = arith.divf %149, %150 : vector<16x32xf32>
    %152 = vector.extract_strided_slice %140 {offsets = [0, 32], sizes = [16, 32], strides = [1, 1]} : vector<16x96xf32> to vector<16x32xf32>
    %153 = vector.extract_strided_slice %143 {offsets = [0, 32], sizes = [16, 32], strides = [1, 1]} : vector<16x96xf32> to vector<16x32xf32>
    %154 = arith.addf %152, %153 : vector<16x32xf32>
    %155 = arith.negf %154 : vector<16x32xf32>
    %156 = math.exp %155 : vector<16x32xf32>
    %cst_52 = arith.constant 1.000000e+00 : f32
    %157 = vector.broadcast %cst_52 : f32 to vector<16x32xf32>
    %158 = arith.addf %157, %156 : vector<16x32xf32>
    %159 = arith.divf %157, %158 : vector<16x32xf32>
    %160 = vector.extract_strided_slice %140 {offsets = [0, 64], sizes = [16, 32], strides = [1, 1]} : vector<16x96xf32> to vector<16x32xf32>
    %161 = vector.extract_strided_slice %143 {offsets = [0, 64], sizes = [16, 32], strides = [1, 1]} : vector<16x96xf32> to vector<16x32xf32>
    %162 = arith.mulf %151, %161 : vector<16x32xf32>
    %163 = arith.addf %160, %162 : vector<16x32xf32>
    %164 = math.tanh %163 : vector<16x32xf32>
    %cst_53 = arith.constant 1.000000e+00 : f32
    %165 = vector.broadcast %cst_53 : f32 to vector<16x32xf32>
    %166 = arith.subf %165, %159 : vector<16x32xf32>
    %167 = arith.mulf %166, %164 : vector<16x32xf32>
    %168 = arith.mulf %159, %107 : vector<16x32xf32>
    %169 = arith.addf %167, %168 : vector<16x32xf32>
    %c32_54 = arith.constant 32 : index
    %c0_55 = arith.constant 0 : index
    %170 = vector.load %arg14[%c32_54, %c0_55] : memref<64x32xf32, #tpu.memory_space<vmem>>, vector<16x32xf32>
    tpu.vector_store %arg14[%c32_54, %c0_55], %169 {strides = array<i32>} : memref<64x32xf32, #tpu.memory_space<vmem>>, vector<16x32xf32>,
    %c16_56 = arith.constant 16 : index
    %c0_57 = arith.constant 0 : index
    %171 = vector.load %arg13[%c16_56, %c0_57] : memref<64x96xf32, #tpu.memory_space<vmem>>, vector<16x96xf32>
    %cst_58 = arith.constant dense<0.000000e+00> : vector<16x96xf32>
    %172 = tpu.matmul %138, %12, %cst_58 {dimension_numbers = #tpu.dot_dimension_numbers<[1], [0], [0], [1], [0, 0, 1, 1], [], []>} : vector<16x32xf32>, vector<32x96xf32>, vector<16x96xf32> -> vector<16x96xf32>
    %173 = vector.broadcast %13 : vector<1x96xf32> to vector<16x96xf32>
    %174 = arith.addf %172, %173 : vector<16x96xf32>
    %175 = vector.extract_strided_slice %171 {offsets = [0, 0], sizes = [16, 32], strides = [1, 1]} : vector<16x96xf32> to vector<16x32xf32>
    %176 = vector.extract_strided_slice %174 {offsets = [0, 0], sizes = [16, 32], strides = [1, 1]} : vector<16x96xf32> to vector<16x32xf32>
    %177 = arith.addf %175, %176 : vector<16x32xf32>
    %178 = arith.negf %177 : vector<16x32xf32>
    %179 = math.exp %178 : vector<16x32xf32>
    %cst_59 = arith.constant 1.000000e+00 : f32
    %180 = vector.broadcast %cst_59 : f32 to vector<16x32xf32>
    %181 = arith.addf %180, %179 : vector<16x32xf32>
    %182 = arith.divf %180, %181 : vector<16x32xf32>
    %183 = vector.extract_strided_slice %171 {offsets = [0, 32], sizes = [16, 32], strides = [1, 1]} : vector<16x96xf32> to vector<16x32xf32>
    %184 = vector.extract_strided_slice %174 {offsets = [0, 32], sizes = [16, 32], strides = [1, 1]} : vector<16x96xf32> to vector<16x32xf32>
    %185 = arith.addf %183, %184 : vector<16x32xf32>
    %186 = arith.negf %185 : vector<16x32xf32>
    %187 = math.exp %186 : vector<16x32xf32>
    %cst_60 = arith.constant 1.000000e+00 : f32
    %188 = vector.broadcast %cst_60 : f32 to vector<16x32xf32>
    %189 = arith.addf %188, %187 : vector<16x32xf32>
    %190 = arith.divf %188, %189 : vector<16x32xf32>
    %191 = vector.extract_strided_slice %171 {offsets = [0, 64], sizes = [16, 32], strides = [1, 1]} : vector<16x96xf32> to vector<16x32xf32>
    %192 = vector.extract_strided_slice %174 {offsets = [0, 64], sizes = [16, 32], strides = [1, 1]} : vector<16x96xf32> to vector<16x32xf32>
    %193 = arith.mulf %182, %192 : vector<16x32xf32>
    %194 = arith.addf %191, %193 : vector<16x32xf32>
    %195 = math.tanh %194 : vector<16x32xf32>
    %cst_61 = arith.constant 1.000000e+00 : f32
    %196 = vector.broadcast %cst_61 : f32 to vector<16x32xf32>
    %197 = arith.subf %196, %190 : vector<16x32xf32>
    %198 = arith.mulf %197, %195 : vector<16x32xf32>
    %199 = arith.mulf %190, %138 : vector<16x32xf32>
    %200 = arith.addf %198, %199 : vector<16x32xf32>
    %c16_62 = arith.constant 16 : index
    %c0_63 = arith.constant 0 : index
    %201 = vector.load %arg15[%c16_62, %c0_63] : memref<64x32xf32, #tpu.memory_space<vmem>>, vector<16x32xf32>
    tpu.vector_store %arg15[%c16_62, %c0_63], %200 {strides = array<i32>} : memref<64x32xf32, #tpu.memory_space<vmem>>, vector<16x32xf32>,
    %c48_64 = arith.constant 48 : index
    %c0_65 = arith.constant 0 : index
    %202 = vector.load %arg12[%c48_64, %c0_65] : memref<64x96xf32, #tpu.memory_space<vmem>>, vector<16x96xf32>
    %cst_66 = arith.constant dense<0.000000e+00> : vector<16x96xf32>
    %203 = tpu.matmul %169, %10, %cst_66 {dimension_numbers = #tpu.dot_dimension_numbers<[1], [0], [0], [1], [0, 0, 1, 1], [], []>} : vector<16x32xf32>, vector<32x96xf32>, vector<16x96xf32> -> vector<16x96xf32>
    %204 = vector.broadcast %11 : vector<1x96xf32> to vector<16x96xf32>
    %205 = arith.addf %203, %204 : vector<16x96xf32>
    %206 = vector.extract_strided_slice %202 {offsets = [0, 0], sizes = [16, 32], strides = [1, 1]} : vector<16x96xf32> to vector<16x32xf32>
    %207 = vector.extract_strided_slice %205 {offsets = [0, 0], sizes = [16, 32], strides = [1, 1]} : vector<16x96xf32> to vector<16x32xf32>
    %208 = arith.addf %206, %207 : vector<16x32xf32>
    %209 = arith.negf %208 : vector<16x32xf32>
    %210 = math.exp %209 : vector<16x32xf32>
    %cst_67 = arith.constant 1.000000e+00 : f32
    %211 = vector.broadcast %cst_67 : f32 to vector<16x32xf32>
    %212 = arith.addf %211, %210 : vector<16x32xf32>
    %213 = arith.divf %211, %212 : vector<16x32xf32>
    %214 = vector.extract_strided_slice %202 {offsets = [0, 32], sizes = [16, 32], strides = [1, 1]} : vector<16x96xf32> to vector<16x32xf32>
    %215 = vector.extract_strided_slice %205 {offsets = [0, 32], sizes = [16, 32], strides = [1, 1]} : vector<16x96xf32> to vector<16x32xf32>
    %216 = arith.addf %214, %215 : vector<16x32xf32>
    %217 = arith.negf %216 : vector<16x32xf32>
    %218 = math.exp %217 : vector<16x32xf32>
    %cst_68 = arith.constant 1.000000e+00 : f32
    %219 = vector.broadcast %cst_68 : f32 to vector<16x32xf32>
    %220 = arith.addf %219, %218 : vector<16x32xf32>
    %221 = arith.divf %219, %220 : vector<16x32xf32>
    %222 = vector.extract_strided_slice %202 {offsets = [0, 64], sizes = [16, 32], strides = [1, 1]} : vector<16x96xf32> to vector<16x32xf32>
    %223 = vector.extract_strided_slice %205 {offsets = [0, 64], sizes = [16, 32], strides = [1, 1]} : vector<16x96xf32> to vector<16x32xf32>
    %224 = arith.mulf %213, %223 : vector<16x32xf32>
    %225 = arith.addf %222, %224 : vector<16x32xf32>
    %226 = math.tanh %225 : vector<16x32xf32>
    %cst_69 = arith.constant 1.000000e+00 : f32
    %227 = vector.broadcast %cst_69 : f32 to vector<16x32xf32>
    %228 = arith.subf %227, %221 : vector<16x32xf32>
    %229 = arith.mulf %228, %226 : vector<16x32xf32>
    %230 = arith.mulf %221, %169 : vector<16x32xf32>
    %231 = arith.addf %229, %230 : vector<16x32xf32>
    %c48_70 = arith.constant 48 : index
    %c0_71 = arith.constant 0 : index
    %232 = vector.load %arg14[%c48_70, %c0_71] : memref<64x32xf32, #tpu.memory_space<vmem>>, vector<16x32xf32>
    tpu.vector_store %arg14[%c48_70, %c0_71], %231 {strides = array<i32>} : memref<64x32xf32, #tpu.memory_space<vmem>>, vector<16x32xf32>,
    %c0_72 = arith.constant 0 : index
    %c0_73 = arith.constant 0 : index
    %233 = vector.load %arg13[%c0_72, %c0_73] : memref<64x96xf32, #tpu.memory_space<vmem>>, vector<16x96xf32>
    %cst_74 = arith.constant dense<0.000000e+00> : vector<16x96xf32>
    %234 = tpu.matmul %200, %12, %cst_74 {dimension_numbers = #tpu.dot_dimension_numbers<[1], [0], [0], [1], [0, 0, 1, 1], [], []>} : vector<16x32xf32>, vector<32x96xf32>, vector<16x96xf32> -> vector<16x96xf32>
    %235 = vector.broadcast %13 : vector<1x96xf32> to vector<16x96xf32>
    %236 = arith.addf %234, %235 : vector<16x96xf32>
    %237 = vector.extract_strided_slice %233 {offsets = [0, 0], sizes = [16, 32], strides = [1, 1]} : vector<16x96xf32> to vector<16x32xf32>
    %238 = vector.extract_strided_slice %236 {offsets = [0, 0], sizes = [16, 32], strides = [1, 1]} : vector<16x96xf32> to vector<16x32xf32>
    %239 = arith.addf %237, %238 : vector<16x32xf32>
    %240 = arith.negf %239 : vector<16x32xf32>
    %241 = math.exp %240 : vector<16x32xf32>
    %cst_75 = arith.constant 1.000000e+00 : f32
    %242 = vector.broadcast %cst_75 : f32 to vector<16x32xf32>
    %243 = arith.addf %242, %241 : vector<16x32xf32>
    %244 = arith.divf %242, %243 : vector<16x32xf32>
    %245 = vector.extract_strided_slice %233 {offsets = [0, 32], sizes = [16, 32], strides = [1, 1]} : vector<16x96xf32> to vector<16x32xf32>
    %246 = vector.extract_strided_slice %236 {offsets = [0, 32], sizes = [16, 32], strides = [1, 1]} : vector<16x96xf32> to vector<16x32xf32>
    %247 = arith.addf %245, %246 : vector<16x32xf32>
    %248 = arith.negf %247 : vector<16x32xf32>
    %249 = math.exp %248 : vector<16x32xf32>
    %cst_76 = arith.constant 1.000000e+00 : f32
    %250 = vector.broadcast %cst_76 : f32 to vector<16x32xf32>
    %251 = arith.addf %250, %249 : vector<16x32xf32>
    %252 = arith.divf %250, %251 : vector<16x32xf32>
    %253 = vector.extract_strided_slice %233 {offsets = [0, 64], sizes = [16, 32], strides = [1, 1]} : vector<16x96xf32> to vector<16x32xf32>
    %254 = vector.extract_strided_slice %236 {offsets = [0, 64], sizes = [16, 32], strides = [1, 1]} : vector<16x96xf32> to vector<16x32xf32>
    %255 = arith.mulf %244, %254 : vector<16x32xf32>
    %256 = arith.addf %253, %255 : vector<16x32xf32>
    %257 = math.tanh %256 : vector<16x32xf32>
    %cst_77 = arith.constant 1.000000e+00 : f32
    %258 = vector.broadcast %cst_77 : f32 to vector<16x32xf32>
    %259 = arith.subf %258, %252 : vector<16x32xf32>
    %260 = arith.mulf %259, %257 : vector<16x32xf32>
    %261 = arith.mulf %252, %200 : vector<16x32xf32>
    %262 = arith.addf %260, %261 : vector<16x32xf32>
    %c0_78 = arith.constant 0 : index
    %c0_79 = arith.constant 0 : index
    %263 = vector.load %arg15[%c0_78, %c0_79] : memref<64x32xf32, #tpu.memory_space<vmem>>, vector<16x32xf32>
    tpu.vector_store %arg15[%c0_78, %c0_79], %262 {strides = array<i32>} : memref<64x32xf32, #tpu.memory_space<vmem>>, vector<16x32xf32>,
    %c0_80 = arith.constant 0 : index
    %c0_81 = arith.constant 0 : index
    %264 = vector.load %arg14[%c0_80, %c0_81] : memref<64x32xf32, #tpu.memory_space<vmem>>, vector<64x32xf32>
    %c0_82 = arith.constant 0 : index
    %c0_83 = arith.constant 0 : index
    %265 = vector.load %arg7[%c0_82, %c0_83] : memref<32x64xf32, #tpu.memory_space<vmem>>, vector<32x64xf32>
    %cst_84 = arith.constant dense<0.000000e+00> : vector<64x64xf32>
    %266 = tpu.matmul %264, %265, %cst_84 {dimension_numbers = #tpu.dot_dimension_numbers<[1], [0], [0], [1], [0, 0, 1, 1], [], []>} : vector<64x32xf32>, vector<32x64xf32>, vector<64x64xf32> -> vector<64x64xf32>
    %c0_85 = arith.constant 0 : index
    %c0_86 = arith.constant 0 : index
    %267 = vector.load %arg15[%c0_85, %c0_86] : memref<64x32xf32, #tpu.memory_space<vmem>>, vector<64x32xf32>
    %c0_87 = arith.constant 0 : index
    %c0_88 = arith.constant 0 : index
    %268 = vector.load %arg8[%c0_87, %c0_88] : memref<32x64xf32, #tpu.memory_space<vmem>>, vector<32x64xf32>
    %cst_89 = arith.constant dense<0.000000e+00> : vector<64x64xf32>
    %269 = tpu.matmul %267, %268, %cst_89 {dimension_numbers = #tpu.dot_dimension_numbers<[1], [0], [0], [1], [0, 0, 1, 1], [], []>} : vector<64x32xf32>, vector<32x64xf32>, vector<64x64xf32> -> vector<64x64xf32>
    %270 = arith.addf %266, %269 : vector<64x64xf32>
    %c0_90 = arith.constant 0 : index
    %c0_91 = arith.constant 0 : index
    %271 = vector.load %arg9[%c0_90, %c0_91] : memref<1x64xf32, #tpu.memory_space<vmem>>, vector<1x64xf32>
    %272 = vector.broadcast %271 : vector<1x64xf32> to vector<64x64xf32>
    %273 = arith.addf %270, %272 : vector<64x64xf32>
    %274 = vector.extract_strided_slice %273 {offsets = [0, 0], sizes = [64, 32], strides = [1, 1]} : vector<64x64xf32> to vector<64x32xf32>
    %c0_92 = arith.constant 0 : index
    %c0_93 = arith.constant 0 : index
    %275 = vector.load %arg10[%c0_92, %c0_93] : memref<64x32xf32, #tpu.memory_space<vmem>>, vector<64x32xf32>
    tpu.vector_store %arg10[%c0_92, %c0_93], %274 {strides = array<i32>} : memref<64x32xf32, #tpu.memory_space<vmem>>, vector<64x32xf32>,
    %276 = vector.extract_strided_slice %273 {offsets = [0, 32], sizes = [64, 32], strides = [1, 1]} : vector<64x64xf32> to vector<64x32xf32>
    %c0_94 = arith.constant 0 : index
    %c0_95 = arith.constant 0 : index
    %277 = vector.load %arg11[%c0_94, %c0_95] : memref<64x32xf32, #tpu.memory_space<vmem>>, vector<64x32xf32>
    tpu.vector_store %arg11[%c0_94, %c0_95], %276 {strides = array<i32>} : memref<64x32xf32, #tpu.memory_space<vmem>>, vector<64x32xf32>,
    return
  }
}

module attributes {stable_mosaic.version = 11 : i64} {
  func.func @_decoder_kernel(%arg0: memref<6x8x96xf32, #tpu.memory_space<vmem>>, %arg1: memref<8x32xf32, #tpu.memory_space<vmem>>, %arg2: memref<8x16x32xf32, #tpu.memory_space<vmem>>, %arg3: memref<8x16x32xf32, #tpu.memory_space<vmem>>, %arg4: memref<8x16xf32, #tpu.memory_space<vmem>>, %arg5: memref<32x96xf32, #tpu.memory_space<vmem>>, %arg6: memref<1x96xf32, #tpu.memory_space<vmem>>, %arg7: memref<32x160xf32, #tpu.memory_space<vmem>>, %arg8: memref<1x160xf32, #tpu.memory_space<vmem>>, %arg9: memref<1x32xf32, #tpu.memory_space<vmem>>, %arg10: memref<6x8x128xf32, #tpu.memory_space<vmem>>) attributes {dimension_semantics = [], scalar_prefetch = 0 : i64, scratch_operands = 0 : i64, tpu.core_type = #tpu.core_type<tc>} {
    %c0 = arith.constant 0 : index
    %c0_0 = arith.constant 0 : index
    %c0_1 = arith.constant 0 : index
    %0 = vector.load %arg2[%c0, %c0_0, %c0_1] : memref<8x16x32xf32, #tpu.memory_space<vmem>>, vector<8x16x32xf32>
    %c0_2 = arith.constant 0 : index
    %c0_3 = arith.constant 0 : index
    %c0_4 = arith.constant 0 : index
    %1 = vector.load %arg3[%c0_2, %c0_3, %c0_4] : memref<8x16x32xf32, #tpu.memory_space<vmem>>, vector<8x16x32xf32>
    %c0_5 = arith.constant 0 : index
    %c0_6 = arith.constant 0 : index
    %2 = vector.load %arg4[%c0_5, %c0_6] : memref<8x16xf32, #tpu.memory_space<vmem>>, vector<8x16xf32>
    %c0_7 = arith.constant 0 : index
    %c0_8 = arith.constant 0 : index
    %3 = vector.load %arg5[%c0_7, %c0_8] : memref<32x96xf32, #tpu.memory_space<vmem>>, vector<32x96xf32>
    %c0_9 = arith.constant 0 : index
    %c0_10 = arith.constant 0 : index
    %4 = vector.load %arg6[%c0_9, %c0_10] : memref<1x96xf32, #tpu.memory_space<vmem>>, vector<1x96xf32>
    %c0_11 = arith.constant 0 : index
    %c0_12 = arith.constant 0 : index
    %5 = vector.load %arg7[%c0_11, %c0_12] : memref<32x160xf32, #tpu.memory_space<vmem>>, vector<32x160xf32>
    %c0_13 = arith.constant 0 : index
    %c0_14 = arith.constant 0 : index
    %6 = vector.load %arg8[%c0_13, %c0_14] : memref<1x160xf32, #tpu.memory_space<vmem>>, vector<1x160xf32>
    %c0_15 = arith.constant 0 : index
    %c0_16 = arith.constant 0 : index
    %7 = vector.load %arg9[%c0_15, %c0_16] : memref<1x32xf32, #tpu.memory_space<vmem>>, vector<1x32xf32>
    %8 = vector.shape_cast %7 : vector<1x32xf32> to vector<1x1x32xf32>
    %9 = vector.shape_cast %8 : vector<1x1x32xf32> to vector<1x1x32xf32>
    %10 = vector.broadcast %9 : vector<1x1x32xf32> to vector<8x16x32xf32>
    %c0_17 = arith.constant 0 : index
    %c0_18 = arith.constant 0 : index
    %11 = vector.load %arg1[%c0_17, %c0_18] : memref<8x32xf32, #tpu.memory_space<vmem>>, vector<8x32xf32>
    %c0_19 = arith.constant 0 : index
    %c0_20 = arith.constant 0 : index
    %c0_21 = arith.constant 0 : index
    %12 = vector.load %arg0[%c0_19, %c0_20, %c0_21] : memref<6x8x96xf32, #tpu.memory_space<vmem>>, vector<1x8x96xf32>
    %13 = vector.shape_cast %12 : vector<1x8x96xf32> to vector<8x96xf32>
    %cst = arith.constant dense<0.000000e+00> : vector<8x96xf32>
    %14 = tpu.matmul %11, %3, %cst {dimension_numbers = #tpu.dot_dimension_numbers<[1], [0], [0], [1], [0, 0, 1, 1], [], []>} : vector<8x32xf32>, vector<32x96xf32>, vector<8x96xf32> -> vector<8x96xf32>
    %15 = vector.broadcast %4 : vector<1x96xf32> to vector<8x96xf32>
    %16 = arith.addf %14, %15 : vector<8x96xf32>
    %17 = vector.extract_strided_slice %13 {offsets = [0, 0], sizes = [8, 32], strides = [1, 1]} : vector<8x96xf32> to vector<8x32xf32>
    %18 = vector.extract_strided_slice %16 {offsets = [0, 0], sizes = [8, 32], strides = [1, 1]} : vector<8x96xf32> to vector<8x32xf32>
    %19 = arith.addf %17, %18 : vector<8x32xf32>
    %20 = arith.negf %19 : vector<8x32xf32>
    %21 = math.exp %20 : vector<8x32xf32>
    %cst_22 = arith.constant 1.000000e+00 : f32
    %22 = vector.broadcast %cst_22 : f32 to vector<8x32xf32>
    %23 = arith.addf %22, %21 : vector<8x32xf32>
    %24 = arith.divf %22, %23 : vector<8x32xf32>
    %25 = vector.extract_strided_slice %13 {offsets = [0, 32], sizes = [8, 32], strides = [1, 1]} : vector<8x96xf32> to vector<8x32xf32>
    %26 = vector.extract_strided_slice %16 {offsets = [0, 32], sizes = [8, 32], strides = [1, 1]} : vector<8x96xf32> to vector<8x32xf32>
    %27 = arith.addf %25, %26 : vector<8x32xf32>
    %28 = arith.negf %27 : vector<8x32xf32>
    %29 = math.exp %28 : vector<8x32xf32>
    %cst_23 = arith.constant 1.000000e+00 : f32
    %30 = vector.broadcast %cst_23 : f32 to vector<8x32xf32>
    %31 = arith.addf %30, %29 : vector<8x32xf32>
    %32 = arith.divf %30, %31 : vector<8x32xf32>
    %33 = vector.extract_strided_slice %13 {offsets = [0, 64], sizes = [8, 32], strides = [1, 1]} : vector<8x96xf32> to vector<8x32xf32>
    %34 = vector.extract_strided_slice %16 {offsets = [0, 64], sizes = [8, 32], strides = [1, 1]} : vector<8x96xf32> to vector<8x32xf32>
    %35 = arith.mulf %24, %34 : vector<8x32xf32>
    %36 = arith.addf %33, %35 : vector<8x32xf32>
    %37 = math.tanh %36 : vector<8x32xf32>
    %cst_24 = arith.constant 1.000000e+00 : f32
    %38 = vector.broadcast %cst_24 : f32 to vector<8x32xf32>
    %39 = arith.subf %38, %32 : vector<8x32xf32>
    %40 = arith.mulf %39, %37 : vector<8x32xf32>
    %41 = arith.mulf %32, %11 : vector<8x32xf32>
    %42 = arith.addf %40, %41 : vector<8x32xf32>
    %cst_25 = arith.constant dense<0.000000e+00> : vector<8x160xf32>
    %43 = tpu.matmul %42, %5, %cst_25 {dimension_numbers = #tpu.dot_dimension_numbers<[1], [0], [0], [1], [0, 0, 1, 1], [], []>} : vector<8x32xf32>, vector<32x160xf32>, vector<8x160xf32> -> vector<8x160xf32>
    %44 = vector.broadcast %6 : vector<1x160xf32> to vector<8x160xf32>
    %45 = arith.addf %43, %44 : vector<8x160xf32>
    %46 = vector.extract_strided_slice %45 {offsets = [0, 0], sizes = [8, 128], strides = [1, 1]} : vector<8x160xf32> to vector<8x128xf32>
    %c0_26 = arith.constant 0 : index
    %c0_27 = arith.constant 0 : index
    %c0_28 = arith.constant 0 : index
    %47 = vector.load %arg10[%c0_26, %c0_27, %c0_28] : memref<6x8x128xf32, #tpu.memory_space<vmem>>, vector<1x8x128xf32>
    %48 = vector.shape_cast %47 : vector<1x8x128xf32> to vector<8x128xf32>
    %49 = vector.shape_cast %46 : vector<8x128xf32> to vector<1x8x128xf32>
    tpu.vector_store %arg10[%c0_26, %c0_27, %c0_28], %49 {strides = array<i32>} : memref<6x8x128xf32, #tpu.memory_space<vmem>>, vector<1x8x128xf32>,
    %50 = vector.extract_strided_slice %45 {offsets = [0, 128], sizes = [8, 32], strides = [1, 1]} : vector<8x160xf32> to vector<8x32xf32>
    %51 = vector.shape_cast %50 : vector<8x32xf32> to vector<8x1x32xf32>
    %52 = vector.broadcast %51 : vector<8x1x32xf32> to vector<8x16x32xf32>
    %53 = arith.addf %1, %52 : vector<8x16x32xf32>
    %54 = math.tanh %53 : vector<8x16x32xf32>
    %55 = arith.mulf %54, %10 : vector<8x16x32xf32>
    %cst_29 = arith.constant dense<0.000000e+00> : vector<8x16xf32>
    %56 = vector.multi_reduction <add>, %55, %cst_29 [2] : vector<8x16x32xf32> to vector<8x16xf32>
    %57 = arith.addf %56, %2 : vector<8x16xf32>
    %cst_30 = arith.constant dense<0xFF800000> : vector<8xf32>
    %58 = vector.multi_reduction <maximumf>, %57, %cst_30 [1] : vector<8x16xf32> to vector<8xf32>
    %59 = vector.shape_cast %58 : vector<8xf32> to vector<8x1xf32>
    %60 = vector.broadcast %59 : vector<8x1xf32> to vector<8x16xf32>
    %61 = arith.subf %57, %60 : vector<8x16xf32>
    %62 = math.exp %61 : vector<8x16xf32>
    %cst_31 = arith.constant dense<0.000000e+00> : vector<8xf32>
    %63 = vector.multi_reduction <add>, %62, %cst_31 [1] : vector<8x16xf32> to vector<8xf32>
    %64 = vector.shape_cast %63 : vector<8xf32> to vector<8x1xf32>
    %65 = tpu.reciprocal %64 {approx = true} : vector<8x1xf32> -> vector<8x1xf32>
    %66 = vector.broadcast %65 : vector<8x1xf32> to vector<8x16xf32>
    %67 = arith.mulf %62, %66 : vector<8x16xf32>
    %68 = vector.shape_cast %67 : vector<8x16xf32> to vector<8x16x1xf32>
    %69 = vector.broadcast %68 : vector<8x16x1xf32> to vector<8x16x32xf32>
    %70 = arith.mulf %69, %0 : vector<8x16x32xf32>
    %cst_32 = arith.constant dense<0.000000e+00> : vector<8x32xf32>
    %71 = vector.multi_reduction <add>, %70, %cst_32 [1] : vector<8x16x32xf32> to vector<8x32xf32>
    %72 = arith.addf %42, %71 : vector<8x32xf32>
    %c1 = arith.constant 1 : index
    %c0_33 = arith.constant 0 : index
    %c0_34 = arith.constant 0 : index
    %73 = vector.load %arg0[%c1, %c0_33, %c0_34] : memref<6x8x96xf32, #tpu.memory_space<vmem>>, vector<1x8x96xf32>
    %74 = vector.shape_cast %73 : vector<1x8x96xf32> to vector<8x96xf32>
    %cst_35 = arith.constant dense<0.000000e+00> : vector<8x96xf32>
    %75 = tpu.matmul %72, %3, %cst_35 {dimension_numbers = #tpu.dot_dimension_numbers<[1], [0], [0], [1], [0, 0, 1, 1], [], []>} : vector<8x32xf32>, vector<32x96xf32>, vector<8x96xf32> -> vector<8x96xf32>
    %76 = vector.broadcast %4 : vector<1x96xf32> to vector<8x96xf32>
    %77 = arith.addf %75, %76 : vector<8x96xf32>
    %78 = vector.extract_strided_slice %74 {offsets = [0, 0], sizes = [8, 32], strides = [1, 1]} : vector<8x96xf32> to vector<8x32xf32>
    %79 = vector.extract_strided_slice %77 {offsets = [0, 0], sizes = [8, 32], strides = [1, 1]} : vector<8x96xf32> to vector<8x32xf32>
    %80 = arith.addf %78, %79 : vector<8x32xf32>
    %81 = arith.negf %80 : vector<8x32xf32>
    %82 = math.exp %81 : vector<8x32xf32>
    %cst_36 = arith.constant 1.000000e+00 : f32
    %83 = vector.broadcast %cst_36 : f32 to vector<8x32xf32>
    %84 = arith.addf %83, %82 : vector<8x32xf32>
    %85 = arith.divf %83, %84 : vector<8x32xf32>
    %86 = vector.extract_strided_slice %74 {offsets = [0, 32], sizes = [8, 32], strides = [1, 1]} : vector<8x96xf32> to vector<8x32xf32>
    %87 = vector.extract_strided_slice %77 {offsets = [0, 32], sizes = [8, 32], strides = [1, 1]} : vector<8x96xf32> to vector<8x32xf32>
    %88 = arith.addf %86, %87 : vector<8x32xf32>
    %89 = arith.negf %88 : vector<8x32xf32>
    %90 = math.exp %89 : vector<8x32xf32>
    %cst_37 = arith.constant 1.000000e+00 : f32
    %91 = vector.broadcast %cst_37 : f32 to vector<8x32xf32>
    %92 = arith.addf %91, %90 : vector<8x32xf32>
    %93 = arith.divf %91, %92 : vector<8x32xf32>
    %94 = vector.extract_strided_slice %74 {offsets = [0, 64], sizes = [8, 32], strides = [1, 1]} : vector<8x96xf32> to vector<8x32xf32>
    %95 = vector.extract_strided_slice %77 {offsets = [0, 64], sizes = [8, 32], strides = [1, 1]} : vector<8x96xf32> to vector<8x32xf32>
    %96 = arith.mulf %85, %95 : vector<8x32xf32>
    %97 = arith.addf %94, %96 : vector<8x32xf32>
    %98 = math.tanh %97 : vector<8x32xf32>
    %cst_38 = arith.constant 1.000000e+00 : f32
    %99 = vector.broadcast %cst_38 : f32 to vector<8x32xf32>
    %100 = arith.subf %99, %93 : vector<8x32xf32>
    %101 = arith.mulf %100, %98 : vector<8x32xf32>
    %102 = arith.mulf %93, %72 : vector<8x32xf32>
    %103 = arith.addf %101, %102 : vector<8x32xf32>
    %cst_39 = arith.constant dense<0.000000e+00> : vector<8x160xf32>
    %104 = tpu.matmul %103, %5, %cst_39 {dimension_numbers = #tpu.dot_dimension_numbers<[1], [0], [0], [1], [0, 0, 1, 1], [], []>} : vector<8x32xf32>, vector<32x160xf32>, vector<8x160xf32> -> vector<8x160xf32>
    %105 = vector.broadcast %6 : vector<1x160xf32> to vector<8x160xf32>
    %106 = arith.addf %104, %105 : vector<8x160xf32>
    %107 = vector.extract_strided_slice %106 {offsets = [0, 0], sizes = [8, 128], strides = [1, 1]} : vector<8x160xf32> to vector<8x128xf32>
    %c1_40 = arith.constant 1 : index
    %c0_41 = arith.constant 0 : index
    %c0_42 = arith.constant 0 : index
    %108 = vector.load %arg10[%c1_40, %c0_41, %c0_42] : memref<6x8x128xf32, #tpu.memory_space<vmem>>, vector<1x8x128xf32>
    %109 = vector.shape_cast %108 : vector<1x8x128xf32> to vector<8x128xf32>
    %110 = vector.shape_cast %107 : vector<8x128xf32> to vector<1x8x128xf32>
    tpu.vector_store %arg10[%c1_40, %c0_41, %c0_42], %110 {strides = array<i32>} : memref<6x8x128xf32, #tpu.memory_space<vmem>>, vector<1x8x128xf32>,
    %111 = vector.extract_strided_slice %106 {offsets = [0, 128], sizes = [8, 32], strides = [1, 1]} : vector<8x160xf32> to vector<8x32xf32>
    %112 = vector.shape_cast %111 : vector<8x32xf32> to vector<8x1x32xf32>
    %113 = vector.broadcast %112 : vector<8x1x32xf32> to vector<8x16x32xf32>
    %114 = arith.addf %1, %113 : vector<8x16x32xf32>
    %115 = math.tanh %114 : vector<8x16x32xf32>
    %116 = arith.mulf %115, %10 : vector<8x16x32xf32>
    %cst_43 = arith.constant dense<0.000000e+00> : vector<8x16xf32>
    %117 = vector.multi_reduction <add>, %116, %cst_43 [2] : vector<8x16x32xf32> to vector<8x16xf32>
    %118 = arith.addf %117, %2 : vector<8x16xf32>
    %cst_44 = arith.constant dense<0xFF800000> : vector<8xf32>
    %119 = vector.multi_reduction <maximumf>, %118, %cst_44 [1] : vector<8x16xf32> to vector<8xf32>
    %120 = vector.shape_cast %119 : vector<8xf32> to vector<8x1xf32>
    %121 = vector.broadcast %120 : vector<8x1xf32> to vector<8x16xf32>
    %122 = arith.subf %118, %121 : vector<8x16xf32>
    %123 = math.exp %122 : vector<8x16xf32>
    %cst_45 = arith.constant dense<0.000000e+00> : vector<8xf32>
    %124 = vector.multi_reduction <add>, %123, %cst_45 [1] : vector<8x16xf32> to vector<8xf32>
    %125 = vector.shape_cast %124 : vector<8xf32> to vector<8x1xf32>
    %126 = tpu.reciprocal %125 {approx = true} : vector<8x1xf32> -> vector<8x1xf32>
    %127 = vector.broadcast %126 : vector<8x1xf32> to vector<8x16xf32>
    %128 = arith.mulf %123, %127 : vector<8x16xf32>
    %129 = vector.shape_cast %128 : vector<8x16xf32> to vector<8x16x1xf32>
    %130 = vector.broadcast %129 : vector<8x16x1xf32> to vector<8x16x32xf32>
    %131 = arith.mulf %130, %0 : vector<8x16x32xf32>
    %cst_46 = arith.constant dense<0.000000e+00> : vector<8x32xf32>
    %132 = vector.multi_reduction <add>, %131, %cst_46 [1] : vector<8x16x32xf32> to vector<8x32xf32>
    %133 = arith.addf %103, %132 : vector<8x32xf32>
    %c2 = arith.constant 2 : index
    %c0_47 = arith.constant 0 : index
    %c0_48 = arith.constant 0 : index
    %134 = vector.load %arg0[%c2, %c0_47, %c0_48] : memref<6x8x96xf32, #tpu.memory_space<vmem>>, vector<1x8x96xf32>
    %135 = vector.shape_cast %134 : vector<1x8x96xf32> to vector<8x96xf32>
    %cst_49 = arith.constant dense<0.000000e+00> : vector<8x96xf32>
    %136 = tpu.matmul %133, %3, %cst_49 {dimension_numbers = #tpu.dot_dimension_numbers<[1], [0], [0], [1], [0, 0, 1, 1], [], []>} : vector<8x32xf32>, vector<32x96xf32>, vector<8x96xf32> -> vector<8x96xf32>
    %137 = vector.broadcast %4 : vector<1x96xf32> to vector<8x96xf32>
    %138 = arith.addf %136, %137 : vector<8x96xf32>
    %139 = vector.extract_strided_slice %135 {offsets = [0, 0], sizes = [8, 32], strides = [1, 1]} : vector<8x96xf32> to vector<8x32xf32>
    %140 = vector.extract_strided_slice %138 {offsets = [0, 0], sizes = [8, 32], strides = [1, 1]} : vector<8x96xf32> to vector<8x32xf32>
    %141 = arith.addf %139, %140 : vector<8x32xf32>
    %142 = arith.negf %141 : vector<8x32xf32>
    %143 = math.exp %142 : vector<8x32xf32>
    %cst_50 = arith.constant 1.000000e+00 : f32
    %144 = vector.broadcast %cst_50 : f32 to vector<8x32xf32>
    %145 = arith.addf %144, %143 : vector<8x32xf32>
    %146 = arith.divf %144, %145 : vector<8x32xf32>
    %147 = vector.extract_strided_slice %135 {offsets = [0, 32], sizes = [8, 32], strides = [1, 1]} : vector<8x96xf32> to vector<8x32xf32>
    %148 = vector.extract_strided_slice %138 {offsets = [0, 32], sizes = [8, 32], strides = [1, 1]} : vector<8x96xf32> to vector<8x32xf32>
    %149 = arith.addf %147, %148 : vector<8x32xf32>
    %150 = arith.negf %149 : vector<8x32xf32>
    %151 = math.exp %150 : vector<8x32xf32>
    %cst_51 = arith.constant 1.000000e+00 : f32
    %152 = vector.broadcast %cst_51 : f32 to vector<8x32xf32>
    %153 = arith.addf %152, %151 : vector<8x32xf32>
    %154 = arith.divf %152, %153 : vector<8x32xf32>
    %155 = vector.extract_strided_slice %135 {offsets = [0, 64], sizes = [8, 32], strides = [1, 1]} : vector<8x96xf32> to vector<8x32xf32>
    %156 = vector.extract_strided_slice %138 {offsets = [0, 64], sizes = [8, 32], strides = [1, 1]} : vector<8x96xf32> to vector<8x32xf32>
    %157 = arith.mulf %146, %156 : vector<8x32xf32>
    %158 = arith.addf %155, %157 : vector<8x32xf32>
    %159 = math.tanh %158 : vector<8x32xf32>
    %cst_52 = arith.constant 1.000000e+00 : f32
    %160 = vector.broadcast %cst_52 : f32 to vector<8x32xf32>
    %161 = arith.subf %160, %154 : vector<8x32xf32>
    %162 = arith.mulf %161, %159 : vector<8x32xf32>
    %163 = arith.mulf %154, %133 : vector<8x32xf32>
    %164 = arith.addf %162, %163 : vector<8x32xf32>
    %cst_53 = arith.constant dense<0.000000e+00> : vector<8x160xf32>
    %165 = tpu.matmul %164, %5, %cst_53 {dimension_numbers = #tpu.dot_dimension_numbers<[1], [0], [0], [1], [0, 0, 1, 1], [], []>} : vector<8x32xf32>, vector<32x160xf32>, vector<8x160xf32> -> vector<8x160xf32>
    %166 = vector.broadcast %6 : vector<1x160xf32> to vector<8x160xf32>
    %167 = arith.addf %165, %166 : vector<8x160xf32>
    %168 = vector.extract_strided_slice %167 {offsets = [0, 0], sizes = [8, 128], strides = [1, 1]} : vector<8x160xf32> to vector<8x128xf32>
    %c2_54 = arith.constant 2 : index
    %c0_55 = arith.constant 0 : index
    %c0_56 = arith.constant 0 : index
    %169 = vector.load %arg10[%c2_54, %c0_55, %c0_56] : memref<6x8x128xf32, #tpu.memory_space<vmem>>, vector<1x8x128xf32>
    %170 = vector.shape_cast %169 : vector<1x8x128xf32> to vector<8x128xf32>
    %171 = vector.shape_cast %168 : vector<8x128xf32> to vector<1x8x128xf32>
    tpu.vector_store %arg10[%c2_54, %c0_55, %c0_56], %171 {strides = array<i32>} : memref<6x8x128xf32, #tpu.memory_space<vmem>>, vector<1x8x128xf32>,
    %172 = vector.extract_strided_slice %167 {offsets = [0, 128], sizes = [8, 32], strides = [1, 1]} : vector<8x160xf32> to vector<8x32xf32>
    %173 = vector.shape_cast %172 : vector<8x32xf32> to vector<8x1x32xf32>
    %174 = vector.broadcast %173 : vector<8x1x32xf32> to vector<8x16x32xf32>
    %175 = arith.addf %1, %174 : vector<8x16x32xf32>
    %176 = math.tanh %175 : vector<8x16x32xf32>
    %177 = arith.mulf %176, %10 : vector<8x16x32xf32>
    %cst_57 = arith.constant dense<0.000000e+00> : vector<8x16xf32>
    %178 = vector.multi_reduction <add>, %177, %cst_57 [2] : vector<8x16x32xf32> to vector<8x16xf32>
    %179 = arith.addf %178, %2 : vector<8x16xf32>
    %cst_58 = arith.constant dense<0xFF800000> : vector<8xf32>
    %180 = vector.multi_reduction <maximumf>, %179, %cst_58 [1] : vector<8x16xf32> to vector<8xf32>
    %181 = vector.shape_cast %180 : vector<8xf32> to vector<8x1xf32>
    %182 = vector.broadcast %181 : vector<8x1xf32> to vector<8x16xf32>
    %183 = arith.subf %179, %182 : vector<8x16xf32>
    %184 = math.exp %183 : vector<8x16xf32>
    %cst_59 = arith.constant dense<0.000000e+00> : vector<8xf32>
    %185 = vector.multi_reduction <add>, %184, %cst_59 [1] : vector<8x16xf32> to vector<8xf32>
    %186 = vector.shape_cast %185 : vector<8xf32> to vector<8x1xf32>
    %187 = tpu.reciprocal %186 {approx = true} : vector<8x1xf32> -> vector<8x1xf32>
    %188 = vector.broadcast %187 : vector<8x1xf32> to vector<8x16xf32>
    %189 = arith.mulf %184, %188 : vector<8x16xf32>
    %190 = vector.shape_cast %189 : vector<8x16xf32> to vector<8x16x1xf32>
    %191 = vector.broadcast %190 : vector<8x16x1xf32> to vector<8x16x32xf32>
    %192 = arith.mulf %191, %0 : vector<8x16x32xf32>
    %cst_60 = arith.constant dense<0.000000e+00> : vector<8x32xf32>
    %193 = vector.multi_reduction <add>, %192, %cst_60 [1] : vector<8x16x32xf32> to vector<8x32xf32>
    %194 = arith.addf %164, %193 : vector<8x32xf32>
    %c3 = arith.constant 3 : index
    %c0_61 = arith.constant 0 : index
    %c0_62 = arith.constant 0 : index
    %195 = vector.load %arg0[%c3, %c0_61, %c0_62] : memref<6x8x96xf32, #tpu.memory_space<vmem>>, vector<1x8x96xf32>
    %196 = vector.shape_cast %195 : vector<1x8x96xf32> to vector<8x96xf32>
    %cst_63 = arith.constant dense<0.000000e+00> : vector<8x96xf32>
    %197 = tpu.matmul %194, %3, %cst_63 {dimension_numbers = #tpu.dot_dimension_numbers<[1], [0], [0], [1], [0, 0, 1, 1], [], []>} : vector<8x32xf32>, vector<32x96xf32>, vector<8x96xf32> -> vector<8x96xf32>
    %198 = vector.broadcast %4 : vector<1x96xf32> to vector<8x96xf32>
    %199 = arith.addf %197, %198 : vector<8x96xf32>
    %200 = vector.extract_strided_slice %196 {offsets = [0, 0], sizes = [8, 32], strides = [1, 1]} : vector<8x96xf32> to vector<8x32xf32>
    %201 = vector.extract_strided_slice %199 {offsets = [0, 0], sizes = [8, 32], strides = [1, 1]} : vector<8x96xf32> to vector<8x32xf32>
    %202 = arith.addf %200, %201 : vector<8x32xf32>
    %203 = arith.negf %202 : vector<8x32xf32>
    %204 = math.exp %203 : vector<8x32xf32>
    %cst_64 = arith.constant 1.000000e+00 : f32
    %205 = vector.broadcast %cst_64 : f32 to vector<8x32xf32>
    %206 = arith.addf %205, %204 : vector<8x32xf32>
    %207 = arith.divf %205, %206 : vector<8x32xf32>
    %208 = vector.extract_strided_slice %196 {offsets = [0, 32], sizes = [8, 32], strides = [1, 1]} : vector<8x96xf32> to vector<8x32xf32>
    %209 = vector.extract_strided_slice %199 {offsets = [0, 32], sizes = [8, 32], strides = [1, 1]} : vector<8x96xf32> to vector<8x32xf32>
    %210 = arith.addf %208, %209 : vector<8x32xf32>
    %211 = arith.negf %210 : vector<8x32xf32>
    %212 = math.exp %211 : vector<8x32xf32>
    %cst_65 = arith.constant 1.000000e+00 : f32
    %213 = vector.broadcast %cst_65 : f32 to vector<8x32xf32>
    %214 = arith.addf %213, %212 : vector<8x32xf32>
    %215 = arith.divf %213, %214 : vector<8x32xf32>
    %216 = vector.extract_strided_slice %196 {offsets = [0, 64], sizes = [8, 32], strides = [1, 1]} : vector<8x96xf32> to vector<8x32xf32>
    %217 = vector.extract_strided_slice %199 {offsets = [0, 64], sizes = [8, 32], strides = [1, 1]} : vector<8x96xf32> to vector<8x32xf32>
    %218 = arith.mulf %207, %217 : vector<8x32xf32>
    %219 = arith.addf %216, %218 : vector<8x32xf32>
    %220 = math.tanh %219 : vector<8x32xf32>
    %cst_66 = arith.constant 1.000000e+00 : f32
    %221 = vector.broadcast %cst_66 : f32 to vector<8x32xf32>
    %222 = arith.subf %221, %215 : vector<8x32xf32>
    %223 = arith.mulf %222, %220 : vector<8x32xf32>
    %224 = arith.mulf %215, %194 : vector<8x32xf32>
    %225 = arith.addf %223, %224 : vector<8x32xf32>
    %cst_67 = arith.constant dense<0.000000e+00> : vector<8x160xf32>
    %226 = tpu.matmul %225, %5, %cst_67 {dimension_numbers = #tpu.dot_dimension_numbers<[1], [0], [0], [1], [0, 0, 1, 1], [], []>} : vector<8x32xf32>, vector<32x160xf32>, vector<8x160xf32> -> vector<8x160xf32>
    %227 = vector.broadcast %6 : vector<1x160xf32> to vector<8x160xf32>
    %228 = arith.addf %226, %227 : vector<8x160xf32>
    %229 = vector.extract_strided_slice %228 {offsets = [0, 0], sizes = [8, 128], strides = [1, 1]} : vector<8x160xf32> to vector<8x128xf32>
    %c3_68 = arith.constant 3 : index
    %c0_69 = arith.constant 0 : index
    %c0_70 = arith.constant 0 : index
    %230 = vector.load %arg10[%c3_68, %c0_69, %c0_70] : memref<6x8x128xf32, #tpu.memory_space<vmem>>, vector<1x8x128xf32>
    %231 = vector.shape_cast %230 : vector<1x8x128xf32> to vector<8x128xf32>
    %232 = vector.shape_cast %229 : vector<8x128xf32> to vector<1x8x128xf32>
    tpu.vector_store %arg10[%c3_68, %c0_69, %c0_70], %232 {strides = array<i32>} : memref<6x8x128xf32, #tpu.memory_space<vmem>>, vector<1x8x128xf32>,
    %233 = vector.extract_strided_slice %228 {offsets = [0, 128], sizes = [8, 32], strides = [1, 1]} : vector<8x160xf32> to vector<8x32xf32>
    %234 = vector.shape_cast %233 : vector<8x32xf32> to vector<8x1x32xf32>
    %235 = vector.broadcast %234 : vector<8x1x32xf32> to vector<8x16x32xf32>
    %236 = arith.addf %1, %235 : vector<8x16x32xf32>
    %237 = math.tanh %236 : vector<8x16x32xf32>
    %238 = arith.mulf %237, %10 : vector<8x16x32xf32>
    %cst_71 = arith.constant dense<0.000000e+00> : vector<8x16xf32>
    %239 = vector.multi_reduction <add>, %238, %cst_71 [2] : vector<8x16x32xf32> to vector<8x16xf32>
    %240 = arith.addf %239, %2 : vector<8x16xf32>
    %cst_72 = arith.constant dense<0xFF800000> : vector<8xf32>
    %241 = vector.multi_reduction <maximumf>, %240, %cst_72 [1] : vector<8x16xf32> to vector<8xf32>
    %242 = vector.shape_cast %241 : vector<8xf32> to vector<8x1xf32>
    %243 = vector.broadcast %242 : vector<8x1xf32> to vector<8x16xf32>
    %244 = arith.subf %240, %243 : vector<8x16xf32>
    %245 = math.exp %244 : vector<8x16xf32>
    %cst_73 = arith.constant dense<0.000000e+00> : vector<8xf32>
    %246 = vector.multi_reduction <add>, %245, %cst_73 [1] : vector<8x16xf32> to vector<8xf32>
    %247 = vector.shape_cast %246 : vector<8xf32> to vector<8x1xf32>
    %248 = tpu.reciprocal %247 {approx = true} : vector<8x1xf32> -> vector<8x1xf32>
    %249 = vector.broadcast %248 : vector<8x1xf32> to vector<8x16xf32>
    %250 = arith.mulf %245, %249 : vector<8x16xf32>
    %251 = vector.shape_cast %250 : vector<8x16xf32> to vector<8x16x1xf32>
    %252 = vector.broadcast %251 : vector<8x16x1xf32> to vector<8x16x32xf32>
    %253 = arith.mulf %252, %0 : vector<8x16x32xf32>
    %cst_74 = arith.constant dense<0.000000e+00> : vector<8x32xf32>
    %254 = vector.multi_reduction <add>, %253, %cst_74 [1] : vector<8x16x32xf32> to vector<8x32xf32>
    %255 = arith.addf %225, %254 : vector<8x32xf32>
    %c4 = arith.constant 4 : index
    %c0_75 = arith.constant 0 : index
    %c0_76 = arith.constant 0 : index
    %256 = vector.load %arg0[%c4, %c0_75, %c0_76] : memref<6x8x96xf32, #tpu.memory_space<vmem>>, vector<1x8x96xf32>
    %257 = vector.shape_cast %256 : vector<1x8x96xf32> to vector<8x96xf32>
    %cst_77 = arith.constant dense<0.000000e+00> : vector<8x96xf32>
    %258 = tpu.matmul %255, %3, %cst_77 {dimension_numbers = #tpu.dot_dimension_numbers<[1], [0], [0], [1], [0, 0, 1, 1], [], []>} : vector<8x32xf32>, vector<32x96xf32>, vector<8x96xf32> -> vector<8x96xf32>
    %259 = vector.broadcast %4 : vector<1x96xf32> to vector<8x96xf32>
    %260 = arith.addf %258, %259 : vector<8x96xf32>
    %261 = vector.extract_strided_slice %257 {offsets = [0, 0], sizes = [8, 32], strides = [1, 1]} : vector<8x96xf32> to vector<8x32xf32>
    %262 = vector.extract_strided_slice %260 {offsets = [0, 0], sizes = [8, 32], strides = [1, 1]} : vector<8x96xf32> to vector<8x32xf32>
    %263 = arith.addf %261, %262 : vector<8x32xf32>
    %264 = arith.negf %263 : vector<8x32xf32>
    %265 = math.exp %264 : vector<8x32xf32>
    %cst_78 = arith.constant 1.000000e+00 : f32
    %266 = vector.broadcast %cst_78 : f32 to vector<8x32xf32>
    %267 = arith.addf %266, %265 : vector<8x32xf32>
    %268 = arith.divf %266, %267 : vector<8x32xf32>
    %269 = vector.extract_strided_slice %257 {offsets = [0, 32], sizes = [8, 32], strides = [1, 1]} : vector<8x96xf32> to vector<8x32xf32>
    %270 = vector.extract_strided_slice %260 {offsets = [0, 32], sizes = [8, 32], strides = [1, 1]} : vector<8x96xf32> to vector<8x32xf32>
    %271 = arith.addf %269, %270 : vector<8x32xf32>
    %272 = arith.negf %271 : vector<8x32xf32>
    %273 = math.exp %272 : vector<8x32xf32>
    %cst_79 = arith.constant 1.000000e+00 : f32
    %274 = vector.broadcast %cst_79 : f32 to vector<8x32xf32>
    %275 = arith.addf %274, %273 : vector<8x32xf32>
    %276 = arith.divf %274, %275 : vector<8x32xf32>
    %277 = vector.extract_strided_slice %257 {offsets = [0, 64], sizes = [8, 32], strides = [1, 1]} : vector<8x96xf32> to vector<8x32xf32>
    %278 = vector.extract_strided_slice %260 {offsets = [0, 64], sizes = [8, 32], strides = [1, 1]} : vector<8x96xf32> to vector<8x32xf32>
    %279 = arith.mulf %268, %278 : vector<8x32xf32>
    %280 = arith.addf %277, %279 : vector<8x32xf32>
    %281 = math.tanh %280 : vector<8x32xf32>
    %cst_80 = arith.constant 1.000000e+00 : f32
    %282 = vector.broadcast %cst_80 : f32 to vector<8x32xf32>
    %283 = arith.subf %282, %276 : vector<8x32xf32>
    %284 = arith.mulf %283, %281 : vector<8x32xf32>
    %285 = arith.mulf %276, %255 : vector<8x32xf32>
    %286 = arith.addf %284, %285 : vector<8x32xf32>
    %cst_81 = arith.constant dense<0.000000e+00> : vector<8x160xf32>
    %287 = tpu.matmul %286, %5, %cst_81 {dimension_numbers = #tpu.dot_dimension_numbers<[1], [0], [0], [1], [0, 0, 1, 1], [], []>} : vector<8x32xf32>, vector<32x160xf32>, vector<8x160xf32> -> vector<8x160xf32>
    %288 = vector.broadcast %6 : vector<1x160xf32> to vector<8x160xf32>
    %289 = arith.addf %287, %288 : vector<8x160xf32>
    %290 = vector.extract_strided_slice %289 {offsets = [0, 0], sizes = [8, 128], strides = [1, 1]} : vector<8x160xf32> to vector<8x128xf32>
    %c4_82 = arith.constant 4 : index
    %c0_83 = arith.constant 0 : index
    %c0_84 = arith.constant 0 : index
    %291 = vector.load %arg10[%c4_82, %c0_83, %c0_84] : memref<6x8x128xf32, #tpu.memory_space<vmem>>, vector<1x8x128xf32>
    %292 = vector.shape_cast %291 : vector<1x8x128xf32> to vector<8x128xf32>
    %293 = vector.shape_cast %290 : vector<8x128xf32> to vector<1x8x128xf32>
    tpu.vector_store %arg10[%c4_82, %c0_83, %c0_84], %293 {strides = array<i32>} : memref<6x8x128xf32, #tpu.memory_space<vmem>>, vector<1x8x128xf32>,
    %294 = vector.extract_strided_slice %289 {offsets = [0, 128], sizes = [8, 32], strides = [1, 1]} : vector<8x160xf32> to vector<8x32xf32>
    %295 = vector.shape_cast %294 : vector<8x32xf32> to vector<8x1x32xf32>
    %296 = vector.broadcast %295 : vector<8x1x32xf32> to vector<8x16x32xf32>
    %297 = arith.addf %1, %296 : vector<8x16x32xf32>
    %298 = math.tanh %297 : vector<8x16x32xf32>
    %299 = arith.mulf %298, %10 : vector<8x16x32xf32>
    %cst_85 = arith.constant dense<0.000000e+00> : vector<8x16xf32>
    %300 = vector.multi_reduction <add>, %299, %cst_85 [2] : vector<8x16x32xf32> to vector<8x16xf32>
    %301 = arith.addf %300, %2 : vector<8x16xf32>
    %cst_86 = arith.constant dense<0xFF800000> : vector<8xf32>
    %302 = vector.multi_reduction <maximumf>, %301, %cst_86 [1] : vector<8x16xf32> to vector<8xf32>
    %303 = vector.shape_cast %302 : vector<8xf32> to vector<8x1xf32>
    %304 = vector.broadcast %303 : vector<8x1xf32> to vector<8x16xf32>
    %305 = arith.subf %301, %304 : vector<8x16xf32>
    %306 = math.exp %305 : vector<8x16xf32>
    %cst_87 = arith.constant dense<0.000000e+00> : vector<8xf32>
    %307 = vector.multi_reduction <add>, %306, %cst_87 [1] : vector<8x16xf32> to vector<8xf32>
    %308 = vector.shape_cast %307 : vector<8xf32> to vector<8x1xf32>
    %309 = tpu.reciprocal %308 {approx = true} : vector<8x1xf32> -> vector<8x1xf32>
    %310 = vector.broadcast %309 : vector<8x1xf32> to vector<8x16xf32>
    %311 = arith.mulf %306, %310 : vector<8x16xf32>
    %312 = vector.shape_cast %311 : vector<8x16xf32> to vector<8x16x1xf32>
    %313 = vector.broadcast %312 : vector<8x16x1xf32> to vector<8x16x32xf32>
    %314 = arith.mulf %313, %0 : vector<8x16x32xf32>
    %cst_88 = arith.constant dense<0.000000e+00> : vector<8x32xf32>
    %315 = vector.multi_reduction <add>, %314, %cst_88 [1] : vector<8x16x32xf32> to vector<8x32xf32>
    %316 = arith.addf %286, %315 : vector<8x32xf32>
    %c5 = arith.constant 5 : index
    %c0_89 = arith.constant 0 : index
    %c0_90 = arith.constant 0 : index
    %317 = vector.load %arg0[%c5, %c0_89, %c0_90] : memref<6x8x96xf32, #tpu.memory_space<vmem>>, vector<1x8x96xf32>
    %318 = vector.shape_cast %317 : vector<1x8x96xf32> to vector<8x96xf32>
    %cst_91 = arith.constant dense<0.000000e+00> : vector<8x96xf32>
    %319 = tpu.matmul %316, %3, %cst_91 {dimension_numbers = #tpu.dot_dimension_numbers<[1], [0], [0], [1], [0, 0, 1, 1], [], []>} : vector<8x32xf32>, vector<32x96xf32>, vector<8x96xf32> -> vector<8x96xf32>
    %320 = vector.broadcast %4 : vector<1x96xf32> to vector<8x96xf32>
    %321 = arith.addf %319, %320 : vector<8x96xf32>
    %322 = vector.extract_strided_slice %318 {offsets = [0, 0], sizes = [8, 32], strides = [1, 1]} : vector<8x96xf32> to vector<8x32xf32>
    %323 = vector.extract_strided_slice %321 {offsets = [0, 0], sizes = [8, 32], strides = [1, 1]} : vector<8x96xf32> to vector<8x32xf32>
    %324 = arith.addf %322, %323 : vector<8x32xf32>
    %325 = arith.negf %324 : vector<8x32xf32>
    %326 = math.exp %325 : vector<8x32xf32>
    %cst_92 = arith.constant 1.000000e+00 : f32
    %327 = vector.broadcast %cst_92 : f32 to vector<8x32xf32>
    %328 = arith.addf %327, %326 : vector<8x32xf32>
    %329 = arith.divf %327, %328 : vector<8x32xf32>
    %330 = vector.extract_strided_slice %318 {offsets = [0, 32], sizes = [8, 32], strides = [1, 1]} : vector<8x96xf32> to vector<8x32xf32>
    %331 = vector.extract_strided_slice %321 {offsets = [0, 32], sizes = [8, 32], strides = [1, 1]} : vector<8x96xf32> to vector<8x32xf32>
    %332 = arith.addf %330, %331 : vector<8x32xf32>
    %333 = arith.negf %332 : vector<8x32xf32>
    %334 = math.exp %333 : vector<8x32xf32>
    %cst_93 = arith.constant 1.000000e+00 : f32
    %335 = vector.broadcast %cst_93 : f32 to vector<8x32xf32>
    %336 = arith.addf %335, %334 : vector<8x32xf32>
    %337 = arith.divf %335, %336 : vector<8x32xf32>
    %338 = vector.extract_strided_slice %318 {offsets = [0, 64], sizes = [8, 32], strides = [1, 1]} : vector<8x96xf32> to vector<8x32xf32>
    %339 = vector.extract_strided_slice %321 {offsets = [0, 64], sizes = [8, 32], strides = [1, 1]} : vector<8x96xf32> to vector<8x32xf32>
    %340 = arith.mulf %329, %339 : vector<8x32xf32>
    %341 = arith.addf %338, %340 : vector<8x32xf32>
    %342 = math.tanh %341 : vector<8x32xf32>
    %cst_94 = arith.constant 1.000000e+00 : f32
    %343 = vector.broadcast %cst_94 : f32 to vector<8x32xf32>
    %344 = arith.subf %343, %337 : vector<8x32xf32>
    %345 = arith.mulf %344, %342 : vector<8x32xf32>
    %346 = arith.mulf %337, %316 : vector<8x32xf32>
    %347 = arith.addf %345, %346 : vector<8x32xf32>
    %cst_95 = arith.constant dense<0.000000e+00> : vector<8x160xf32>
    %348 = tpu.matmul %347, %5, %cst_95 {dimension_numbers = #tpu.dot_dimension_numbers<[1], [0], [0], [1], [0, 0, 1, 1], [], []>} : vector<8x32xf32>, vector<32x160xf32>, vector<8x160xf32> -> vector<8x160xf32>
    %349 = vector.broadcast %6 : vector<1x160xf32> to vector<8x160xf32>
    %350 = arith.addf %348, %349 : vector<8x160xf32>
    %351 = vector.extract_strided_slice %350 {offsets = [0, 0], sizes = [8, 128], strides = [1, 1]} : vector<8x160xf32> to vector<8x128xf32>
    %c5_96 = arith.constant 5 : index
    %c0_97 = arith.constant 0 : index
    %c0_98 = arith.constant 0 : index
    %352 = vector.load %arg10[%c5_96, %c0_97, %c0_98] : memref<6x8x128xf32, #tpu.memory_space<vmem>>, vector<1x8x128xf32>
    %353 = vector.shape_cast %352 : vector<1x8x128xf32> to vector<8x128xf32>
    %354 = vector.shape_cast %351 : vector<8x128xf32> to vector<1x8x128xf32>
    tpu.vector_store %arg10[%c5_96, %c0_97, %c0_98], %354 {strides = array<i32>} : memref<6x8x128xf32, #tpu.memory_space<vmem>>, vector<1x8x128xf32>,
    return
  }
}

</mosaic_0001>

<llo_original>
// kernel: _lambda_.2
$region0: #{_lambda_.2}
  #allocation0 [shape = 'u32[]', space=smem, size = 0x4, offset = 0x4, fixed_abs, tag = 'smem constant byte address 0x4 - core index']
  #allocation1 [shape = 'u32[144,128]{1,0:T(1,128)}', space=vmem, size = 0x12000, scoped, tag = 'internal scratch']
  #allocation2 [shape = 'f32[64,96]{1,0:T(8,128)}', space=vmem, size = 0x8000, scoped, tag = 'scratch operand']
  #allocation3 [shape = 'f32[64,96]{1,0:T(8,128)}', space=vmem, size = 0x8000, scoped, tag = 'scratch operand']
  #allocation4 [shape = 'f32[64,32]{1,0:T(8,128)}', space=vmem, size = 0x8000, scoped, tag = 'scratch operand']
  #allocation5 [shape = 'f32[64,32]{1,0:T(8,128)}', space=vmem, size = 0x8000, scoped, tag = 'scratch operand']
  %s0 = inlined_call_operand.vmem [shape: f32[64,16], index: 0, kind: input, shape index: {}]
  %s1 = inlined_call_operand.vmem [shape: f32[16,256], index: 1, kind: input, shape index: {}]
  %s2 = inlined_call_operand.vmem [shape: f32[1,256], index: 2, kind: input, shape index: {}]
  %s3 = inlined_call_operand.vmem [shape: f32[32,96], index: 3, kind: input, shape index: {}]
  %s4 = inlined_call_operand.vmem [shape: f32[1,96], index: 4, kind: input, shape index: {}]
  %s5 = inlined_call_operand.vmem [shape: f32[32,96], index: 5, kind: input, shape index: {}]
  %s6 = inlined_call_operand.vmem [shape: f32[1,96], index: 6, kind: input, shape index: {}]
  %s7 = inlined_call_operand.vmem [shape: f32[32,64], index: 7, kind: input, shape index: {}]
  %s8 = inlined_call_operand.vmem [shape: f32[32,64], index: 8, kind: input, shape index: {}]
  %s9 = inlined_call_operand.vmem [shape: f32[1,64], index: 9, kind: input, shape index: {}]
  %s10 = inlined_call_operand.vmem [shape: f32[64,32], index: 10, kind: output, shape index: {0}]
  %s11 = inlined_call_operand.vmem [shape: f32[64,32], index: 11, kind: output, shape index: {1}]
  %12 = xla_tuple %s10, %s11
  %s13 = sld [smem:[#allocation0]]
  $region58: #{_lambda_.2} parent=0
    _
  %s15 = ssub.s32 1, %s13
  %s16 = scalar_select 0, %s15, %s13
  // Predicated region
  $region2: #{_lambda_.2} parent=0 // pred_check
    _
  $region3: #{_lambda_.2} parent=0 // pred_check_branch
    %18 = sbr.rel (0) target = $region5
  $region4: #{_lambda_.2} parent=0 // pred_region
    _
  $region5: #{_lambda_.2} parent=0 // pred_fallthru
    _
  // Predicated region
  $region6: #{_lambda_.2} parent=0 // pred_check
    _
  $region7: #{_lambda_.2} parent=0 // pred_check_branch
    %20 = sbr.rel (0) target = $region9
  $region8: #{_lambda_.2} parent=0 // pred_region
    _
  $region9: #{_lambda_.2} parent=0 // pred_fallthru
    _
  // Predicated region
  $region10: #{_lambda_.2} parent=0 // pred_check
    _
  $region11: #{_lambda_.2} parent=0 // pred_check_branch
    %22 = sbr.rel (0) target = $region13
  $region12: #{_lambda_.2} parent=0 // pred_region
    _
  $region13: #{_lambda_.2} parent=0 // pred_fallthru
    _
  // Predicated region
  $region14: #{_lambda_.2} parent=0 // pred_check
    _
  $region15: #{_lambda_.2} parent=0 // pred_check_branch
    %24 = sbr.rel (0) target = $region17
  $region16: #{_lambda_.2} parent=0 // pred_region
    _
  $region17: #{_lambda_.2} parent=0 // pred_fallthru
    _
  // Predicated region
  $region18: #{_lambda_.2} parent=0 // pred_check
    _
  $region19: #{_lambda_.2} parent=0 // pred_check_branch
    %26 = sbr.rel (0) target = $region21
  $region20: #{_lambda_.2} parent=0 // pred_region
    _
  $region21: #{_lambda_.2} parent=0 // pred_fallthru
    _
  // Predicated region
  $region22: #{_lambda_.2} parent=0 // pred_check
    _
  $region23: #{_lambda_.2} parent=0 // pred_check_branch
    %28 = sbr.rel (0) target = $region25
  $region24: #{_lambda_.2} parent=0 // pred_region
    _
  $region25: #{_lambda_.2} parent=0 // pred_fallthru
    _
  // Predicated region
  $region26: #{_lambda_.2} parent=0 // pred_check
    _
  $region27: #{_lambda_.2} parent=0 // pred_check_branch
    %30 = sbr.rel (0) target = $region29
  $region28: #{_lambda_.2} parent=0 // pred_region
    _
  $region29: #{_lambda_.2} parent=0 // pred_fallthru
    _
  // Predicated region
  $region30: #{_lambda_.2} parent=0 // pred_check
    _
  $region31: #{_lambda_.2} parent=0 // pred_check_branch
    %32 = sbr.rel (0) target = $region33
  $region32: #{_lambda_.2} parent=0 // pred_region
    _
  $region33: #{_lambda_.2} parent=0 // pred_fallthru
    _
  // Predicated region
  $region34: #{_lambda_.2} parent=0 // pred_check
    _
  $region35: #{_lambda_.2} parent=0 // pred_check_branch
    %34 = sbr.rel (0) target = $region37
  $region36: #{_lambda_.2} parent=0 // pred_region
    _
  $region37: #{_lambda_.2} parent=0 // pred_fallthru
    _
  // Predicated region
  $region38: #{_lambda_.2} parent=0 // pred_check
    _
  $region39: #{_lambda_.2} parent=0 // pred_check_branch
    %36 = sbr.rel (0) target = $region41
  $region40: #{_lambda_.2} parent=0 // pred_region
    _
  $region41: #{_lambda_.2} parent=0 // pred_fallthru
    _
  %v37 = vld [vmem:[%s0] sm:$0xff]
  %v38 = vld [vmem:[%s0 + $0x8] sm:$0xff]
  %v39 = vld [vmem:[%s0 + $0x10] sm:$0xff]
  %v40 = vld [vmem:[%s0 + $0x18] sm:$0xff]
  %v41 = vld [vmem:[%s0 + $0x20] sm:$0xff]
  %v42 = vld [vmem:[%s0 + $0x28] sm:$0xff]
  %v43 = vld [vmem:[%s0 + $0x30] sm:$0xff]
  %v44 = vld [vmem:[%s0 + $0x38] sm:$0xff]
  %v45 = vld [vmem:[%s1] sm:$0xff]
  %v46 = vld [vmem:[%s1 + $0x8] sm:$0xff]
  %v47 = vld [vmem:[%s1 + $0x10] sm:$0xff]
  %v48 = vld [vmem:[%s1 + $0x18] sm:$0xff]
  %v49 = vld [vmem:[%s2] sm:$0x3]
  %v51 = vlaneseq
  %v52 = vshrl.u32 %v51, 7
  %v53 = vsub.s32 0, %v52
  %v54 = vrot.slane %v49, %v53
  %v55 = vlaneseq
  %v56 = vshrl.u32 %v55, 7
  %v57 = vsub.s32 1, %v56
  %v58 = vrot.slane %v49, %v57
  %vm61 = vcmask 130048
  %v63 = vsel %vm61, %v37, 0
  %v66 = vsel %vm61, %v38, 0
  %v69 = vsel %vm61, %v39, 0
  %v72 = vsel %vm61, %v40, 0
  %v75 = vsel %vm61, %v41, 0
  %v78 = vsel %vm61, %v42, 0
  %v81 = vsel %vm61, %v43, 0
  %v84 = vsel %vm61, %v44, 0
  %86 = vmatprep.subr.mxu0 %v46
  %87 = vmatpush1.msra.mxu0 %v45
  %88 = vmatprep.subr.mxu0 %v48
  %89 = vmatpush1.msra.mxu0 %v47
  %90 = vmatprep.subr.mxu0 0.0
  %91 = vmatpush1.msra.mxu0 0.0
  %92 = vmatprep.subr.mxu0 0.0
  %93 = vmatpush1.msra.mxu0 0.0
  %94 = vmatprep.subr.mxu0 0.0
  %95 = vmatpush1.msra.mxu0 0.0
  %96 = vmatprep.subr.mxu0 0.0
  %97 = vmatpush1.msra.mxu0 0.0
  %98 = vmatprep.subr.mxu0 0.0
  %99 = vmatpush1.msra.mxu0 0.0
  %100 = vmatprep.subr.mxu0 0.0
  %101 = vmatpush1.msra.mxu0 0.0
  %102 = vmatprep.subr.mxu0 0.0
  %103 = vmatpush1.msra.mxu0 0.0
  %104 = vmatprep.subr.mxu0 0.0
  %105 = vmatpush1.msra.mxu0 0.0
  %106 = vmatprep.subr.mxu0 0.0
  %107 = vmatpush1.msra.mxu0 0.0
  %108 = vmatprep.subr.mxu0 0.0
  %109 = vmatpush1.msra.mxu0 0.0
  %110 = vmatprep.subr.mxu0 0.0
  %111 = vmatpush1.msra.mxu0 0.0
  %112 = vmatprep.subr.mxu0 0.0
  %113 = vmatpush1.msra.mxu0 0.0
  %114 = vmatprep.subr.mxu0 0.0
  %115 = vmatpush1.msra.mxu0 0.0
  %116 = vmatprep.subr.mxu0 0.0
  %117 = vmatpush1.msra.mxu0 0.0
  %118 = vmatprep.subr.mxu0 0.0
  %119 = vmatpush1.msra.mxu0 0.0
  %120 = vmatprep.subr.mxu0 0.0
  %121 = vmatpush1.msra.mxu0 0.0
  %122 = vmatprep.subr.mxu0 0.0
  %123 = vmatpush1.msra.mxu0 0.0
  %124 = vmatprep.subr.mxu0 0.0
  %125 = vmatpush1.msra.mxu0 0.0
  %126 = vmatprep.subr.mxu0 0.0
  %127 = vmatpush1.msra.mxu0 0.0
  %128 = vmatprep.subr.mxu0 0.0
  %129 = vmatpush1.msra.mxu0 0.0
  %130 = vmatprep.subr.mxu0 0.0
  %131 = vmatpush1.msra.mxu0 0.0
  %132 = vmatprep.subr.mxu0 0.0
  %133 = vmatpush1.msra.mxu0 0.0
  %134 = vmatprep.subr.mxu0 0.0
  %135 = vmatpush1.msra.mxu0 0.0
  %136 = vmatprep.subr.mxu0 0.0
  %137 = vmatpush1.msra.mxu0 0.0
  %138 = vmatprep.subr.mxu0 0.0
  %139 = vmatpush1.msra.mxu0 0.0
  %140 = vmatprep.subr.mxu0 0.0
  %141 = vmatpush1.msra.mxu0 0.0
  %142 = vmatprep.subr.mxu0 0.0
  %143 = vmatpush1.msra.mxu0 0.0
  %144 = vmatprep.subr.mxu0 0.0
  %145 = vmatpush1.msra.mxu0 0.0
  %146 = vmatprep.subr.mxu0 0.0
  %147 = vmatpush1.msra.mxu0 0.0
  %148 = vmatprep.subr.mxu0 0.0
  %149 = vmatpush1.msra.mxu0 0.0
  %150 = vmatprep.mubr.f32.mxu0 0.0
  %151 = vmatmul.mubr.f32.gmra.mrb[0].mxu0 %v63
  %v152 = vpop.f32.mrb[0].mxu0
  %v153 = vadd.f32 %v54, %v152
  %v154 = vpop.f32.mrb[0].mxu0
  %v155 = vadd.f32 %v58, %v154
  %156 = vmatprep.mubr.f32.mxu0 0.0
  %157 = vmatmul.mubr.f32.gmra.mrb[0].mxu0 %v66
  %v158 = vpop.f32.mrb[0].mxu0
  %v159 = vadd.f32 %v54, %v158
  %v160 = vpop.f32.mrb[0].mxu0
  %v161 = vadd.f32 %v58, %v160
  %162 = vmatprep.mubr.f32.mxu0 0.0
  %163 = vmatmul.mubr.f32.gmra.mrb[0].mxu0 %v69
  %v164 = vpop.f32.mrb[0].mxu0
  %v165 = vadd.f32 %v54, %v164
  %v166 = vpop.f32.mrb[0].mxu0
  %v167 = vadd.f32 %v58, %v166
  %168 = vmatprep.mubr.f32.mxu0 0.0
  %169 = vmatmul.mubr.f32.gmra.mrb[0].mxu0 %v72
  %v170 = vpop.f32.mrb[0].mxu0
  %v171 = vadd.f32 %v54, %v170
  %v172 = vpop.f32.mrb[0].mxu0
  %v173 = vadd.f32 %v58, %v172
  %174 = vmatprep.mubr.f32.mxu0 0.0
  %175 = vmatmul.mubr.f32.gmra.mrb[0].mxu0 %v75
  %v176 = vpop.f32.mrb[0].mxu0
  %v177 = vadd.f32 %v54, %v176
  %v178 = vpop.f32.mrb[0].mxu0
  %v179 = vadd.f32 %v58, %v178
  %180 = vmatprep.mubr.f32.mxu0 0.0
  %181 = vmatmul.mubr.f32.gmra.mrb[0].mxu0 %v78
  %v182 = vpop.f32.mrb[0].mxu0
  %v183 = vadd.f32 %v54, %v182
  %v184 = vpop.f32.mrb[0].mxu0
  %v185 = vadd.f32 %v58, %v184
  %186 = vmatprep.mubr.f32.mxu0 0.0
  %187 = vmatmul.mubr.f32.gmra.mrb[0].mxu0 %v81
  %v188 = vpop.f32.mrb[0].mxu0
  %v189 = vadd.f32 %v54, %v188
  %v190 = vpop.f32.mrb[0].mxu0
  %v191 = vadd.f32 %v58, %v190
  %192 = vmatprep.mubr.f32.mxu0 0.0
  %193 = vmatmul.mubr.f32.gmra.mrb[0].mxu0 %v84
  %v194 = vpop.f32.mrb[0].mxu0
  %v195 = vadd.f32 %v54, %v194
  %v196 = vpop.f32.mrb[0].mxu0
  %v197 = vadd.f32 %v58, %v196
  %198 = vdwg.mxu0
  %vm199 = vcmask 785408
  %200 = vst.msk [vmem:[#allocation2] sm:$0xff] %vm199, %v153
  %201 = vst.msk [vmem:[#allocation2 + $0x8] sm:$0xff] %vm199, %v159
  %202 = vst.msk [vmem:[#allocation2 + $0x10] sm:$0xff] %vm199, %v165
  %203 = vst.msk [vmem:[#allocation2 + $0x18] sm:$0xff] %vm199, %v171
  %204 = vst.msk [vmem:[#allocation2 + $0x20] sm:$0xff] %vm199, %v177
  %205 = vst.msk [vmem:[#allocation2 + $0x28] sm:$0xff] %vm199, %v183
  %206 = vst.msk [vmem:[#allocation2 + $0x30] sm:$0xff] %vm199, %v189
  %207 = vst.msk [vmem:[#allocation2 + $0x38] sm:$0xff] %vm199, %v195
  %208 = vst.msk [vmem:[#allocation3] sm:$0xff] %vm199, %v155
  %209 = vst.msk [vmem:[#allocation3 + $0x8] sm:$0xff] %vm199, %v161
  %210 = vst.msk [vmem:[#allocation3 + $0x10] sm:$0xff] %vm199, %v167
  %211 = vst.msk [vmem:[#allocation3 + $0x18] sm:$0xff] %vm199, %v173
  %212 = vst.msk [vmem:[#allocation3 + $0x20] sm:$0xff] %vm199, %v179
  %213 = vst.msk [vmem:[#allocation3 + $0x28] sm:$0xff] %vm199, %v185
  %214 = vst.msk [vmem:[#allocation3 + $0x30] sm:$0xff] %vm199, %v191
  %215 = vst.msk [vmem:[#allocation3 + $0x38] sm:$0xff] %vm199, %v197
  %v216 = vld [vmem:[%s3] sm:$0xff]
  %v217 = vld [vmem:[%s3 + $0x8] sm:$0xff]
  %v218 = vld [vmem:[%s3 + $0x10] sm:$0xff]
  %v219 = vld [vmem:[%s3 + $0x18] sm:$0xff]
  %v220 = vld [vmem:[%s4] sm:$0x1]
  %v221 = vld [vmem:[%s5] sm:$0xff]
  %v222 = vld [vmem:[%s5 + $0x8] sm:$0xff]
  %v223 = vld [vmem:[%s5 + $0x10] sm:$0xff]
  %v224 = vld [vmem:[%s5 + $0x18] sm:$0xff]
  %v225 = vld [vmem:[%s6] sm:$0x1]
  %v226 = vld [vmem:[#allocation2] sm:$0xff]
  %v227 = vld [vmem:[#allocation2 + $0x8] sm:$0xff]
  %v229 = vlaneseq
  %v230 = vshrl.u32 %v229, 7
  %v231 = vsub.s32 0, %v230
  %v232 = vrot.slane %v220, %v231
  %vm234 = vcmask 261120
  %v236 = vsel %vm234, 0.0, 0
  %238 = vmatprep.subr.mxu0 0.0
  %239 = vmatpush1.msra.mxu0 %v216
  %240 = vmatprep.subr.mxu0 0.0
  %241 = vmatpush1.msra.mxu0 %v217
  %242 = vmatprep.subr.mxu0 0.0
  %243 = vmatpush1.msra.mxu0 %v218
  %244 = vmatprep.subr.mxu0 0.0
  %245 = vmatpush1.msra.mxu0 %v219
  %246 = vmatprep.subr.mxu0 0.0
  %247 = vmatpush1.msra.mxu0 0.0
  %248 = vmatprep.subr.mxu0 0.0
  %249 = vmatpush1.msra.mxu0 0.0
  %250 = vmatprep.subr.mxu0 0.0
  %251 = vmatpush1.msra.mxu0 0.0
  %252 = vmatprep.subr.mxu0 0.0
  %253 = vmatpush1.msra.mxu0 0.0
  %254 = vmatprep.subr.mxu0 0.0
  %255 = vmatpush1.msra.mxu0 0.0
  %256 = vmatprep.subr.mxu0 0.0
  %257 = vmatpush1.msra.mxu0 0.0
  %258 = vmatprep.subr.mxu0 0.0
  %259 = vmatpush1.msra.mxu0 0.0
  %260 = vmatprep.subr.mxu0 0.0
  %261 = vmatpush1.msra.mxu0 0.0
  %262 = vmatprep.subr.mxu0 0.0
  %263 = vmatpush1.msra.mxu0 0.0
  %264 = vmatprep.subr.mxu0 0.0
  %265 = vmatpush1.msra.mxu0 0.0
  %266 = vmatprep.subr.mxu0 0.0
  %267 = vmatpush1.msra.mxu0 0.0
  %268 = vmatprep.subr.mxu0 0.0
  %269 = vmatpush1.msra.mxu0 0.0
  %270 = vmatprep.subr.mxu0 0.0
  %271 = vmatpush1.msra.mxu0 0.0
  %272 = vmatprep.subr.mxu0 0.0
  %273 = vmatpush1.msra.mxu0 0.0
  %274 = vmatprep.subr.mxu0 0.0
  %275 = vmatpush1.msra.mxu0 0.0
  %276 = vmatprep.subr.mxu0 0.0
  %277 = vmatpush1.msra.mxu0 0.0
  %278 = vmatprep.subr.mxu0 0.0
  %279 = vmatpush1.msra.mxu0 0.0
  %280 = vmatprep.subr.mxu0 0.0
  %281 = vmatpush1.msra.mxu0 0.0
  %282 = vmatprep.subr.mxu0 0.0
  %283 = vmatpush1.msra.mxu0 0.0
  %284 = vmatprep.subr.mxu0 0.0
  %285 = vmatpush1.msra.mxu0 0.0
  %286 = vmatprep.subr.mxu0 0.0
  %287 = vmatpush1.msra.mxu0 0.0
  %288 = vmatprep.subr.mxu0 0.0
  %289 = vmatpush1.msra.mxu0 0.0
  %290 = vmatprep.subr.mxu0 0.0
  %291 = vmatpush1.msra.mxu0 0.0
  %292 = vmatprep.subr.mxu0 0.0
  %293 = vmatpush1.msra.mxu0 0.0
  %294 = vmatprep.subr.mxu0 0.0
  %295 = vmatpush1.msra.mxu0 0.0
  %296 = vmatprep.subr.mxu0 0.0
  %297 = vmatpush1.msra.mxu0 0.0
  %298 = vmatprep.subr.mxu0 0.0
  %299 = vmatpush1.msra.mxu0 0.0
  %300 = vmatprep.subr.mxu0 0.0
  %301 = vmatpush1.msra.mxu0 0.0
  %302 = vmatprep.mubr.f32.mxu0 0.0
  %303 = vmatmul.mubr.f32.gmra.mrb[0].mxu0 %v236
  %v304 = vpop.f32.mrb[0].mxu0
  %v305 = vadd.f32 %v232, %v304
  %v306 = vpop.f32.mrb[0].mxu0
  %307 = vmatprep.mubr.f32.mxu0 0.0
  %308 = vmatmul.mubr.f32.gmra.mrb[0].mxu0 %v236
  %v309 = vpop.f32.mrb[0].mxu0
  %v310 = vadd.f32 %v232, %v309
  %v311 = vpop.f32.mrb[0].mxu0
  %312 = vdwg.mxu0
  %v313 = vadd.f32 %v226, %v305
  %v314 = vadd.f32 %v227, %v310
  %v315 = vxor.u32 %v313, 2147483648
  %v316 = vxor.u32 %v314, 2147483648
  %v317 = vmul.f32 %v315, 1.442695
  %v318 = vpow.pop %v317
  %v319 = vmul.f32 %v316, 1.442695
  %v320 = vpow.pop %v319
  %v321 = vadd.f32 %v318, 1.0
  %v322 = vadd.f32 %v320, 1.0
  %v323 = vrcp.pop %v321
  %v324 = vmul.f32 1.0, %v323
  %v325 = vrcp.pop %v322
  %v326 = vmul.f32 1.0, %v325
  %329 = vrot.lane.b32.xlu0 %v305, 64
  %v330 = vpop.permute.xlu0 %329
  %331 = vrot.lane.b32.xlu0 %v310, 64
  %v332 = vpop.permute.xlu0 %331
  %v335 = vmul.f32 %v324, %v330
  %v336 = vmul.f32 %v326, %v332
  %339 = vrot.lane.b32.xlu0 %v335, 64
  %v340 = vpop.permute.xlu0 %339
  %341 = vrot.lane.b32.xlu0 %v336, 64
  %v342 = vpop.permute.xlu0 %341
  %v345 = vadd.f32 %v226, %v340
  %v346 = vadd.f32 %v227, %v342
  %v347 = vtanh.pop %v345
  %v348 = vtanh.pop %v346
  %v349 = vsub.f32 1.0, %v324
  %v350 = vsub.f32 1.0, %v326
  %353 = vrot.lane.b32.xlu0 %v347, 96
  %v354 = vpop.permute.xlu0 %353
  %355 = vrot.lane.b32.xlu0 %v348, 96
  %v356 = vpop.permute.xlu0 %355
  %v359 = vmul.f32 %v349, %v354
  %v360 = vmul.f32 %v350, %v356
  %v361 = vmul.f32 %v324, 0.0
  %v362 = vmul.f32 %v326, 0.0
  %v363 = vadd.f32 %v359, %v361
  %v364 = vadd.f32 %v360, %v362
  %367 = vrot.lane.b32.xlu0 %v363, 96
  %v368 = vpop.permute.xlu0 %367
  %369 = vrot.lane.b32.xlu0 %v364, 96
  %v370 = vpop.permute.xlu0 %369
  %373 = vst.msk [vmem:[#allocation4] sm:$0xff] %vm234, %v368
  %374 = vst.msk [vmem:[#allocation4 + $0x8] sm:$0xff] %vm234, %v370
  %v375 = vld [vmem:[#allocation3 + $0x30] sm:$0xff]
  %v376 = vld [vmem:[#allocation3 + $0x38] sm:$0xff]
  %v378 = vlaneseq
  %v379 = vshrl.u32 %v378, 7
  %v380 = vsub.s32 0, %v379
  %v381 = vrot.slane %v225, %v380
  %383 = vmatprep.subr.mxu0 0.0
  %384 = vmatpush1.msra.mxu0 %v221
  %385 = vmatprep.subr.mxu0 0.0
  %386 = vmatpush1.msra.mxu0 %v222
  %387 = vmatprep.subr.mxu0 0.0
  %388 = vmatpush1.msra.mxu0 %v223
  %389 = vmatprep.subr.mxu0 0.0
  %390 = vmatpush1.msra.mxu0 %v224
  %391 = vmatprep.subr.mxu0 0.0
  %392 = vmatpush1.msra.mxu0 0.0
  %393 = vmatprep.subr.mxu0 0.0
  %394 = vmatpush1.msra.mxu0 0.0
  %395 = vmatprep.subr.mxu0 0.0
  %396 = vmatpush1.msra.mxu0 0.0
  %397 = vmatprep.subr.mxu0 0.0
  %398 = vmatpush1.msra.mxu0 0.0
  %399 = vmatprep.subr.mxu0 0.0
  %400 = vmatpush1.msra.mxu0 0.0
  %401 = vmatprep.subr.mxu0 0.0
  %402 = vmatpush1.msra.mxu0 0.0
  %403 = vmatprep.subr.mxu0 0.0
  %404 = vmatpush1.msra.mxu0 0.0
  %405 = vmatprep.subr.mxu0 0.0
  %406 = vmatpush1.msra.mxu0 0.0
  %407 = vmatprep.subr.mxu0 0.0
  %408 = vmatpush1.msra.mxu0 0.0
  %409 = vmatprep.subr.mxu0 0.0
  %410 = vmatpush1.msra.mxu0 0.0
  %411 = vmatprep.subr.mxu0 0.0
  %412 = vmatpush1.msra.mxu0 0.0
  %413 = vmatprep.subr.mxu0 0.0
  %414 = vmatpush1.msra.mxu0 0.0
  %415 = vmatprep.subr.mxu0 0.0
  %416 = vmatpush1.msra.mxu0 0.0
  %417 = vmatprep.subr.mxu0 0.0
  %418 = vmatpush1.msra.mxu0 0.0
  %419 = vmatprep.subr.mxu0 0.0
  %420 = vmatpush1.msra.mxu0 0.0
  %421 = vmatprep.subr.mxu0 0.0
  %422 = vmatpush1.msra.mxu0 0.0
  %423 = vmatprep.subr.mxu0 0.0
  %424 = vmatpush1.msra.mxu0 0.0
  %425 = vmatprep.subr.mxu0 0.0
  %426 = vmatpush1.msra.mxu0 0.0
  %427 = vmatprep.subr.mxu0 0.0
  %428 = vmatpush1.msra.mxu0 0.0
  %429 = vmatprep.subr.mxu0 0.0
  %430 = vmatpush1.msra.mxu0 0.0
  %431 = vmatprep.subr.mxu0 0.0
  %432 = vmatpush1.msra.mxu0 0.0
  %433 = vmatprep.subr.mxu0 0.0
  %434 = vmatpush1.msra.mxu0 0.0
  %435 = vmatprep.subr.mxu0 0.0
  %436 = vmatpush1.msra.mxu0 0.0
  %437 = vmatprep.subr.mxu0 0.0
  %438 = vmatpush1.msra.mxu0 0.0
  %439 = vmatprep.subr.mxu0 0.0
  %440 = vmatpush1.msra.mxu0 0.0
  %441 = vmatprep.subr.mxu0 0.0
  %442 = vmatpush1.msra.mxu0 0.0
  %443 = vmatprep.subr.mxu0 0.0
  %444 = vmatpush1.msra.mxu0 0.0
  %445 = vmatprep.subr.mxu0 0.0
  %446 = vmatpush1.msra.mxu0 0.0
  %447 = vmatprep.mubr.f32.mxu0 0.0
  %448 = vmatmul.mubr.f32.gmra.mrb[0].mxu0 %v236
  %v449 = vpop.f32.mrb[0].mxu0
  %v450 = vadd.f32 %v381, %v449
  %v451 = vpop.f32.mrb[0].mxu0
  %452 = vmatprep.mubr.f32.mxu0 0.0
  %453 = vmatmul.mubr.f32.gmra.mrb[0].mxu0 %v236
  %v454 = vpop.f32.mrb[0].mxu0
  %v455 = vadd.f32 %v381, %v454
  %v456 = vpop.f32.mrb[0].mxu0
  %457 = vdwg.mxu0
  %v458 = vadd.f32 %v375, %v450
  %v459 = vadd.f32 %v376, %v455
  %v460 = vxor.u32 %v458, 2147483648
  %v461 = vxor.u32 %v459, 2147483648
  %v462 = vmul.f32 %v460, 1.442695
  %v463 = vpow.pop %v462
  %v464 = vmul.f32 %v461, 1.442695
  %v465 = vpow.pop %v464
  %v466 = vadd.f32 %v463, 1.0
  %v467 = vadd.f32 %v465, 1.0
  %v468 = vrcp.pop %v466
  %v469 = vmul.f32 1.0, %v468
  %v470 = vrcp.pop %v467
  %v471 = vmul.f32 1.0, %v470
  %474 = vrot.lane.b32.xlu0 %v450, 64
  %v475 = vpop.permute.xlu0 %474
  %476 = vrot.lane.b32.xlu0 %v455, 64
  %v477 = vpop.permute.xlu0 %476
  %v480 = vmul.f32 %v469, %v475
  %v481 = vmul.f32 %v471, %v477
  %484 = vrot.lane.b32.xlu0 %v480, 64
  %v485 = vpop.permute.xlu0 %484
  %486 = vrot.lane.b32.xlu0 %v481, 64
  %v487 = vpop.permute.xlu0 %486
  %v490 = vadd.f32 %v375, %v485
  %v491 = vadd.f32 %v376, %v487
  %v492 = vtanh.pop %v490
  %v493 = vtanh.pop %v491
  %v494 = vsub.f32 1.0, %v469
  %v495 = vsub.f32 1.0, %v471
  %498 = vrot.lane.b32.xlu0 %v492, 96
  %v499 = vpop.permute.xlu0 %498
  %500 = vrot.lane.b32.xlu0 %v493, 96
  %v501 = vpop.permute.xlu0 %500
  %v504 = vmul.f32 %v494, %v499
  %v505 = vmul.f32 %v495, %v501
  %v506 = vmul.f32 %v469, 0.0
  %v507 = vmul.f32 %v471, 0.0
  %v508 = vadd.f32 %v504, %v506
  %v509 = vadd.f32 %v505, %v507
  %512 = vrot.lane.b32.xlu0 %v508, 96
  %v513 = vpop.permute.xlu0 %512
  %514 = vrot.lane.b32.xlu0 %v509, 96
  %v515 = vpop.permute.xlu0 %514
  %518 = vst.msk [vmem:[#allocation5 + $0x30] sm:$0xff] %vm234, %v513
  %519 = vst.msk [vmem:[#allocation5 + $0x38] sm:$0xff] %vm234, %v515
  %v520 = vld [vmem:[#allocation2 + $0x10] sm:$0xff]
  %v521 = vld [vmem:[#allocation2 + $0x18] sm:$0xff]
  %v522 = vsel %vm234, %v368, 0
  %v524 = vsel %vm234, %v370, 0
  %526 = vmatprep.subr.mxu0 0.0
  %527 = vmatpush1.msra.mxu0 %v216
  %528 = vmatprep.subr.mxu0 0.0
  %529 = vmatpush1.msra.mxu0 %v217
  %530 = vmatprep.subr.mxu0 0.0
  %531 = vmatpush1.msra.mxu0 %v218
  %532 = vmatprep.subr.mxu0 0.0
  %533 = vmatpush1.msra.mxu0 %v219
  %534 = vmatprep.subr.mxu0 0.0
  %535 = vmatpush1.msra.mxu0 0.0
  %536 = vmatprep.subr.mxu0 0.0
  %537 = vmatpush1.msra.mxu0 0.0
  %538 = vmatprep.subr.mxu0 0.0
  %539 = vmatpush1.msra.mxu0 0.0
  %540 = vmatprep.subr.mxu0 0.0
  %541 = vmatpush1.msra.mxu0 0.0
  %542 = vmatprep.subr.mxu0 0.0
  %543 = vmatpush1.msra.mxu0 0.0
  %544 = vmatprep.subr.mxu0 0.0
  %545 = vmatpush1.msra.mxu0 0.0
  %546 = vmatprep.subr.mxu0 0.0
  %547 = vmatpush1.msra.mxu0 0.0
  %548 = vmatprep.subr.mxu0 0.0
  %549 = vmatpush1.msra.mxu0 0.0
  %550 = vmatprep.subr.mxu0 0.0
  %551 = vmatpush1.msra.mxu0 0.0
  %552 = vmatprep.subr.mxu0 0.0
  %553 = vmatpush1.msra.mxu0 0.0
  %554 = vmatprep.subr.mxu0 0.0
  %555 = vmatpush1.msra.mxu0 0.0
  %556 = vmatprep.subr.mxu0 0.0
  %557 = vmatpush1.msra.mxu0 0.0
  %558 = vmatprep.subr.mxu0 0.0
  %559 = vmatpush1.msra.mxu0 0.0
  %560 = vmatprep.subr.mxu0 0.0
  %561 = vmatpush1.msra.mxu0 0.0
  %562 = vmatprep.subr.mxu0 0.0
  %563 = vmatpush1.msra.mxu0 0.0
  %564 = vmatprep.subr.mxu0 0.0
  %565 = vmatpush1.msra.mxu0 0.0
  %566 = vmatprep.subr.mxu0 0.0
  %567 = vmatpush1.msra.mxu0 0.0
  %568 = vmatprep.subr.mxu0 0.0
  %569 = vmatpush1.msra.mxu0 0.0
  %570 = vmatprep.subr.mxu0 0.0
  %571 = vmatpush1.msra.mxu0 0.0
  %572 = vmatprep.subr.mxu0 0.0
  %573 = vmatpush1.msra.mxu0 0.0
  %574 = vmatprep.subr.mxu0 0.0
  %575 = vmatpush1.msra.mxu0 0.0
  %576 = vmatprep.subr.mxu0 0.0
  %577 = vmatpush1.msra.mxu0 0.0
  %578 = vmatprep.subr.mxu0 0.0
  %579 = vmatpush1.msra.mxu0 0.0
  %580 = vmatprep.subr.mxu0 0.0
  %581 = vmatpush1.msra.mxu0 0.0
  %582 = vmatprep.subr.mxu0 0.0
  %583 = vmatpush1.msra.mxu0 0.0
  %584 = vmatprep.subr.mxu0 0.0
  %585 = vmatpush1.msra.mxu0 0.0
  %586 = vmatprep.subr.mxu0 0.0
  %587 = vmatpush1.msra.mxu0 0.0
  %588 = vmatprep.subr.mxu0 0.0
  %589 = vmatpush1.msra.mxu0 0.0
  %590 = vmatprep.mubr.f32.mxu0 0.0
  %591 = vmatmul.mubr.f32.gmra.mrb[0].mxu0 %v522
  %v592 = vpop.f32.mrb[0].mxu0
  %v593 = vadd.f32 %v232, %v592
  %v594 = vpop.f32.mrb[0].mxu0
  %595 = vmatprep.mubr.f32.mxu0 0.0
  %596 = vmatmul.mubr.f32.gmra.mrb[0].mxu0 %v524
  %v597 = vpop.f32.mrb[0].mxu0
  %v598 = vadd.f32 %v232, %v597
  %v599 = vpop.f32.mrb[0].mxu0
  %600 = vdwg.mxu0
  %v601 = vadd.f32 %v520, %v593
  %v602 = vadd.f32 %v521, %v598
  %v603 = vxor.u32 %v601, 2147483648
  %v604 = vxor.u32 %v602, 2147483648
  %v605 = vmul.f32 %v603, 1.442695
  %v606 = vpow.pop %v605
  %v607 = vmul.f32 %v604, 1.442695
  %v608 = vpow.pop %v607
  %v609 = vadd.f32 %v606, 1.0
  %v610 = vadd.f32 %v608, 1.0
  %v611 = vrcp.pop %v609
  %v612 = vmul.f32 1.0, %v611
  %v613 = vrcp.pop %v610
  %v614 = vmul.f32 1.0, %v613
  %617 = vrot.lane.b32.xlu0 %v593, 64
  %v618 = vpop.permute.xlu0 %617
  %619 = vrot.lane.b32.xlu0 %v598, 64
  %v620 = vpop.permute.xlu0 %619
  %v623 = vmul.f32 %v612, %v618
  %v624 = vmul.f32 %v614, %v620
  %627 = vrot.lane.b32.xlu0 %v623, 64
  %v628 = vpop.permute.xlu0 %627
  %629 = vrot.lane.b32.xlu0 %v624, 64
  %v630 = vpop.permute.xlu0 %629
  %v633 = vadd.f32 %v520, %v628
  %v634 = vadd.f32 %v521, %v630
  %v635 = vtanh.pop %v633
  %v636 = vtanh.pop %v634
  %v637 = vsub.f32 1.0, %v612
  %v638 = vsub.f32 1.0, %v614
  %641 = vrot.lane.b32.xlu0 %v635, 96
  %v642 = vpop.permute.xlu0 %641
  %643 = vrot.lane.b32.xlu0 %v636, 96
  %v644 = vpop.permute.xlu0 %643
  %v647 = vmul.f32 %v637, %v642
  %v648 = vmul.f32 %v638, %v644
  %v649 = vmul.f32 %v612, %v363
  %v650 = vmul.f32 %v614, %v364
  %v651 = vadd.f32 %v647, %v649
  %v652 = vadd.f32 %v648, %v650
  %655 = vrot.lane.b32.xlu0 %v651, 96
  %v656 = vpop.permute.xlu0 %655
  %657 = vrot.lane.b32.xlu0 %v652, 96
  %v658 = vpop.permute.xlu0 %657
  %661 = vst.msk [vmem:[#allocation4 + $0x10] sm:$0xff] %vm234, %v656
  %662 = vst.msk [vmem:[#allocation4 + $0x18] sm:$0xff] %vm234, %v658
  %v663 = vld [vmem:[#allocation3 + $0x20] sm:$0xff]
  %v664 = vld [vmem:[#allocation3 + $0x28] sm:$0xff]
  %v665 = vsel %vm234, %v513, 0
  %v667 = vsel %vm234, %v515, 0
  %669 = vmatprep.subr.mxu0 0.0
  %670 = vmatpush1.msra.mxu0 %v221
  %671 = vmatprep.subr.mxu0 0.0
  %672 = vmatpush1.msra.mxu0 %v222
  %673 = vmatprep.subr.mxu0 0.0
  %674 = vmatpush1.msra.mxu0 %v223
  %675 = vmatprep.subr.mxu0 0.0
  %676 = vmatpush1.msra.mxu0 %v224
  %677 = vmatprep.subr.mxu0 0.0
  %678 = vmatpush1.msra.mxu0 0.0
  %679 = vmatprep.subr.mxu0 0.0
  %680 = vmatpush1.msra.mxu0 0.0
  %681 = vmatprep.subr.mxu0 0.0
  %682 = vmatpush1.msra.mxu0 0.0
  %683 = vmatprep.subr.mxu0 0.0
  %684 = vmatpush1.msra.mxu0 0.0
  %685 = vmatprep.subr.mxu0 0.0
  %686 = vmatpush1.msra.mxu0 0.0
  %687 = vmatprep.subr.mxu0 0.0
  %688 = vmatpush1.msra.mxu0 0.0
  %689 = vmatprep.subr.mxu0 0.0
  %690 = vmatpush1.msra.mxu0 0.0
  %691 = vmatprep.subr.mxu0 0.0
  %692 = vmatpush1.msra.mxu0 0.0
  %693 = vmatprep.subr.mxu0 0.0
  %694 = vmatpush1.msra.mxu0 0.0
  %695 = vmatprep.subr.mxu0 0.0
  %696 = vmatpush1.msra.mxu0 0.0
  %697 = vmatprep.subr.mxu0 0.0
  %698 = vmatpush1.msra.mxu0 0.0
  %699 = vmatprep.subr.mxu0 0.0
  %700 = vmatpush1.msra.mxu0 0.0
  %701 = vmatprep.subr.mxu0 0.0
  %702 = vmatpush1.msra.mxu0 0.0
  %703 = vmatprep.subr.mxu0 0.0
  %704 = vmatpush1.msra.mxu0 0.0
  %705 = vmatprep.subr.mxu0 0.0
  %706 = vmatpush1.msra.mxu0 0.0
  %707 = vmatprep.subr.mxu0 0.0
  %708 = vmatpush1.msra.mxu0 0.0
  %709 = vmatprep.subr.mxu0 0.0
  %710 = vmatpush1.msra.mxu0 0.0
  %711 = vmatprep.subr.mxu0 0.0
  %712 = vmatpush1.msra.mxu0 0.0
  %713 = vmatprep.subr.mxu0 0.0
  %714 = vmatpush1.msra.mxu0 0.0
  %715 = vmatprep.subr.mxu0 0.0
  %716 = vmatpush1.msra.mxu0 0.0
  %717 = vmatprep.subr.mxu0 0.0
  %718 = vmatpush1.msra.mxu0 0.0
  %719 = vmatprep.subr.mxu0 0.0
  %720 = vmatpush1.msra.mxu0 0.0
  %721 = vmatprep.subr.mxu0 0.0
  %722 = vmatpush1.msra.mxu0 0.0
  %723 = vmatprep.subr.mxu0 0.0
  %724 = vmatpush1.msra.mxu0 0.0
  %725 = vmatprep.subr.mxu0 0.0
  %726 = vmatpush1.msra.mxu0 0.0
  %727 = vmatprep.subr.mxu0 0.0
  %728 = vmatpush1.msra.mxu0 0.0
  %729 = vmatprep.subr.mxu0 0.0
  %730 = vmatpush1.msra.mxu0 0.0
  %731 = vmatprep.subr.mxu0 0.0
  %732 = vmatpush1.msra.mxu0 0.0
  %733 = vmatprep.mubr.f32.mxu0 0.0
  %734 = vmatmul.mubr.f32.gmra.mrb[0].mxu0 %v665
  %v735 = vpop.f32.mrb[0].mxu0
  %v736 = vadd.f32 %v381, %v735
  %v737 = vpop.f32.mrb[0].mxu0
  %738 = vmatprep.mubr.f32.mxu0 0.0
  %739 = vmatmul.mubr.f32.gmra.mrb[0].mxu0 %v667
  %v740 = vpop.f32.mrb[0].mxu0
  %v741 = vadd.f32 %v381, %v740
  %v742 = vpop.f32.mrb[0].mxu0
  %743 = vdwg.mxu0
  %v744 = vadd.f32 %v663, %v736
  %v745 = vadd.f32 %v664, %v741
  %v746 = vxor.u32 %v744, 2147483648
  %v747 = vxor.u32 %v745, 2147483648
  %v748 = vmul.f32 %v746, 1.442695
  %v749 = vpow.pop %v748
  %v750 = vmul.f32 %v747, 1.442695
  %v751 = vpow.pop %v750
  %v752 = vadd.f32 %v749, 1.0
  %v753 = vadd.f32 %v751, 1.0
  %v754 = vrcp.pop %v752
  %v755 = vmul.f32 1.0, %v754
  %v756 = vrcp.pop %v753
  %v757 = vmul.f32 1.0, %v756
  %760 = vrot.lane.b32.xlu0 %v736, 64
  %v761 = vpop.permute.xlu0 %760
  %762 = vrot.lane.b32.xlu0 %v741, 64
  %v763 = vpop.permute.xlu0 %762
  %v766 = vmul.f32 %v755, %v761
  %v767 = vmul.f32 %v757, %v763
  %770 = vrot.lane.b32.xlu0 %v766, 64
  %v771 = vpop.permute.xlu0 %770
  %772 = vrot.lane.b32.xlu0 %v767, 64
  %v773 = vpop.permute.xlu0 %772
  %v776 = vadd.f32 %v663, %v771
  %v777 = vadd.f32 %v664, %v773
  %v778 = vtanh.pop %v776
  %v779 = vtanh.pop %v777
  %v780 = vsub.f32 1.0, %v755
  %v781 = vsub.f32 1.0, %v757
  %784 = vrot.lane.b32.xlu0 %v778, 96
  %v785 = vpop.permute.xlu0 %784
  %786 = vrot.lane.b32.xlu0 %v779, 96
  %v787 = vpop.permute.xlu0 %786
  %v790 = vmul.f32 %v780, %v785
  %v791 = vmul.f32 %v781, %v787
  %v792 = vmul.f32 %v755, %v508
  %v793 = vmul.f32 %v757, %v509
  %v794 = vadd.f32 %v790, %v792
  %v795 = vadd.f32 %v791, %v793
  %798 = vrot.lane.b32.xlu0 %v794, 96
  %v799 = vpop.permute.xlu0 %798
  %800 = vrot.lane.b32.xlu0 %v795, 96
  %v801 = vpop.permute.xlu0 %800
  %804 = vst.msk [vmem:[#allocation5 + $0x20] sm:$0xff] %vm234, %v799
  %805 = vst.msk [vmem:[#allocation5 + $0x28] sm:$0xff] %vm234, %v801
  %v806 = vld [vmem:[#allocation2 + $0x20] sm:$0xff]
  %v807 = vld [vmem:[#allocation2 + $0x28] sm:$0xff]
  %v808 = vsel %vm234, %v656, 0
  %v810 = vsel %vm234, %v658, 0
  %812 = vmatprep.subr.mxu0 0.0
  %813 = vmatpush1.msra.mxu0 %v216
  %814 = vmatprep.subr.mxu0 0.0
  %815 = vmatpush1.msra.mxu0 %v217
  %816 = vmatprep.subr.mxu0 0.0
  %817 = vmatpush1.msra.mxu0 %v218
  %818 = vmatprep.subr.mxu0 0.0
  %819 = vmatpush1.msra.mxu0 %v219
  %820 = vmatprep.subr.mxu0 0.0
  %821 = vmatpush1.msra.mxu0 0.0
  %822 = vmatprep.subr.mxu0 0.0
  %823 = vmatpush1.msra.mxu0 0.0
  %824 = vmatprep.subr.mxu0 0.0
  %825 = vmatpush1.msra.mxu0 0.0
  %826 = vmatprep.subr.mxu0 0.0
  %827 = vmatpush1.msra.mxu0 0.0
  %828 = vmatprep.subr.mxu0 0.0
  %829 = vmatpush1.msra.mxu0 0.0
  %830 = vmatprep.subr.mxu0 0.0
  %831 = vmatpush1.msra.mxu0 0.0
  %832 = vmatprep.subr.mxu0 0.0
  %833 = vmatpush1.msra.mxu0 0.0
  %834 = vmatprep.subr.mxu0 0.0
  %835 = vmatpush1.msra.mxu0 0.0
  %836 = vmatprep.subr.mxu0 0.0
  %837 = vmatpush1.msra.mxu0 0.0
  %838 = vmatprep.subr.mxu0 0.0
  %839 = vmatpush1.msra.mxu0 0.0
  %840 = vmatprep.subr.mxu0 0.0
  %841 = vmatpush1.msra.mxu0 0.0
  %842 = vmatprep.subr.mxu0 0.0
  %843 = vmatpush1.msra.mxu0 0.0
  %844 = vmatprep.subr.mxu0 0.0
  %845 = vmatpush1.msra.mxu0 0.0
  %846 = vmatprep.subr.mxu0 0.0
  %847 = vmatpush1.msra.mxu0 0.0
  %848 = vmatprep.subr.mxu0 0.0
  %849 = vmatpush1.msra.mxu0 0.0
  %850 = vmatprep.subr.mxu0 0.0
  %851 = vmatpush1.msra.mxu0 0.0
  %852 = vmatprep.subr.mxu0 0.0
  %853 = vmatpush1.msra.mxu0 0.0
  %854 = vmatprep.subr.mxu0 0.0
  %855 = vmatpush1.msra.mxu0 0.0
  %856 = vmatprep.subr.mxu0 0.0
  %857 = vmatpush1.msra.mxu0 0.0
  %858 = vmatprep.subr.mxu0 0.0
  %859 = vmatpush1.msra.mxu0 0.0
  %860 = vmatprep.subr.mxu0 0.0
  %861 = vmatpush1.msra.mxu0 0.0
  %862 = vmatprep.subr.mxu0 0.0
  %863 = vmatpush1.msra.mxu0 0.0
  %864 = vmatprep.subr.mxu0 0.0
  %865 = vmatpush1.msra.mxu0 0.0
  %866 = vmatprep.subr.mxu0 0.0
  %867 = vmatpush1.msra.mxu0 0.0
  %868 = vmatprep.subr.mxu0 0.0
  %869 = vmatpush1.msra.mxu0 0.0
  %870 = vmatprep.subr.mxu0 0.0
  %871 = vmatpush1.msra.mxu0 0.0
  %872 = vmatprep.subr.mxu0 0.0
  %873 = vmatpush1.msra.mxu0 0.0
  %874 = vmatprep.subr.mxu0 0.0
  %875 = vmatpush1.msra.mxu0 0.0
  %876 = vmatprep.mubr.f32.mxu0 0.0
  %877 = vmatmul.mubr.f32.gmra.mrb[0].mxu0 %v808
  %v878 = vpop.f32.mrb[0].mxu0
  %v879 = vadd.f32 %v232, %v878
  %v880 = vpop.f32.mrb[0].mxu0
  %881 = vmatprep.mubr.f32.mxu0 0.0
  %882 = vmatmul.mubr.f32.gmra.mrb[0].mxu0 %v810
  %v883 = vpop.f32.mrb[0].mxu0
  %v884 = vadd.f32 %v232, %v883
  %v885 = vpop.f32.mrb[0].mxu0
  %886 = vdwg.mxu0
  %v887 = vadd.f32 %v806, %v879
  %v888 = vadd.f32 %v807, %v884
  %v889 = vxor.u32 %v887, 2147483648
  %v890 = vxor.u32 %v888, 2147483648
  %v891 = vmul.f32 %v889, 1.442695
  %v892 = vpow.pop %v891
  %v893 = vmul.f32 %v890, 1.442695
  %v894 = vpow.pop %v893
  %v895 = vadd.f32 %v892, 1.0
  %v896 = vadd.f32 %v894, 1.0
  %v897 = vrcp.pop %v895
  %v898 = vmul.f32 1.0, %v897
  %v899 = vrcp.pop %v896
  %v900 = vmul.f32 1.0, %v899
  %903 = vrot.lane.b32.xlu0 %v879, 64
  %v904 = vpop.permute.xlu0 %903
  %905 = vrot.lane.b32.xlu0 %v884, 64
  %v906 = vpop.permute.xlu0 %905
  %v909 = vmul.f32 %v898, %v904
  %v910 = vmul.f32 %v900, %v906
  %913 = vrot.lane.b32.xlu0 %v909, 64
  %v914 = vpop.permute.xlu0 %913
  %915 = vrot.lane.b32.xlu0 %v910, 64
  %v916 = vpop.permute.xlu0 %915
  %v919 = vadd.f32 %v806, %v914
  %v920 = vadd.f32 %v807, %v916
  %v921 = vtanh.pop %v919
  %v922 = vtanh.pop %v920
  %v923 = vsub.f32 1.0, %v898
  %v924 = vsub.f32 1.0, %v900
  %927 = vrot.lane.b32.xlu0 %v921, 96
  %v928 = vpop.permute.xlu0 %927
  %929 = vrot.lane.b32.xlu0 %v922, 96
  %v930 = vpop.permute.xlu0 %929
  %v933 = vmul.f32 %v923, %v928
  %v934 = vmul.f32 %v924, %v930
  %v935 = vmul.f32 %v898, %v651
  %v936 = vmul.f32 %v900, %v652
  %v937 = vadd.f32 %v933, %v935
  %v938 = vadd.f32 %v934, %v936
  %941 = vrot.lane.b32.xlu0 %v937, 96
  %v942 = vpop.permute.xlu0 %941
  %943 = vrot.lane.b32.xlu0 %v938, 96
  %v944 = vpop.permute.xlu0 %943
  %947 = vst.msk [vmem:[#allocation4 + $0x20] sm:$0xff] %vm234, %v942
  %948 = vst.msk [vmem:[#allocation4 + $0x28] sm:$0xff] %vm234, %v944
  %v949 = vld [vmem:[#allocation3 + $0x10] sm:$0xff]
  %v950 = vld [vmem:[#allocation3 + $0x18] sm:$0xff]
  %v951 = vsel %vm234, %v799, 0
  %v953 = vsel %vm234, %v801, 0
  %955 = vmatprep.subr.mxu0 0.0
  %956 = vmatpush1.msra.mxu0 %v221
  %957 = vmatprep.subr.mxu0 0.0
  %958 = vmatpush1.msra.mxu0 %v222
  %959 = vmatprep.subr.mxu0 0.0
  %960 = vmatpush1.msra.mxu0 %v223
  %961 = vmatprep.subr.mxu0 0.0
  %962 = vmatpush1.msra.mxu0 %v224
  %963 = vmatprep.subr.mxu0 0.0
  %964 = vmatpush1.msra.mxu0 0.0
  %965 = vmatprep.subr.mxu0 0.0
  %966 = vmatpush1.msra.mxu0 0.0
  %967 = vmatprep.subr.mxu0 0.0
  %968 = vmatpush1.msra.mxu0 0.0
  %969 = vmatprep.subr.mxu0 0.0
  %970 = vmatpush1.msra.mxu0 0.0
  %971 = vmatprep.subr.mxu0 0.0
  %972 = vmatpush1.msra.mxu0 0.0
  %973 = vmatprep.subr.mxu0 0.0
  %974 = vmatpush1.msra.mxu0 0.0
  %975 = vmatprep.subr.mxu0 0.0
  %976 = vmatpush1.msra.mxu0 0.0
  %977 = vmatprep.subr.mxu0 0.0
  %978 = vmatpush1.msra.mxu0 0.0
  %979 = vmatprep.subr.mxu0 0.0
  %980 = vmatpush1.msra.mxu0 0.0
  %981 = vmatprep.subr.mxu0 0.0
  %982 = vmatpush1.msra.mxu0 0.0
  %983 = vmatprep.subr.mxu0 0.0
  %984 = vmatpush1.msra.mxu0 0.0
  %985 = vmatprep.subr.mxu0 0.0
  %986 = vmatpush1.msra.mxu0 0.0
  %987 = vmatprep.subr.mxu0 0.0
  %988 = vmatpush1.msra.mxu0 0.0
  %989 = vmatprep.subr.mxu0 0.0
  %990 = vmatpush1.msra.mxu0 0.0
  %991 = vmatprep.subr.mxu0 0.0
  %992 = vmatpush1.msra.mxu0 0.0
  %993 = vmatprep.subr.mxu0 0.0
  %994 = vmatpush1.msra.mxu0 0.0
  %995 = vmatprep.subr.mxu0 0.0
  %996 = vmatpush1.msra.mxu0 0.0
  %997 = vmatprep.subr.mxu0 0.0
  %998 = vmatpush1.msra.mxu0 0.0
  %999 = vmatprep.subr.mxu0 0.0
  %1000 = vmatpush1.msra.mxu0 0.0
  %1001 = vmatprep.subr.mxu0 0.0
  %1002 = vmatpush1.msra.mxu0 0.0
  %1003 = vmatprep.subr.mxu0 0.0
  %1004 = vmatpush1.msra.mxu0 0.0
  %1005 = vmatprep.subr.mxu0 0.0
  %1006 = vmatpush1.msra.mxu0 0.0
  %1007 = vmatprep.subr.mxu0 0.0
  %1008 = vmatpush1.msra.mxu0 0.0
  %1009 = vmatprep.subr.mxu0 0.0
  %1010 = vmatpush1.msra.mxu0 0.0
  %1011 = vmatprep.subr.mxu0 0.0
  %1012 = vmatpush1.msra.mxu0 0.0
  %1013 = vmatprep.subr.mxu0 0.0
  %1014 = vmatpush1.msra.mxu0 0.0
  %1015 = vmatprep.subr.mxu0 0.0
  %1016 = vmatpush1.msra.mxu0 0.0
  %1017 = vmatprep.subr.mxu0 0.0
  %1018 = vmatpush1.msra.mxu0 0.0
  %1019 = vmatprep.mubr.f32.mxu0 0.0
  %1020 = vmatmul.mubr.f32.gmra.mrb[0].mxu0 %v951
  %v1021 = vpop.f32.mrb[0].mxu0
  %v1022 = vadd.f32 %v381, %v1021
  %v1023 = vpop.f32.mrb[0].mxu0
  %1024 = vmatprep.mubr.f32.mxu0 0.0
  %1025 = vmatmul.mubr.f32.gmra.mrb[0].mxu0 %v953
  %v1026 = vpop.f32.mrb[0].mxu0
  %v1027 = vadd.f32 %v381, %v1026
  %v1028 = vpop.f32.mrb[0].mxu0
  %1029 = vdwg.mxu0
  %v1030 = vadd.f32 %v949, %v1022
  %v1031 = vadd.f32 %v950, %v1027
  %v1032 = vxor.u32 %v1030, 2147483648
  %v1033 = vxor.u32 %v1031, 2147483648
  %v1034 = vmul.f32 %v1032, 1.442695
  %v1035 = vpow.pop %v1034
  %v1036 = vmul.f32 %v1033, 1.442695
  %v1037 = vpow.pop %v1036
  %v1038 = vadd.f32 %v1035, 1.0
  %v1039 = vadd.f32 %v1037, 1.0
  %v1040 = vrcp.pop %v1038
  %v1041 = vmul.f32 1.0, %v1040
  %v1042 = vrcp.pop %v1039
  %v1043 = vmul.f32 1.0, %v1042
  %1046 = vrot.lane.b32.xlu0 %v1022, 64
  %v1047 = vpop.permute.xlu0 %1046
  %1048 = vrot.lane.b32.xlu0 %v1027, 64
  %v1049 = vpop.permute.xlu0 %1048
  %v1052 = vmul.f32 %v1041, %v1047
  %v1053 = vmul.f32 %v1043, %v1049
  %1056 = vrot.lane.b32.xlu0 %v1052, 64
  %v1057 = vpop.permute.xlu0 %1056
  %1058 = vrot.lane.b32.xlu0 %v1053, 64
  %v1059 = vpop.permute.xlu0 %1058
  %v1062 = vadd.f32 %v949, %v1057
  %v1063 = vadd.f32 %v950, %v1059
  %v1064 = vtanh.pop %v1062
  %v1065 = vtanh.pop %v1063
  %v1066 = vsub.f32 1.0, %v1041
  %v1067 = vsub.f32 1.0, %v1043
  %1070 = vrot.lane.b32.xlu0 %v1064, 96
  %v1071 = vpop.permute.xlu0 %1070
  %1072 = vrot.lane.b32.xlu0 %v1065, 96
  %v1073 = vpop.permute.xlu0 %1072
  %v1076 = vmul.f32 %v1066, %v1071
  %v1077 = vmul.f32 %v1067, %v1073
  %v1078 = vmul.f32 %v1041, %v794
  %v1079 = vmul.f32 %v1043, %v795
  %v1080 = vadd.f32 %v1076, %v1078
  %v1081 = vadd.f32 %v1077, %v1079
  %1084 = vrot.lane.b32.xlu0 %v1080, 96
  %v1085 = vpop.permute.xlu0 %1084
  %1086 = vrot.lane.b32.xlu0 %v1081, 96
  %v1087 = vpop.permute.xlu0 %1086
  %1090 = vst.msk [vmem:[#allocation5 + $0x10] sm:$0xff] %vm234, %v1085
  %1091 = vst.msk [vmem:[#allocation5 + $0x18] sm:$0xff] %vm234, %v1087
  %v1092 = vld [vmem:[#allocation2 + $0x30] sm:$0xff]
  %v1093 = vld [vmem:[#allocation2 + $0x38] sm:$0xff]
  %v1094 = vsel %vm234, %v942, 0
  %v1096 = vsel %vm234, %v944, 0
  %1098 = vmatprep.subr.mxu0 0.0
  %1099 = vmatpush1.msra.mxu0 %v216
  %1100 = vmatprep.subr.mxu0 0.0
  %1101 = vmatpush1.msra.mxu0 %v217
  %1102 = vmatprep.subr.mxu0 0.0
  %1103 = vmatpush1.msra.mxu0 %v218
  %1104 = vmatprep.subr.mxu0 0.0
  %1105 = vmatpush1.msra.mxu0 %v219
  %1106 = vmatprep.subr.mxu0 0.0
  %1107 = vmatpush1.msra.mxu0 0.0
  %1108 = vmatprep.subr.mxu0 0.0
  %1109 = vmatpush1.msra.mxu0 0.0
  %1110 = vmatprep.subr.mxu0 0.0
  %1111 = vmatpush1.msra.mxu0 0.0
  %1112 = vmatprep.subr.mxu0 0.0
  %1113 = vmatpush1.msra.mxu0 0.0
  %1114 = vmatprep.subr.mxu0 0.0
  %1115 = vmatpush1.msra.mxu0 0.0
  %1116 = vmatprep.subr.mxu0 0.0
  %1117 = vmatpush1.msra.mxu0 0.0
  %1118 = vmatprep.subr.mxu0 0.0
  %1119 = vmatpush1.msra.mxu0 0.0
  %1120 = vmatprep.subr.mxu0 0.0
  %1121 = vmatpush1.msra.mxu0 0.0
  %1122 = vmatprep.subr.mxu0 0.0
  %1123 = vmatpush1.msra.mxu0 0.0
  %1124 = vmatprep.subr.mxu0 0.0
  %1125 = vmatpush1.msra.mxu0 0.0
  %1126 = vmatprep.subr.mxu0 0.0
  %1127 = vmatpush1.msra.mxu0 0.0
  %1128 = vmatprep.subr.mxu0 0.0
  %1129 = vmatpush1.msra.mxu0 0.0
  %1130 = vmatprep.subr.mxu0 0.0
  %1131 = vmatpush1.msra.mxu0 0.0
  %1132 = vmatprep.subr.mxu0 0.0
  %1133 = vmatpush1.msra.mxu0 0.0
  %1134 = vmatprep.subr.mxu0 0.0
  %1135 = vmatpush1.msra.mxu0 0.0
  %1136 = vmatprep.subr.mxu0 0.0
  %1137 = vmatpush1.msra.mxu0 0.0
  %1138 = vmatprep.subr.mxu0 0.0
  %1139 = vmatpush1.msra.mxu0 0.0
  %1140 = vmatprep.subr.mxu0 0.0
  %1141 = vmatpush1.msra.mxu0 0.0
  %1142 = vmatprep.subr.mxu0 0.0
  %1143 = vmatpush1.msra.mxu0 0.0
  %1144 = vmatprep.subr.mxu0 0.0
  %1145 = vmatpush1.msra.mxu0 0.0
  %1146 = vmatprep.subr.mxu0 0.0
  %1147 = vmatpush1.msra.mxu0 0.0
  %1148 = vmatprep.subr.mxu0 0.0
  %1149 = vmatpush1.msra.mxu0 0.0
  %1150 = vmatprep.subr.mxu0 0.0
  %1151 = vmatpush1.msra.mxu0 0.0
  %1152 = vmatprep.subr.mxu0 0.0
  %1153 = vmatpush1.msra.mxu0 0.0
  %1154 = vmatprep.subr.mxu0 0.0
  %1155 = vmatpush1.msra.mxu0 0.0
  %1156 = vmatprep.subr.mxu0 0.0
  %1157 = vmatpush1.msra.mxu0 0.0
  %1158 = vmatprep.subr.mxu0 0.0
  %1159 = vmatpush1.msra.mxu0 0.0
  %1160 = vmatprep.subr.mxu0 0.0
  %1161 = vmatpush1.msra.mxu0 0.0
  %1162 = vmatprep.mubr.f32.mxu0 0.0
  %1163 = vmatmul.mubr.f32.gmra.mrb[0].mxu0 %v1094
  %v1164 = vpop.f32.mrb[0].mxu0
  %v1165 = vadd.f32 %v232, %v1164
  %v1166 = vpop.f32.mrb[0].mxu0
  %1167 = vmatprep.mubr.f32.mxu0 0.0
  %1168 = vmatmul.mubr.f32.gmra.mrb[0].mxu0 %v1096
  %v1169 = vpop.f32.mrb[0].mxu0
  %v1170 = vadd.f32 %v232, %v1169
  %v1171 = vpop.f32.mrb[0].mxu0
  %1172 = vdwg.mxu0
  %v1173 = vadd.f32 %v1092, %v1165
  %v1174 = vadd.f32 %v1093, %v1170
  %v1175 = vxor.u32 %v1173, 2147483648
  %v1176 = vxor.u32 %v1174, 2147483648
  %v1177 = vmul.f32 %v1175, 1.442695
  %v1178 = vpow.pop %v1177
  %v1179 = vmul.f32 %v1176, 1.442695
  %v1180 = vpow.pop %v1179
  %v1181 = vadd.f32 %v1178, 1.0
  %v1182 = vadd.f32 %v1180, 1.0
  %v1183 = vrcp.pop %v1181
  %v1184 = vmul.f32 1.0, %v1183
  %v1185 = vrcp.pop %v1182
  %v1186 = vmul.f32 1.0, %v1185
  %1189 = vrot.lane.b32.xlu0 %v1165, 64
  %v1190 = vpop.permute.xlu0 %1189
  %1191 = vrot.lane.b32.xlu0 %v1170, 64
  %v1192 = vpop.permute.xlu0 %1191
  %v1195 = vmul.f32 %v1184, %v1190
  %v1196 = vmul.f32 %v1186, %v1192
  %1199 = vrot.lane.b32.xlu0 %v1195, 64
  %v1200 = vpop.permute.xlu0 %1199
  %1201 = vrot.lane.b32.xlu0 %v1196, 64
  %v1202 = vpop.permute.xlu0 %1201
  %v1205 = vadd.f32 %v1092, %v1200
  %v1206 = vadd.f32 %v1093, %v1202
  %v1207 = vtanh.pop %v1205
  %v1208 = vtanh.pop %v1206
  %v1209 = vsub.f32 1.0, %v1184
  %v1210 = vsub.f32 1.0, %v1186
  %1213 = vrot.lane.b32.xlu0 %v1207, 96
  %v1214 = vpop.permute.xlu0 %1213
  %1215 = vrot.lane.b32.xlu0 %v1208, 96
  %v1216 = vpop.permute.xlu0 %1215
  %v1219 = vmul.f32 %v1209, %v1214
  %v1220 = vmul.f32 %v1210, %v1216
  %v1221 = vmul.f32 %v1184, %v937
  %v1222 = vmul.f32 %v1186, %v938
  %v1223 = vadd.f32 %v1219, %v1221
  %v1224 = vadd.f32 %v1220, %v1222
  %1227 = vrot.lane.b32.xlu0 %v1223, 96
  %v1228 = vpop.permute.xlu0 %1227
  %1229 = vrot.lane.b32.xlu0 %v1224, 96
  %v1230 = vpop.permute.xlu0 %1229
  %1233 = vst.msk [vmem:[#allocation4 + $0x30] sm:$0xff] %vm234, %v1228
  %1234 = vst.msk [vmem:[#allocation4 + $0x38] sm:$0xff] %vm234, %v1230
  %v1235 = vld [vmem:[#allocation3] sm:$0xff]
  %v1236 = vld [vmem:[#allocation3 + $0x8] sm:$0xff]
  %v1237 = vsel %vm234, %v1085, 0
  %v1239 = vsel %vm234, %v1087, 0
  %1241 = vmatprep.subr.mxu0 0.0
  %1242 = vmatpush1.msra.mxu0 %v221
  %1243 = vmatprep.subr.mxu0 0.0
  %1244 = vmatpush1.msra.mxu0 %v222
  %1245 = vmatprep.subr.mxu0 0.0
  %1246 = vmatpush1.msra.mxu0 %v223
  %1247 = vmatprep.subr.mxu0 0.0
  %1248 = vmatpush1.msra.mxu0 %v224
  %1249 = vmatprep.subr.mxu0 0.0
  %1250 = vmatpush1.msra.mxu0 0.0
  %1251 = vmatprep.subr.mxu0 0.0
  %1252 = vmatpush1.msra.mxu0 0.0
  %1253 = vmatprep.subr.mxu0 0.0
  %1254 = vmatpush1.msra.mxu0 0.0
  %1255 = vmatprep.subr.mxu0 0.0
  %1256 = vmatpush1.msra.mxu0 0.0
  %1257 = vmatprep.subr.mxu0 0.0
  %1258 = vmatpush1.msra.mxu0 0.0
  %1259 = vmatprep.subr.mxu0 0.0
  %1260 = vmatpush1.msra.mxu0 0.0
  %1261 = vmatprep.subr.mxu0 0.0
  %1262 = vmatpush1.msra.mxu0 0.0
  %1263 = vmatprep.subr.mxu0 0.0
  %1264 = vmatpush1.msra.mxu0 0.0
  %1265 = vmatprep.subr.mxu0 0.0
  %1266 = vmatpush1.msra.mxu0 0.0
  %1267 = vmatprep.subr.mxu0 0.0
  %1268 = vmatpush1.msra.mxu0 0.0
  %1269 = vmatprep.subr.mxu0 0.0
  %1270 = vmatpush1.msra.mxu0 0.0
  %1271 = vmatprep.subr.mxu0 0.0
  %1272 = vmatpush1.msra.mxu0 0.0
  %1273 = vmatprep.subr.mxu0 0.0
  %1274 = vmatpush1.msra.mxu0 0.0
  %1275 = vmatprep.subr.mxu0 0.0
  %1276 = vmatpush1.msra.mxu0 0.0
  %1277 = vmatprep.subr.mxu0 0.0
  %1278 = vmatpush1.msra.mxu0 0.0
  %1279 = vmatprep.subr.mxu0 0.0
  %1280 = vmatpush1.msra.mxu0 0.0
  %1281 = vmatprep.subr.mxu0 0.0
  %1282 = vmatpush1.msra.mxu0 0.0
  %1283 = vmatprep.subr.mxu0 0.0
  %1284 = vmatpush1.msra.mxu0 0.0
  %1285 = vmatprep.subr.mxu0 0.0
  %1286 = vmatpush1.msra.mxu0 0.0
  %1287 = vmatprep.subr.mxu0 0.0
  %1288 = vmatpush1.msra.mxu0 0.0
  %1289 = vmatprep.subr.mxu0 0.0
  %1290 = vmatpush1.msra.mxu0 0.0
  %1291 = vmatprep.subr.mxu0 0.0
  %1292 = vmatpush1.msra.mxu0 0.0
  %1293 = vmatprep.subr.mxu0 0.0
  %1294 = vmatpush1.msra.mxu0 0.0
  %1295 = vmatprep.subr.mxu0 0.0
  %1296 = vmatpush1.msra.mxu0 0.0
  %1297 = vmatprep.subr.mxu0 0.0
  %1298 = vmatpush1.msra.mxu0 0.0
  %1299 = vmatprep.subr.mxu0 0.0
  %1300 = vmatpush1.msra.mxu0 0.0
  %1301 = vmatprep.subr.mxu0 0.0
  %1302 = vmatpush1.msra.mxu0 0.0
  %1303 = vmatprep.subr.mxu0 0.0
  %1304 = vmatpush1.msra.mxu0 0.0
  %1305 = vmatprep.mubr.f32.mxu0 0.0
  %1306 = vmatmul.mubr.f32.gmra.mrb[0].mxu0 %v1237
  %v1307 = vpop.f32.mrb[0].mxu0
  %v1308 = vadd.f32 %v381, %v1307
  %v1309 = vpop.f32.mrb[0].mxu0
  %1310 = vmatprep.mubr.f32.mxu0 0.0
  %1311 = vmatmul.mubr.f32.gmra.mrb[0].mxu0 %v1239
  %v1312 = vpop.f32.mrb[0].mxu0
  %v1313 = vadd.f32 %v381, %v1312
  %v1314 = vpop.f32.mrb[0].mxu0
  %1315 = vdwg.mxu0
  %v1316 = vadd.f32 %v1235, %v1308
  %v1317 = vadd.f32 %v1236, %v1313
  %v1318 = vxor.u32 %v1316, 2147483648
  %v1319 = vxor.u32 %v1317, 2147483648
  %v1320 = vmul.f32 %v1318, 1.442695
  %v1321 = vpow.pop %v1320
  %v1322 = vmul.f32 %v1319, 1.442695
  %v1323 = vpow.pop %v1322
  %v1324 = vadd.f32 %v1321, 1.0
  %v1325 = vadd.f32 %v1323, 1.0
  %v1326 = vrcp.pop %v1324
  %v1327 = vmul.f32 1.0, %v1326
  %v1328 = vrcp.pop %v1325
  %v1329 = vmul.f32 1.0, %v1328
  %1332 = vrot.lane.b32.xlu0 %v1308, 64
  %v1333 = vpop.permute.xlu0 %1332
  %1334 = vrot.lane.b32.xlu0 %v1313, 64
  %v1335 = vpop.permute.xlu0 %1334
  %v1338 = vmul.f32 %v1327, %v1333
  %v1339 = vmul.f32 %v1329, %v1335
  %1342 = vrot.lane.b32.xlu0 %v1338, 64
  %v1343 = vpop.permute.xlu0 %1342
  %1344 = vrot.lane.b32.xlu0 %v1339, 64
  %v1345 = vpop.permute.xlu0 %1344
  %v1348 = vadd.f32 %v1235, %v1343
  %v1349 = vadd.f32 %v1236, %v1345
  %v1350 = vtanh.pop %v1348
  %v1351 = vtanh.pop %v1349
  %v1352 = vsub.f32 1.0, %v1327
  %v1353 = vsub.f32 1.0, %v1329
  %1356 = vrot.lane.b32.xlu0 %v1350, 96
  %v1357 = vpop.permute.xlu0 %1356
  %1358 = vrot.lane.b32.xlu0 %v1351, 96
  %v1359 = vpop.permute.xlu0 %1358
  %v1362 = vmul.f32 %v1352, %v1357
  %v1363 = vmul.f32 %v1353, %v1359
  %v1364 = vmul.f32 %v1327, %v1080
  %v1365 = vmul.f32 %v1329, %v1081
  %v1366 = vadd.f32 %v1362, %v1364
  %v1367 = vadd.f32 %v1363, %v1365
  %1370 = vrot.lane.b32.xlu0 %v1366, 96
  %v1371 = vpop.permute.xlu0 %1370
  %1372 = vrot.lane.b32.xlu0 %v1367, 96
  %v1373 = vpop.permute.xlu0 %1372
  %1376 = vst.msk [vmem:[#allocation5] sm:$0xff] %vm234, %v1371
  %1377 = vst.msk [vmem:[#allocation5 + $0x8] sm:$0xff] %vm234, %v1373
  %v1378 = vld [vmem:[#allocation4] sm:$0xff]
  %v1379 = vld [vmem:[#allocation4 + $0x8] sm:$0xff]
  %v1380 = vld [vmem:[#allocation4 + $0x10] sm:$0xff]
  %v1381 = vld [vmem:[#allocation4 + $0x18] sm:$0xff]
  %v1382 = vld [vmem:[#allocation4 + $0x20] sm:$0xff]
  %v1383 = vld [vmem:[#allocation4 + $0x28] sm:$0xff]
  %v1384 = vld [vmem:[#allocation4 + $0x30] sm:$0xff]
  %v1385 = vld [vmem:[#allocation4 + $0x38] sm:$0xff]
  %v1386 = vld [vmem:[%s7] sm:$0xff]
  %v1387 = vld [vmem:[%s7 + $0x8] sm:$0xff]
  %v1388 = vld [vmem:[%s7 + $0x10] sm:$0xff]
  %v1389 = vld [vmem:[%s7 + $0x18] sm:$0xff]
  %v1390 = vld [vmem:[#allocation5] sm:$0xff]
  %v1391 = vld [vmem:[#allocation5 + $0x8] sm:$0xff]
  %v1392 = vld [vmem:[#allocation5 + $0x10] sm:$0xff]
  %v1393 = vld [vmem:[#allocation5 + $0x18] sm:$0xff]
  %v1394 = vld [vmem:[#allocation5 + $0x20] sm:$0xff]
  %v1395 = vld [vmem:[#allocation5 + $0x28] sm:$0xff]
  %v1396 = vld [vmem:[#allocation5 + $0x30] sm:$0xff]
  %v1397 = vld [vmem:[#allocation5 + $0x38] sm:$0xff]
  %v1398 = vld [vmem:[%s8] sm:$0xff]
  %v1399 = vld [vmem:[%s8 + $0x8] sm:$0xff]
  %v1400 = vld [vmem:[%s8 + $0x10] sm:$0xff]
  %v1401 = vld [vmem:[%s8 + $0x18] sm:$0xff]
  %v1403 = vsel %vm234, %v1390, 0
  %v1406 = vsel %vm234, %v1391, 0
  %v1409 = vsel %vm234, %v1392, 0
  %v1412 = vsel %vm234, %v1393, 0
  %v1415 = vsel %vm234, %v1394, 0
  %v1418 = vsel %vm234, %v1395, 0
  %v1421 = vsel %vm234, %v1396, 0
  %v1424 = vsel %vm234, %v1397, 0
  %1426 = vmatprep.subr.mxu0 0.0
  %1427 = vmatpush1.msra.mxu0 %v1398
  %1428 = vmatprep.subr.mxu0 0.0
  %1429 = vmatpush1.msra.mxu0 %v1399
  %1430 = vmatprep.subr.mxu0 0.0
  %1431 = vmatpush1.msra.mxu0 %v1400
  %1432 = vmatprep.subr.mxu0 0.0
  %1433 = vmatpush1.msra.mxu0 %v1401
  %1434 = vmatprep.subr.mxu0 0.0
  %1435 = vmatpush1.msra.mxu0 0.0
  %1436 = vmatprep.subr.mxu0 0.0
  %1437 = vmatpush1.msra.mxu0 0.0
  %1438 = vmatprep.subr.mxu0 0.0
  %1439 = vmatpush1.msra.mxu0 0.0
  %1440 = vmatprep.subr.mxu0 0.0
  %1441 = vmatpush1.msra.mxu0 0.0
  %1442 = vmatprep.subr.mxu0 0.0
  %1443 = vmatpush1.msra.mxu0 0.0
  %1444 = vmatprep.subr.mxu0 0.0
  %1445 = vmatpush1.msra.mxu0 0.0
  %1446 = vmatprep.subr.mxu0 0.0
  %1447 = vmatpush1.msra.mxu0 0.0
  %1448 = vmatprep.subr.mxu0 0.0
  %1449 = vmatpush1.msra.mxu0 0.0
  %1450 = vmatprep.subr.mxu0 0.0
  %1451 = vmatpush1.msra.mxu0 0.0
  %1452 = vmatprep.subr.mxu0 0.0
  %1453 = vmatpush1.msra.mxu0 0.0
  %1454 = vmatprep.subr.mxu0 0.0
  %1455 = vmatpush1.msra.mxu0 0.0
  %1456 = vmatprep.subr.mxu0 0.0
  %1457 = vmatpush1.msra.mxu0 0.0
  %1458 = vmatprep.subr.mxu0 0.0
  %1459 = vmatpush1.msra.mxu0 0.0
  %1460 = vmatprep.subr.mxu0 0.0
  %1461 = vmatpush1.msra.mxu0 0.0
  %1462 = vmatprep.subr.mxu0 0.0
  %1463 = vmatpush1.msra.mxu0 0.0
  %1464 = vmatprep.subr.mxu0 0.0
  %1465 = vmatpush1.msra.mxu0 0.0
  %1466 = vmatprep.subr.mxu0 0.0
  %1467 = vmatpush1.msra.mxu0 0.0
  %1468 = vmatprep.subr.mxu0 0.0
  %1469 = vmatpush1.msra.mxu0 0.0
  %1470 = vmatprep.subr.mxu0 0.0
  %1471 = vmatpush1.msra.mxu0 0.0
  %1472 = vmatprep.subr.mxu0 0.0
  %1473 = vmatpush1.msra.mxu0 0.0
  %1474 = vmatprep.subr.mxu0 0.0
  %1475 = vmatpush1.msra.mxu0 0.0
  %1476 = vmatprep.subr.mxu0 0.0
  %1477 = vmatpush1.msra.mxu0 0.0
  %1478 = vmatprep.subr.mxu0 0.0
  %1479 = vmatpush1.msra.mxu0 0.0
  %1480 = vmatprep.subr.mxu0 0.0
  %1481 = vmatpush1.msra.mxu0 0.0
  %1482 = vmatprep.subr.mxu0 0.0
  %1483 = vmatpush1.msra.mxu0 0.0
  %1484 = vmatprep.subr.mxu0 0.0
  %1485 = vmatpush1.msra.mxu0 0.0
  %1486 = vmatprep.subr.mxu0 0.0
  %1487 = vmatpush1.msra.mxu0 0.0
  %1488 = vmatprep.subr.mxu0 0.0
  %1489 = vmatpush1.msra.mxu0 0.0
  %1490 = vmatprep.mubr.f32.mxu0 0.0
  %1491 = vmatmul.mubr.f32.gmra.mrb[0].mxu0 %v1403
  %v1492 = vpop.f32.mrb[0].mxu0
  %v1493 = vadd.f32 0.0, %v1492
  %v1494 = vpop.f32.mrb[0].mxu0
  %1495 = vmatprep.mubr.f32.mxu0 0.0
  %1496 = vmatmul.mubr.f32.gmra.mrb[0].mxu0 %v1406
  %v1497 = vpop.f32.mrb[0].mxu0
  %v1498 = vadd.f32 0.0, %v1497
  %v1499 = vpop.f32.mrb[0].mxu0
  %1500 = vmatprep.mubr.f32.mxu0 0.0
  %1501 = vmatmul.mubr.f32.gmra.mrb[0].mxu0 %v1409
  %v1502 = vpop.f32.mrb[0].mxu0
  %v1503 = vadd.f32 0.0, %v1502
  %v1504 = vpop.f32.mrb[0].mxu0
  %1505 = vmatprep.mubr.f32.mxu0 0.0
  %1506 = vmatmul.mubr.f32.gmra.mrb[0].mxu0 %v1412
  %v1507 = vpop.f32.mrb[0].mxu0
  %v1508 = vadd.f32 0.0, %v1507
  %v1509 = vpop.f32.mrb[0].mxu0
  %1510 = vmatprep.mubr.f32.mxu0 0.0
  %1511 = vmatmul.mubr.f32.gmra.mrb[0].mxu0 %v1415
  %v1512 = vpop.f32.mrb[0].mxu0
  %v1513 = vadd.f32 0.0, %v1512
  %v1514 = vpop.f32.mrb[0].mxu0
  %1515 = vmatprep.mubr.f32.mxu0 0.0
  %1516 = vmatmul.mubr.f32.gmra.mrb[0].mxu0 %v1418
  %v1517 = vpop.f32.mrb[0].mxu0
  %v1518 = vadd.f32 0.0, %v1517
  %v1519 = vpop.f32.mrb[0].mxu0
  %1520 = vmatprep.mubr.f32.mxu0 0.0
  %1521 = vmatmul.mubr.f32.gmra.mrb[0].mxu0 %v1421
  %v1522 = vpop.f32.mrb[0].mxu0
  %v1523 = vadd.f32 0.0, %v1522
  %v1524 = vpop.f32.mrb[0].mxu0
  %1525 = vmatprep.mubr.f32.mxu0 0.0
  %1526 = vmatmul.mubr.f32.gmra.mrb[0].mxu0 %v1424
  %v1527 = vpop.f32.mrb[0].mxu0
  %v1528 = vadd.f32 0.0, %v1527
  %v1529 = vpop.f32.mrb[0].mxu0
  %1530 = vdwg.mxu0
  %v1532 = vsel %vm234, %v1378, 0
  %v1535 = vsel %vm234, %v1379, 0
  %v1538 = vsel %vm234, %v1380, 0
  %v1541 = vsel %vm234, %v1381, 0
  %v1544 = vsel %vm234, %v1382, 0
  %v1547 = vsel %vm234, %v1383, 0
  %v1550 = vsel %vm234, %v1384, 0
  %v1553 = vsel %vm234, %v1385, 0
  %1555 = vmatprep.subr.mxu0 0.0
  %1556 = vmatpush1.msra.mxu0 %v1386
  %1557 = vmatprep.subr.mxu0 0.0
  %1558 = vmatpush1.msra.mxu0 %v1387
  %1559 = vmatprep.subr.mxu0 0.0
  %1560 = vmatpush1.msra.mxu0 %v1388
  %1561 = vmatprep.subr.mxu0 0.0
  %1562 = vmatpush1.msra.mxu0 %v1389
  %1563 = vmatprep.subr.mxu0 0.0
  %1564 = vmatpush1.msra.mxu0 0.0
  %1565 = vmatprep.subr.mxu0 0.0
  %1566 = vmatpush1.msra.mxu0 0.0
  %1567 = vmatprep.subr.mxu0 0.0
  %1568 = vmatpush1.msra.mxu0 0.0
  %1569 = vmatprep.subr.mxu0 0.0
  %1570 = vmatpush1.msra.mxu0 0.0
  %1571 = vmatprep.subr.mxu0 0.0
  %1572 = vmatpush1.msra.mxu0 0.0
  %1573 = vmatprep.subr.mxu0 0.0
  %1574 = vmatpush1.msra.mxu0 0.0
  %1575 = vmatprep.subr.mxu0 0.0
  %1576 = vmatpush1.msra.mxu0 0.0
  %1577 = vmatprep.subr.mxu0 0.0
  %1578 = vmatpush1.msra.mxu0 0.0
  %1579 = vmatprep.subr.mxu0 0.0
  %1580 = vmatpush1.msra.mxu0 0.0
  %1581 = vmatprep.subr.mxu0 0.0
  %1582 = vmatpush1.msra.mxu0 0.0
  %1583 = vmatprep.subr.mxu0 0.0
  %1584 = vmatpush1.msra.mxu0 0.0
  %1585 = vmatprep.subr.mxu0 0.0
  %1586 = vmatpush1.msra.mxu0 0.0
  %1587 = vmatprep.subr.mxu0 0.0
  %1588 = vmatpush1.msra.mxu0 0.0
  %1589 = vmatprep.subr.mxu0 0.0
  %1590 = vmatpush1.msra.mxu0 0.0
  %1591 = vmatprep.subr.mxu0 0.0
  %1592 = vmatpush1.msra.mxu0 0.0
  %1593 = vmatprep.subr.mxu0 0.0
  %1594 = vmatpush1.msra.mxu0 0.0
  %1595 = vmatprep.subr.mxu0 0.0
  %1596 = vmatpush1.msra.mxu0 0.0
  %1597 = vmatprep.subr.mxu0 0.0
  %1598 = vmatpush1.msra.mxu0 0.0
  %1599 = vmatprep.subr.mxu0 0.0
  %1600 = vmatpush1.msra.mxu0 0.0
  %1601 = vmatprep.subr.mxu0 0.0
  %1602 = vmatpush1.msra.mxu0 0.0
  %1603 = vmatprep.subr.mxu0 0.0
  %1604 = vmatpush1.msra.mxu0 0.0
  %1605 = vmatprep.subr.mxu0 0.0
  %1606 = vmatpush1.msra.mxu0 0.0
  %1607 = vmatprep.subr.mxu0 0.0
  %1608 = vmatpush1.msra.mxu0 0.0
  %1609 = vmatprep.subr.mxu0 0.0
  %1610 = vmatpush1.msra.mxu0 0.0
  %1611 = vmatprep.subr.mxu0 0.0
  %1612 = vmatpush1.msra.mxu0 0.0
  %1613 = vmatprep.subr.mxu0 0.0
  %1614 = vmatpush1.msra.mxu0 0.0
  %1615 = vmatprep.subr.mxu0 0.0
  %1616 = vmatpush1.msra.mxu0 0.0
  %1617 = vmatprep.subr.mxu0 0.0
  %1618 = vmatpush1.msra.mxu0 0.0
  %1619 = vmatprep.mubr.f32.mxu0 0.0
  %1620 = vmatmul.mubr.f32.gmra.mrb[0].mxu0 %v1532
  %v1621 = vpop.f32.mrb[0].mxu0
  %v1622 = vadd.f32 %v1493, %v1621
  %v1623 = vpop.f32.mrb[0].mxu0
  %1624 = vmatprep.mubr.f32.mxu0 0.0
  %1625 = vmatmul.mubr.f32.gmra.mrb[0].mxu0 %v1535
  %v1626 = vpop.f32.mrb[0].mxu0
  %v1627 = vadd.f32 %v1498, %v1626
  %v1628 = vpop.f32.mrb[0].mxu0
  %1629 = vmatprep.mubr.f32.mxu0 0.0
  %1630 = vmatmul.mubr.f32.gmra.mrb[0].mxu0 %v1538
  %v1631 = vpop.f32.mrb[0].mxu0
  %v1632 = vadd.f32 %v1503, %v1631
  %v1633 = vpop.f32.mrb[0].mxu0
  %1634 = vmatprep.mubr.f32.mxu0 0.0
  %1635 = vmatmul.mubr.f32.gmra.mrb[0].mxu0 %v1541
  %v1636 = vpop.f32.mrb[0].mxu0
  %v1637 = vadd.f32 %v1508, %v1636
  %v1638 = vpop.f32.mrb[0].mxu0
  %1639 = vmatprep.mubr.f32.mxu0 0.0
  %1640 = vmatmul.mubr.f32.gmra.mrb[0].mxu0 %v1544
  %v1641 = vpop.f32.mrb[0].mxu0
  %v1642 = vadd.f32 %v1513, %v1641
  %v1643 = vpop.f32.mrb[0].mxu0
  %1644 = vmatprep.mubr.f32.mxu0 0.0
  %1645 = vmatmul.mubr.f32.gmra.mrb[0].mxu0 %v1547
  %v1646 = vpop.f32.mrb[0].mxu0
  %v1647 = vadd.f32 %v1518, %v1646
  %v1648 = vpop.f32.mrb[0].mxu0
  %1649 = vmatprep.mubr.f32.mxu0 0.0
  %1650 = vmatmul.mubr.f32.gmra.mrb[0].mxu0 %v1550
  %v1651 = vpop.f32.mrb[0].mxu0
  %v1652 = vadd.f32 %v1523, %v1651
  %v1653 = vpop.f32.mrb[0].mxu0
  %1654 = vmatprep.mubr.f32.mxu0 0.0
  %1655 = vmatmul.mubr.f32.gmra.mrb[0].mxu0 %v1553
  %v1656 = vpop.f32.mrb[0].mxu0
  %v1657 = vadd.f32 %v1528, %v1656
  %v1658 = vpop.f32.mrb[0].mxu0
  %1659 = vdwg.mxu0
  %v1660 = vld [vmem:[%s9] sm:$0x1]
  %v1662 = vlaneseq
  %v1663 = vshrl.u32 %v1662, 7
  %v1664 = vsub.s32 0, %v1663
  %v1665 = vrot.slane %v1660, %v1664
  %v1667 = vadd.f32 %v1622, %v1665
  %v1668 = vadd.f32 %v1627, %v1665
  %v1669 = vadd.f32 %v1632, %v1665
  %v1670 = vadd.f32 %v1637, %v1665
  %v1671 = vadd.f32 %v1642, %v1665
  %v1672 = vadd.f32 %v1647, %v1665
  %v1673 = vadd.f32 %v1652, %v1665
  %v1674 = vadd.f32 %v1657, %v1665
  %1675 = vst.msk [vmem:[%s10] sm:$0xff] %vm234, %v1667
  %1676 = vst.msk [vmem:[%s10 + $0x8] sm:$0xff] %vm234, %v1668
  %1677 = vst.msk [vmem:[%s10 + $0x10] sm:$0xff] %vm234, %v1669
  %1678 = vst.msk [vmem:[%s10 + $0x18] sm:$0xff] %vm234, %v1670
  %1679 = vst.msk [vmem:[%s10 + $0x20] sm:$0xff] %vm234, %v1671
  %1680 = vst.msk [vmem:[%s10 + $0x28] sm:$0xff] %vm234, %v1672
  %1681 = vst.msk [vmem:[%s10 + $0x30] sm:$0xff] %vm234, %v1673
  %1682 = vst.msk [vmem:[%s10 + $0x38] sm:$0xff] %vm234, %v1674
  %1691 = vrot.lane.b32.xlu0 %v1667, 96
  %v1692 = vpop.permute.xlu0 %1691
  %1693 = vrot.lane.b32.xlu0 %v1668, 96
  %v1694 = vpop.permute.xlu0 %1693
  %1695 = vrot.lane.b32.xlu0 %v1669, 96
  %v1696 = vpop.permute.xlu0 %1695
  %1697 = vrot.lane.b32.xlu0 %v1670, 96
  %v1698 = vpop.permute.xlu0 %1697
  %1699 = vrot.lane.b32.xlu0 %v1671, 96
  %v1700 = vpop.permute.xlu0 %1699
  %1701 = vrot.lane.b32.xlu0 %v1672, 96
  %v1702 = vpop.permute.xlu0 %1701
  %1703 = vrot.lane.b32.xlu0 %v1673, 96
  %v1704 = vpop.permute.xlu0 %1703
  %1705 = vrot.lane.b32.xlu0 %v1674, 96
  %v1706 = vpop.permute.xlu0 %1705
  %1715 = vst.msk [vmem:[%s11] sm:$0xff] %vm234, %v1692
  %1716 = vst.msk [vmem:[%s11 + $0x8] sm:$0xff] %vm234, %v1694
  %1717 = vst.msk [vmem:[%s11 + $0x10] sm:$0xff] %vm234, %v1696
  %1718 = vst.msk [vmem:[%s11 + $0x18] sm:$0xff] %vm234, %v1698
  %1719 = vst.msk [vmem:[%s11 + $0x20] sm:$0xff] %vm234, %v1700
  %1720 = vst.msk [vmem:[%s11 + $0x28] sm:$0xff] %vm234, %v1702
  %1721 = vst.msk [vmem:[%s11 + $0x30] sm:$0xff] %vm234, %v1704
  %1722 = vst.msk [vmem:[%s11 + $0x38] sm:$0xff] %vm234, %v1706
  // Predicated region
  $region42: #{_lambda_.2} parent=0 // pred_check
    _
  $region43: #{_lambda_.2} parent=0 // pred_check_branch
    %1724 = sbr.rel (0) target = $region45
  $region44: #{_lambda_.2} parent=0 // pred_region
    _
  $region45: #{_lambda_.2} parent=0 // pred_fallthru
    _
  // Predicated region
  $region46: #{_lambda_.2} parent=0 // pred_check
    _
  $region47: #{_lambda_.2} parent=0 // pred_check_branch
    %1726 = sbr.rel (0) target = $region49
  $region48: #{_lambda_.2} parent=0 // pred_region
    _
  $region49: #{_lambda_.2} parent=0 // pred_fallthru
    _
  // Predicated region
  $region50: #{_lambda_.2} parent=0 // pred_check
    _
  $region51: #{_lambda_.2} parent=0 // pred_check_branch
    %1728 = sbr.rel (0) target = $region53
  $region52: #{_lambda_.2} parent=0 // pred_region
    _
  $region53: #{_lambda_.2} parent=0 // pred_fallthru
    _
  // Predicated region
  $region54: #{_lambda_.2} parent=0 // pred_check
    _
  $region55: #{_lambda_.2} parent=0 // pred_check_branch
    %1730 = sbr.rel (0) target = $region57
  $region56: #{_lambda_.2} parent=0 // pred_region
    _
  $region57: #{_lambda_.2} parent=0 // pred_fallthru
    _

// kernel: _lambda_.3
$region0: #{_lambda_.3}
  #allocation0 [shape = 'u32[]', space=smem, size = 0x4, offset = 0x4, fixed_abs, tag = 'smem constant byte address 0x4 - core index']
  #allocation1 [shape = 'u32[144,128]{1,0:T(1,128)}', space=vmem, size = 0x12000, scoped, tag = 'internal scratch']
  %s0 = inlined_call_operand.vmem [shape: f32[6,8,96], index: 0, kind: input, shape index: {}]
  %s1 = inlined_call_operand.vmem [shape: f32[8,32], index: 1, kind: input, shape index: {}]
  %s2 = inlined_call_operand.vmem [shape: f32[8,16,32], index: 2, kind: input, shape index: {}]
  %s3 = inlined_call_operand.vmem [shape: f32[8,16,32], index: 3, kind: input, shape index: {}]
  %s4 = inlined_call_operand.vmem [shape: f32[8,16], index: 4, kind: input, shape index: {}]
  %s5 = inlined_call_operand.vmem [shape: f32[32,96], index: 5, kind: input, shape index: {}]
  %s6 = inlined_call_operand.vmem [shape: f32[1,96], index: 6, kind: input, shape index: {}]
  %s7 = inlined_call_operand.vmem [shape: f32[32,160], index: 7, kind: input, shape index: {}]
  %s8 = inlined_call_operand.vmem [shape: f32[1,160], index: 8, kind: input, shape index: {}]
  %s9 = inlined_call_operand.vmem [shape: f32[1,32], index: 9, kind: input, shape index: {}]
  %s10 = inlined_call_operand.vmem [shape: f32[6,8,128], index: 10, kind: output, shape index: {}]
  %s11 = sld [smem:[#allocation0]]
  $region50: #{_lambda_.3} parent=0
    _
  %s13 = ssub.s32 1, %s11
  %s14 = scalar_select 0, %s13, %s11
  // Predicated region
  $region2: #{_lambda_.3} parent=0 // pred_check
    _
  $region3: #{_lambda_.3} parent=0 // pred_check_branch
    %16 = sbr.rel (0) target = $region5
  $region4: #{_lambda_.3} parent=0 // pred_region
    _
  $region5: #{_lambda_.3} parent=0 // pred_fallthru
    _
  // Predicated region
  $region6: #{_lambda_.3} parent=0 // pred_check
    _
  $region7: #{_lambda_.3} parent=0 // pred_check_branch
    %18 = sbr.rel (0) target = $region9
  $region8: #{_lambda_.3} parent=0 // pred_region
    _
  $region9: #{_lambda_.3} parent=0 // pred_fallthru
    _
  // Predicated region
  $region10: #{_lambda_.3} parent=0 // pred_check
    _
  $region11: #{_lambda_.3} parent=0 // pred_check_branch
    %20 = sbr.rel (0) target = $region13
  $region12: #{_lambda_.3} parent=0 // pred_region
    _
  $region13: #{_lambda_.3} parent=0 // pred_fallthru
    _
  // Predicated region
  $region14: #{_lambda_.3} parent=0 // pred_check
    _
  $region15: #{_lambda_.3} parent=0 // pred_check_branch
    %22 = sbr.rel (0) target = $region17
  $region16: #{_lambda_.3} parent=0 // pred_region
    _
  $region17: #{_lambda_.3} parent=0 // pred_fallthru
    _
  // Predicated region
  $region18: #{_lambda_.3} parent=0 // pred_check
    _
  $region19: #{_lambda_.3} parent=0 // pred_check_branch
    %24 = sbr.rel (0) target = $region21
  $region20: #{_lambda_.3} parent=0 // pred_region
    _
  $region21: #{_lambda_.3} parent=0 // pred_fallthru
    _
  // Predicated region
  $region22: #{_lambda_.3} parent=0 // pred_check
    _
  $region23: #{_lambda_.3} parent=0 // pred_check_branch
    %26 = sbr.rel (0) target = $region25
  $region24: #{_lambda_.3} parent=0 // pred_region
    _
  $region25: #{_lambda_.3} parent=0 // pred_fallthru
    _
  // Predicated region
  $region26: #{_lambda_.3} parent=0 // pred_check
    _
  $region27: #{_lambda_.3} parent=0 // pred_check_branch
    %28 = sbr.rel (0) target = $region29
  $region28: #{_lambda_.3} parent=0 // pred_region
    _
  $region29: #{_lambda_.3} parent=0 // pred_fallthru
    _
  // Predicated region
  $region30: #{_lambda_.3} parent=0 // pred_check
    _
  $region31: #{_lambda_.3} parent=0 // pred_check_branch
    %30 = sbr.rel (0) target = $region33
  $region32: #{_lambda_.3} parent=0 // pred_region
    _
  $region33: #{_lambda_.3} parent=0 // pred_fallthru
    _
  // Predicated region
  $region34: #{_lambda_.3} parent=0 // pred_check
    _
  $region35: #{_lambda_.3} parent=0 // pred_check_branch
    %32 = sbr.rel (0) target = $region37
  $region36: #{_lambda_.3} parent=0 // pred_region
    _
  $region37: #{_lambda_.3} parent=0 // pred_fallthru
    _
  // Predicated region
  $region38: #{_lambda_.3} parent=0 // pred_check
    _
  $region39: #{_lambda_.3} parent=0 // pred_check_branch
    %34 = sbr.rel (0) target = $region41
  $region40: #{_lambda_.3} parent=0 // pred_region
    _
  $region41: #{_lambda_.3} parent=0 // pred_fallthru
    _
  %v35 = vld [vmem:[%s2] sm:$0xff]
  %v36 = vld [vmem:[%s2 + $0x8] sm:$0xff]
  %v37 = vld [vmem:[%s2 + $0x10] sm:$0xff]
  %v38 = vld [vmem:[%s2 + $0x18] sm:$0xff]
  %v39 = vld [vmem:[%s2 + $0x20] sm:$0xff]
  %v40 = vld [vmem:[%s2 + $0x28] sm:$0xff]
  %v41 = vld [vmem:[%s2 + $0x30] sm:$0xff]
  %v42 = vld [vmem:[%s2 + $0x38] sm:$0xff]
  %v43 = vld [vmem:[%s2 + $0x40] sm:$0xff]
  %v44 = vld [vmem:[%s2 + $0x48] sm:$0xff]
  %v45 = vld [vmem:[%s2 + $0x50] sm:$0xff]
  %v46 = vld [vmem:[%s2 + $0x58] sm:$0xff]
  %v47 = vld [vmem:[%s2 + $0x60] sm:$0xff]
  %v48 = vld [vmem:[%s2 + $0x68] sm:$0xff]
  %v49 = vld [vmem:[%s2 + $0x70] sm:$0xff]
  %v50 = vld [vmem:[%s2 + $0x78] sm:$0xff]
  %v51 = vld [vmem:[%s3] sm:$0xff]
  %v52 = vld [vmem:[%s3 + $0x8] sm:$0xff]
  %v53 = vld [vmem:[%s3 + $0x10] sm:$0xff]
  %v54 = vld [vmem:[%s3 + $0x18] sm:$0xff]
  %v55 = vld [vmem:[%s3 + $0x20] sm:$0xff]
  %v56 = vld [vmem:[%s3 + $0x28] sm:$0xff]
  %v57 = vld [vmem:[%s3 + $0x30] sm:$0xff]
  %v58 = vld [vmem:[%s3 + $0x38] sm:$0xff]
  %v59 = vld [vmem:[%s3 + $0x40] sm:$0xff]
  %v60 = vld [vmem:[%s3 + $0x48] sm:$0xff]
  %v61 = vld [vmem:[%s3 + $0x50] sm:$0xff]
  %v62 = vld [vmem:[%s3 + $0x58] sm:$0xff]
  %v63 = vld [vmem:[%s3 + $0x60] sm:$0xff]
  %v64 = vld [vmem:[%s3 + $0x68] sm:$0xff]
  %v65 = vld [vmem:[%s3 + $0x70] sm:$0xff]
  %v66 = vld [vmem:[%s3 + $0x78] sm:$0xff]
  %v67 = vld [vmem:[%s4] sm:$0xff]
  %v68 = vld [vmem:[%s5] sm:$0xff]
  %v69 = vld [vmem:[%s5 + $0x8] sm:$0xff]
  %v70 = vld [vmem:[%s5 + $0x10] sm:$0xff]
  %v71 = vld [vmem:[%s5 + $0x18] sm:$0xff]
  %v72 = vld [vmem:[%s6] sm:$0x1]
  %v73 = vld [vmem:[%s7] sm:$0xff]
  %v74 = vld [vmem:[%s7 + $0x8] sm:$0xff]
  %v75 = vld [vmem:[%s7 + $0x10] sm:$0xff]
  %v76 = vld [vmem:[%s7 + $0x18] sm:$0xff]
  %v77 = vld [vmem:[%s7 + $0x20] sm:$0xff]
  %v78 = vld [vmem:[%s7 + $0x28] sm:$0xff]
  %v79 = vld [vmem:[%s7 + $0x30] sm:$0xff]
  %v80 = vld [vmem:[%s7 + $0x38] sm:$0xff]
  %v81 = vld [vmem:[%s8] sm:$0x3]
  %v82 = vld [vmem:[%s9] sm:$0x1]
  %v84 = vlaneseq
  %v85 = vshrl.u32 %v84, 7
  %v86 = vsub.s32 0, %v85
  %v87 = vrot.slane %v82, %v86
  %v89 = vld [vmem:[%s1] sm:$0xff]
  %v90 = vld [vmem:[%s0] sm:$0xff]
  %v92 = vlaneseq
  %v93 = vshrl.u32 %v92, 7
  %v94 = vsub.s32 0, %v93
  %v95 = vrot.slane %v72, %v94
  %vm97 = vcmask 261120
  %v99 = vsel %vm97, %v89, 0
  %101 = vmatprep.subr.mxu0 0.0
  %102 = vmatpush1.msra.mxu0 %v68
  %103 = vmatprep.subr.mxu0 0.0
  %104 = vmatpush1.msra.mxu0 %v69
  %105 = vmatprep.subr.mxu0 0.0
  %106 = vmatpush1.msra.mxu0 %v70
  %107 = vmatprep.subr.mxu0 0.0
  %108 = vmatpush1.msra.mxu0 %v71
  %109 = vmatprep.subr.mxu0 0.0
  %110 = vmatpush1.msra.mxu0 0.0
  %111 = vmatprep.subr.mxu0 0.0
  %112 = vmatpush1.msra.mxu0 0.0
  %113 = vmatprep.subr.mxu0 0.0
  %114 = vmatpush1.msra.mxu0 0.0
  %115 = vmatprep.subr.mxu0 0.0
  %116 = vmatpush1.msra.mxu0 0.0
  %117 = vmatprep.subr.mxu0 0.0
  %118 = vmatpush1.msra.mxu0 0.0
  %119 = vmatprep.subr.mxu0 0.0
  %120 = vmatpush1.msra.mxu0 0.0
  %121 = vmatprep.subr.mxu0 0.0
  %122 = vmatpush1.msra.mxu0 0.0
  %123 = vmatprep.subr.mxu0 0.0
  %124 = vmatpush1.msra.mxu0 0.0
  %125 = vmatprep.subr.mxu0 0.0
  %126 = vmatpush1.msra.mxu0 0.0
  %127 = vmatprep.subr.mxu0 0.0
  %128 = vmatpush1.msra.mxu0 0.0
  %129 = vmatprep.subr.mxu0 0.0
  %130 = vmatpush1.msra.mxu0 0.0
  %131 = vmatprep.subr.mxu0 0.0
  %132 = vmatpush1.msra.mxu0 0.0
  %133 = vmatprep.subr.mxu0 0.0
  %134 = vmatpush1.msra.mxu0 0.0
  %135 = vmatprep.subr.mxu0 0.0
  %136 = vmatpush1.msra.mxu0 0.0
  %137 = vmatprep.subr.mxu0 0.0
  %138 = vmatpush1.msra.mxu0 0.0
  %139 = vmatprep.subr.mxu0 0.0
  %140 = vmatpush1.msra.mxu0 0.0
  %141 = vmatprep.subr.mxu0 0.0
  %142 = vmatpush1.msra.mxu0 0.0
  %143 = vmatprep.subr.mxu0 0.0
  %144 = vmatpush1.msra.mxu0 0.0
  %145 = vmatprep.subr.mxu0 0.0
  %146 = vmatpush1.msra.mxu0 0.0
  %147 = vmatprep.subr.mxu0 0.0
  %148 = vmatpush1.msra.mxu0 0.0
  %149 = vmatprep.subr.mxu0 0.0
  %150 = vmatpush1.msra.mxu0 0.0
  %151 = vmatprep.subr.mxu0 0.0
  %152 = vmatpush1.msra.mxu0 0.0
  %153 = vmatprep.subr.mxu0 0.0
  %154 = vmatpush1.msra.mxu0 0.0
  %155 = vmatprep.subr.mxu0 0.0
  %156 = vmatpush1.msra.mxu0 0.0
  %157 = vmatprep.subr.mxu0 0.0
  %158 = vmatpush1.msra.mxu0 0.0
  %159 = vmatprep.subr.mxu0 0.0
  %160 = vmatpush1.msra.mxu0 0.0
  %161 = vmatprep.subr.mxu0 0.0
  %162 = vmatpush1.msra.mxu0 0.0
  %163 = vmatprep.subr.mxu0 0.0
  %164 = vmatpush1.msra.mxu0 0.0
  %165 = vmatprep.mubr.f32.mxu0 0.0
  %166 = vmatmul.mubr.f32.gmra.mrb[0].mxu0 %v99
  %v167 = vpop.f32.mrb[0].mxu0
  %v168 = vadd.f32 %v95, %v167
  %v169 = vpop.f32.mrb[0].mxu0
  %170 = vdwg.mxu0
  %v171 = vadd.f32 %v90, %v168
  %v172 = vxor.u32 %v171, 2147483648
  %v173 = vmul.f32 %v172, 1.442695
  %v174 = vpow.pop %v173
  %v175 = vadd.f32 %v174, 1.0
  %v176 = vrcp.pop %v175
  %v177 = vmul.f32 1.0, %v176
  %179 = vrot.lane.b32.xlu0 %v168, 64
  %v180 = vpop.permute.xlu0 %179
  %v182 = vmul.f32 %v177, %v180
  %184 = vrot.lane.b32.xlu0 %v182, 64
  %v185 = vpop.permute.xlu0 %184
  %v187 = vadd.f32 %v90, %v185
  %v188 = vtanh.pop %v187
  %v189 = vsub.f32 1.0, %v177
  %191 = vrot.lane.b32.xlu0 %v188, 96
  %v192 = vpop.permute.xlu0 %191
  %v194 = vmul.f32 %v189, %v192
  %195 = vrot.lane.b32.xlu0 %v89, 32
  %v196 = vpop.permute.xlu0 %195
  %v198 = vmul.f32 %v177, %v196
  %v199 = vadd.f32 %v194, %v198
  %v201 = vlaneseq
  %v202 = vshrl.u32 %v201, 7
  %v203 = vsub.s32 0, %v202
  %v204 = vrot.slane %v81, %v203
  %v205 = vlaneseq
  %v206 = vshrl.u32 %v205, 7
  %v207 = vsub.s32 1, %v206
  %v208 = vrot.slane %v81, %v207
  %212 = vrot.lane.b32.xlu0 %v199, 96
  %v213 = vpop.permute.xlu0 %212
  %v214 = vsel %vm97, %v213, 0
  %216 = vmatprep.subr.mxu0 %v74
  %217 = vmatpush1.msra.mxu0 %v73
  %218 = vmatprep.subr.mxu0 %v76
  %219 = vmatpush1.msra.mxu0 %v75
  %220 = vmatprep.subr.mxu0 %v78
  %221 = vmatpush1.msra.mxu0 %v77
  %222 = vmatprep.subr.mxu0 %v80
  %223 = vmatpush1.msra.mxu0 %v79
  %224 = vmatprep.subr.mxu0 0.0
  %225 = vmatpush1.msra.mxu0 0.0
  %226 = vmatprep.subr.mxu0 0.0
  %227 = vmatpush1.msra.mxu0 0.0
  %228 = vmatprep.subr.mxu0 0.0
  %229 = vmatpush1.msra.mxu0 0.0
  %230 = vmatprep.subr.mxu0 0.0
  %231 = vmatpush1.msra.mxu0 0.0
  %232 = vmatprep.subr.mxu0 0.0
  %233 = vmatpush1.msra.mxu0 0.0
  %234 = vmatprep.subr.mxu0 0.0
  %235 = vmatpush1.msra.mxu0 0.0
  %236 = vmatprep.subr.mxu0 0.0
  %237 = vmatpush1.msra.mxu0 0.0
  %238 = vmatprep.subr.mxu0 0.0
  %239 = vmatpush1.msra.mxu0 0.0
  %240 = vmatprep.subr.mxu0 0.0
  %241 = vmatpush1.msra.mxu0 0.0
  %242 = vmatprep.subr.mxu0 0.0
  %243 = vmatpush1.msra.mxu0 0.0
  %244 = vmatprep.subr.mxu0 0.0
  %245 = vmatpush1.msra.mxu0 0.0
  %246 = vmatprep.subr.mxu0 0.0
  %247 = vmatpush1.msra.mxu0 0.0
  %248 = vmatprep.subr.mxu0 0.0
  %249 = vmatpush1.msra.mxu0 0.0
  %250 = vmatprep.subr.mxu0 0.0
  %251 = vmatpush1.msra.mxu0 0.0
  %252 = vmatprep.subr.mxu0 0.0
  %253 = vmatpush1.msra.mxu0 0.0
  %254 = vmatprep.subr.mxu0 0.0
  %255 = vmatpush1.msra.mxu0 0.0
  %256 = vmatprep.subr.mxu0 0.0
  %257 = vmatpush1.msra.mxu0 0.0
  %258 = vmatprep.subr.mxu0 0.0
  %259 = vmatpush1.msra.mxu0 0.0
  %260 = vmatprep.subr.mxu0 0.0
  %261 = vmatpush1.msra.mxu0 0.0
  %262 = vmatprep.subr.mxu0 0.0
  %263 = vmatpush1.msra.mxu0 0.0
  %264 = vmatprep.subr.mxu0 0.0
  %265 = vmatpush1.msra.mxu0 0.0
  %266 = vmatprep.subr.mxu0 0.0
  %267 = vmatpush1.msra.mxu0 0.0
  %268 = vmatprep.subr.mxu0 0.0
  %269 = vmatpush1.msra.mxu0 0.0
  %270 = vmatprep.subr.mxu0 0.0
  %271 = vmatpush1.msra.mxu0 0.0
  %272 = vmatprep.subr.mxu0 0.0
  %273 = vmatpush1.msra.mxu0 0.0
  %274 = vmatprep.subr.mxu0 0.0
  %275 = vmatpush1.msra.mxu0 0.0
  %276 = vmatprep.subr.mxu0 0.0
  %277 = vmatpush1.msra.mxu0 0.0
  %278 = vmatprep.subr.mxu0 0.0
  %279 = vmatpush1.msra.mxu0 0.0
  %280 = vmatprep.mubr.f32.mxu0 0.0
  %281 = vmatmul.mubr.f32.gmra.mrb[0].mxu0 %v214
  %v282 = vpop.f32.mrb[0].mxu0
  %v283 = vadd.f32 %v204, %v282
  %v284 = vpop.f32.mrb[0].mxu0
  %v285 = vadd.f32 %v208, %v284
  %286 = vdwg.mxu0
  %287 = vst [vmem:[%s10] sm:$0xff] %v283
  %v289 = vcombine.high %v285, %v285
  %v291 = vunpack.c.l.s4 1966171168
  %v292 = vunpack.c.0.s8 %v291
  %v293 = vlaneseq
  %v294 = vshrl.u32 %v293, 7
  %v295 = vsub.s32 %v292, %v294
  %v296 = vrot.slane %v285, %v295
  %v298 = vunpack.c.l.s4 1966171168
  %v299 = vunpack.c.0.s8 %v298
  %v300 = vlaneseq
  %v301 = vshrl.u32 %v300, 7
  %v302 = vsub.s32 %v299, %v301
  %v303 = vrot.slane %v289, %v302
  %v304 = vcombine.high %v296, %v296
  %v305 = vcombine.high %v303, %v303
  %v307 = vunpack.c.l.s4 1966171168
  %v308 = vunpack.c.0.s8 %v307
  %v309 = vlaneseq
  %v310 = vshrl.u32 %v309, 7
  %v311 = vsub.s32 %v308, %v310
  %v312 = vrot.slane %v296, %v311
  %v314 = vunpack.c.l.s4 1966171168
  %v315 = vunpack.c.0.s8 %v314
  %v316 = vlaneseq
  %v317 = vshrl.u32 %v316, 7
  %v318 = vsub.s32 %v315, %v317
  %v319 = vrot.slane %v303, %v318
  %v321 = vunpack.c.l.s4 1966171168
  %v322 = vunpack.c.0.s8 %v321
  %v323 = vlaneseq
  %v324 = vshrl.u32 %v323, 7
  %v325 = vsub.s32 %v322, %v324
  %v326 = vrot.slane %v304, %v325
  %v328 = vunpack.c.l.s4 1966171168
  %v329 = vunpack.c.0.s8 %v328
  %v330 = vlaneseq
  %v331 = vshrl.u32 %v330, 7
  %v332 = vsub.s32 %v329, %v331
  %v333 = vrot.slane %v305, %v332
  %v334 = vcombine.high %v312, %v312
  %v335 = vcombine.high %v319, %v319
  %v336 = vcombine.high %v326, %v326
  %v337 = vcombine.high %v333, %v333
  %v338 = vlaneseq
  %v339 = vshrl.u32 %v338, 7
  %v340 = vsub.s32 0, %v339
  %v341 = vrot.slane %v312, %v340
  %v342 = vlaneseq
  %v343 = vshrl.u32 %v342, 7
  %v344 = vsub.s32 0, %v343
  %v345 = vrot.slane %v326, %v344
  %v346 = vlaneseq
  %v347 = vshrl.u32 %v346, 7
  %v348 = vsub.s32 0, %v347
  %v349 = vrot.slane %v334, %v348
  %v350 = vlaneseq
  %v351 = vshrl.u32 %v350, 7
  %v352 = vsub.s32 0, %v351
  %v353 = vrot.slane %v336, %v352
  %v354 = vlaneseq
  %v355 = vshrl.u32 %v354, 7
  %v356 = vsub.s32 0, %v355
  %v357 = vrot.slane %v319, %v356
  %v358 = vlaneseq
  %v359 = vshrl.u32 %v358, 7
  %v360 = vsub.s32 0, %v359
  %v361 = vrot.slane %v333, %v360
  %v362 = vlaneseq
  %v363 = vshrl.u32 %v362, 7
  %v364 = vsub.s32 0, %v363
  %v365 = vrot.slane %v335, %v364
  %v366 = vlaneseq
  %v367 = vshrl.u32 %v366, 7
  %v368 = vsub.s32 0, %v367
  %v369 = vrot.slane %v337, %v368
  %v378 = vadd.f32 %v51, %v341
  %v379 = vadd.f32 %v52, %v341
  %v380 = vadd.f32 %v53, %v345
  %v381 = vadd.f32 %v54, %v345
  %v382 = vadd.f32 %v55, %v349
  %v383 = vadd.f32 %v56, %v349
  %v384 = vadd.f32 %v57, %v353
  %v385 = vadd.f32 %v58, %v353
  %v386 = vadd.f32 %v59, %v357
  %v387 = vadd.f32 %v60, %v357
  %v388 = vadd.f32 %v61, %v361
  %v389 = vadd.f32 %v62, %v361
  %v390 = vadd.f32 %v63, %v365
  %v391 = vadd.f32 %v64, %v365
  %v392 = vadd.f32 %v65, %v369
  %v393 = vadd.f32 %v66, %v369
  %v394 = vtanh.pop %v378
  %v395 = vtanh.pop %v379
  %v396 = vtanh.pop %v380
  %v397 = vtanh.pop %v381
  %v398 = vtanh.pop %v382
  %v399 = vtanh.pop %v383
  %v400 = vtanh.pop %v384
  %v401 = vtanh.pop %v385
  %v402 = vtanh.pop %v386
  %v403 = vtanh.pop %v387
  %v404 = vtanh.pop %v388
  %v405 = vtanh.pop %v389
  %v406 = vtanh.pop %v390
  %v407 = vtanh.pop %v391
  %v408 = vtanh.pop %v392
  %v409 = vtanh.pop %v393
  %v410 = vmul.f32 %v394, %v87
  %v411 = vmul.f32 %v395, %v87
  %v412 = vmul.f32 %v396, %v87
  %v413 = vmul.f32 %v397, %v87
  %v414 = vmul.f32 %v398, %v87
  %v415 = vmul.f32 %v399, %v87
  %v416 = vmul.f32 %v400, %v87
  %v417 = vmul.f32 %v401, %v87
  %v418 = vmul.f32 %v402, %v87
  %v419 = vmul.f32 %v403, %v87
  %v420 = vmul.f32 %v404, %v87
  %v421 = vmul.f32 %v405, %v87
  %v422 = vmul.f32 %v406, %v87
  %v423 = vmul.f32 %v407, %v87
  %v424 = vmul.f32 %v408, %v87
  %v425 = vmul.f32 %v409, %v87
  %v426 = vsel %vm97, %v410, 0.0
  %427 = vadd.xlane.f32.xlu0 %v426
  %v428 = vpop.xlane.xlu0 %427
  %v429 = vsel %vm97, %v411, 0.0
  %430 = vadd.xlane.f32.xlu0 %v429
  %v431 = vpop.xlane.xlu0 %430
  %v432 = vsel %vm97, %v412, 0.0
  %433 = vadd.xlane.f32.xlu0 %v432
  %v434 = vpop.xlane.xlu0 %433
  %v435 = vsel %vm97, %v413, 0.0
  %436 = vadd.xlane.f32.xlu0 %v435
  %v437 = vpop.xlane.xlu0 %436
  %v438 = vsel %vm97, %v414, 0.0
  %439 = vadd.xlane.f32.xlu0 %v438
  %v440 = vpop.xlane.xlu0 %439
  %v441 = vsel %vm97, %v415, 0.0
  %442 = vadd.xlane.f32.xlu0 %v441
  %v443 = vpop.xlane.xlu0 %442
  %v444 = vsel %vm97, %v416, 0.0
  %445 = vadd.xlane.f32.xlu0 %v444
  %v446 = vpop.xlane.xlu0 %445
  %v447 = vsel %vm97, %v417, 0.0
  %448 = vadd.xlane.f32.xlu0 %v447
  %v449 = vpop.xlane.xlu0 %448
  %v450 = vsel %vm97, %v418, 0.0
  %451 = vadd.xlane.f32.xlu0 %v450
  %v452 = vpop.xlane.xlu0 %451
  %v453 = vsel %vm97, %v419, 0.0
  %454 = vadd.xlane.f32.xlu0 %v453
  %v455 = vpop.xlane.xlu0 %454
  %v456 = vsel %vm97, %v420, 0.0
  %457 = vadd.xlane.f32.xlu0 %v456
  %v458 = vpop.xlane.xlu0 %457
  %v459 = vsel %vm97, %v421, 0.0
  %460 = vadd.xlane.f32.xlu0 %v459
  %v461 = vpop.xlane.xlu0 %460
  %v462 = vsel %vm97, %v422, 0.0
  %463 = vadd.xlane.f32.xlu0 %v462
  %v464 = vpop.xlane.xlu0 %463
  %v465 = vsel %vm97, %v423, 0.0
  %466 = vadd.xlane.f32.xlu0 %v465
  %v467 = vpop.xlane.xlu0 %466
  %v468 = vsel %vm97, %v424, 0.0
  %469 = vadd.xlane.f32.xlu0 %v468
  %v470 = vpop.xlane.xlu0 %469
  %v471 = vsel %vm97, %v425, 0.0
  %472 = vadd.xlane.f32.xlu0 %v471
  %v473 = vpop.xlane.xlu0 %472
  %v475 = vlaneseq
  %v476 = vshrl.u32 %v475, 7
  %v477 = vsub.s32 0, %v476
  %v478 = vrot.slane %v67, %v477
  %480 = vbcast.lane.b32.xlu0 %v478, 256
  %v481 = vpop.permute.xlu0 %480
  %s483 = sor.u32 256, 8
  %484 = vbcast.lane.b32.xlu0 %v478, %s483
  %v485 = vpop.permute.xlu0 %484
  %v486 = vlaneseq
  %v487 = vshrl.u32 %v486, 7
  %v488 = vsub.s32 1, %v487
  %v489 = vrot.slane %v67, %v488
  %491 = vbcast.lane.b32.xlu0 %v489, 256
  %v492 = vpop.permute.xlu0 %491
  %s494 = sor.u32 256, 8
  %495 = vbcast.lane.b32.xlu0 %v489, %s494
  %v496 = vpop.permute.xlu0 %495
  %v497 = vlaneseq
  %v498 = vshrl.u32 %v497, 7
  %v499 = vsub.s32 2, %v498
  %v500 = vrot.slane %v67, %v499
  %502 = vbcast.lane.b32.xlu0 %v500, 256
  %v503 = vpop.permute.xlu0 %502
  %s505 = sor.u32 256, 8
  %506 = vbcast.lane.b32.xlu0 %v500, %s505
  %v507 = vpop.permute.xlu0 %506
  %v508 = vlaneseq
  %v509 = vshrl.u32 %v508, 7
  %v510 = vsub.s32 3, %v509
  %v511 = vrot.slane %v67, %v510
  %513 = vbcast.lane.b32.xlu0 %v511, 256
  %v514 = vpop.permute.xlu0 %513
  %s516 = sor.u32 256, 8
  %517 = vbcast.lane.b32.xlu0 %v511, %s516
  %v518 = vpop.permute.xlu0 %517
  %v519 = vlaneseq
  %v520 = vshrl.u32 %v519, 7
  %v521 = vsub.s32 4, %v520
  %v522 = vrot.slane %v67, %v521
  %524 = vbcast.lane.b32.xlu0 %v522, 256
  %v525 = vpop.permute.xlu0 %524
  %s527 = sor.u32 256, 8
  %528 = vbcast.lane.b32.xlu0 %v522, %s527
  %v529 = vpop.permute.xlu0 %528
  %v530 = vlaneseq
  %v531 = vshrl.u32 %v530, 7
  %v532 = vsub.s32 5, %v531
  %v533 = vrot.slane %v67, %v532
  %535 = vbcast.lane.b32.xlu0 %v533, 256
  %v536 = vpop.permute.xlu0 %535
  %s538 = sor.u32 256, 8
  %539 = vbcast.lane.b32.xlu0 %v533, %s538
  %v540 = vpop.permute.xlu0 %539
  %v541 = vlaneseq
  %v542 = vshrl.u32 %v541, 7
  %v543 = vsub.s32 6, %v542
  %v544 = vrot.slane %v67, %v543
  %546 = vbcast.lane.b32.xlu0 %v544, 256
  %v547 = vpop.permute.xlu0 %546
  %s549 = sor.u32 256, 8
  %550 = vbcast.lane.b32.xlu0 %v544, %s549
  %v551 = vpop.permute.xlu0 %550
  %v552 = vlaneseq
  %v553 = vshrl.u32 %v552, 7
  %v554 = vsub.s32 7, %v553
  %v555 = vrot.slane %v67, %v554
  %557 = vbcast.lane.b32.xlu0 %v555, 256
  %v558 = vpop.permute.xlu0 %557
  %s560 = sor.u32 256, 8
  %561 = vbcast.lane.b32.xlu0 %v555, %s560
  %v562 = vpop.permute.xlu0 %561
  %v579 = vadd.f32 %v428, %v481
  %v580 = vadd.f32 %v431, %v485
  %v581 = vadd.f32 %v434, %v492
  %v582 = vadd.f32 %v437, %v496
  %v583 = vadd.f32 %v440, %v503
  %v584 = vadd.f32 %v443, %v507
  %v585 = vadd.f32 %v446, %v514
  %v586 = vadd.f32 %v449, %v518
  %v587 = vadd.f32 %v452, %v525
  %v588 = vadd.f32 %v455, %v529
  %v589 = vadd.f32 %v458, %v536
  %v590 = vadd.f32 %v461, %v540
  %v591 = vadd.f32 %v464, %v547
  %v592 = vadd.f32 %v467, %v551
  %v593 = vadd.f32 %v470, %v558
  %v594 = vadd.f32 %v473, %v562
  %611 = vset.pattern.permute.xlu0 0
  %612 = vperm.xlu0 %611, %v579
  %v613 = vpop.permute.xlu0 %612
  %614 = vset.pattern.permute.xlu0 0
  %615 = vperm.xlu0 %614, %v580
  %v616 = vpop.permute.xlu0 %615
  %617 = vset.pattern.permute.xlu0 0
  %618 = vperm.xlu0 %617, %v581
  %v619 = vpop.permute.xlu0 %618
  %620 = vset.pattern.permute.xlu0 0
  %621 = vperm.xlu0 %620, %v582
  %v622 = vpop.permute.xlu0 %621
  %623 = vset.pattern.permute.xlu0 0
  %624 = vperm.xlu0 %623, %v583
  %v625 = vpop.permute.xlu0 %624
  %626 = vset.pattern.permute.xlu0 0
  %627 = vperm.xlu0 %626, %v584
  %v628 = vpop.permute.xlu0 %627
  %629 = vset.pattern.permute.xlu0 0
  %630 = vperm.xlu0 %629, %v585
  %v631 = vpop.permute.xlu0 %630
  %632 = vset.pattern.permute.xlu0 0
  %633 = vperm.xlu0 %632, %v586
  %v634 = vpop.permute.xlu0 %633
  %635 = vset.pattern.permute.xlu0 0
  %636 = vperm.xlu0 %635, %v587
  %v637 = vpop.permute.xlu0 %636
  %638 = vset.pattern.permute.xlu0 0
  %639 = vperm.xlu0 %638, %v588
  %v640 = vpop.permute.xlu0 %639
  %641 = vset.pattern.permute.xlu0 0
  %642 = vperm.xlu0 %641, %v589
  %v643 = vpop.permute.xlu0 %642
  %644 = vset.pattern.permute.xlu0 0
  %645 = vperm.xlu0 %644, %v590
  %v646 = vpop.permute.xlu0 %645
  %647 = vset.pattern.permute.xlu0 0
  %648 = vperm.xlu0 %647, %v591
  %v649 = vpop.permute.xlu0 %648
  %650 = vset.pattern.permute.xlu0 0
  %651 = vperm.xlu0 %650, %v592
  %v652 = vpop.permute.xlu0 %651
  %653 = vset.pattern.permute.xlu0 0
  %654 = vperm.xlu0 %653, %v593
  %v655 = vpop.permute.xlu0 %654
  %656 = vset.pattern.permute.xlu0 0
  %657 = vperm.xlu0 %656, %v594
  %v658 = vpop.permute.xlu0 %657
  %v659 = vlaneseq
  %v660 = vand.u32 %v659, 127
  %v661 = vlaneseq
  %v662 = vshrl.u32 %v661, 7
  %v663 = vsub.s32 %v660, %v662
  %v664 = vrot.slane %v613, %v663
  %v665 = vadd.s32 %v660, 4294967288
  %v666 = vlaneseq
  %v667 = vshrl.u32 %v666, 7
  %v668 = vsub.s32 %v665, %v667
  %v669 = vrot.slane %v616, %v668
  %vm670 = vcmask 130112
  %v671 = vsel %vm670, %v669, %v664
  %v672 = vlaneseq
  %v673 = vshrl.u32 %v672, 7
  %v674 = vsub.s32 %v660, %v673
  %v675 = vrot.slane %v619, %v674
  %v676 = vlaneseq
  %v677 = vshrl.u32 %v676, 7
  %v678 = vsub.s32 %v665, %v677
  %v679 = vrot.slane %v622, %v678
  %v680 = vsel %vm670, %v679, %v675
  %v681 = vlaneseq
  %v682 = vshrl.u32 %v681, 7
  %v683 = vsub.s32 %v660, %v682
  %v684 = vrot.slane %v625, %v683
  %v685 = vlaneseq
  %v686 = vshrl.u32 %v685, 7
  %v687 = vsub.s32 %v665, %v686
  %v688 = vrot.slane %v628, %v687
  %v689 = vsel %vm670, %v688, %v684
  %v690 = vlaneseq
  %v691 = vshrl.u32 %v690, 7
  %v692 = vsub.s32 %v660, %v691
  %v693 = vrot.slane %v631, %v692
  %v694 = vlaneseq
  %v695 = vshrl.u32 %v694, 7
  %v696 = vsub.s32 %v665, %v695
  %v697 = vrot.slane %v634, %v696
  %v698 = vsel %vm670, %v697, %v693
  %v699 = vlaneseq
  %v700 = vshrl.u32 %v699, 7
  %v701 = vsub.s32 %v660, %v700
  %v702 = vrot.slane %v637, %v701
  %v703 = vlaneseq
  %v704 = vshrl.u32 %v703, 7
  %v705 = vsub.s32 %v665, %v704
  %v706 = vrot.slane %v640, %v705
  %v707 = vsel %vm670, %v706, %v702
  %v708 = vlaneseq
  %v709 = vshrl.u32 %v708, 7
  %v710 = vsub.s32 %v660, %v709
  %v711 = vrot.slane %v643, %v710
  %v712 = vlaneseq
  %v713 = vshrl.u32 %v712, 7
  %v714 = vsub.s32 %v665, %v713
  %v715 = vrot.slane %v646, %v714
  %v716 = vsel %vm670, %v715, %v711
  %v717 = vlaneseq
  %v718 = vshrl.u32 %v717, 7
  %v719 = vsub.s32 %v660, %v718
  %v720 = vrot.slane %v649, %v719
  %v721 = vlaneseq
  %v722 = vshrl.u32 %v721, 7
  %v723 = vsub.s32 %v665, %v722
  %v724 = vrot.slane %v652, %v723
  %v725 = vsel %vm670, %v724, %v720
  %v726 = vlaneseq
  %v727 = vshrl.u32 %v726, 7
  %v728 = vsub.s32 %v660, %v727
  %v729 = vrot.slane %v655, %v728
  %v730 = vlaneseq
  %v731 = vshrl.u32 %v730, 7
  %v732 = vsub.s32 %v665, %v731
  %v733 = vrot.slane %v658, %v732
  %v734 = vsel %vm670, %v733, %v729
  %vm735 = vcmask 1041409
  %v736 = vsel %vm735, %v680, %v671
  %vm737 = vcmask 1042434
  %v738 = vsel %vm737, %v689, %v736
  %vm739 = vcmask 1043459
  %v740 = vsel %vm739, %v698, %v738
  %vm741 = vcmask 1044484
  %v742 = vsel %vm741, %v707, %v740
  %vm743 = vcmask 1045509
  %v744 = vsel %vm743, %v716, %v742
  %vm745 = vcmask 1046534
  %v746 = vsel %vm745, %v725, %v744
  %vm747 = vcmask 1047559
  %v748 = vsel %vm747, %v734, %v746
  %vm750 = vcmask 130048
  %v751 = vsel %vm750, %v748, -inf
  %752 = vmax.xlane.f32.xlu0 %v751
  %v753 = vpop.xlane.xlu0 %752
  %v755 = vlaneseq
  %v756 = vshrl.u32 %v755, 7
  %v757 = vsub.s32 0, %v756
  %v758 = vrot.slane %v753, %v757
  %v759 = vlaneseq
  %v760 = vshrl.u32 %v759, 7
  %v761 = vsub.s32 1, %v760
  %v762 = vrot.slane %v753, %v761
  %v763 = vlaneseq
  %v764 = vshrl.u32 %v763, 7
  %v765 = vsub.s32 2, %v764
  %v766 = vrot.slane %v753, %v765
  %v767 = vlaneseq
  %v768 = vshrl.u32 %v767, 7
  %v769 = vsub.s32 3, %v768
  %v770 = vrot.slane %v753, %v769
  %v771 = vlaneseq
  %v772 = vshrl.u32 %v771, 7
  %v773 = vsub.s32 4, %v772
  %v774 = vrot.slane %v753, %v773
  %v775 = vlaneseq
  %v776 = vshrl.u32 %v775, 7
  %v777 = vsub.s32 5, %v776
  %v778 = vrot.slane %v753, %v777
  %v779 = vlaneseq
  %v780 = vshrl.u32 %v779, 7
  %v781 = vsub.s32 6, %v780
  %v782 = vrot.slane %v753, %v781
  %v783 = vlaneseq
  %v784 = vshrl.u32 %v783, 7
  %v785 = vsub.s32 7, %v784
  %v786 = vrot.slane %v753, %v785
  %v795 = vsub.f32 %v579, %v758
  %v796 = vsub.f32 %v580, %v758
  %v797 = vsub.f32 %v581, %v762
  %v798 = vsub.f32 %v582, %v762
  %v799 = vsub.f32 %v583, %v766
  %v800 = vsub.f32 %v584, %v766
  %v801 = vsub.f32 %v585, %v770
  %v802 = vsub.f32 %v586, %v770
  %v803 = vsub.f32 %v587, %v774
  %v804 = vsub.f32 %v588, %v774
  %v805 = vsub.f32 %v589, %v778
  %v806 = vsub.f32 %v590, %v778
  %v807 = vsub.f32 %v591, %v782
  %v808 = vsub.f32 %v592, %v782
  %v809 = vsub.f32 %v593, %v786
  %v810 = vsub.f32 %v594, %v786
  %v811 = vmul.f32 %v795, 1.442695
  %v812 = vpow.pop %v811
  %v813 = vmul.f32 %v796, 1.442695
  %v814 = vpow.pop %v813
  %v815 = vmul.f32 %v797, 1.442695
  %v816 = vpow.pop %v815
  %v817 = vmul.f32 %v798, 1.442695
  %v818 = vpow.pop %v817
  %v819 = vmul.f32 %v799, 1.442695
  %v820 = vpow.pop %v819
  %v821 = vmul.f32 %v800, 1.442695
  %v822 = vpow.pop %v821
  %v823 = vmul.f32 %v801, 1.442695
  %v824 = vpow.pop %v823
  %v825 = vmul.f32 %v802, 1.442695
  %v826 = vpow.pop %v825
  %v827 = vmul.f32 %v803, 1.442695
  %v828 = vpow.pop %v827
  %v829 = vmul.f32 %v804, 1.442695
  %v830 = vpow.pop %v829
  %v831 = vmul.f32 %v805, 1.442695
  %v832 = vpow.pop %v831
  %v833 = vmul.f32 %v806, 1.442695
  %v834 = vpow.pop %v833
  %v835 = vmul.f32 %v807, 1.442695
  %v836 = vpow.pop %v835
  %v837 = vmul.f32 %v808, 1.442695
  %v838 = vpow.pop %v837
  %v839 = vmul.f32 %v809, 1.442695
  %v840 = vpow.pop %v839
  %v841 = vmul.f32 %v810, 1.442695
  %v842 = vpow.pop %v841
  %859 = vset.pattern.permute.xlu0 0
  %860 = vperm.xlu0 %859, %v812
  %v861 = vpop.permute.xlu0 %860
  %862 = vset.pattern.permute.xlu0 0
  %863 = vperm.xlu0 %862, %v814
  %v864 = vpop.permute.xlu0 %863
  %865 = vset.pattern.permute.xlu0 0
  %866 = vperm.xlu0 %865, %v816
  %v867 = vpop.permute.xlu0 %866
  %868 = vset.pattern.permute.xlu0 0
  %869 = vperm.xlu0 %868, %v818
  %v870 = vpop.permute.xlu0 %869
  %871 = vset.pattern.permute.xlu0 0
  %872 = vperm.xlu0 %871, %v820
  %v873 = vpop.permute.xlu0 %872
  %874 = vset.pattern.permute.xlu0 0
  %875 = vperm.xlu0 %874, %v822
  %v876 = vpop.permute.xlu0 %875
  %877 = vset.pattern.permute.xlu0 0
  %878 = vperm.xlu0 %877, %v824
  %v879 = vpop.permute.xlu0 %878
  %880 = vset.pattern.permute.xlu0 0
  %881 = vperm.xlu0 %880, %v826
  %v882 = vpop.permute.xlu0 %881
  %883 = vset.pattern.permute.xlu0 0
  %884 = vperm.xlu0 %883, %v828
  %v885 = vpop.permute.xlu0 %884
  %886 = vset.pattern.permute.xlu0 0
  %887 = vperm.xlu0 %886, %v830
  %v888 = vpop.permute.xlu0 %887
  %889 = vset.pattern.permute.xlu0 0
  %890 = vperm.xlu0 %889, %v832
  %v891 = vpop.permute.xlu0 %890
  %892 = vset.pattern.permute.xlu0 0
  %893 = vperm.xlu0 %892, %v834
  %v894 = vpop.permute.xlu0 %893
  %895 = vset.pattern.permute.xlu0 0
  %896 = vperm.xlu0 %895, %v836
  %v897 = vpop.permute.xlu0 %896
  %898 = vset.pattern.permute.xlu0 0
  %899 = vperm.xlu0 %898, %v838
  %v900 = vpop.permute.xlu0 %899
  %901 = vset.pattern.permute.xlu0 0
  %902 = vperm.xlu0 %901, %v840
  %v903 = vpop.permute.xlu0 %902
  %904 = vset.pattern.permute.xlu0 0
  %905 = vperm.xlu0 %904, %v842
  %v906 = vpop.permute.xlu0 %905
  %v907 = vlaneseq
  %v908 = vshrl.u32 %v907, 7
  %v909 = vsub.s32 %v660, %v908
  %v910 = vrot.slane %v861, %v909
  %v911 = vlaneseq
  %v912 = vshrl.u32 %v911, 7
  %v913 = vsub.s32 %v665, %v912
  %v914 = vrot.slane %v864, %v913
  %v915 = vsel %vm670, %v914, %v910
  %v916 = vlaneseq
  %v917 = vshrl.u32 %v916, 7
  %v918 = vsub.s32 %v660, %v917
  %v919 = vrot.slane %v867, %v918
  %v920 = vlaneseq
  %v921 = vshrl.u32 %v920, 7
  %v922 = vsub.s32 %v665, %v921
  %v923 = vrot.slane %v870, %v922
  %v924 = vsel %vm670, %v923, %v919
  %v925 = vlaneseq
  %v926 = vshrl.u32 %v925, 7
  %v927 = vsub.s32 %v660, %v926
  %v928 = vrot.slane %v873, %v927
  %v929 = vlaneseq
  %v930 = vshrl.u32 %v929, 7
  %v931 = vsub.s32 %v665, %v930
  %v932 = vrot.slane %v876, %v931
  %v933 = vsel %vm670, %v932, %v928
  %v934 = vlaneseq
  %v935 = vshrl.u32 %v934, 7
  %v936 = vsub.s32 %v660, %v935
  %v937 = vrot.slane %v879, %v936
  %v938 = vlaneseq
  %v939 = vshrl.u32 %v938, 7
  %v940 = vsub.s32 %v665, %v939
  %v941 = vrot.slane %v882, %v940
  %v942 = vsel %vm670, %v941, %v937
  %v943 = vlaneseq
  %v944 = vshrl.u32 %v943, 7
  %v945 = vsub.s32 %v660, %v944
  %v946 = vrot.slane %v885, %v945
  %v947 = vlaneseq
  %v948 = vshrl.u32 %v947, 7
  %v949 = vsub.s32 %v665, %v948
  %v950 = vrot.slane %v888, %v949
  %v951 = vsel %vm670, %v950, %v946
  %v952 = vlaneseq
  %v953 = vshrl.u32 %v952, 7
  %v954 = vsub.s32 %v660, %v953
  %v955 = vrot.slane %v891, %v954
  %v956 = vlaneseq
  %v957 = vshrl.u32 %v956, 7
  %v958 = vsub.s32 %v665, %v957
  %v959 = vrot.slane %v894, %v958
  %v960 = vsel %vm670, %v959, %v955
  %v961 = vlaneseq
  %v962 = vshrl.u32 %v961, 7
  %v963 = vsub.s32 %v660, %v962
  %v964 = vrot.slane %v897, %v963
  %v965 = vlaneseq
  %v966 = vshrl.u32 %v965, 7
  %v967 = vsub.s32 %v665, %v966
  %v968 = vrot.slane %v900, %v967
  %v969 = vsel %vm670, %v968, %v964
  %v970 = vlaneseq
  %v971 = vshrl.u32 %v970, 7
  %v972 = vsub.s32 %v660, %v971
  %v973 = vrot.slane %v903, %v972
  %v974 = vlaneseq
  %v975 = vshrl.u32 %v974, 7
  %v976 = vsub.s32 %v665, %v975
  %v977 = vrot.slane %v906, %v976
  %v978 = vsel %vm670, %v977, %v973
  %v979 = vsel %vm735, %v924, %v915
  %v980 = vsel %vm737, %v933, %v979
  %v981 = vsel %vm739, %v942, %v980
  %v982 = vsel %vm741, %v951, %v981
  %v983 = vsel %vm743, %v960, %v982
  %v984 = vsel %vm745, %v969, %v983
  %v985 = vsel %vm747, %v978, %v984
  %v987 = vsel %vm750, %v985, 0.0
  %988 = vadd.xlane.f32.xlu0 %v987
  %v989 = vpop.xlane.xlu0 %988
  %v990 = vrcp.pop %v989
  %v992 = vlaneseq
  %v993 = vshrl.u32 %v992, 7
  %v994 = vsub.s32 0, %v993
  %v995 = vrot.slane %v990, %v994
  %v996 = vlaneseq
  %v997 = vshrl.u32 %v996, 7
  %v998 = vsub.s32 1, %v997
  %v999 = vrot.slane %v990, %v998
  %v1000 = vlaneseq
  %v1001 = vshrl.u32 %v1000, 7
  %v1002 = vsub.s32 2, %v1001
  %v1003 = vrot.slane %v990, %v1002
  %v1004 = vlaneseq
  %v1005 = vshrl.u32 %v1004, 7
  %v1006 = vsub.s32 3, %v1005
  %v1007 = vrot.slane %v990, %v1006
  %v1008 = vlaneseq
  %v1009 = vshrl.u32 %v1008, 7
  %v1010 = vsub.s32 4, %v1009
  %v1011 = vrot.slane %v990, %v1010
  %v1012 = vlaneseq
  %v1013 = vshrl.u32 %v1012, 7
  %v1014 = vsub.s32 5, %v1013
  %v1015 = vrot.slane %v990, %v1014
  %v1016 = vlaneseq
  %v1017 = vshrl.u32 %v1016, 7
  %v1018 = vsub.s32 6, %v1017
  %v1019 = vrot.slane %v990, %v1018
  %v1020 = vlaneseq
  %v1021 = vshrl.u32 %v1020, 7
  %v1022 = vsub.s32 7, %v1021
  %v1023 = vrot.slane %v990, %v1022
  %v1032 = vmul.f32 %v812, %v995
  %v1033 = vmul.f32 %v814, %v995
  %v1034 = vmul.f32 %v816, %v999
  %v1035 = vmul.f32 %v818, %v999
  %v1036 = vmul.f32 %v820, %v1003
  %v1037 = vmul.f32 %v822, %v1003
  %v1038 = vmul.f32 %v824, %v1007
  %v1039 = vmul.f32 %v826, %v1007
  %v1040 = vmul.f32 %v828, %v1011
  %v1041 = vmul.f32 %v830, %v1011
  %v1042 = vmul.f32 %v832, %v1015
  %v1043 = vmul.f32 %v834, %v1015
  %v1044 = vmul.f32 %v836, %v1019
  %v1045 = vmul.f32 %v838, %v1019
  %v1046 = vmul.f32 %v840, %v1023
  %v1047 = vmul.f32 %v842, %v1023
  %1049 = vset.pattern.permute.xlu0 0
  %1050 = vperm.xlu0 %1049, %v1032
  %v1051 = vpop.permute.xlu0 %1050
  %1054 = vset.pattern.permute.xlu0 0
  %1055 = vperm.xlu0 %1054, %v1033
  %v1056 = vpop.permute.xlu0 %1055
  %1059 = vset.pattern.permute.xlu0 0
  %1060 = vperm.xlu0 %1059, %v1034
  %v1061 = vpop.permute.xlu0 %1060
  %1064 = vset.pattern.permute.xlu0 0
  %1065 = vperm.xlu0 %1064, %v1035
  %v1066 = vpop.permute.xlu0 %1065
  %1069 = vset.pattern.permute.xlu0 0
  %1070 = vperm.xlu0 %1069, %v1036
  %v1071 = vpop.permute.xlu0 %1070
  %1074 = vset.pattern.permute.xlu0 0
  %1075 = vperm.xlu0 %1074, %v1037
  %v1076 = vpop.permute.xlu0 %1075
  %1079 = vset.pattern.permute.xlu0 0
  %1080 = vperm.xlu0 %1079, %v1038
  %v1081 = vpop.permute.xlu0 %1080
  %1084 = vset.pattern.permute.xlu0 0
  %1085 = vperm.xlu0 %1084, %v1039
  %v1086 = vpop.permute.xlu0 %1085
  %1089 = vset.pattern.permute.xlu0 0
  %1090 = vperm.xlu0 %1089, %v1040
  %v1091 = vpop.permute.xlu0 %1090
  %1094 = vset.pattern.permute.xlu0 0
  %1095 = vperm.xlu0 %1094, %v1041
  %v1096 = vpop.permute.xlu0 %1095
  %1099 = vset.pattern.permute.xlu0 0
  %1100 = vperm.xlu0 %1099, %v1042
  %v1101 = vpop.permute.xlu0 %1100
  %1104 = vset.pattern.permute.xlu0 0
  %1105 = vperm.xlu0 %1104, %v1043
  %v1106 = vpop.permute.xlu0 %1105
  %1109 = vset.pattern.permute.xlu0 0
  %1110 = vperm.xlu0 %1109, %v1044
  %v1111 = vpop.permute.xlu0 %1110
  %1114 = vset.pattern.permute.xlu0 0
  %1115 = vperm.xlu0 %1114, %v1045
  %v1116 = vpop.permute.xlu0 %1115
  %1119 = vset.pattern.permute.xlu0 0
  %1120 = vperm.xlu0 %1119, %v1046
  %v1121 = vpop.permute.xlu0 %1120
  %1124 = vset.pattern.permute.xlu0 0
  %1125 = vperm.xlu0 %1124, %v1047
  %v1126 = vpop.permute.xlu0 %1125
  %v1128 = vmul.f32 %v1051, %v35
  %v1129 = vmul.f32 %v1056, %v36
  %v1130 = vmul.f32 %v1061, %v37
  %v1131 = vmul.f32 %v1066, %v38
  %v1132 = vmul.f32 %v1071, %v39
  %v1133 = vmul.f32 %v1076, %v40
  %v1134 = vmul.f32 %v1081, %v41
  %v1135 = vmul.f32 %v1086, %v42
  %v1136 = vmul.f32 %v1091, %v43
  %v1137 = vmul.f32 %v1096, %v44
  %v1138 = vmul.f32 %v1101, %v45
  %v1139 = vmul.f32 %v1106, %v46
  %v1140 = vmul.f32 %v1111, %v47
  %v1141 = vmul.f32 %v1116, %v48
  %v1142 = vmul.f32 %v1121, %v49
  %v1143 = vmul.f32 %v1126, %v50
  %v1144 = vsel %vm97, %v1128, 0.0
  %v1145 = vsel %vm97, %v1129, 0.0
  %v1146 = vadd.f32 %v1144, %v1145
  %v1147 = vrot.slane %v1146, 4
  %v1148 = vadd.f32 %v1146, %v1147
  %v1149 = vrot.slane %v1148, 2
  %v1150 = vadd.f32 %v1148, %v1149
  %v1151 = vrot.slane %v1150, 1
  %v1152 = vadd.f32 %v1150, %v1151
  %v1153 = vsel %vm97, %v1130, 0.0
  %v1154 = vsel %vm97, %v1131, 0.0
  %v1155 = vadd.f32 %v1153, %v1154
  %v1156 = vrot.slane %v1155, 4
  %v1157 = vadd.f32 %v1155, %v1156
  %v1158 = vrot.slane %v1157, 2
  %v1159 = vadd.f32 %v1157, %v1158
  %v1160 = vrot.slane %v1159, 1
  %v1161 = vadd.f32 %v1159, %v1160
  %v1162 = vsel %vm97, %v1132, 0.0
  %v1163 = vsel %vm97, %v1133, 0.0
  %v1164 = vadd.f32 %v1162, %v1163
  %v1165 = vrot.slane %v1164, 4
  %v1166 = vadd.f32 %v1164, %v1165
  %v1167 = vrot.slane %v1166, 2
  %v1168 = vadd.f32 %v1166, %v1167
  %v1169 = vrot.slane %v1168, 1
  %v1170 = vadd.f32 %v1168, %v1169
  %v1171 = vsel %vm97, %v1134, 0.0
  %v1172 = vsel %vm97, %v1135, 0.0
  %v1173 = vadd.f32 %v1171, %v1172
  %v1174 = vrot.slane %v1173, 4
  %v1175 = vadd.f32 %v1173, %v1174
  %v1176 = vrot.slane %v1175, 2
  %v1177 = vadd.f32 %v1175, %v1176
  %v1178 = vrot.slane %v1177, 1
  %v1179 = vadd.f32 %v1177, %v1178
  %v1180 = vsel %vm97, %v1136, 0.0
  %v1181 = vsel %vm97, %v1137, 0.0
  %v1182 = vadd.f32 %v1180, %v1181
  %v1183 = vrot.slane %v1182, 4
  %v1184 = vadd.f32 %v1182, %v1183
  %v1185 = vrot.slane %v1184, 2
  %v1186 = vadd.f32 %v1184, %v1185
  %v1187 = vrot.slane %v1186, 1
  %v1188 = vadd.f32 %v1186, %v1187
  %v1189 = vsel %vm97, %v1138, 0.0
  %v1190 = vsel %vm97, %v1139, 0.0
  %v1191 = vadd.f32 %v1189, %v1190
  %v1192 = vrot.slane %v1191, 4
  %v1193 = vadd.f32 %v1191, %v1192
  %v1194 = vrot.slane %v1193, 2
  %v1195 = vadd.f32 %v1193, %v1194
  %v1196 = vrot.slane %v1195, 1
  %v1197 = vadd.f32 %v1195, %v1196
  %v1198 = vsel %vm97, %v1140, 0.0
  %v1199 = vsel %vm97, %v1141, 0.0
  %v1200 = vadd.f32 %v1198, %v1199
  %v1201 = vrot.slane %v1200, 4
  %v1202 = vadd.f32 %v1200, %v1201
  %v1203 = vrot.slane %v1202, 2
  %v1204 = vadd.f32 %v1202, %v1203
  %v1205 = vrot.slane %v1204, 1
  %v1206 = vadd.f32 %v1204, %v1205
  %v1207 = vsel %vm97, %v1142, 0.0
  %v1208 = vsel %vm97, %v1143, 0.0
  %v1209 = vadd.f32 %v1207, %v1208
  %v1210 = vrot.slane %v1209, 4
  %v1211 = vadd.f32 %v1209, %v1210
  %v1212 = vrot.slane %v1211, 2
  %v1213 = vadd.f32 %v1211, %v1212
  %v1214 = vrot.slane %v1213, 1
  %v1215 = vadd.f32 %v1213, %v1214
  %v1224 = vsel %vm735, %v1161, %v1152
  %v1225 = vsel %vm737, %v1170, %v1224
  %v1226 = vsel %vm739, %v1179, %v1225
  %v1227 = vsel %vm741, %v1188, %v1226
  %v1228 = vsel %vm743, %v1197, %v1227
  %v1229 = vsel %vm745, %v1206, %v1228
  %v1230 = vsel %vm747, %v1215, %v1229
  %1231 = vrot.lane.b32.xlu0 %v1230, 32
  %v1232 = vpop.permute.xlu0 %1231
  %v1234 = vadd.f32 %v199, %v1232
  %s1235 = scalar_lea.vmem %s0, 8
  %v1236 = vld [vmem:[%s1235] sm:$0xff]
  %1238 = vrot.lane.b32.xlu0 %v1234, 96
  %v1239 = vpop.permute.xlu0 %1238
  %v1240 = vsel %vm97, %v1239, 0
  %1242 = vmatprep.subr.mxu0 0.0
  %1243 = vmatpush1.msra.mxu0 %v68
  %1244 = vmatprep.subr.mxu0 0.0
  %1245 = vmatpush1.msra.mxu0 %v69
  %1246 = vmatprep.subr.mxu0 0.0
  %1247 = vmatpush1.msra.mxu0 %v70
  %1248 = vmatprep.subr.mxu0 0.0
  %1249 = vmatpush1.msra.mxu0 %v71
  %1250 = vmatprep.subr.mxu0 0.0
  %1251 = vmatpush1.msra.mxu0 0.0
  %1252 = vmatprep.subr.mxu0 0.0
  %1253 = vmatpush1.msra.mxu0 0.0
  %1254 = vmatprep.subr.mxu0 0.0
  %1255 = vmatpush1.msra.mxu0 0.0
  %1256 = vmatprep.subr.mxu0 0.0
  %1257 = vmatpush1.msra.mxu0 0.0
  %1258 = vmatprep.subr.mxu0 0.0
  %1259 = vmatpush1.msra.mxu0 0.0
  %1260 = vmatprep.subr.mxu0 0.0
  %1261 = vmatpush1.msra.mxu0 0.0
  %1262 = vmatprep.subr.mxu0 0.0
  %1263 = vmatpush1.msra.mxu0 0.0
  %1264 = vmatprep.subr.mxu0 0.0
  %1265 = vmatpush1.msra.mxu0 0.0
  %1266 = vmatprep.subr.mxu0 0.0
  %1267 = vmatpush1.msra.mxu0 0.0
  %1268 = vmatprep.subr.mxu0 0.0
  %1269 = vmatpush1.msra.mxu0 0.0
  %1270 = vmatprep.subr.mxu0 0.0
  %1271 = vmatpush1.msra.mxu0 0.0
  %1272 = vmatprep.subr.mxu0 0.0
  %1273 = vmatpush1.msra.mxu0 0.0
  %1274 = vmatprep.subr.mxu0 0.0
  %1275 = vmatpush1.msra.mxu0 0.0
  %1276 = vmatprep.subr.mxu0 0.0
  %1277 = vmatpush1.msra.mxu0 0.0
  %1278 = vmatprep.subr.mxu0 0.0
  %1279 = vmatpush1.msra.mxu0 0.0
  %1280 = vmatprep.subr.mxu0 0.0
  %1281 = vmatpush1.msra.mxu0 0.0
  %1282 = vmatprep.subr.mxu0 0.0
  %1283 = vmatpush1.msra.mxu0 0.0
  %1284 = vmatprep.subr.mxu0 0.0
  %1285 = vmatpush1.msra.mxu0 0.0
  %1286 = vmatprep.subr.mxu0 0.0
  %1287 = vmatpush1.msra.mxu0 0.0
  %1288 = vmatprep.subr.mxu0 0.0
  %1289 = vmatpush1.msra.mxu0 0.0
  %1290 = vmatprep.subr.mxu0 0.0
  %1291 = vmatpush1.msra.mxu0 0.0
  %1292 = vmatprep.subr.mxu0 0.0
  %1293 = vmatpush1.msra.mxu0 0.0
  %1294 = vmatprep.subr.mxu0 0.0
  %1295 = vmatpush1.msra.mxu0 0.0
  %1296 = vmatprep.subr.mxu0 0.0
  %1297 = vmatpush1.msra.mxu0 0.0
  %1298 = vmatprep.subr.mxu0 0.0
  %1299 = vmatpush1.msra.mxu0 0.0
  %1300 = vmatprep.subr.mxu0 0.0
  %1301 = vmatpush1.msra.mxu0 0.0
  %1302 = vmatprep.subr.mxu0 0.0
  %1303 = vmatpush1.msra.mxu0 0.0
  %1304 = vmatprep.subr.mxu0 0.0
  %1305 = vmatpush1.msra.mxu0 0.0
  %1306 = vmatprep.mubr.f32.mxu0 0.0
  %1307 = vmatmul.mubr.f32.gmra.mrb[0].mxu0 %v1240
  %v1308 = vpop.f32.mrb[0].mxu0
  %v1309 = vadd.f32 %v95, %v1308
  %v1310 = vpop.f32.mrb[0].mxu0
  %1311 = vdwg.mxu0
  %v1312 = vadd.f32 %v1236, %v1309
  %v1313 = vxor.u32 %v1312, 2147483648
  %v1314 = vmul.f32 %v1313, 1.442695
  %v1315 = vpow.pop %v1314
  %v1316 = vadd.f32 %v1315, 1.0
  %v1317 = vrcp.pop %v1316
  %v1318 = vmul.f32 1.0, %v1317
  %1320 = vrot.lane.b32.xlu0 %v1309, 64
  %v1321 = vpop.permute.xlu0 %1320
  %v1323 = vmul.f32 %v1318, %v1321
  %1325 = vrot.lane.b32.xlu0 %v1323, 64
  %v1326 = vpop.permute.xlu0 %1325
  %v1328 = vadd.f32 %v1236, %v1326
  %v1329 = vtanh.pop %v1328
  %v1330 = vsub.f32 1.0, %v1318
  %1332 = vrot.lane.b32.xlu0 %v1329, 96
  %v1333 = vpop.permute.xlu0 %1332
  %v1335 = vmul.f32 %v1330, %v1333
  %v1336 = vmul.f32 %v1318, %v1234
  %v1337 = vadd.f32 %v1335, %v1336
  %1339 = vrot.lane.b32.xlu0 %v1337, 96
  %v1340 = vpop.permute.xlu0 %1339
  %v1341 = vsel %vm97, %v1340, 0
  %1343 = vmatprep.subr.mxu0 %v74
  %1344 = vmatpush1.msra.mxu0 %v73
  %1345 = vmatprep.subr.mxu0 %v76
  %1346 = vmatpush1.msra.mxu0 %v75
  %1347 = vmatprep.subr.mxu0 %v78
  %1348 = vmatpush1.msra.mxu0 %v77
  %1349 = vmatprep.subr.mxu0 %v80
  %1350 = vmatpush1.msra.mxu0 %v79
  %1351 = vmatprep.subr.mxu0 0.0
  %1352 = vmatpush1.msra.mxu0 0.0
  %1353 = vmatprep.subr.mxu0 0.0
  %1354 = vmatpush1.msra.mxu0 0.0
  %1355 = vmatprep.subr.mxu0 0.0
  %1356 = vmatpush1.msra.mxu0 0.0
  %1357 = vmatprep.subr.mxu0 0.0
  %1358 = vmatpush1.msra.mxu0 0.0
  %1359 = vmatprep.subr.mxu0 0.0
  %1360 = vmatpush1.msra.mxu0 0.0
  %1361 = vmatprep.subr.mxu0 0.0
  %1362 = vmatpush1.msra.mxu0 0.0
  %1363 = vmatprep.subr.mxu0 0.0
  %1364 = vmatpush1.msra.mxu0 0.0
  %1365 = vmatprep.subr.mxu0 0.0
  %1366 = vmatpush1.msra.mxu0 0.0
  %1367 = vmatprep.subr.mxu0 0.0
  %1368 = vmatpush1.msra.mxu0 0.0
  %1369 = vmatprep.subr.mxu0 0.0
  %1370 = vmatpush1.msra.mxu0 0.0
  %1371 = vmatprep.subr.mxu0 0.0
  %1372 = vmatpush1.msra.mxu0 0.0
  %1373 = vmatprep.subr.mxu0 0.0
  %1374 = vmatpush1.msra.mxu0 0.0
  %1375 = vmatprep.subr.mxu0 0.0
  %1376 = vmatpush1.msra.mxu0 0.0
  %1377 = vmatprep.subr.mxu0 0.0
  %1378 = vmatpush1.msra.mxu0 0.0
  %1379 = vmatprep.subr.mxu0 0.0
  %1380 = vmatpush1.msra.mxu0 0.0
  %1381 = vmatprep.subr.mxu0 0.0
  %1382 = vmatpush1.msra.mxu0 0.0
  %1383 = vmatprep.subr.mxu0 0.0
  %1384 = vmatpush1.msra.mxu0 0.0
  %1385 = vmatprep.subr.mxu0 0.0
  %1386 = vmatpush1.msra.mxu0 0.0
  %1387 = vmatprep.subr.mxu0 0.0
  %1388 = vmatpush1.msra.mxu0 0.0
  %1389 = vmatprep.subr.mxu0 0.0
  %1390 = vmatpush1.msra.mxu0 0.0
  %1391 = vmatprep.subr.mxu0 0.0
  %1392 = vmatpush1.msra.mxu0 0.0
  %1393 = vmatprep.subr.mxu0 0.0
  %1394 = vmatpush1.msra.mxu0 0.0
  %1395 = vmatprep.subr.mxu0 0.0
  %1396 = vmatpush1.msra.mxu0 0.0
  %1397 = vmatprep.subr.mxu0 0.0
  %1398 = vmatpush1.msra.mxu0 0.0
  %1399 = vmatprep.subr.mxu0 0.0
  %1400 = vmatpush1.msra.mxu0 0.0
  %1401 = vmatprep.subr.mxu0 0.0
  %1402 = vmatpush1.msra.mxu0 0.0
  %1403 = vmatprep.subr.mxu0 0.0
  %1404 = vmatpush1.msra.mxu0 0.0
  %1405 = vmatprep.subr.mxu0 0.0
  %1406 = vmatpush1.msra.mxu0 0.0
  %1407 = vmatprep.mubr.f32.mxu0 0.0
  %1408 = vmatmul.mubr.f32.gmra.mrb[0].mxu0 %v1341
  %v1409 = vpop.f32.mrb[0].mxu0
  %v1410 = vadd.f32 %v204, %v1409
  %v1411 = vpop.f32.mrb[0].mxu0
  %v1412 = vadd.f32 %v208, %v1411
  %1413 = vdwg.mxu0
  %s1414 = scalar_lea.vmem %s10, 8
  %1415 = vst [vmem:[%s1414] sm:$0xff] %v1410
  %v1417 = vcombine.high %v1412, %v1412
  %v1419 = vunpack.c.l.s4 1966171168
  %v1420 = vunpack.c.0.s8 %v1419
  %v1421 = vlaneseq
  %v1422 = vshrl.u32 %v1421, 7
  %v1423 = vsub.s32 %v1420, %v1422
  %v1424 = vrot.slane %v1412, %v1423
  %v1426 = vunpack.c.l.s4 1966171168
  %v1427 = vunpack.c.0.s8 %v1426
  %v1428 = vlaneseq
  %v1429 = vshrl.u32 %v1428, 7
  %v1430 = vsub.s32 %v1427, %v1429
  %v1431 = vrot.slane %v1417, %v1430
  %v1432 = vcombine.high %v1424, %v1424
  %v1433 = vcombine.high %v1431, %v1431
  %v1435 = vunpack.c.l.s4 1966171168
  %v1436 = vunpack.c.0.s8 %v1435
  %v1437 = vlaneseq
  %v1438 = vshrl.u32 %v1437, 7
  %v1439 = vsub.s32 %v1436, %v1438
  %v1440 = vrot.slane %v1424, %v1439
  %v1442 = vunpack.c.l.s4 1966171168
  %v1443 = vunpack.c.0.s8 %v1442
  %v1444 = vlaneseq
  %v1445 = vshrl.u32 %v1444, 7
  %v1446 = vsub.s32 %v1443, %v1445
  %v1447 = vrot.slane %v1431, %v1446
  %v1449 = vunpack.c.l.s4 1966171168
  %v1450 = vunpack.c.0.s8 %v1449
  %v1451 = vlaneseq
  %v1452 = vshrl.u32 %v1451, 7
  %v1453 = vsub.s32 %v1450, %v1452
  %v1454 = vrot.slane %v1432, %v1453
  %v1456 = vunpack.c.l.s4 1966171168
  %v1457 = vunpack.c.0.s8 %v1456
  %v1458 = vlaneseq
  %v1459 = vshrl.u32 %v1458, 7
  %v1460 = vsub.s32 %v1457, %v1459
  %v1461 = vrot.slane %v1433, %v1460
  %v1462 = vcombine.high %v1440, %v1440
  %v1463 = vcombine.high %v1447, %v1447
  %v1464 = vcombine.high %v1454, %v1454
  %v1465 = vcombine.high %v1461, %v1461
  %v1466 = vlaneseq
  %v1467 = vshrl.u32 %v1466, 7
  %v1468 = vsub.s32 0, %v1467
  %v1469 = vrot.slane %v1440, %v1468
  %v1470 = vlaneseq
  %v1471 = vshrl.u32 %v1470, 7
  %v1472 = vsub.s32 0, %v1471
  %v1473 = vrot.slane %v1454, %v1472
  %v1474 = vlaneseq
  %v1475 = vshrl.u32 %v1474, 7
  %v1476 = vsub.s32 0, %v1475
  %v1477 = vrot.slane %v1462, %v1476
  %v1478 = vlaneseq
  %v1479 = vshrl.u32 %v1478, 7
  %v1480 = vsub.s32 0, %v1479
  %v1481 = vrot.slane %v1464, %v1480
  %v1482 = vlaneseq
  %v1483 = vshrl.u32 %v1482, 7
  %v1484 = vsub.s32 0, %v1483
  %v1485 = vrot.slane %v1447, %v1484
  %v1486 = vlaneseq
  %v1487 = vshrl.u32 %v1486, 7
  %v1488 = vsub.s32 0, %v1487
  %v1489 = vrot.slane %v1461, %v1488
  %v1490 = vlaneseq
  %v1491 = vshrl.u32 %v1490, 7
  %v1492 = vsub.s32 0, %v1491
  %v1493 = vrot.slane %v1463, %v1492
  %v1494 = vlaneseq
  %v1495 = vshrl.u32 %v1494, 7
  %v1496 = vsub.s32 0, %v1495
  %v1497 = vrot.slane %v1465, %v1496
  %v1506 = vadd.f32 %v51, %v1469
  %v1507 = vadd.f32 %v52, %v1469
  %v1508 = vadd.f32 %v53, %v1473
  %v1509 = vadd.f32 %v54, %v1473
  %v1510 = vadd.f32 %v55, %v1477
  %v1511 = vadd.f32 %v56, %v1477
  %v1512 = vadd.f32 %v57, %v1481
  %v1513 = vadd.f32 %v58, %v1481
  %v1514 = vadd.f32 %v59, %v1485
  %v1515 = vadd.f32 %v60, %v1485
  %v1516 = vadd.f32 %v61, %v1489
  %v1517 = vadd.f32 %v62, %v1489
  %v1518 = vadd.f32 %v63, %v1493
  %v1519 = vadd.f32 %v64, %v1493
  %v1520 = vadd.f32 %v65, %v1497
  %v1521 = vadd.f32 %v66, %v1497
  %v1522 = vtanh.pop %v1506
  %v1523 = vtanh.pop %v1507
  %v1524 = vtanh.pop %v1508
  %v1525 = vtanh.pop %v1509
  %v1526 = vtanh.pop %v1510
  %v1527 = vtanh.pop %v1511
  %v1528 = vtanh.pop %v1512
  %v1529 = vtanh.pop %v1513
  %v1530 = vtanh.pop %v1514
  %v1531 = vtanh.pop %v1515
  %v1532 = vtanh.pop %v1516
  %v1533 = vtanh.pop %v1517
  %v1534 = vtanh.pop %v1518
  %v1535 = vtanh.pop %v1519
  %v1536 = vtanh.pop %v1520
  %v1537 = vtanh.pop %v1521
  %v1538 = vmul.f32 %v1522, %v87
  %v1539 = vmul.f32 %v1523, %v87
  %v1540 = vmul.f32 %v1524, %v87
  %v1541 = vmul.f32 %v1525, %v87
  %v1542 = vmul.f32 %v1526, %v87
  %v1543 = vmul.f32 %v1527, %v87
  %v1544 = vmul.f32 %v1528, %v87
  %v1545 = vmul.f32 %v1529, %v87
  %v1546 = vmul.f32 %v1530, %v87
  %v1547 = vmul.f32 %v1531, %v87
  %v1548 = vmul.f32 %v1532, %v87
  %v1549 = vmul.f32 %v1533, %v87
  %v1550 = vmul.f32 %v1534, %v87
  %v1551 = vmul.f32 %v1535, %v87
  %v1552 = vmul.f32 %v1536, %v87
  %v1553 = vmul.f32 %v1537, %v87
  %v1554 = vsel %vm97, %v1538, 0.0
  %1555 = vadd.xlane.f32.xlu0 %v1554
  %v1556 = vpop.xlane.xlu0 %1555
  %v1557 = vsel %vm97, %v1539, 0.0
  %1558 = vadd.xlane.f32.xlu0 %v1557
  %v1559 = vpop.xlane.xlu0 %1558
  %v1560 = vsel %vm97, %v1540, 0.0
  %1561 = vadd.xlane.f32.xlu0 %v1560
  %v1562 = vpop.xlane.xlu0 %1561
  %v1563 = vsel %vm97, %v1541, 0.0
  %1564 = vadd.xlane.f32.xlu0 %v1563
  %v1565 = vpop.xlane.xlu0 %1564
  %v1566 = vsel %vm97, %v1542, 0.0
  %1567 = vadd.xlane.f32.xlu0 %v1566
  %v1568 = vpop.xlane.xlu0 %1567
  %v1569 = vsel %vm97, %v1543, 0.0
  %1570 = vadd.xlane.f32.xlu0 %v1569
  %v1571 = vpop.xlane.xlu0 %1570
  %v1572 = vsel %vm97, %v1544, 0.0
  %1573 = vadd.xlane.f32.xlu0 %v1572
  %v1574 = vpop.xlane.xlu0 %1573
  %v1575 = vsel %vm97, %v1545, 0.0
  %1576 = vadd.xlane.f32.xlu0 %v1575
  %v1577 = vpop.xlane.xlu0 %1576
  %v1578 = vsel %vm97, %v1546, 0.0
  %1579 = vadd.xlane.f32.xlu0 %v1578
  %v1580 = vpop.xlane.xlu0 %1579
  %v1581 = vsel %vm97, %v1547, 0.0
  %1582 = vadd.xlane.f32.xlu0 %v1581
  %v1583 = vpop.xlane.xlu0 %1582
  %v1584 = vsel %vm97, %v1548, 0.0
  %1585 = vadd.xlane.f32.xlu0 %v1584
  %v1586 = vpop.xlane.xlu0 %1585
  %v1587 = vsel %vm97, %v1549, 0.0
  %1588 = vadd.xlane.f32.xlu0 %v1587
  %v1589 = vpop.xlane.xlu0 %1588
  %v1590 = vsel %vm97, %v1550, 0.0
  %1591 = vadd.xlane.f32.xlu0 %v1590
  %v1592 = vpop.xlane.xlu0 %1591
  %v1593 = vsel %vm97, %v1551, 0.0
  %1594 = vadd.xlane.f32.xlu0 %v1593
  %v1595 = vpop.xlane.xlu0 %1594
  %v1596 = vsel %vm97, %v1552, 0.0
  %1597 = vadd.xlane.f32.xlu0 %v1596
  %v1598 = vpop.xlane.xlu0 %1597
  %v1599 = vsel %vm97, %v1553, 0.0
  %1600 = vadd.xlane.f32.xlu0 %v1599
  %v1601 = vpop.xlane.xlu0 %1600
  %v1602 = vadd.f32 %v1556, %v481
  %v1603 = vadd.f32 %v1559, %v485
  %v1604 = vadd.f32 %v1562, %v492
  %v1605 = vadd.f32 %v1565, %v496
  %v1606 = vadd.f32 %v1568, %v503
  %v1607 = vadd.f32 %v1571, %v507
  %v1608 = vadd.f32 %v1574, %v514
  %v1609 = vadd.f32 %v1577, %v518
  %v1610 = vadd.f32 %v1580, %v525
  %v1611 = vadd.f32 %v1583, %v529
  %v1612 = vadd.f32 %v1586, %v536
  %v1613 = vadd.f32 %v1589, %v540
  %v1614 = vadd.f32 %v1592, %v547
  %v1615 = vadd.f32 %v1595, %v551
  %v1616 = vadd.f32 %v1598, %v558
  %v1617 = vadd.f32 %v1601, %v562
  %1634 = vset.pattern.permute.xlu0 0
  %1635 = vperm.xlu0 %1634, %v1602
  %v1636 = vpop.permute.xlu0 %1635
  %1637 = vset.pattern.permute.xlu0 0
  %1638 = vperm.xlu0 %1637, %v1603
  %v1639 = vpop.permute.xlu0 %1638
  %1640 = vset.pattern.permute.xlu0 0
  %1641 = vperm.xlu0 %1640, %v1604
  %v1642 = vpop.permute.xlu0 %1641
  %1643 = vset.pattern.permute.xlu0 0
  %1644 = vperm.xlu0 %1643, %v1605
  %v1645 = vpop.permute.xlu0 %1644
  %1646 = vset.pattern.permute.xlu0 0
  %1647 = vperm.xlu0 %1646, %v1606
  %v1648 = vpop.permute.xlu0 %1647
  %1649 = vset.pattern.permute.xlu0 0
  %1650 = vperm.xlu0 %1649, %v1607
  %v1651 = vpop.permute.xlu0 %1650
  %1652 = vset.pattern.permute.xlu0 0
  %1653 = vperm.xlu0 %1652, %v1608
  %v1654 = vpop.permute.xlu0 %1653
  %1655 = vset.pattern.permute.xlu0 0
  %1656 = vperm.xlu0 %1655, %v1609
  %v1657 = vpop.permute.xlu0 %1656
  %1658 = vset.pattern.permute.xlu0 0
  %1659 = vperm.xlu0 %1658, %v1610
  %v1660 = vpop.permute.xlu0 %1659
  %1661 = vset.pattern.permute.xlu0 0
  %1662 = vperm.xlu0 %1661, %v1611
  %v1663 = vpop.permute.xlu0 %1662
  %1664 = vset.pattern.permute.xlu0 0
  %1665 = vperm.xlu0 %1664, %v1612
  %v1666 = vpop.permute.xlu0 %1665
  %1667 = vset.pattern.permute.xlu0 0
  %1668 = vperm.xlu0 %1667, %v1613
  %v1669 = vpop.permute.xlu0 %1668
  %1670 = vset.pattern.permute.xlu0 0
  %1671 = vperm.xlu0 %1670, %v1614
  %v1672 = vpop.permute.xlu0 %1671
  %1673 = vset.pattern.permute.xlu0 0
  %1674 = vperm.xlu0 %1673, %v1615
  %v1675 = vpop.permute.xlu0 %1674
  %1676 = vset.pattern.permute.xlu0 0
  %1677 = vperm.xlu0 %1676, %v1616
  %v1678 = vpop.permute.xlu0 %1677
  %1679 = vset.pattern.permute.xlu0 0
  %1680 = vperm.xlu0 %1679, %v1617
  %v1681 = vpop.permute.xlu0 %1680
  %v1682 = vlaneseq
  %v1683 = vshrl.u32 %v1682, 7
  %v1684 = vsub.s32 %v660, %v1683
  %v1685 = vrot.slane %v1636, %v1684
  %v1686 = vlaneseq
  %v1687 = vshrl.u32 %v1686, 7
  %v1688 = vsub.s32 %v665, %v1687
  %v1689 = vrot.slane %v1639, %v1688
  %v1690 = vsel %vm670, %v1689, %v1685
  %v1691 = vlaneseq
  %v1692 = vshrl.u32 %v1691, 7
  %v1693 = vsub.s32 %v660, %v1692
  %v1694 = vrot.slane %v1642, %v1693
  %v1695 = vlaneseq
  %v1696 = vshrl.u32 %v1695, 7
  %v1697 = vsub.s32 %v665, %v1696
  %v1698 = vrot.slane %v1645, %v1697
  %v1699 = vsel %vm670, %v1698, %v1694
  %v1700 = vlaneseq
  %v1701 = vshrl.u32 %v1700, 7
  %v1702 = vsub.s32 %v660, %v1701
  %v1703 = vrot.slane %v1648, %v1702
  %v1704 = vlaneseq
  %v1705 = vshrl.u32 %v1704, 7
  %v1706 = vsub.s32 %v665, %v1705
  %v1707 = vrot.slane %v1651, %v1706
  %v1708 = vsel %vm670, %v1707, %v1703
  %v1709 = vlaneseq
  %v1710 = vshrl.u32 %v1709, 7
  %v1711 = vsub.s32 %v660, %v1710
  %v1712 = vrot.slane %v1654, %v1711
  %v1713 = vlaneseq
  %v1714 = vshrl.u32 %v1713, 7
  %v1715 = vsub.s32 %v665, %v1714
  %v1716 = vrot.slane %v1657, %v1715
  %v1717 = vsel %vm670, %v1716, %v1712
  %v1718 = vlaneseq
  %v1719 = vshrl.u32 %v1718, 7
  %v1720 = vsub.s32 %v660, %v1719
  %v1721 = vrot.slane %v1660, %v1720
  %v1722 = vlaneseq
  %v1723 = vshrl.u32 %v1722, 7
  %v1724 = vsub.s32 %v665, %v1723
  %v1725 = vrot.slane %v1663, %v1724
  %v1726 = vsel %vm670, %v1725, %v1721
  %v1727 = vlaneseq
  %v1728 = vshrl.u32 %v1727, 7
  %v1729 = vsub.s32 %v660, %v1728
  %v1730 = vrot.slane %v1666, %v1729
  %v1731 = vlaneseq
  %v1732 = vshrl.u32 %v1731, 7
  %v1733 = vsub.s32 %v665, %v1732
  %v1734 = vrot.slane %v1669, %v1733
  %v1735 = vsel %vm670, %v1734, %v1730
  %v1736 = vlaneseq
  %v1737 = vshrl.u32 %v1736, 7
  %v1738 = vsub.s32 %v660, %v1737
  %v1739 = vrot.slane %v1672, %v1738
  %v1740 = vlaneseq
  %v1741 = vshrl.u32 %v1740, 7
  %v1742 = vsub.s32 %v665, %v1741
  %v1743 = vrot.slane %v1675, %v1742
  %v1744 = vsel %vm670, %v1743, %v1739
  %v1745 = vlaneseq
  %v1746 = vshrl.u32 %v1745, 7
  %v1747 = vsub.s32 %v660, %v1746
  %v1748 = vrot.slane %v1678, %v1747
  %v1749 = vlaneseq
  %v1750 = vshrl.u32 %v1749, 7
  %v1751 = vsub.s32 %v665, %v1750
  %v1752 = vrot.slane %v1681, %v1751
  %v1753 = vsel %vm670, %v1752, %v1748
  %v1754 = vsel %vm735, %v1699, %v1690
  %v1755 = vsel %vm737, %v1708, %v1754
  %v1756 = vsel %vm739, %v1717, %v1755
  %v1757 = vsel %vm741, %v1726, %v1756
  %v1758 = vsel %vm743, %v1735, %v1757
  %v1759 = vsel %vm745, %v1744, %v1758
  %v1760 = vsel %vm747, %v1753, %v1759
  %v1762 = vsel %vm750, %v1760, -inf
  %1763 = vmax.xlane.f32.xlu0 %v1762
  %v1764 = vpop.xlane.xlu0 %1763
  %v1766 = vlaneseq
  %v1767 = vshrl.u32 %v1766, 7
  %v1768 = vsub.s32 0, %v1767
  %v1769 = vrot.slane %v1764, %v1768
  %v1770 = vlaneseq
  %v1771 = vshrl.u32 %v1770, 7
  %v1772 = vsub.s32 1, %v1771
  %v1773 = vrot.slane %v1764, %v1772
  %v1774 = vlaneseq
  %v1775 = vshrl.u32 %v1774, 7
  %v1776 = vsub.s32 2, %v1775
  %v1777 = vrot.slane %v1764, %v1776
  %v1778 = vlaneseq
  %v1779 = vshrl.u32 %v1778, 7
  %v1780 = vsub.s32 3, %v1779
  %v1781 = vrot.slane %v1764, %v1780
  %v1782 = vlaneseq
  %v1783 = vshrl.u32 %v1782, 7
  %v1784 = vsub.s32 4, %v1783
  %v1785 = vrot.slane %v1764, %v1784
  %v1786 = vlaneseq
  %v1787 = vshrl.u32 %v1786, 7
  %v1788 = vsub.s32 5, %v1787
  %v1789 = vrot.slane %v1764, %v1788
  %v1790 = vlaneseq
  %v1791 = vshrl.u32 %v1790, 7
  %v1792 = vsub.s32 6, %v1791
  %v1793 = vrot.slane %v1764, %v1792
  %v1794 = vlaneseq
  %v1795 = vshrl.u32 %v1794, 7
  %v1796 = vsub.s32 7, %v1795
  %v1797 = vrot.slane %v1764, %v1796
  %v1806 = vsub.f32 %v1602, %v1769
  %v1807 = vsub.f32 %v1603, %v1769
  %v1808 = vsub.f32 %v1604, %v1773
  %v1809 = vsub.f32 %v1605, %v1773
  %v1810 = vsub.f32 %v1606, %v1777
  %v1811 = vsub.f32 %v1607, %v1777
  %v1812 = vsub.f32 %v1608, %v1781
  %v1813 = vsub.f32 %v1609, %v1781
  %v1814 = vsub.f32 %v1610, %v1785
  %v1815 = vsub.f32 %v1611, %v1785
  %v1816 = vsub.f32 %v1612, %v1789
  %v1817 = vsub.f32 %v1613, %v1789
  %v1818 = vsub.f32 %v1614, %v1793
  %v1819 = vsub.f32 %v1615, %v1793
  %v1820 = vsub.f32 %v1616, %v1797
  %v1821 = vsub.f32 %v1617, %v1797
  %v1822 = vmul.f32 %v1806, 1.442695
  %v1823 = vpow.pop %v1822
  %v1824 = vmul.f32 %v1807, 1.442695
  %v1825 = vpow.pop %v1824
  %v1826 = vmul.f32 %v1808, 1.442695
  %v1827 = vpow.pop %v1826
  %v1828 = vmul.f32 %v1809, 1.442695
  %v1829 = vpow.pop %v1828
  %v1830 = vmul.f32 %v1810, 1.442695
  %v1831 = vpow.pop %v1830
  %v1832 = vmul.f32 %v1811, 1.442695
  %v1833 = vpow.pop %v1832
  %v1834 = vmul.f32 %v1812, 1.442695
  %v1835 = vpow.pop %v1834
  %v1836 = vmul.f32 %v1813, 1.442695
  %v1837 = vpow.pop %v1836
  %v1838 = vmul.f32 %v1814, 1.442695
  %v1839 = vpow.pop %v1838
  %v1840 = vmul.f32 %v1815, 1.442695
  %v1841 = vpow.pop %v1840
  %v1842 = vmul.f32 %v1816, 1.442695
  %v1843 = vpow.pop %v1842
  %v1844 = vmul.f32 %v1817, 1.442695
  %v1845 = vpow.pop %v1844
  %v1846 = vmul.f32 %v1818, 1.442695
  %v1847 = vpow.pop %v1846
  %v1848 = vmul.f32 %v1819, 1.442695
  %v1849 = vpow.pop %v1848
  %v1850 = vmul.f32 %v1820, 1.442695
  %v1851 = vpow.pop %v1850
  %v1852 = vmul.f32 %v1821, 1.442695
  %v1853 = vpow.pop %v1852
  %1870 = vset.pattern.permute.xlu0 0
  %1871 = vperm.xlu0 %1870, %v1823
  %v1872 = vpop.permute.xlu0 %1871
  %1873 = vset.pattern.permute.xlu0 0
  %1874 = vperm.xlu0 %1873, %v1825
  %v1875 = vpop.permute.xlu0 %1874
  %1876 = vset.pattern.permute.xlu0 0
  %1877 = vperm.xlu0 %1876, %v1827
  %v1878 = vpop.permute.xlu0 %1877
  %1879 = vset.pattern.permute.xlu0 0
  %1880 = vperm.xlu0 %1879, %v1829
  %v1881 = vpop.permute.xlu0 %1880
  %1882 = vset.pattern.permute.xlu0 0
  %1883 = vperm.xlu0 %1882, %v1831
  %v1884 = vpop.permute.xlu0 %1883
  %1885 = vset.pattern.permute.xlu0 0
  %1886 = vperm.xlu0 %1885, %v1833
  %v1887 = vpop.permute.xlu0 %1886
  %1888 = vset.pattern.permute.xlu0 0
  %1889 = vperm.xlu0 %1888, %v1835
  %v1890 = vpop.permute.xlu0 %1889
  %1891 = vset.pattern.permute.xlu0 0
  %1892 = vperm.xlu0 %1891, %v1837
  %v1893 = vpop.permute.xlu0 %1892
  %1894 = vset.pattern.permute.xlu0 0
  %1895 = vperm.xlu0 %1894, %v1839
  %v1896 = vpop.permute.xlu0 %1895
  %1897 = vset.pattern.permute.xlu0 0
  %1898 = vperm.xlu0 %1897, %v1841
  %v1899 = vpop.permute.xlu0 %1898
  %1900 = vset.pattern.permute.xlu0 0
  %1901 = vperm.xlu0 %1900, %v1843
  %v1902 = vpop.permute.xlu0 %1901
  %1903 = vset.pattern.permute.xlu0 0
  %1904 = vperm.xlu0 %1903, %v1845
  %v1905 = vpop.permute.xlu0 %1904
  %1906 = vset.pattern.permute.xlu0 0
  %1907 = vperm.xlu0 %1906, %v1847
  %v1908 = vpop.permute.xlu0 %1907
  %1909 = vset.pattern.permute.xlu0 0
  %1910 = vperm.xlu0 %1909, %v1849
  %v1911 = vpop.permute.xlu0 %1910
  %1912 = vset.pattern.permute.xlu0 0
  %1913 = vperm.xlu0 %1912, %v1851
  %v1914 = vpop.permute.xlu0 %1913
  %1915 = vset.pattern.permute.xlu0 0
  %1916 = vperm.xlu0 %1915, %v1853
  %v1917 = vpop.permute.xlu0 %1916
  %v1918 = vlaneseq
  %v1919 = vshrl.u32 %v1918, 7
  %v1920 = vsub.s32 %v660, %v1919
  %v1921 = vrot.slane %v1872, %v1920
  %v1922 = vlaneseq
  %v1923 = vshrl.u32 %v1922, 7
  %v1924 = vsub.s32 %v665, %v1923
  %v1925 = vrot.slane %v1875, %v1924
  %v1926 = vsel %vm670, %v1925, %v1921
  %v1927 = vlaneseq
  %v1928 = vshrl.u32 %v1927, 7
  %v1929 = vsub.s32 %v660, %v1928
  %v1930 = vrot.slane %v1878, %v1929
  %v1931 = vlaneseq
  %v1932 = vshrl.u32 %v1931, 7
  %v1933 = vsub.s32 %v665, %v1932
  %v1934 = vrot.slane %v1881, %v1933
  %v1935 = vsel %vm670, %v1934, %v1930
  %v1936 = vlaneseq
  %v1937 = vshrl.u32 %v1936, 7
  %v1938 = vsub.s32 %v660, %v1937
  %v1939 = vrot.slane %v1884, %v1938
  %v1940 = vlaneseq
  %v1941 = vshrl.u32 %v1940, 7
  %v1942 = vsub.s32 %v665, %v1941
  %v1943 = vrot.slane %v1887, %v1942
  %v1944 = vsel %vm670, %v1943, %v1939
  %v1945 = vlaneseq
  %v1946 = vshrl.u32 %v1945, 7
  %v1947 = vsub.s32 %v660, %v1946
  %v1948 = vrot.slane %v1890, %v1947
  %v1949 = vlaneseq
  %v1950 = vshrl.u32 %v1949, 7
  %v1951 = vsub.s32 %v665, %v1950
  %v1952 = vrot.slane %v1893, %v1951
  %v1953 = vsel %vm670, %v1952, %v1948
  %v1954 = vlaneseq
  %v1955 = vshrl.u32 %v1954, 7
  %v1956 = vsub.s32 %v660, %v1955
  %v1957 = vrot.slane %v1896, %v1956
  %v1958 = vlaneseq
  %v1959 = vshrl.u32 %v1958, 7
  %v1960 = vsub.s32 %v665, %v1959
  %v1961 = vrot.slane %v1899, %v1960
  %v1962 = vsel %vm670, %v1961, %v1957
  %v1963 = vlaneseq
  %v1964 = vshrl.u32 %v1963, 7
  %v1965 = vsub.s32 %v660, %v1964
  %v1966 = vrot.slane %v1902, %v1965
  %v1967 = vlaneseq
  %v1968 = vshrl.u32 %v1967, 7
  %v1969 = vsub.s32 %v665, %v1968
  %v1970 = vrot.slane %v1905, %v1969
  %v1971 = vsel %vm670, %v1970, %v1966
  %v1972 = vlaneseq
  %v1973 = vshrl.u32 %v1972, 7
  %v1974 = vsub.s32 %v660, %v1973
  %v1975 = vrot.slane %v1908, %v1974
  %v1976 = vlaneseq
  %v1977 = vshrl.u32 %v1976, 7
  %v1978 = vsub.s32 %v665, %v1977
  %v1979 = vrot.slane %v1911, %v1978
  %v1980 = vsel %vm670, %v1979, %v1975
  %v1981 = vlaneseq
  %v1982 = vshrl.u32 %v1981, 7
  %v1983 = vsub.s32 %v660, %v1982
  %v1984 = vrot.slane %v1914, %v1983
  %v1985 = vlaneseq
  %v1986 = vshrl.u32 %v1985, 7
  %v1987 = vsub.s32 %v665, %v1986
  %v1988 = vrot.slane %v1917, %v1987
  %v1989 = vsel %vm670, %v1988, %v1984
  %v1990 = vsel %vm735, %v1935, %v1926
  %v1991 = vsel %vm737, %v1944, %v1990
  %v1992 = vsel %vm739, %v1953, %v1991
  %v1993 = vsel %vm741, %v1962, %v1992
  %v1994 = vsel %vm743, %v1971, %v1993
  %v1995 = vsel %vm745, %v1980, %v1994
  %v1996 = vsel %vm747, %v1989, %v1995
  %v1998 = vsel %vm750, %v1996, 0.0
  %1999 = vadd.xlane.f32.xlu0 %v1998
  %v2000 = vpop.xlane.xlu0 %1999
  %v2001 = vrcp.pop %v2000
  %v2003 = vlaneseq
  %v2004 = vshrl.u32 %v2003, 7
  %v2005 = vsub.s32 0, %v2004
  %v2006 = vrot.slane %v2001, %v2005
  %v2007 = vlaneseq
  %v2008 = vshrl.u32 %v2007, 7
  %v2009 = vsub.s32 1, %v2008
  %v2010 = vrot.slane %v2001, %v2009
  %v2011 = vlaneseq
  %v2012 = vshrl.u32 %v2011, 7
  %v2013 = vsub.s32 2, %v2012
  %v2014 = vrot.slane %v2001, %v2013
  %v2015 = vlaneseq
  %v2016 = vshrl.u32 %v2015, 7
  %v2017 = vsub.s32 3, %v2016
  %v2018 = vrot.slane %v2001, %v2017
  %v2019 = vlaneseq
  %v2020 = vshrl.u32 %v2019, 7
  %v2021 = vsub.s32 4, %v2020
  %v2022 = vrot.slane %v2001, %v2021
  %v2023 = vlaneseq
  %v2024 = vshrl.u32 %v2023, 7
  %v2025 = vsub.s32 5, %v2024
  %v2026 = vrot.slane %v2001, %v2025
  %v2027 = vlaneseq
  %v2028 = vshrl.u32 %v2027, 7
  %v2029 = vsub.s32 6, %v2028
  %v2030 = vrot.slane %v2001, %v2029
  %v2031 = vlaneseq
  %v2032 = vshrl.u32 %v2031, 7
  %v2033 = vsub.s32 7, %v2032
  %v2034 = vrot.slane %v2001, %v2033
  %v2043 = vmul.f32 %v1823, %v2006
  %v2044 = vmul.f32 %v1825, %v2006
  %v2045 = vmul.f32 %v1827, %v2010
  %v2046 = vmul.f32 %v1829, %v2010
  %v2047 = vmul.f32 %v1831, %v2014
  %v2048 = vmul.f32 %v1833, %v2014
  %v2049 = vmul.f32 %v1835, %v2018
  %v2050 = vmul.f32 %v1837, %v2018
  %v2051 = vmul.f32 %v1839, %v2022
  %v2052 = vmul.f32 %v1841, %v2022
  %v2053 = vmul.f32 %v1843, %v2026
  %v2054 = vmul.f32 %v1845, %v2026
  %v2055 = vmul.f32 %v1847, %v2030
  %v2056 = vmul.f32 %v1849, %v2030
  %v2057 = vmul.f32 %v1851, %v2034
  %v2058 = vmul.f32 %v1853, %v2034
  %2060 = vset.pattern.permute.xlu0 0
  %2061 = vperm.xlu0 %2060, %v2043
  %v2062 = vpop.permute.xlu0 %2061
  %2065 = vset.pattern.permute.xlu0 0
  %2066 = vperm.xlu0 %2065, %v2044
  %v2067 = vpop.permute.xlu0 %2066
  %2070 = vset.pattern.permute.xlu0 0
  %2071 = vperm.xlu0 %2070, %v2045
  %v2072 = vpop.permute.xlu0 %2071
  %2075 = vset.pattern.permute.xlu0 0
  %2076 = vperm.xlu0 %2075, %v2046
  %v2077 = vpop.permute.xlu0 %2076
  %2080 = vset.pattern.permute.xlu0 0
  %2081 = vperm.xlu0 %2080, %v2047
  %v2082 = vpop.permute.xlu0 %2081
  %2085 = vset.pattern.permute.xlu0 0
  %2086 = vperm.xlu0 %2085, %v2048
  %v2087 = vpop.permute.xlu0 %2086
  %2090 = vset.pattern.permute.xlu0 0
  %2091 = vperm.xlu0 %2090, %v2049
  %v2092 = vpop.permute.xlu0 %2091
  %2095 = vset.pattern.permute.xlu0 0
  %2096 = vperm.xlu0 %2095, %v2050
  %v2097 = vpop.permute.xlu0 %2096
  %2100 = vset.pattern.permute.xlu0 0
  %2101 = vperm.xlu0 %2100, %v2051
  %v2102 = vpop.permute.xlu0 %2101
  %2105 = vset.pattern.permute.xlu0 0
  %2106 = vperm.xlu0 %2105, %v2052
  %v2107 = vpop.permute.xlu0 %2106
  %2110 = vset.pattern.permute.xlu0 0
  %2111 = vperm.xlu0 %2110, %v2053
  %v2112 = vpop.permute.xlu0 %2111
  %2115 = vset.pattern.permute.xlu0 0
  %2116 = vperm.xlu0 %2115, %v2054
  %v2117 = vpop.permute.xlu0 %2116
  %2120 = vset.pattern.permute.xlu0 0
  %2121 = vperm.xlu0 %2120, %v2055
  %v2122 = vpop.permute.xlu0 %2121
  %2125 = vset.pattern.permute.xlu0 0
  %2126 = vperm.xlu0 %2125, %v2056
  %v2127 = vpop.permute.xlu0 %2126
  %2130 = vset.pattern.permute.xlu0 0
  %2131 = vperm.xlu0 %2130, %v2057
  %v2132 = vpop.permute.xlu0 %2131
  %2135 = vset.pattern.permute.xlu0 0
  %2136 = vperm.xlu0 %2135, %v2058
  %v2137 = vpop.permute.xlu0 %2136
  %v2139 = vmul.f32 %v2062, %v35
  %v2140 = vmul.f32 %v2067, %v36
  %v2141 = vmul.f32 %v2072, %v37
  %v2142 = vmul.f32 %v2077, %v38
  %v2143 = vmul.f32 %v2082, %v39
  %v2144 = vmul.f32 %v2087, %v40
  %v2145 = vmul.f32 %v2092, %v41
  %v2146 = vmul.f32 %v2097, %v42
  %v2147 = vmul.f32 %v2102, %v43
  %v2148 = vmul.f32 %v2107, %v44
  %v2149 = vmul.f32 %v2112, %v45
  %v2150 = vmul.f32 %v2117, %v46
  %v2151 = vmul.f32 %v2122, %v47
  %v2152 = vmul.f32 %v2127, %v48
  %v2153 = vmul.f32 %v2132, %v49
  %v2154 = vmul.f32 %v2137, %v50
  %v2155 = vsel %vm97, %v2139, 0.0
  %v2156 = vsel %vm97, %v2140, 0.0
  %v2157 = vadd.f32 %v2155, %v2156
  %v2158 = vrot.slane %v2157, 4
  %v2159 = vadd.f32 %v2157, %v2158
  %v2160 = vrot.slane %v2159, 2
  %v2161 = vadd.f32 %v2159, %v2160
  %v2162 = vrot.slane %v2161, 1
  %v2163 = vadd.f32 %v2161, %v2162
  %v2164 = vsel %vm97, %v2141, 0.0
  %v2165 = vsel %vm97, %v2142, 0.0
  %v2166 = vadd.f32 %v2164, %v2165
  %v2167 = vrot.slane %v2166, 4
  %v2168 = vadd.f32 %v2166, %v2167
  %v2169 = vrot.slane %v2168, 2
  %v2170 = vadd.f32 %v2168, %v2169
  %v2171 = vrot.slane %v2170, 1
  %v2172 = vadd.f32 %v2170, %v2171
  %v2173 = vsel %vm97, %v2143, 0.0
  %v2174 = vsel %vm97, %v2144, 0.0
  %v2175 = vadd.f32 %v2173, %v2174
  %v2176 = vrot.slane %v2175, 4
  %v2177 = vadd.f32 %v2175, %v2176
  %v2178 = vrot.slane %v2177, 2
  %v2179 = vadd.f32 %v2177, %v2178
  %v2180 = vrot.slane %v2179, 1
  %v2181 = vadd.f32 %v2179, %v2180
  %v2182 = vsel %vm97, %v2145, 0.0
  %v2183 = vsel %vm97, %v2146, 0.0
  %v2184 = vadd.f32 %v2182, %v2183
  %v2185 = vrot.slane %v2184, 4
  %v2186 = vadd.f32 %v2184, %v2185
  %v2187 = vrot.slane %v2186, 2
  %v2188 = vadd.f32 %v2186, %v2187
  %v2189 = vrot.slane %v2188, 1
  %v2190 = vadd.f32 %v2188, %v2189
  %v2191 = vsel %vm97, %v2147, 0.0
  %v2192 = vsel %vm97, %v2148, 0.0
  %v2193 = vadd.f32 %v2191, %v2192
  %v2194 = vrot.slane %v2193, 4
  %v2195 = vadd.f32 %v2193, %v2194
  %v2196 = vrot.slane %v2195, 2
  %v2197 = vadd.f32 %v2195, %v2196
  %v2198 = vrot.slane %v2197, 1
  %v2199 = vadd.f32 %v2197, %v2198
  %v2200 = vsel %vm97, %v2149, 0.0
  %v2201 = vsel %vm97, %v2150, 0.0
  %v2202 = vadd.f32 %v2200, %v2201
  %v2203 = vrot.slane %v2202, 4
  %v2204 = vadd.f32 %v2202, %v2203
  %v2205 = vrot.slane %v2204, 2
  %v2206 = vadd.f32 %v2204, %v2205
  %v2207 = vrot.slane %v2206, 1
  %v2208 = vadd.f32 %v2206, %v2207
  %v2209 = vsel %vm97, %v2151, 0.0
  %v2210 = vsel %vm97, %v2152, 0.0
  %v2211 = vadd.f32 %v2209, %v2210
  %v2212 = vrot.slane %v2211, 4
  %v2213 = vadd.f32 %v2211, %v2212
  %v2214 = vrot.slane %v2213, 2
  %v2215 = vadd.f32 %v2213, %v2214
  %v2216 = vrot.slane %v2215, 1
  %v2217 = vadd.f32 %v2215, %v2216
  %v2218 = vsel %vm97, %v2153, 0.0
  %v2219 = vsel %vm97, %v2154, 0.0
  %v2220 = vadd.f32 %v2218, %v2219
  %v2221 = vrot.slane %v2220, 4
  %v2222 = vadd.f32 %v2220, %v2221
  %v2223 = vrot.slane %v2222, 2
  %v2224 = vadd.f32 %v2222, %v2223
  %v2225 = vrot.slane %v2224, 1
  %v2226 = vadd.f32 %v2224, %v2225
  %v2235 = vsel %vm735, %v2172, %v2163
  %v2236 = vsel %vm737, %v2181, %v2235
  %v2237 = vsel %vm739, %v2190, %v2236
  %v2238 = vsel %vm741, %v2199, %v2237
  %v2239 = vsel %vm743, %v2208, %v2238
  %v2240 = vsel %vm745, %v2217, %v2239
  %v2241 = vsel %vm747, %v2226, %v2240
  %2242 = vrot.lane.b32.xlu0 %v2241, 32
  %v2243 = vpop.permute.xlu0 %2242
  %v2245 = vadd.f32 %v1337, %v2243
  %s2246 = scalar_lea.vmem %s0, 16
  %v2247 = vld [vmem:[%s2246] sm:$0xff]
  %2249 = vrot.lane.b32.xlu0 %v2245, 96
  %v2250 = vpop.permute.xlu0 %2249
  %v2251 = vsel %vm97, %v2250, 0
  %2253 = vmatprep.subr.mxu0 0.0
  %2254 = vmatpush1.msra.mxu0 %v68
  %2255 = vmatprep.subr.mxu0 0.0
  %2256 = vmatpush1.msra.mxu0 %v69
  %2257 = vmatprep.subr.mxu0 0.0
  %2258 = vmatpush1.msra.mxu0 %v70
  %2259 = vmatprep.subr.mxu0 0.0
  %2260 = vmatpush1.msra.mxu0 %v71
  %2261 = vmatprep.subr.mxu0 0.0
  %2262 = vmatpush1.msra.mxu0 0.0
  %2263 = vmatprep.subr.mxu0 0.0
  %2264 = vmatpush1.msra.mxu0 0.0
  %2265 = vmatprep.subr.mxu0 0.0
  %2266 = vmatpush1.msra.mxu0 0.0
  %2267 = vmatprep.subr.mxu0 0.0
  %2268 = vmatpush1.msra.mxu0 0.0
  %2269 = vmatprep.subr.mxu0 0.0
  %2270 = vmatpush1.msra.mxu0 0.0
  %2271 = vmatprep.subr.mxu0 0.0
  %2272 = vmatpush1.msra.mxu0 0.0
  %2273 = vmatprep.subr.mxu0 0.0
  %2274 = vmatpush1.msra.mxu0 0.0
  %2275 = vmatprep.subr.mxu0 0.0
  %2276 = vmatpush1.msra.mxu0 0.0
  %2277 = vmatprep.subr.mxu0 0.0
  %2278 = vmatpush1.msra.mxu0 0.0
  %2279 = vmatprep.subr.mxu0 0.0
  %2280 = vmatpush1.msra.mxu0 0.0
  %2281 = vmatprep.subr.mxu0 0.0
  %2282 = vmatpush1.msra.mxu0 0.0
  %2283 = vmatprep.subr.mxu0 0.0
  %2284 = vmatpush1.msra.mxu0 0.0
  %2285 = vmatprep.subr.mxu0 0.0
  %2286 = vmatpush1.msra.mxu0 0.0
  %2287 = vmatprep.subr.mxu0 0.0
  %2288 = vmatpush1.msra.mxu0 0.0
  %2289 = vmatprep.subr.mxu0 0.0
  %2290 = vmatpush1.msra.mxu0 0.0
  %2291 = vmatprep.subr.mxu0 0.0
  %2292 = vmatpush1.msra.mxu0 0.0
  %2293 = vmatprep.subr.mxu0 0.0
  %2294 = vmatpush1.msra.mxu0 0.0
  %2295 = vmatprep.subr.mxu0 0.0
  %2296 = vmatpush1.msra.mxu0 0.0
  %2297 = vmatprep.subr.mxu0 0.0
  %2298 = vmatpush1.msra.mxu0 0.0
  %2299 = vmatprep.subr.mxu0 0.0
  %2300 = vmatpush1.msra.mxu0 0.0
  %2301 = vmatprep.subr.mxu0 0.0
  %2302 = vmatpush1.msra.mxu0 0.0
  %2303 = vmatprep.subr.mxu0 0.0
  %2304 = vmatpush1.msra.mxu0 0.0
  %2305 = vmatprep.subr.mxu0 0.0
  %2306 = vmatpush1.msra.mxu0 0.0
  %2307 = vmatprep.subr.mxu0 0.0
  %2308 = vmatpush1.msra.mxu0 0.0
  %2309 = vmatprep.subr.mxu0 0.0
  %2310 = vmatpush1.msra.mxu0 0.0
  %2311 = vmatprep.subr.mxu0 0.0
  %2312 = vmatpush1.msra.mxu0 0.0
  %2313 = vmatprep.subr.mxu0 0.0
  %2314 = vmatpush1.msra.mxu0 0.0
  %2315 = vmatprep.subr.mxu0 0.0
  %2316 = vmatpush1.msra.mxu0 0.0
  %2317 = vmatprep.mubr.f32.mxu0 0.0
  %2318 = vmatmul.mubr.f32.gmra.mrb[0].mxu0 %v2251
  %v2319 = vpop.f32.mrb[0].mxu0
  %v2320 = vadd.f32 %v95, %v2319
  %v2321 = vpop.f32.mrb[0].mxu0
  %2322 = vdwg.mxu0
  %v2323 = vadd.f32 %v2247, %v2320
  %v2324 = vxor.u32 %v2323, 2147483648
  %v2325 = vmul.f32 %v2324, 1.442695
  %v2326 = vpow.pop %v2325
  %v2327 = vadd.f32 %v2326, 1.0
  %v2328 = vrcp.pop %v2327
  %v2329 = vmul.f32 1.0, %v2328
  %2331 = vrot.lane.b32.xlu0 %v2320, 64
  %v2332 = vpop.permute.xlu0 %2331
  %v2334 = vmul.f32 %v2329, %v2332
  %2336 = vrot.lane.b32.xlu0 %v2334, 64
  %v2337 = vpop.permute.xlu0 %2336
  %v2339 = vadd.f32 %v2247, %v2337
  %v2340 = vtanh.pop %v2339
  %v2341 = vsub.f32 1.0, %v2329
  %2343 = vrot.lane.b32.xlu0 %v2340, 96
  %v2344 = vpop.permute.xlu0 %2343
  %v2346 = vmul.f32 %v2341, %v2344
  %v2347 = vmul.f32 %v2329, %v2245
  %v2348 = vadd.f32 %v2346, %v2347
  %2350 = vrot.lane.b32.xlu0 %v2348, 96
  %v2351 = vpop.permute.xlu0 %2350
  %v2352 = vsel %vm97, %v2351, 0
  %2354 = vmatprep.subr.mxu0 %v74
  %2355 = vmatpush1.msra.mxu0 %v73
  %2356 = vmatprep.subr.mxu0 %v76
  %2357 = vmatpush1.msra.mxu0 %v75
  %2358 = vmatprep.subr.mxu0 %v78
  %2359 = vmatpush1.msra.mxu0 %v77
  %2360 = vmatprep.subr.mxu0 %v80
  %2361 = vmatpush1.msra.mxu0 %v79
  %2362 = vmatprep.subr.mxu0 0.0
  %2363 = vmatpush1.msra.mxu0 0.0
  %2364 = vmatprep.subr.mxu0 0.0
  %2365 = vmatpush1.msra.mxu0 0.0
  %2366 = vmatprep.subr.mxu0 0.0
  %2367 = vmatpush1.msra.mxu0 0.0
  %2368 = vmatprep.subr.mxu0 0.0
  %2369 = vmatpush1.msra.mxu0 0.0
  %2370 = vmatprep.subr.mxu0 0.0
  %2371 = vmatpush1.msra.mxu0 0.0
  %2372 = vmatprep.subr.mxu0 0.0
  %2373 = vmatpush1.msra.mxu0 0.0
  %2374 = vmatprep.subr.mxu0 0.0
  %2375 = vmatpush1.msra.mxu0 0.0
  %2376 = vmatprep.subr.mxu0 0.0
  %2377 = vmatpush1.msra.mxu0 0.0
  %2378 = vmatprep.subr.mxu0 0.0
  %2379 = vmatpush1.msra.mxu0 0.0
  %2380 = vmatprep.subr.mxu0 0.0
  %2381 = vmatpush1.msra.mxu0 0.0
  %2382 = vmatprep.subr.mxu0 0.0
  %2383 = vmatpush1.msra.mxu0 0.0
  %2384 = vmatprep.subr.mxu0 0.0
  %2385 = vmatpush1.msra.mxu0 0.0
  %2386 = vmatprep.subr.mxu0 0.0
  %2387 = vmatpush1.msra.mxu0 0.0
  %2388 = vmatprep.subr.mxu0 0.0
  %2389 = vmatpush1.msra.mxu0 0.0
  %2390 = vmatprep.subr.mxu0 0.0
  %2391 = vmatpush1.msra.mxu0 0.0
  %2392 = vmatprep.subr.mxu0 0.0
  %2393 = vmatpush1.msra.mxu0 0.0
  %2394 = vmatprep.subr.mxu0 0.0
  %2395 = vmatpush1.msra.mxu0 0.0
  %2396 = vmatprep.subr.mxu0 0.0
  %2397 = vmatpush1.msra.mxu0 0.0
  %2398 = vmatprep.subr.mxu0 0.0
  %2399 = vmatpush1.msra.mxu0 0.0
  %2400 = vmatprep.subr.mxu0 0.0
  %2401 = vmatpush1.msra.mxu0 0.0
  %2402 = vmatprep.subr.mxu0 0.0
  %2403 = vmatpush1.msra.mxu0 0.0
  %2404 = vmatprep.subr.mxu0 0.0
  %2405 = vmatpush1.msra.mxu0 0.0
  %2406 = vmatprep.subr.mxu0 0.0
  %2407 = vmatpush1.msra.mxu0 0.0
  %2408 = vmatprep.subr.mxu0 0.0
  %2409 = vmatpush1.msra.mxu0 0.0
  %2410 = vmatprep.subr.mxu0 0.0
  %2411 = vmatpush1.msra.mxu0 0.0
  %2412 = vmatprep.subr.mxu0 0.0
  %2413 = vmatpush1.msra.mxu0 0.0
  %2414 = vmatprep.subr.mxu0 0.0
  %2415 = vmatpush1.msra.mxu0 0.0
  %2416 = vmatprep.subr.mxu0 0.0
  %2417 = vmatpush1.msra.mxu0 0.0
  %2418 = vmatprep.mubr.f32.mxu0 0.0
  %2419 = vmatmul.mubr.f32.gmra.mrb[0].mxu0 %v2352
  %v2420 = vpop.f32.mrb[0].mxu0
  %v2421 = vadd.f32 %v204, %v2420
  %v2422 = vpop.f32.mrb[0].mxu0
  %v2423 = vadd.f32 %v208, %v2422
  %2424 = vdwg.mxu0
  %s2425 = scalar_lea.vmem %s10, 16
  %2426 = vst [vmem:[%s2425] sm:$0xff] %v2421
  %v2428 = vcombine.high %v2423, %v2423
  %v2430 = vunpack.c.l.s4 1966171168
  %v2431 = vunpack.c.0.s8 %v2430
  %v2432 = vlaneseq
  %v2433 = vshrl.u32 %v2432, 7
  %v2434 = vsub.s32 %v2431, %v2433
  %v2435 = vrot.slane %v2423, %v2434
  %v2437 = vunpack.c.l.s4 1966171168
  %v2438 = vunpack.c.0.s8 %v2437
  %v2439 = vlaneseq
  %v2440 = vshrl.u32 %v2439, 7
  %v2441 = vsub.s32 %v2438, %v2440
  %v2442 = vrot.slane %v2428, %v2441
  %v2443 = vcombine.high %v2435, %v2435
  %v2444 = vcombine.high %v2442, %v2442
  %v2446 = vunpack.c.l.s4 1966171168
  %v2447 = vunpack.c.0.s8 %v2446
  %v2448 = vlaneseq
  %v2449 = vshrl.u32 %v2448, 7
  %v2450 = vsub.s32 %v2447, %v2449
  %v2451 = vrot.slane %v2435, %v2450
  %v2453 = vunpack.c.l.s4 1966171168
  %v2454 = vunpack.c.0.s8 %v2453
  %v2455 = vlaneseq
  %v2456 = vshrl.u32 %v2455, 7
  %v2457 = vsub.s32 %v2454, %v2456
  %v2458 = vrot.slane %v2442, %v2457
  %v2460 = vunpack.c.l.s4 1966171168
  %v2461 = vunpack.c.0.s8 %v2460
  %v2462 = vlaneseq
  %v2463 = vshrl.u32 %v2462, 7
  %v2464 = vsub.s32 %v2461, %v2463
  %v2465 = vrot.slane %v2443, %v2464
  %v2467 = vunpack.c.l.s4 1966171168
  %v2468 = vunpack.c.0.s8 %v2467
  %v2469 = vlaneseq
  %v2470 = vshrl.u32 %v2469, 7
  %v2471 = vsub.s32 %v2468, %v2470
  %v2472 = vrot.slane %v2444, %v2471
  %v2473 = vcombine.high %v2451, %v2451
  %v2474 = vcombine.high %v2458, %v2458
  %v2475 = vcombine.high %v2465, %v2465
  %v2476 = vcombine.high %v2472, %v2472
  %v2477 = vlaneseq
  %v2478 = vshrl.u32 %v2477, 7
  %v2479 = vsub.s32 0, %v2478
  %v2480 = vrot.slane %v2451, %v2479
  %v2481 = vlaneseq
  %v2482 = vshrl.u32 %v2481, 7
  %v2483 = vsub.s32 0, %v2482
  %v2484 = vrot.slane %v2465, %v2483
  %v2485 = vlaneseq
  %v2486 = vshrl.u32 %v2485, 7
  %v2487 = vsub.s32 0, %v2486
  %v2488 = vrot.slane %v2473, %v2487
  %v2489 = vlaneseq
  %v2490 = vshrl.u32 %v2489, 7
  %v2491 = vsub.s32 0, %v2490
  %v2492 = vrot.slane %v2475, %v2491
  %v2493 = vlaneseq
  %v2494 = vshrl.u32 %v2493, 7
  %v2495 = vsub.s32 0, %v2494
  %v2496 = vrot.slane %v2458, %v2495
  %v2497 = vlaneseq
  %v2498 = vshrl.u32 %v2497, 7
  %v2499 = vsub.s32 0, %v2498
  %v2500 = vrot.slane %v2472, %v2499
  %v2501 = vlaneseq
  %v2502 = vshrl.u32 %v2501, 7
  %v2503 = vsub.s32 0, %v2502
  %v2504 = vrot.slane %v2474, %v2503
  %v2505 = vlaneseq
  %v2506 = vshrl.u32 %v2505, 7
  %v2507 = vsub.s32 0, %v2506
  %v2508 = vrot.slane %v2476, %v2507
  %v2517 = vadd.f32 %v51, %v2480
  %v2518 = vadd.f32 %v52, %v2480
  %v2519 = vadd.f32 %v53, %v2484
  %v2520 = vadd.f32 %v54, %v2484
  %v2521 = vadd.f32 %v55, %v2488
  %v2522 = vadd.f32 %v56, %v2488
  %v2523 = vadd.f32 %v57, %v2492
  %v2524 = vadd.f32 %v58, %v2492
  %v2525 = vadd.f32 %v59, %v2496
  %v2526 = vadd.f32 %v60, %v2496
  %v2527 = vadd.f32 %v61, %v2500
  %v2528 = vadd.f32 %v62, %v2500
  %v2529 = vadd.f32 %v63, %v2504
  %v2530 = vadd.f32 %v64, %v2504
  %v2531 = vadd.f32 %v65, %v2508
  %v2532 = vadd.f32 %v66, %v2508
  %v2533 = vtanh.pop %v2517
  %v2534 = vtanh.pop %v2518
  %v2535 = vtanh.pop %v2519
  %v2536 = vtanh.pop %v2520
  %v2537 = vtanh.pop %v2521
  %v2538 = vtanh.pop %v2522
  %v2539 = vtanh.pop %v2523
  %v2540 = vtanh.pop %v2524
  %v2541 = vtanh.pop %v2525
  %v2542 = vtanh.pop %v2526
  %v2543 = vtanh.pop %v2527
  %v2544 = vtanh.pop %v2528
  %v2545 = vtanh.pop %v2529
  %v2546 = vtanh.pop %v2530
  %v2547 = vtanh.pop %v2531
  %v2548 = vtanh.pop %v2532
  %v2549 = vmul.f32 %v2533, %v87
  %v2550 = vmul.f32 %v2534, %v87
  %v2551 = vmul.f32 %v2535, %v87
  %v2552 = vmul.f32 %v2536, %v87
  %v2553 = vmul.f32 %v2537, %v87
  %v2554 = vmul.f32 %v2538, %v87
  %v2555 = vmul.f32 %v2539, %v87
  %v2556 = vmul.f32 %v2540, %v87
  %v2557 = vmul.f32 %v2541, %v87
  %v2558 = vmul.f32 %v2542, %v87
  %v2559 = vmul.f32 %v2543, %v87
  %v2560 = vmul.f32 %v2544, %v87
  %v2561 = vmul.f32 %v2545, %v87
  %v2562 = vmul.f32 %v2546, %v87
  %v2563 = vmul.f32 %v2547, %v87
  %v2564 = vmul.f32 %v2548, %v87
  %v2565 = vsel %vm97, %v2549, 0.0
  %2566 = vadd.xlane.f32.xlu0 %v2565
  %v2567 = vpop.xlane.xlu0 %2566
  %v2568 = vsel %vm97, %v2550, 0.0
  %2569 = vadd.xlane.f32.xlu0 %v2568
  %v2570 = vpop.xlane.xlu0 %2569
  %v2571 = vsel %vm97, %v2551, 0.0
  %2572 = vadd.xlane.f32.xlu0 %v2571
  %v2573 = vpop.xlane.xlu0 %2572
  %v2574 = vsel %vm97, %v2552, 0.0
  %2575 = vadd.xlane.f32.xlu0 %v2574
  %v2576 = vpop.xlane.xlu0 %2575
  %v2577 = vsel %vm97, %v2553, 0.0
  %2578 = vadd.xlane.f32.xlu0 %v2577
  %v2579 = vpop.xlane.xlu0 %2578
  %v2580 = vsel %vm97, %v2554, 0.0
  %2581 = vadd.xlane.f32.xlu0 %v2580
  %v2582 = vpop.xlane.xlu0 %2581
  %v2583 = vsel %vm97, %v2555, 0.0
  %2584 = vadd.xlane.f32.xlu0 %v2583
  %v2585 = vpop.xlane.xlu0 %2584
  %v2586 = vsel %vm97, %v2556, 0.0
  %2587 = vadd.xlane.f32.xlu0 %v2586
  %v2588 = vpop.xlane.xlu0 %2587
  %v2589 = vsel %vm97, %v2557, 0.0
  %2590 = vadd.xlane.f32.xlu0 %v2589
  %v2591 = vpop.xlane.xlu0 %2590
  %v2592 = vsel %vm97, %v2558, 0.0
  %2593 = vadd.xlane.f32.xlu0 %v2592
  %v2594 = vpop.xlane.xlu0 %2593
  %v2595 = vsel %vm97, %v2559, 0.0
  %2596 = vadd.xlane.f32.xlu0 %v2595
  %v2597 = vpop.xlane.xlu0 %2596
  %v2598 = vsel %vm97, %v2560, 0.0
  %2599 = vadd.xlane.f32.xlu0 %v2598
  %v2600 = vpop.xlane.xlu0 %2599
  %v2601 = vsel %vm97, %v2561, 0.0
  %2602 = vadd.xlane.f32.xlu0 %v2601
  %v2603 = vpop.xlane.xlu0 %2602
  %v2604 = vsel %vm97, %v2562, 0.0
  %2605 = vadd.xlane.f32.xlu0 %v2604
  %v2606 = vpop.xlane.xlu0 %2605
  %v2607 = vsel %vm97, %v2563, 0.0
  %2608 = vadd.xlane.f32.xlu0 %v2607
  %v2609 = vpop.xlane.xlu0 %2608
  %v2610 = vsel %vm97, %v2564, 0.0
  %2611 = vadd.xlane.f32.xlu0 %v2610
  %v2612 = vpop.xlane.xlu0 %2611
  %v2613 = vadd.f32 %v2567, %v481
  %v2614 = vadd.f32 %v2570, %v485
  %v2615 = vadd.f32 %v2573, %v492
  %v2616 = vadd.f32 %v2576, %v496
  %v2617 = vadd.f32 %v2579, %v503
  %v2618 = vadd.f32 %v2582, %v507
  %v2619 = vadd.f32 %v2585, %v514
  %v2620 = vadd.f32 %v2588, %v518
  %v2621 = vadd.f32 %v2591, %v525
  %v2622 = vadd.f32 %v2594, %v529
  %v2623 = vadd.f32 %v2597, %v536
  %v2624 = vadd.f32 %v2600, %v540
  %v2625 = vadd.f32 %v2603, %v547
  %v2626 = vadd.f32 %v2606, %v551
  %v2627 = vadd.f32 %v2609, %v558
  %v2628 = vadd.f32 %v2612, %v562
  %2645 = vset.pattern.permute.xlu0 0
  %2646 = vperm.xlu0 %2645, %v2613
  %v2647 = vpop.permute.xlu0 %2646
  %2648 = vset.pattern.permute.xlu0 0
  %2649 = vperm.xlu0 %2648, %v2614
  %v2650 = vpop.permute.xlu0 %2649
  %2651 = vset.pattern.permute.xlu0 0
  %2652 = vperm.xlu0 %2651, %v2615
  %v2653 = vpop.permute.xlu0 %2652
  %2654 = vset.pattern.permute.xlu0 0
  %2655 = vperm.xlu0 %2654, %v2616
  %v2656 = vpop.permute.xlu0 %2655
  %2657 = vset.pattern.permute.xlu0 0
  %2658 = vperm.xlu0 %2657, %v2617
  %v2659 = vpop.permute.xlu0 %2658
  %2660 = vset.pattern.permute.xlu0 0
  %2661 = vperm.xlu0 %2660, %v2618
  %v2662 = vpop.permute.xlu0 %2661
  %2663 = vset.pattern.permute.xlu0 0
  %2664 = vperm.xlu0 %2663, %v2619
  %v2665 = vpop.permute.xlu0 %2664
  %2666 = vset.pattern.permute.xlu0 0
  %2667 = vperm.xlu0 %2666, %v2620
  %v2668 = vpop.permute.xlu0 %2667
  %2669 = vset.pattern.permute.xlu0 0
  %2670 = vperm.xlu0 %2669, %v2621
  %v2671 = vpop.permute.xlu0 %2670
  %2672 = vset.pattern.permute.xlu0 0
  %2673 = vperm.xlu0 %2672, %v2622
  %v2674 = vpop.permute.xlu0 %2673
  %2675 = vset.pattern.permute.xlu0 0
  %2676 = vperm.xlu0 %2675, %v2623
  %v2677 = vpop.permute.xlu0 %2676
  %2678 = vset.pattern.permute.xlu0 0
  %2679 = vperm.xlu0 %2678, %v2624
  %v2680 = vpop.permute.xlu0 %2679
  %2681 = vset.pattern.permute.xlu0 0
  %2682 = vperm.xlu0 %2681, %v2625
  %v2683 = vpop.permute.xlu0 %2682
  %2684 = vset.pattern.permute.xlu0 0
  %2685 = vperm.xlu0 %2684, %v2626
  %v2686 = vpop.permute.xlu0 %2685
  %2687 = vset.pattern.permute.xlu0 0
  %2688 = vperm.xlu0 %2687, %v2627
  %v2689 = vpop.permute.xlu0 %2688
  %2690 = vset.pattern.permute.xlu0 0
  %2691 = vperm.xlu0 %2690, %v2628
  %v2692 = vpop.permute.xlu0 %2691
  %v2693 = vlaneseq
  %v2694 = vshrl.u32 %v2693, 7
  %v2695 = vsub.s32 %v660, %v2694
  %v2696 = vrot.slane %v2647, %v2695
  %v2697 = vlaneseq
  %v2698 = vshrl.u32 %v2697, 7
  %v2699 = vsub.s32 %v665, %v2698
  %v2700 = vrot.slane %v2650, %v2699
  %v2701 = vsel %vm670, %v2700, %v2696
  %v2702 = vlaneseq
  %v2703 = vshrl.u32 %v2702, 7
  %v2704 = vsub.s32 %v660, %v2703
  %v2705 = vrot.slane %v2653, %v2704
  %v2706 = vlaneseq
  %v2707 = vshrl.u32 %v2706, 7
  %v2708 = vsub.s32 %v665, %v2707
  %v2709 = vrot.slane %v2656, %v2708
  %v2710 = vsel %vm670, %v2709, %v2705
  %v2711 = vlaneseq
  %v2712 = vshrl.u32 %v2711, 7
  %v2713 = vsub.s32 %v660, %v2712
  %v2714 = vrot.slane %v2659, %v2713
  %v2715 = vlaneseq
  %v2716 = vshrl.u32 %v2715, 7
  %v2717 = vsub.s32 %v665, %v2716
  %v2718 = vrot.slane %v2662, %v2717
  %v2719 = vsel %vm670, %v2718, %v2714
  %v2720 = vlaneseq
  %v2721 = vshrl.u32 %v2720, 7
  %v2722 = vsub.s32 %v660, %v2721
  %v2723 = vrot.slane %v2665, %v2722
  %v2724 = vlaneseq
  %v2725 = vshrl.u32 %v2724, 7
  %v2726 = vsub.s32 %v665, %v2725
  %v2727 = vrot.slane %v2668, %v2726
  %v2728 = vsel %vm670, %v2727, %v2723
  %v2729 = vlaneseq
  %v2730 = vshrl.u32 %v2729, 7
  %v2731 = vsub.s32 %v660, %v2730
  %v2732 = vrot.slane %v2671, %v2731
  %v2733 = vlaneseq
  %v2734 = vshrl.u32 %v2733, 7
  %v2735 = vsub.s32 %v665, %v2734
  %v2736 = vrot.slane %v2674, %v2735
  %v2737 = vsel %vm670, %v2736, %v2732
  %v2738 = vlaneseq
  %v2739 = vshrl.u32 %v2738, 7
  %v2740 = vsub.s32 %v660, %v2739
  %v2741 = vrot.slane %v2677, %v2740
  %v2742 = vlaneseq
  %v2743 = vshrl.u32 %v2742, 7
  %v2744 = vsub.s32 %v665, %v2743
  %v2745 = vrot.slane %v2680, %v2744
  %v2746 = vsel %vm670, %v2745, %v2741
  %v2747 = vlaneseq
  %v2748 = vshrl.u32 %v2747, 7
  %v2749 = vsub.s32 %v660, %v2748
  %v2750 = vrot.slane %v2683, %v2749
  %v2751 = vlaneseq
  %v2752 = vshrl.u32 %v2751, 7
  %v2753 = vsub.s32 %v665, %v2752
  %v2754 = vrot.slane %v2686, %v2753
  %v2755 = vsel %vm670, %v2754, %v2750
  %v2756 = vlaneseq
  %v2757 = vshrl.u32 %v2756, 7
  %v2758 = vsub.s32 %v660, %v2757
  %v2759 = vrot.slane %v2689, %v2758
  %v2760 = vlaneseq
  %v2761 = vshrl.u32 %v2760, 7
  %v2762 = vsub.s32 %v665, %v2761
  %v2763 = vrot.slane %v2692, %v2762
  %v2764 = vsel %vm670, %v2763, %v2759
  %v2765 = vsel %vm735, %v2710, %v2701
  %v2766 = vsel %vm737, %v2719, %v2765
  %v2767 = vsel %vm739, %v2728, %v2766
  %v2768 = vsel %vm741, %v2737, %v2767
  %v2769 = vsel %vm743, %v2746, %v2768
  %v2770 = vsel %vm745, %v2755, %v2769
  %v2771 = vsel %vm747, %v2764, %v2770
  %v2773 = vsel %vm750, %v2771, -inf
  %2774 = vmax.xlane.f32.xlu0 %v2773
  %v2775 = vpop.xlane.xlu0 %2774
  %v2777 = vlaneseq
  %v2778 = vshrl.u32 %v2777, 7
  %v2779 = vsub.s32 0, %v2778
  %v2780 = vrot.slane %v2775, %v2779
  %v2781 = vlaneseq
  %v2782 = vshrl.u32 %v2781, 7
  %v2783 = vsub.s32 1, %v2782
  %v2784 = vrot.slane %v2775, %v2783
  %v2785 = vlaneseq
  %v2786 = vshrl.u32 %v2785, 7
  %v2787 = vsub.s32 2, %v2786
  %v2788 = vrot.slane %v2775, %v2787
  %v2789 = vlaneseq
  %v2790 = vshrl.u32 %v2789, 7
  %v2791 = vsub.s32 3, %v2790
  %v2792 = vrot.slane %v2775, %v2791
  %v2793 = vlaneseq
  %v2794 = vshrl.u32 %v2793, 7
  %v2795 = vsub.s32 4, %v2794
  %v2796 = vrot.slane %v2775, %v2795
  %v2797 = vlaneseq
  %v2798 = vshrl.u32 %v2797, 7
  %v2799 = vsub.s32 5, %v2798
  %v2800 = vrot.slane %v2775, %v2799
  %v2801 = vlaneseq
  %v2802 = vshrl.u32 %v2801, 7
  %v2803 = vsub.s32 6, %v2802
  %v2804 = vrot.slane %v2775, %v2803
  %v2805 = vlaneseq
  %v2806 = vshrl.u32 %v2805, 7
  %v2807 = vsub.s32 7, %v2806
  %v2808 = vrot.slane %v2775, %v2807
  %v2817 = vsub.f32 %v2613, %v2780
  %v2818 = vsub.f32 %v2614, %v2780
  %v2819 = vsub.f32 %v2615, %v2784
  %v2820 = vsub.f32 %v2616, %v2784
  %v2821 = vsub.f32 %v2617, %v2788
  %v2822 = vsub.f32 %v2618, %v2788
  %v2823 = vsub.f32 %v2619, %v2792
  %v2824 = vsub.f32 %v2620, %v2792
  %v2825 = vsub.f32 %v2621, %v2796
  %v2826 = vsub.f32 %v2622, %v2796
  %v2827 = vsub.f32 %v2623, %v2800
  %v2828 = vsub.f32 %v2624, %v2800
  %v2829 = vsub.f32 %v2625, %v2804
  %v2830 = vsub.f32 %v2626, %v2804
  %v2831 = vsub.f32 %v2627, %v2808
  %v2832 = vsub.f32 %v2628, %v2808
  %v2833 = vmul.f32 %v2817, 1.442695
  %v2834 = vpow.pop %v2833
  %v2835 = vmul.f32 %v2818, 1.442695
  %v2836 = vpow.pop %v2835
  %v2837 = vmul.f32 %v2819, 1.442695
  %v2838 = vpow.pop %v2837
  %v2839 = vmul.f32 %v2820, 1.442695
  %v2840 = vpow.pop %v2839
  %v2841 = vmul.f32 %v2821, 1.442695
  %v2842 = vpow.pop %v2841
  %v2843 = vmul.f32 %v2822, 1.442695
  %v2844 = vpow.pop %v2843
  %v2845 = vmul.f32 %v2823, 1.442695
  %v2846 = vpow.pop %v2845
  %v2847 = vmul.f32 %v2824, 1.442695
  %v2848 = vpow.pop %v2847
  %v2849 = vmul.f32 %v2825, 1.442695
  %v2850 = vpow.pop %v2849
  %v2851 = vmul.f32 %v2826, 1.442695
  %v2852 = vpow.pop %v2851
  %v2853 = vmul.f32 %v2827, 1.442695
  %v2854 = vpow.pop %v2853
  %v2855 = vmul.f32 %v2828, 1.442695
  %v2856 = vpow.pop %v2855
  %v2857 = vmul.f32 %v2829, 1.442695
  %v2858 = vpow.pop %v2857
  %v2859 = vmul.f32 %v2830, 1.442695
  %v2860 = vpow.pop %v2859
  %v2861 = vmul.f32 %v2831, 1.442695
  %v2862 = vpow.pop %v2861
  %v2863 = vmul.f32 %v2832, 1.442695
  %v2864 = vpow.pop %v2863
  %2881 = vset.pattern.permute.xlu0 0
  %2882 = vperm.xlu0 %2881, %v2834
  %v2883 = vpop.permute.xlu0 %2882
  %2884 = vset.pattern.permute.xlu0 0
  %2885 = vperm.xlu0 %2884, %v2836
  %v2886 = vpop.permute.xlu0 %2885
  %2887 = vset.pattern.permute.xlu0 0
  %2888 = vperm.xlu0 %2887, %v2838
  %v2889 = vpop.permute.xlu0 %2888
  %2890 = vset.pattern.permute.xlu0 0
  %2891 = vperm.xlu0 %2890, %v2840
  %v2892 = vpop.permute.xlu0 %2891
  %2893 = vset.pattern.permute.xlu0 0
  %2894 = vperm.xlu0 %2893, %v2842
  %v2895 = vpop.permute.xlu0 %2894
  %2896 = vset.pattern.permute.xlu0 0
  %2897 = vperm.xlu0 %2896, %v2844
  %v2898 = vpop.permute.xlu0 %2897
  %2899 = vset.pattern.permute.xlu0 0
  %2900 = vperm.xlu0 %2899, %v2846
  %v2901 = vpop.permute.xlu0 %2900
  %2902 = vset.pattern.permute.xlu0 0
  %2903 = vperm.xlu0 %2902, %v2848
  %v2904 = vpop.permute.xlu0 %2903
  %2905 = vset.pattern.permute.xlu0 0
  %2906 = vperm.xlu0 %2905, %v2850
  %v2907 = vpop.permute.xlu0 %2906
  %2908 = vset.pattern.permute.xlu0 0
  %2909 = vperm.xlu0 %2908, %v2852
  %v2910 = vpop.permute.xlu0 %2909
  %2911 = vset.pattern.permute.xlu0 0
  %2912 = vperm.xlu0 %2911, %v2854
  %v2913 = vpop.permute.xlu0 %2912
  %2914 = vset.pattern.permute.xlu0 0
  %2915 = vperm.xlu0 %2914, %v2856
  %v2916 = vpop.permute.xlu0 %2915
  %2917 = vset.pattern.permute.xlu0 0
  %2918 = vperm.xlu0 %2917, %v2858
  %v2919 = vpop.permute.xlu0 %2918
  %2920 = vset.pattern.permute.xlu0 0
  %2921 = vperm.xlu0 %2920, %v2860
  %v2922 = vpop.permute.xlu0 %2921
  %2923 = vset.pattern.permute.xlu0 0
  %2924 = vperm.xlu0 %2923, %v2862
  %v2925 = vpop.permute.xlu0 %2924
  %2926 = vset.pattern.permute.xlu0 0
  %2927 = vperm.xlu0 %2926, %v2864
  %v2928 = vpop.permute.xlu0 %2927
  %v2929 = vlaneseq
  %v2930 = vshrl.u32 %v2929, 7
  %v2931 = vsub.s32 %v660, %v2930
  %v2932 = vrot.slane %v2883, %v2931
  %v2933 = vlaneseq
  %v2934 = vshrl.u32 %v2933, 7
  %v2935 = vsub.s32 %v665, %v2934
  %v2936 = vrot.slane %v2886, %v2935
  %v2937 = vsel %vm670, %v2936, %v2932
  %v2938 = vlaneseq
  %v2939 = vshrl.u32 %v2938, 7
  %v2940 = vsub.s32 %v660, %v2939
  %v2941 = vrot.slane %v2889, %v2940
  %v2942 = vlaneseq
  %v2943 = vshrl.u32 %v2942, 7
  %v2944 = vsub.s32 %v665, %v2943
  %v2945 = vrot.slane %v2892, %v2944
  %v2946 = vsel %vm670, %v2945, %v2941
  %v2947 = vlaneseq
  %v2948 = vshrl.u32 %v2947, 7
  %v2949 = vsub.s32 %v660, %v2948
  %v2950 = vrot.slane %v2895, %v2949
  %v2951 = vlaneseq
  %v2952 = vshrl.u32 %v2951, 7
  %v2953 = vsub.s32 %v665, %v2952
  %v2954 = vrot.slane %v2898, %v2953
  %v2955 = vsel %vm670, %v2954, %v2950
  %v2956 = vlaneseq
  %v2957 = vshrl.u32 %v2956, 7
  %v2958 = vsub.s32 %v660, %v2957
  %v2959 = vrot.slane %v2901, %v2958
  %v2960 = vlaneseq
  %v2961 = vshrl.u32 %v2960, 7
  %v2962 = vsub.s32 %v665, %v2961
  %v2963 = vrot.slane %v2904, %v2962
  %v2964 = vsel %vm670, %v2963, %v2959
  %v2965 = vlaneseq
  %v2966 = vshrl.u32 %v2965, 7
  %v2967 = vsub.s32 %v660, %v2966
  %v2968 = vrot.slane %v2907, %v2967
  %v2969 = vlaneseq
  %v2970 = vshrl.u32 %v2969, 7
  %v2971 = vsub.s32 %v665, %v2970
  %v2972 = vrot.slane %v2910, %v2971
  %v2973 = vsel %vm670, %v2972, %v2968
  %v2974 = vlaneseq
  %v2975 = vshrl.u32 %v2974, 7
  %v2976 = vsub.s32 %v660, %v2975
  %v2977 = vrot.slane %v2913, %v2976
  %v2978 = vlaneseq
  %v2979 = vshrl.u32 %v2978, 7
  %v2980 = vsub.s32 %v665, %v2979
  %v2981 = vrot.slane %v2916, %v2980
  %v2982 = vsel %vm670, %v2981, %v2977
  %v2983 = vlaneseq
  %v2984 = vshrl.u32 %v2983, 7
  %v2985 = vsub.s32 %v660, %v2984
  %v2986 = vrot.slane %v2919, %v2985
  %v2987 = vlaneseq
  %v2988 = vshrl.u32 %v2987, 7
  %v2989 = vsub.s32 %v665, %v2988
  %v2990 = vrot.slane %v2922, %v2989
  %v2991 = vsel %vm670, %v2990, %v2986
  %v2992 = vlaneseq
  %v2993 = vshrl.u32 %v2992, 7
  %v2994 = vsub.s32 %v660, %v2993
  %v2995 = vrot.slane %v2925, %v2994
  %v2996 = vlaneseq
  %v2997 = vshrl.u32 %v2996, 7
  %v2998 = vsub.s32 %v665, %v2997
  %v2999 = vrot.slane %v2928, %v2998
  %v3000 = vsel %vm670, %v2999, %v2995
  %v3001 = vsel %vm735, %v2946, %v2937
  %v3002 = vsel %vm737, %v2955, %v3001
  %v3003 = vsel %vm739, %v2964, %v3002
  %v3004 = vsel %vm741, %v2973, %v3003
  %v3005 = vsel %vm743, %v2982, %v3004
  %v3006 = vsel %vm745, %v2991, %v3005
  %v3007 = vsel %vm747, %v3000, %v3006
  %v3009 = vsel %vm750, %v3007, 0.0
  %3010 = vadd.xlane.f32.xlu0 %v3009
  %v3011 = vpop.xlane.xlu0 %3010
  %v3012 = vrcp.pop %v3011
  %v3014 = vlaneseq
  %v3015 = vshrl.u32 %v3014, 7
  %v3016 = vsub.s32 0, %v3015
  %v3017 = vrot.slane %v3012, %v3016
  %v3018 = vlaneseq
  %v3019 = vshrl.u32 %v3018, 7
  %v3020 = vsub.s32 1, %v3019
  %v3021 = vrot.slane %v3012, %v3020
  %v3022 = vlaneseq
  %v3023 = vshrl.u32 %v3022, 7
  %v3024 = vsub.s32 2, %v3023
  %v3025 = vrot.slane %v3012, %v3024
  %v3026 = vlaneseq
  %v3027 = vshrl.u32 %v3026, 7
  %v3028 = vsub.s32 3, %v3027
  %v3029 = vrot.slane %v3012, %v3028
  %v3030 = vlaneseq
  %v3031 = vshrl.u32 %v3030, 7
  %v3032 = vsub.s32 4, %v3031
  %v3033 = vrot.slane %v3012, %v3032
  %v3034 = vlaneseq
  %v3035 = vshrl.u32 %v3034, 7
  %v3036 = vsub.s32 5, %v3035
  %v3037 = vrot.slane %v3012, %v3036
  %v3038 = vlaneseq
  %v3039 = vshrl.u32 %v3038, 7
  %v3040 = vsub.s32 6, %v3039
  %v3041 = vrot.slane %v3012, %v3040
  %v3042 = vlaneseq
  %v3043 = vshrl.u32 %v3042, 7
  %v3044 = vsub.s32 7, %v3043
  %v3045 = vrot.slane %v3012, %v3044
  %v3054 = vmul.f32 %v2834, %v3017
  %v3055 = vmul.f32 %v2836, %v3017
  %v3056 = vmul.f32 %v2838, %v3021
  %v3057 = vmul.f32 %v2840, %v3021
  %v3058 = vmul.f32 %v2842, %v3025
  %v3059 = vmul.f32 %v2844, %v3025
  %v3060 = vmul.f32 %v2846, %v3029
  %v3061 = vmul.f32 %v2848, %v3029
  %v3062 = vmul.f32 %v2850, %v3033
  %v3063 = vmul.f32 %v2852, %v3033
  %v3064 = vmul.f32 %v2854, %v3037
  %v3065 = vmul.f32 %v2856, %v3037
  %v3066 = vmul.f32 %v2858, %v3041
  %v3067 = vmul.f32 %v2860, %v3041
  %v3068 = vmul.f32 %v2862, %v3045
  %v3069 = vmul.f32 %v2864, %v3045
  %3071 = vset.pattern.permute.xlu0 0
  %3072 = vperm.xlu0 %3071, %v3054
  %v3073 = vpop.permute.xlu0 %3072
  %3076 = vset.pattern.permute.xlu0 0
  %3077 = vperm.xlu0 %3076, %v3055
  %v3078 = vpop.permute.xlu0 %3077
  %3081 = vset.pattern.permute.xlu0 0
  %3082 = vperm.xlu0 %3081, %v3056
  %v3083 = vpop.permute.xlu0 %3082
  %3086 = vset.pattern.permute.xlu0 0
  %3087 = vperm.xlu0 %3086, %v3057
  %v3088 = vpop.permute.xlu0 %3087
  %3091 = vset.pattern.permute.xlu0 0
  %3092 = vperm.xlu0 %3091, %v3058
  %v3093 = vpop.permute.xlu0 %3092
  %3096 = vset.pattern.permute.xlu0 0
  %3097 = vperm.xlu0 %3096, %v3059
  %v3098 = vpop.permute.xlu0 %3097
  %3101 = vset.pattern.permute.xlu0 0
  %3102 = vperm.xlu0 %3101, %v3060
  %v3103 = vpop.permute.xlu0 %3102
  %3106 = vset.pattern.permute.xlu0 0
  %3107 = vperm.xlu0 %3106, %v3061
  %v3108 = vpop.permute.xlu0 %3107
  %3111 = vset.pattern.permute.xlu0 0
  %3112 = vperm.xlu0 %3111, %v3062
  %v3113 = vpop.permute.xlu0 %3112
  %3116 = vset.pattern.permute.xlu0 0
  %3117 = vperm.xlu0 %3116, %v3063
  %v3118 = vpop.permute.xlu0 %3117
  %3121 = vset.pattern.permute.xlu0 0
  %3122 = vperm.xlu0 %3121, %v3064
  %v3123 = vpop.permute.xlu0 %3122
  %3126 = vset.pattern.permute.xlu0 0
  %3127 = vperm.xlu0 %3126, %v3065
  %v3128 = vpop.permute.xlu0 %3127
  %3131 = vset.pattern.permute.xlu0 0
  %3132 = vperm.xlu0 %3131, %v3066
  %v3133 = vpop.permute.xlu0 %3132
  %3136 = vset.pattern.permute.xlu0 0
  %3137 = vperm.xlu0 %3136, %v3067
  %v3138 = vpop.permute.xlu0 %3137
  %3141 = vset.pattern.permute.xlu0 0
  %3142 = vperm.xlu0 %3141, %v3068
  %v3143 = vpop.permute.xlu0 %3142
  %3146 = vset.pattern.permute.xlu0 0
  %3147 = vperm.xlu0 %3146, %v3069
  %v3148 = vpop.permute.xlu0 %3147
  %v3150 = vmul.f32 %v3073, %v35
  %v3151 = vmul.f32 %v3078, %v36
  %v3152 = vmul.f32 %v3083, %v37
  %v3153 = vmul.f32 %v3088, %v38
  %v3154 = vmul.f32 %v3093, %v39
  %v3155 = vmul.f32 %v3098, %v40
  %v3156 = vmul.f32 %v3103, %v41
  %v3157 = vmul.f32 %v3108, %v42
  %v3158 = vmul.f32 %v3113, %v43
  %v3159 = vmul.f32 %v3118, %v44
  %v3160 = vmul.f32 %v3123, %v45
  %v3161 = vmul.f32 %v3128, %v46
  %v3162 = vmul.f32 %v3133, %v47
  %v3163 = vmul.f32 %v3138, %v48
  %v3164 = vmul.f32 %v3143, %v49
  %v3165 = vmul.f32 %v3148, %v50
  %v3166 = vsel %vm97, %v3150, 0.0
  %v3167 = vsel %vm97, %v3151, 0.0
  %v3168 = vadd.f32 %v3166, %v3167
  %v3169 = vrot.slane %v3168, 4
  %v3170 = vadd.f32 %v3168, %v3169
  %v3171 = vrot.slane %v3170, 2
  %v3172 = vadd.f32 %v3170, %v3171
  %v3173 = vrot.slane %v3172, 1
  %v3174 = vadd.f32 %v3172, %v3173
  %v3175 = vsel %vm97, %v3152, 0.0
  %v3176 = vsel %vm97, %v3153, 0.0
  %v3177 = vadd.f32 %v3175, %v3176
  %v3178 = vrot.slane %v3177, 4
  %v3179 = vadd.f32 %v3177, %v3178
  %v3180 = vrot.slane %v3179, 2
  %v3181 = vadd.f32 %v3179, %v3180
  %v3182 = vrot.slane %v3181, 1
  %v3183 = vadd.f32 %v3181, %v3182
  %v3184 = vsel %vm97, %v3154, 0.0
  %v3185 = vsel %vm97, %v3155, 0.0
  %v3186 = vadd.f32 %v3184, %v3185
  %v3187 = vrot.slane %v3186, 4
  %v3188 = vadd.f32 %v3186, %v3187
  %v3189 = vrot.slane %v3188, 2
  %v3190 = vadd.f32 %v3188, %v3189
  %v3191 = vrot.slane %v3190, 1
  %v3192 = vadd.f32 %v3190, %v3191
  %v3193 = vsel %vm97, %v3156, 0.0
  %v3194 = vsel %vm97, %v3157, 0.0
  %v3195 = vadd.f32 %v3193, %v3194
  %v3196 = vrot.slane %v3195, 4
  %v3197 = vadd.f32 %v3195, %v3196
  %v3198 = vrot.slane %v3197, 2
  %v3199 = vadd.f32 %v3197, %v3198
  %v3200 = vrot.slane %v3199, 1
  %v3201 = vadd.f32 %v3199, %v3200
  %v3202 = vsel %vm97, %v3158, 0.0
  %v3203 = vsel %vm97, %v3159, 0.0
  %v3204 = vadd.f32 %v3202, %v3203
  %v3205 = vrot.slane %v3204, 4
  %v3206 = vadd.f32 %v3204, %v3205
  %v3207 = vrot.slane %v3206, 2
  %v3208 = vadd.f32 %v3206, %v3207
  %v3209 = vrot.slane %v3208, 1
  %v3210 = vadd.f32 %v3208, %v3209
  %v3211 = vsel %vm97, %v3160, 0.0
  %v3212 = vsel %vm97, %v3161, 0.0
  %v3213 = vadd.f32 %v3211, %v3212
  %v3214 = vrot.slane %v3213, 4
  %v3215 = vadd.f32 %v3213, %v3214
  %v3216 = vrot.slane %v3215, 2
  %v3217 = vadd.f32 %v3215, %v3216
  %v3218 = vrot.slane %v3217, 1
  %v3219 = vadd.f32 %v3217, %v3218
  %v3220 = vsel %vm97, %v3162, 0.0
  %v3221 = vsel %vm97, %v3163, 0.0
  %v3222 = vadd.f32 %v3220, %v3221
  %v3223 = vrot.slane %v3222, 4
  %v3224 = vadd.f32 %v3222, %v3223
  %v3225 = vrot.slane %v3224, 2
  %v3226 = vadd.f32 %v3224, %v3225
  %v3227 = vrot.slane %v3226, 1
  %v3228 = vadd.f32 %v3226, %v3227
  %v3229 = vsel %vm97, %v3164, 0.0
  %v3230 = vsel %vm97, %v3165, 0.0
  %v3231 = vadd.f32 %v3229, %v3230
  %v3232 = vrot.slane %v3231, 4
  %v3233 = vadd.f32 %v3231, %v3232
  %v3234 = vrot.slane %v3233, 2
  %v3235 = vadd.f32 %v3233, %v3234
  %v3236 = vrot.slane %v3235, 1
  %v3237 = vadd.f32 %v3235, %v3236
  %v3246 = vsel %vm735, %v3183, %v3174
  %v3247 = vsel %vm737, %v3192, %v3246
  %v3248 = vsel %vm739, %v3201, %v3247
  %v3249 = vsel %vm741, %v3210, %v3248
  %v3250 = vsel %vm743, %v3219, %v3249
  %v3251 = vsel %vm745, %v3228, %v3250
  %v3252 = vsel %vm747, %v3237, %v3251
  %3253 = vrot.lane.b32.xlu0 %v3252, 32
  %v3254 = vpop.permute.xlu0 %3253
  %v3256 = vadd.f32 %v2348, %v3254
  %s3257 = scalar_lea.vmem %s0, 24
  %v3258 = vld [vmem:[%s3257] sm:$0xff]
  %3260 = vrot.lane.b32.xlu0 %v3256, 96
  %v3261 = vpop.permute.xlu0 %3260
  %v3262 = vsel %vm97, %v3261, 0
  %3264 = vmatprep.subr.mxu0 0.0
  %3265 = vmatpush1.msra.mxu0 %v68
  %3266 = vmatprep.subr.mxu0 0.0
  %3267 = vmatpush1.msra.mxu0 %v69
  %3268 = vmatprep.subr.mxu0 0.0
  %3269 = vmatpush1.msra.mxu0 %v70
  %3270 = vmatprep.subr.mxu0 0.0
  %3271 = vmatpush1.msra.mxu0 %v71
  %3272 = vmatprep.subr.mxu0 0.0
  %3273 = vmatpush1.msra.mxu0 0.0
  %3274 = vmatprep.subr.mxu0 0.0
  %3275 = vmatpush1.msra.mxu0 0.0
  %3276 = vmatprep.subr.mxu0 0.0
  %3277 = vmatpush1.msra.mxu0 0.0
  %3278 = vmatprep.subr.mxu0 0.0
  %3279 = vmatpush1.msra.mxu0 0.0
  %3280 = vmatprep.subr.mxu0 0.0
  %3281 = vmatpush1.msra.mxu0 0.0
  %3282 = vmatprep.subr.mxu0 0.0
  %3283 = vmatpush1.msra.mxu0 0.0
  %3284 = vmatprep.subr.mxu0 0.0
  %3285 = vmatpush1.msra.mxu0 0.0
  %3286 = vmatprep.subr.mxu0 0.0
  %3287 = vmatpush1.msra.mxu0 0.0
  %3288 = vmatprep.subr.mxu0 0.0
  %3289 = vmatpush1.msra.mxu0 0.0
  %3290 = vmatprep.subr.mxu0 0.0
  %3291 = vmatpush1.msra.mxu0 0.0
  %3292 = vmatprep.subr.mxu0 0.0
  %3293 = vmatpush1.msra.mxu0 0.0
  %3294 = vmatprep.subr.mxu0 0.0
  %3295 = vmatpush1.msra.mxu0 0.0
  %3296 = vmatprep.subr.mxu0 0.0
  %3297 = vmatpush1.msra.mxu0 0.0
  %3298 = vmatprep.subr.mxu0 0.0
  %3299 = vmatpush1.msra.mxu0 0.0
  %3300 = vmatprep.subr.mxu0 0.0
  %3301 = vmatpush1.msra.mxu0 0.0
  %3302 = vmatprep.subr.mxu0 0.0
  %3303 = vmatpush1.msra.mxu0 0.0
  %3304 = vmatprep.subr.mxu0 0.0
  %3305 = vmatpush1.msra.mxu0 0.0
  %3306 = vmatprep.subr.mxu0 0.0
  %3307 = vmatpush1.msra.mxu0 0.0
  %3308 = vmatprep.subr.mxu0 0.0
  %3309 = vmatpush1.msra.mxu0 0.0
  %3310 = vmatprep.subr.mxu0 0.0
  %3311 = vmatpush1.msra.mxu0 0.0
  %3312 = vmatprep.subr.mxu0 0.0
  %3313 = vmatpush1.msra.mxu0 0.0
  %3314 = vmatprep.subr.mxu0 0.0
  %3315 = vmatpush1.msra.mxu0 0.0
  %3316 = vmatprep.subr.mxu0 0.0
  %3317 = vmatpush1.msra.mxu0 0.0
  %3318 = vmatprep.subr.mxu0 0.0
  %3319 = vmatpush1.msra.mxu0 0.0
  %3320 = vmatprep.subr.mxu0 0.0
  %3321 = vmatpush1.msra.mxu0 0.0
  %3322 = vmatprep.subr.mxu0 0.0
  %3323 = vmatpush1.msra.mxu0 0.0
  %3324 = vmatprep.subr.mxu0 0.0
  %3325 = vmatpush1.msra.mxu0 0.0
  %3326 = vmatprep.subr.mxu0 0.0
  %3327 = vmatpush1.msra.mxu0 0.0
  %3328 = vmatprep.mubr.f32.mxu0 0.0
  %3329 = vmatmul.mubr.f32.gmra.mrb[0].mxu0 %v3262
  %v3330 = vpop.f32.mrb[0].mxu0
  %v3331 = vadd.f32 %v95, %v3330
  %v3332 = vpop.f32.mrb[0].mxu0
  %3333 = vdwg.mxu0
  %v3334 = vadd.f32 %v3258, %v3331
  %v3335 = vxor.u32 %v3334, 2147483648
  %v3336 = vmul.f32 %v3335, 1.442695
  %v3337 = vpow.pop %v3336
  %v3338 = vadd.f32 %v3337, 1.0
  %v3339 = vrcp.pop %v3338
  %v3340 = vmul.f32 1.0, %v3339
  %3342 = vrot.lane.b32.xlu0 %v3331, 64
  %v3343 = vpop.permute.xlu0 %3342
  %v3345 = vmul.f32 %v3340, %v3343
  %3347 = vrot.lane.b32.xlu0 %v3345, 64
  %v3348 = vpop.permute.xlu0 %3347
  %v3350 = vadd.f32 %v3258, %v3348
  %v3351 = vtanh.pop %v3350
  %v3352 = vsub.f32 1.0, %v3340
  %3354 = vrot.lane.b32.xlu0 %v3351, 96
  %v3355 = vpop.permute.xlu0 %3354
  %v3357 = vmul.f32 %v3352, %v3355
  %v3358 = vmul.f32 %v3340, %v3256
  %v3359 = vadd.f32 %v3357, %v3358
  %3361 = vrot.lane.b32.xlu0 %v3359, 96
  %v3362 = vpop.permute.xlu0 %3361
  %v3363 = vsel %vm97, %v3362, 0
  %3365 = vmatprep.subr.mxu0 %v74
  %3366 = vmatpush1.msra.mxu0 %v73
  %3367 = vmatprep.subr.mxu0 %v76
  %3368 = vmatpush1.msra.mxu0 %v75
  %3369 = vmatprep.subr.mxu0 %v78
  %3370 = vmatpush1.msra.mxu0 %v77
  %3371 = vmatprep.subr.mxu0 %v80
  %3372 = vmatpush1.msra.mxu0 %v79
  %3373 = vmatprep.subr.mxu0 0.0
  %3374 = vmatpush1.msra.mxu0 0.0
  %3375 = vmatprep.subr.mxu0 0.0
  %3376 = vmatpush1.msra.mxu0 0.0
  %3377 = vmatprep.subr.mxu0 0.0
  %3378 = vmatpush1.msra.mxu0 0.0
  %3379 = vmatprep.subr.mxu0 0.0
  %3380 = vmatpush1.msra.mxu0 0.0
  %3381 = vmatprep.subr.mxu0 0.0
  %3382 = vmatpush1.msra.mxu0 0.0
  %3383 = vmatprep.subr.mxu0 0.0
  %3384 = vmatpush1.msra.mxu0 0.0
  %3385 = vmatprep.subr.mxu0 0.0
  %3386 = vmatpush1.msra.mxu0 0.0
  %3387 = vmatprep.subr.mxu0 0.0
  %3388 = vmatpush1.msra.mxu0 0.0
  %3389 = vmatprep.subr.mxu0 0.0
  %3390 = vmatpush1.msra.mxu0 0.0
  %3391 = vmatprep.subr.mxu0 0.0
  %3392 = vmatpush1.msra.mxu0 0.0
  %3393 = vmatprep.subr.mxu0 0.0
  %3394 = vmatpush1.msra.mxu0 0.0
  %3395 = vmatprep.subr.mxu0 0.0
  %3396 = vmatpush1.msra.mxu0 0.0
  %3397 = vmatprep.subr.mxu0 0.0
  %3398 = vmatpush1.msra.mxu0 0.0
  %3399 = vmatprep.subr.mxu0 0.0
  %3400 = vmatpush1.msra.mxu0 0.0
  %3401 = vmatprep.subr.mxu0 0.0
  %3402 = vmatpush1.msra.mxu0 0.0
  %3403 = vmatprep.subr.mxu0 0.0
  %3404 = vmatpush1.msra.mxu0 0.0
  %3405 = vmatprep.subr.mxu0 0.0
  %3406 = vmatpush1.msra.mxu0 0.0
  %3407 = vmatprep.subr.mxu0 0.0
  %3408 = vmatpush1.msra.mxu0 0.0
  %3409 = vmatprep.subr.mxu0 0.0
  %3410 = vmatpush1.msra.mxu0 0.0
  %3411 = vmatprep.subr.mxu0 0.0
  %3412 = vmatpush1.msra.mxu0 0.0
  %3413 = vmatprep.subr.mxu0 0.0
  %3414 = vmatpush1.msra.mxu0 0.0
  %3415 = vmatprep.subr.mxu0 0.0
  %3416 = vmatpush1.msra.mxu0 0.0
  %3417 = vmatprep.subr.mxu0 0.0
  %3418 = vmatpush1.msra.mxu0 0.0
  %3419 = vmatprep.subr.mxu0 0.0
  %3420 = vmatpush1.msra.mxu0 0.0
  %3421 = vmatprep.subr.mxu0 0.0
  %3422 = vmatpush1.msra.mxu0 0.0
  %3423 = vmatprep.subr.mxu0 0.0
  %3424 = vmatpush1.msra.mxu0 0.0
  %3425 = vmatprep.subr.mxu0 0.0
  %3426 = vmatpush1.msra.mxu0 0.0
  %3427 = vmatprep.subr.mxu0 0.0
  %3428 = vmatpush1.msra.mxu0 0.0
  %3429 = vmatprep.mubr.f32.mxu0 0.0
  %3430 = vmatmul.mubr.f32.gmra.mrb[0].mxu0 %v3363
  %v3431 = vpop.f32.mrb[0].mxu0
  %v3432 = vadd.f32 %v204, %v3431
  %v3433 = vpop.f32.mrb[0].mxu0
  %v3434 = vadd.f32 %v208, %v3433
  %3435 = vdwg.mxu0
  %s3436 = scalar_lea.vmem %s10, 24
  %3437 = vst [vmem:[%s3436] sm:$0xff] %v3432
  %v3439 = vcombine.high %v3434, %v3434
  %v3441 = vunpack.c.l.s4 1966171168
  %v3442 = vunpack.c.0.s8 %v3441
  %v3443 = vlaneseq
  %v3444 = vshrl.u32 %v3443, 7
  %v3445 = vsub.s32 %v3442, %v3444
  %v3446 = vrot.slane %v3434, %v3445
  %v3448 = vunpack.c.l.s4 1966171168
  %v3449 = vunpack.c.0.s8 %v3448
  %v3450 = vlaneseq
  %v3451 = vshrl.u32 %v3450, 7
  %v3452 = vsub.s32 %v3449, %v3451
  %v3453 = vrot.slane %v3439, %v3452
  %v3454 = vcombine.high %v3446, %v3446
  %v3455 = vcombine.high %v3453, %v3453
  %v3457 = vunpack.c.l.s4 1966171168
  %v3458 = vunpack.c.0.s8 %v3457
  %v3459 = vlaneseq
  %v3460 = vshrl.u32 %v3459, 7
  %v3461 = vsub.s32 %v3458, %v3460
  %v3462 = vrot.slane %v3446, %v3461
  %v3464 = vunpack.c.l.s4 1966171168
  %v3465 = vunpack.c.0.s8 %v3464
  %v3466 = vlaneseq
  %v3467 = vshrl.u32 %v3466, 7
  %v3468 = vsub.s32 %v3465, %v3467
  %v3469 = vrot.slane %v3453, %v3468
  %v3471 = vunpack.c.l.s4 1966171168
  %v3472 = vunpack.c.0.s8 %v3471
  %v3473 = vlaneseq
  %v3474 = vshrl.u32 %v3473, 7
  %v3475 = vsub.s32 %v3472, %v3474
  %v3476 = vrot.slane %v3454, %v3475
  %v3478 = vunpack.c.l.s4 1966171168
  %v3479 = vunpack.c.0.s8 %v3478
  %v3480 = vlaneseq
  %v3481 = vshrl.u32 %v3480, 7
  %v3482 = vsub.s32 %v3479, %v3481
  %v3483 = vrot.slane %v3455, %v3482
  %v3484 = vcombine.high %v3462, %v3462
  %v3485 = vcombine.high %v3469, %v3469
  %v3486 = vcombine.high %v3476, %v3476
  %v3487 = vcombine.high %v3483, %v3483
  %v3488 = vlaneseq
  %v3489 = vshrl.u32 %v3488, 7
  %v3490 = vsub.s32 0, %v3489
  %v3491 = vrot.slane %v3462, %v3490
  %v3492 = vlaneseq
  %v3493 = vshrl.u32 %v3492, 7
  %v3494 = vsub.s32 0, %v3493
  %v3495 = vrot.slane %v3476, %v3494
  %v3496 = vlaneseq
  %v3497 = vshrl.u32 %v3496, 7
  %v3498 = vsub.s32 0, %v3497
  %v3499 = vrot.slane %v3484, %v3498
  %v3500 = vlaneseq
  %v3501 = vshrl.u32 %v3500, 7
  %v3502 = vsub.s32 0, %v3501
  %v3503 = vrot.slane %v3486, %v3502
  %v3504 = vlaneseq
  %v3505 = vshrl.u32 %v3504, 7
  %v3506 = vsub.s32 0, %v3505
  %v3507 = vrot.slane %v3469, %v3506
  %v3508 = vlaneseq
  %v3509 = vshrl.u32 %v3508, 7
  %v3510 = vsub.s32 0, %v3509
  %v3511 = vrot.slane %v3483, %v3510
  %v3512 = vlaneseq
  %v3513 = vshrl.u32 %v3512, 7
  %v3514 = vsub.s32 0, %v3513
  %v3515 = vrot.slane %v3485, %v3514
  %v3516 = vlaneseq
  %v3517 = vshrl.u32 %v3516, 7
  %v3518 = vsub.s32 0, %v3517
  %v3519 = vrot.slane %v3487, %v3518
  %v3528 = vadd.f32 %v51, %v3491
  %v3529 = vadd.f32 %v52, %v3491
  %v3530 = vadd.f32 %v53, %v3495
  %v3531 = vadd.f32 %v54, %v3495
  %v3532 = vadd.f32 %v55, %v3499
  %v3533 = vadd.f32 %v56, %v3499
  %v3534 = vadd.f32 %v57, %v3503
  %v3535 = vadd.f32 %v58, %v3503
  %v3536 = vadd.f32 %v59, %v3507
  %v3537 = vadd.f32 %v60, %v3507
  %v3538 = vadd.f32 %v61, %v3511
  %v3539 = vadd.f32 %v62, %v3511
  %v3540 = vadd.f32 %v63, %v3515
  %v3541 = vadd.f32 %v64, %v3515
  %v3542 = vadd.f32 %v65, %v3519
  %v3543 = vadd.f32 %v66, %v3519
  %v3544 = vtanh.pop %v3528
  %v3545 = vtanh.pop %v3529
  %v3546 = vtanh.pop %v3530
  %v3547 = vtanh.pop %v3531
  %v3548 = vtanh.pop %v3532
  %v3549 = vtanh.pop %v3533
  %v3550 = vtanh.pop %v3534
  %v3551 = vtanh.pop %v3535
  %v3552 = vtanh.pop %v3536
  %v3553 = vtanh.pop %v3537
  %v3554 = vtanh.pop %v3538
  %v3555 = vtanh.pop %v3539
  %v3556 = vtanh.pop %v3540
  %v3557 = vtanh.pop %v3541
  %v3558 = vtanh.pop %v3542
  %v3559 = vtanh.pop %v3543
  %v3560 = vmul.f32 %v3544, %v87
  %v3561 = vmul.f32 %v3545, %v87
  %v3562 = vmul.f32 %v3546, %v87
  %v3563 = vmul.f32 %v3547, %v87
  %v3564 = vmul.f32 %v3548, %v87
  %v3565 = vmul.f32 %v3549, %v87
  %v3566 = vmul.f32 %v3550, %v87
  %v3567 = vmul.f32 %v3551, %v87
  %v3568 = vmul.f32 %v3552, %v87
  %v3569 = vmul.f32 %v3553, %v87
  %v3570 = vmul.f32 %v3554, %v87
  %v3571 = vmul.f32 %v3555, %v87
  %v3572 = vmul.f32 %v3556, %v87
  %v3573 = vmul.f32 %v3557, %v87
  %v3574 = vmul.f32 %v3558, %v87
  %v3575 = vmul.f32 %v3559, %v87
  %v3576 = vsel %vm97, %v3560, 0.0
  %3577 = vadd.xlane.f32.xlu0 %v3576
  %v3578 = vpop.xlane.xlu0 %3577
  %v3579 = vsel %vm97, %v3561, 0.0
  %3580 = vadd.xlane.f32.xlu0 %v3579
  %v3581 = vpop.xlane.xlu0 %3580
  %v3582 = vsel %vm97, %v3562, 0.0
  %3583 = vadd.xlane.f32.xlu0 %v3582
  %v3584 = vpop.xlane.xlu0 %3583
  %v3585 = vsel %vm97, %v3563, 0.0
  %3586 = vadd.xlane.f32.xlu0 %v3585
  %v3587 = vpop.xlane.xlu0 %3586
  %v3588 = vsel %vm97, %v3564, 0.0
  %3589 = vadd.xlane.f32.xlu0 %v3588
  %v3590 = vpop.xlane.xlu0 %3589
  %v3591 = vsel %vm97, %v3565, 0.0
  %3592 = vadd.xlane.f32.xlu0 %v3591
  %v3593 = vpop.xlane.xlu0 %3592
  %v3594 = vsel %vm97, %v3566, 0.0
  %3595 = vadd.xlane.f32.xlu0 %v3594
  %v3596 = vpop.xlane.xlu0 %3595
  %v3597 = vsel %vm97, %v3567, 0.0
  %3598 = vadd.xlane.f32.xlu0 %v3597
  %v3599 = vpop.xlane.xlu0 %3598
  %v3600 = vsel %vm97, %v3568, 0.0
  %3601 = vadd.xlane.f32.xlu0 %v3600
  %v3602 = vpop.xlane.xlu0 %3601
  %v3603 = vsel %vm97, %v3569, 0.0
  %3604 = vadd.xlane.f32.xlu0 %v3603
  %v3605 = vpop.xlane.xlu0 %3604
  %v3606 = vsel %vm97, %v3570, 0.0
  %3607 = vadd.xlane.f32.xlu0 %v3606
  %v3608 = vpop.xlane.xlu0 %3607
  %v3609 = vsel %vm97, %v3571, 0.0
  %3610 = vadd.xlane.f32.xlu0 %v3609
  %v3611 = vpop.xlane.xlu0 %3610
  %v3612 = vsel %vm97, %v3572, 0.0
  %3613 = vadd.xlane.f32.xlu0 %v3612
  %v3614 = vpop.xlane.xlu0 %3613
  %v3615 = vsel %vm97, %v3573, 0.0
  %3616 = vadd.xlane.f32.xlu0 %v3615
  %v3617 = vpop.xlane.xlu0 %3616
  %v3618 = vsel %vm97, %v3574, 0.0
  %3619 = vadd.xlane.f32.xlu0 %v3618
  %v3620 = vpop.xlane.xlu0 %3619
  %v3621 = vsel %vm97, %v3575, 0.0
  %3622 = vadd.xlane.f32.xlu0 %v3621
  %v3623 = vpop.xlane.xlu0 %3622
  %v3624 = vadd.f32 %v3578, %v481
  %v3625 = vadd.f32 %v3581, %v485
  %v3626 = vadd.f32 %v3584, %v492
  %v3627 = vadd.f32 %v3587, %v496
  %v3628 = vadd.f32 %v3590, %v503
  %v3629 = vadd.f32 %v3593, %v507
  %v3630 = vadd.f32 %v3596, %v514
  %v3631 = vadd.f32 %v3599, %v518
  %v3632 = vadd.f32 %v3602, %v525
  %v3633 = vadd.f32 %v3605, %v529
  %v3634 = vadd.f32 %v3608, %v536
  %v3635 = vadd.f32 %v3611, %v540
  %v3636 = vadd.f32 %v3614, %v547
  %v3637 = vadd.f32 %v3617, %v551
  %v3638 = vadd.f32 %v3620, %v558
  %v3639 = vadd.f32 %v3623, %v562
  %3656 = vset.pattern.permute.xlu0 0
  %3657 = vperm.xlu0 %3656, %v3624
  %v3658 = vpop.permute.xlu0 %3657
  %3659 = vset.pattern.permute.xlu0 0
  %3660 = vperm.xlu0 %3659, %v3625
  %v3661 = vpop.permute.xlu0 %3660
  %3662 = vset.pattern.permute.xlu0 0
  %3663 = vperm.xlu0 %3662, %v3626
  %v3664 = vpop.permute.xlu0 %3663
  %3665 = vset.pattern.permute.xlu0 0
  %3666 = vperm.xlu0 %3665, %v3627
  %v3667 = vpop.permute.xlu0 %3666
  %3668 = vset.pattern.permute.xlu0 0
  %3669 = vperm.xlu0 %3668, %v3628
  %v3670 = vpop.permute.xlu0 %3669
  %3671 = vset.pattern.permute.xlu0 0
  %3672 = vperm.xlu0 %3671, %v3629
  %v3673 = vpop.permute.xlu0 %3672
  %3674 = vset.pattern.permute.xlu0 0
  %3675 = vperm.xlu0 %3674, %v3630
  %v3676 = vpop.permute.xlu0 %3675
  %3677 = vset.pattern.permute.xlu0 0
  %3678 = vperm.xlu0 %3677, %v3631
  %v3679 = vpop.permute.xlu0 %3678
  %3680 = vset.pattern.permute.xlu0 0
  %3681 = vperm.xlu0 %3680, %v3632
  %v3682 = vpop.permute.xlu0 %3681
  %3683 = vset.pattern.permute.xlu0 0
  %3684 = vperm.xlu0 %3683, %v3633
  %v3685 = vpop.permute.xlu0 %3684
  %3686 = vset.pattern.permute.xlu0 0
  %3687 = vperm.xlu0 %3686, %v3634
  %v3688 = vpop.permute.xlu0 %3687
  %3689 = vset.pattern.permute.xlu0 0
  %3690 = vperm.xlu0 %3689, %v3635
  %v3691 = vpop.permute.xlu0 %3690
  %3692 = vset.pattern.permute.xlu0 0
  %3693 = vperm.xlu0 %3692, %v3636
  %v3694 = vpop.permute.xlu0 %3693
  %3695 = vset.pattern.permute.xlu0 0
  %3696 = vperm.xlu0 %3695, %v3637
  %v3697 = vpop.permute.xlu0 %3696
  %3698 = vset.pattern.permute.xlu0 0
  %3699 = vperm.xlu0 %3698, %v3638
  %v3700 = vpop.permute.xlu0 %3699
  %3701 = vset.pattern.permute.xlu0 0
  %3702 = vperm.xlu0 %3701, %v3639
  %v3703 = vpop.permute.xlu0 %3702
  %v3704 = vlaneseq
  %v3705 = vshrl.u32 %v3704, 7
  %v3706 = vsub.s32 %v660, %v3705
  %v3707 = vrot.slane %v3658, %v3706
  %v3708 = vlaneseq
  %v3709 = vshrl.u32 %v3708, 7
  %v3710 = vsub.s32 %v665, %v3709
  %v3711 = vrot.slane %v3661, %v3710
  %v3712 = vsel %vm670, %v3711, %v3707
  %v3713 = vlaneseq
  %v3714 = vshrl.u32 %v3713, 7
  %v3715 = vsub.s32 %v660, %v3714
  %v3716 = vrot.slane %v3664, %v3715
  %v3717 = vlaneseq
  %v3718 = vshrl.u32 %v3717, 7
  %v3719 = vsub.s32 %v665, %v3718
  %v3720 = vrot.slane %v3667, %v3719
  %v3721 = vsel %vm670, %v3720, %v3716
  %v3722 = vlaneseq
  %v3723 = vshrl.u32 %v3722, 7
  %v3724 = vsub.s32 %v660, %v3723
  %v3725 = vrot.slane %v3670, %v3724
  %v3726 = vlaneseq
  %v3727 = vshrl.u32 %v3726, 7
  %v3728 = vsub.s32 %v665, %v3727
  %v3729 = vrot.slane %v3673, %v3728
  %v3730 = vsel %vm670, %v3729, %v3725
  %v3731 = vlaneseq
  %v3732 = vshrl.u32 %v3731, 7
  %v3733 = vsub.s32 %v660, %v3732
  %v3734 = vrot.slane %v3676, %v3733
  %v3735 = vlaneseq
  %v3736 = vshrl.u32 %v3735, 7
  %v3737 = vsub.s32 %v665, %v3736
  %v3738 = vrot.slane %v3679, %v3737
  %v3739 = vsel %vm670, %v3738, %v3734
  %v3740 = vlaneseq
  %v3741 = vshrl.u32 %v3740, 7
  %v3742 = vsub.s32 %v660, %v3741
  %v3743 = vrot.slane %v3682, %v3742
  %v3744 = vlaneseq
  %v3745 = vshrl.u32 %v3744, 7
  %v3746 = vsub.s32 %v665, %v3745
  %v3747 = vrot.slane %v3685, %v3746
  %v3748 = vsel %vm670, %v3747, %v3743
  %v3749 = vlaneseq
  %v3750 = vshrl.u32 %v3749, 7
  %v3751 = vsub.s32 %v660, %v3750
  %v3752 = vrot.slane %v3688, %v3751
  %v3753 = vlaneseq
  %v3754 = vshrl.u32 %v3753, 7
  %v3755 = vsub.s32 %v665, %v3754
  %v3756 = vrot.slane %v3691, %v3755
  %v3757 = vsel %vm670, %v3756, %v3752
  %v3758 = vlaneseq
  %v3759 = vshrl.u32 %v3758, 7
  %v3760 = vsub.s32 %v660, %v3759
  %v3761 = vrot.slane %v3694, %v3760
  %v3762 = vlaneseq
  %v3763 = vshrl.u32 %v3762, 7
  %v3764 = vsub.s32 %v665, %v3763
  %v3765 = vrot.slane %v3697, %v3764
  %v3766 = vsel %vm670, %v3765, %v3761
  %v3767 = vlaneseq
  %v3768 = vshrl.u32 %v3767, 7
  %v3769 = vsub.s32 %v660, %v3768
  %v3770 = vrot.slane %v3700, %v3769
  %v3771 = vlaneseq
  %v3772 = vshrl.u32 %v3771, 7
  %v3773 = vsub.s32 %v665, %v3772
  %v3774 = vrot.slane %v3703, %v3773
  %v3775 = vsel %vm670, %v3774, %v3770
  %v3776 = vsel %vm735, %v3721, %v3712
  %v3777 = vsel %vm737, %v3730, %v3776
  %v3778 = vsel %vm739, %v3739, %v3777
  %v3779 = vsel %vm741, %v3748, %v3778
  %v3780 = vsel %vm743, %v3757, %v3779
  %v3781 = vsel %vm745, %v3766, %v3780
  %v3782 = vsel %vm747, %v3775, %v3781
  %v3784 = vsel %vm750, %v3782, -inf
  %3785 = vmax.xlane.f32.xlu0 %v3784
  %v3786 = vpop.xlane.xlu0 %3785
  %v3788 = vlaneseq
  %v3789 = vshrl.u32 %v3788, 7
  %v3790 = vsub.s32 0, %v3789
  %v3791 = vrot.slane %v3786, %v3790
  %v3792 = vlaneseq
  %v3793 = vshrl.u32 %v3792, 7
  %v3794 = vsub.s32 1, %v3793
  %v3795 = vrot.slane %v3786, %v3794
  %v3796 = vlaneseq
  %v3797 = vshrl.u32 %v3796, 7
  %v3798 = vsub.s32 2, %v3797
  %v3799 = vrot.slane %v3786, %v3798
  %v3800 = vlaneseq
  %v3801 = vshrl.u32 %v3800, 7
  %v3802 = vsub.s32 3, %v3801
  %v3803 = vrot.slane %v3786, %v3802
  %v3804 = vlaneseq
  %v3805 = vshrl.u32 %v3804, 7
  %v3806 = vsub.s32 4, %v3805
  %v3807 = vrot.slane %v3786, %v3806
  %v3808 = vlaneseq
  %v3809 = vshrl.u32 %v3808, 7
  %v3810 = vsub.s32 5, %v3809
  %v3811 = vrot.slane %v3786, %v3810
  %v3812 = vlaneseq
  %v3813 = vshrl.u32 %v3812, 7
  %v3814 = vsub.s32 6, %v3813
  %v3815 = vrot.slane %v3786, %v3814
  %v3816 = vlaneseq
  %v3817 = vshrl.u32 %v3816, 7
  %v3818 = vsub.s32 7, %v3817
  %v3819 = vrot.slane %v3786, %v3818
  %v3828 = vsub.f32 %v3624, %v3791
  %v3829 = vsub.f32 %v3625, %v3791
  %v3830 = vsub.f32 %v3626, %v3795
  %v3831 = vsub.f32 %v3627, %v3795
  %v3832 = vsub.f32 %v3628, %v3799
  %v3833 = vsub.f32 %v3629, %v3799
  %v3834 = vsub.f32 %v3630, %v3803
  %v3835 = vsub.f32 %v3631, %v3803
  %v3836 = vsub.f32 %v3632, %v3807
  %v3837 = vsub.f32 %v3633, %v3807
  %v3838 = vsub.f32 %v3634, %v3811
  %v3839 = vsub.f32 %v3635, %v3811
  %v3840 = vsub.f32 %v3636, %v3815
  %v3841 = vsub.f32 %v3637, %v3815
  %v3842 = vsub.f32 %v3638, %v3819
  %v3843 = vsub.f32 %v3639, %v3819
  %v3844 = vmul.f32 %v3828, 1.442695
  %v3845 = vpow.pop %v3844
  %v3846 = vmul.f32 %v3829, 1.442695
  %v3847 = vpow.pop %v3846
  %v3848 = vmul.f32 %v3830, 1.442695
  %v3849 = vpow.pop %v3848
  %v3850 = vmul.f32 %v3831, 1.442695
  %v3851 = vpow.pop %v3850
  %v3852 = vmul.f32 %v3832, 1.442695
  %v3853 = vpow.pop %v3852
  %v3854 = vmul.f32 %v3833, 1.442695
  %v3855 = vpow.pop %v3854
  %v3856 = vmul.f32 %v3834, 1.442695
  %v3857 = vpow.pop %v3856
  %v3858 = vmul.f32 %v3835, 1.442695
  %v3859 = vpow.pop %v3858
  %v3860 = vmul.f32 %v3836, 1.442695
  %v3861 = vpow.pop %v3860
  %v3862 = vmul.f32 %v3837, 1.442695
  %v3863 = vpow.pop %v3862
  %v3864 = vmul.f32 %v3838, 1.442695
  %v3865 = vpow.pop %v3864
  %v3866 = vmul.f32 %v3839, 1.442695
  %v3867 = vpow.pop %v3866
  %v3868 = vmul.f32 %v3840, 1.442695
  %v3869 = vpow.pop %v3868
  %v3870 = vmul.f32 %v3841, 1.442695
  %v3871 = vpow.pop %v3870
  %v3872 = vmul.f32 %v3842, 1.442695
  %v3873 = vpow.pop %v3872
  %v3874 = vmul.f32 %v3843, 1.442695
  %v3875 = vpow.pop %v3874
  %3892 = vset.pattern.permute.xlu0 0
  %3893 = vperm.xlu0 %3892, %v3845
  %v3894 = vpop.permute.xlu0 %3893
  %3895 = vset.pattern.permute.xlu0 0
  %3896 = vperm.xlu0 %3895, %v3847
  %v3897 = vpop.permute.xlu0 %3896
  %3898 = vset.pattern.permute.xlu0 0
  %3899 = vperm.xlu0 %3898, %v3849
  %v3900 = vpop.permute.xlu0 %3899
  %3901 = vset.pattern.permute.xlu0 0
  %3902 = vperm.xlu0 %3901, %v3851
  %v3903 = vpop.permute.xlu0 %3902
  %3904 = vset.pattern.permute.xlu0 0
  %3905 = vperm.xlu0 %3904, %v3853
  %v3906 = vpop.permute.xlu0 %3905
  %3907 = vset.pattern.permute.xlu0 0
  %3908 = vperm.xlu0 %3907, %v3855
  %v3909 = vpop.permute.xlu0 %3908
  %3910 = vset.pattern.permute.xlu0 0
  %3911 = vperm.xlu0 %3910, %v3857
  %v3912 = vpop.permute.xlu0 %3911
  %3913 = vset.pattern.permute.xlu0 0
  %3914 = vperm.xlu0 %3913, %v3859
  %v3915 = vpop.permute.xlu0 %3914
  %3916 = vset.pattern.permute.xlu0 0
  %3917 = vperm.xlu0 %3916, %v3861
  %v3918 = vpop.permute.xlu0 %3917
  %3919 = vset.pattern.permute.xlu0 0
  %3920 = vperm.xlu0 %3919, %v3863
  %v3921 = vpop.permute.xlu0 %3920
  %3922 = vset.pattern.permute.xlu0 0
  %3923 = vperm.xlu0 %3922, %v3865
  %v3924 = vpop.permute.xlu0 %3923
  %3925 = vset.pattern.permute.xlu0 0
  %3926 = vperm.xlu0 %3925, %v3867
  %v3927 = vpop.permute.xlu0 %3926
  %3928 = vset.pattern.permute.xlu0 0
  %3929 = vperm.xlu0 %3928, %v3869
  %v3930 = vpop.permute.xlu0 %3929
  %3931 = vset.pattern.permute.xlu0 0
  %3932 = vperm.xlu0 %3931, %v3871
  %v3933 = vpop.permute.xlu0 %3932
  %3934 = vset.pattern.permute.xlu0 0
  %3935 = vperm.xlu0 %3934, %v3873
  %v3936 = vpop.permute.xlu0 %3935
  %3937 = vset.pattern.permute.xlu0 0
  %3938 = vperm.xlu0 %3937, %v3875
  %v3939 = vpop.permute.xlu0 %3938
  %v3940 = vlaneseq
  %v3941 = vshrl.u32 %v3940, 7
  %v3942 = vsub.s32 %v660, %v3941
  %v3943 = vrot.slane %v3894, %v3942
  %v3944 = vlaneseq
  %v3945 = vshrl.u32 %v3944, 7
  %v3946 = vsub.s32 %v665, %v3945
  %v3947 = vrot.slane %v3897, %v3946
  %v3948 = vsel %vm670, %v3947, %v3943
  %v3949 = vlaneseq
  %v3950 = vshrl.u32 %v3949, 7
  %v3951 = vsub.s32 %v660, %v3950
  %v3952 = vrot.slane %v3900, %v3951
  %v3953 = vlaneseq
  %v3954 = vshrl.u32 %v3953, 7
  %v3955 = vsub.s32 %v665, %v3954
  %v3956 = vrot.slane %v3903, %v3955
  %v3957 = vsel %vm670, %v3956, %v3952
  %v3958 = vlaneseq
  %v3959 = vshrl.u32 %v3958, 7
  %v3960 = vsub.s32 %v660, %v3959
  %v3961 = vrot.slane %v3906, %v3960
  %v3962 = vlaneseq
  %v3963 = vshrl.u32 %v3962, 7
  %v3964 = vsub.s32 %v665, %v3963
  %v3965 = vrot.slane %v3909, %v3964
  %v3966 = vsel %vm670, %v3965, %v3961
  %v3967 = vlaneseq
  %v3968 = vshrl.u32 %v3967, 7
  %v3969 = vsub.s32 %v660, %v3968
  %v3970 = vrot.slane %v3912, %v3969
  %v3971 = vlaneseq
  %v3972 = vshrl.u32 %v3971, 7
  %v3973 = vsub.s32 %v665, %v3972
  %v3974 = vrot.slane %v3915, %v3973
  %v3975 = vsel %vm670, %v3974, %v3970
  %v3976 = vlaneseq
  %v3977 = vshrl.u32 %v3976, 7
  %v3978 = vsub.s32 %v660, %v3977
  %v3979 = vrot.slane %v3918, %v3978
  %v3980 = vlaneseq
  %v3981 = vshrl.u32 %v3980, 7
  %v3982 = vsub.s32 %v665, %v3981
  %v3983 = vrot.slane %v3921, %v3982
  %v3984 = vsel %vm670, %v3983, %v3979
  %v3985 = vlaneseq
  %v3986 = vshrl.u32 %v3985, 7
  %v3987 = vsub.s32 %v660, %v3986
  %v3988 = vrot.slane %v3924, %v3987
  %v3989 = vlaneseq
  %v3990 = vshrl.u32 %v3989, 7
  %v3991 = vsub.s32 %v665, %v3990
  %v3992 = vrot.slane %v3927, %v3991
  %v3993 = vsel %vm670, %v3992, %v3988
  %v3994 = vlaneseq
  %v3995 = vshrl.u32 %v3994, 7
  %v3996 = vsub.s32 %v660, %v3995
  %v3997 = vrot.slane %v3930, %v3996
  %v3998 = vlaneseq
  %v3999 = vshrl.u32 %v3998, 7
  %v4000 = vsub.s32 %v665, %v3999
  %v4001 = vrot.slane %v3933, %v4000
  %v4002 = vsel %vm670, %v4001, %v3997
  %v4003 = vlaneseq
  %v4004 = vshrl.u32 %v4003, 7
  %v4005 = vsub.s32 %v660, %v4004
  %v4006 = vrot.slane %v3936, %v4005
  %v4007 = vlaneseq
  %v4008 = vshrl.u32 %v4007, 7
  %v4009 = vsub.s32 %v665, %v4008
  %v4010 = vrot.slane %v3939, %v4009
  %v4011 = vsel %vm670, %v4010, %v4006
  %v4012 = vsel %vm735, %v3957, %v3948
  %v4013 = vsel %vm737, %v3966, %v4012
  %v4014 = vsel %vm739, %v3975, %v4013
  %v4015 = vsel %vm741, %v3984, %v4014
  %v4016 = vsel %vm743, %v3993, %v4015
  %v4017 = vsel %vm745, %v4002, %v4016
  %v4018 = vsel %vm747, %v4011, %v4017
  %v4020 = vsel %vm750, %v4018, 0.0
  %4021 = vadd.xlane.f32.xlu0 %v4020
  %v4022 = vpop.xlane.xlu0 %4021
  %v4023 = vrcp.pop %v4022
  %v4025 = vlaneseq
  %v4026 = vshrl.u32 %v4025, 7
  %v4027 = vsub.s32 0, %v4026
  %v4028 = vrot.slane %v4023, %v4027
  %v4029 = vlaneseq
  %v4030 = vshrl.u32 %v4029, 7
  %v4031 = vsub.s32 1, %v4030
  %v4032 = vrot.slane %v4023, %v4031
  %v4033 = vlaneseq
  %v4034 = vshrl.u32 %v4033, 7
  %v4035 = vsub.s32 2, %v4034
  %v4036 = vrot.slane %v4023, %v4035
  %v4037 = vlaneseq
  %v4038 = vshrl.u32 %v4037, 7
  %v4039 = vsub.s32 3, %v4038
  %v4040 = vrot.slane %v4023, %v4039
  %v4041 = vlaneseq
  %v4042 = vshrl.u32 %v4041, 7
  %v4043 = vsub.s32 4, %v4042
  %v4044 = vrot.slane %v4023, %v4043
  %v4045 = vlaneseq
  %v4046 = vshrl.u32 %v4045, 7
  %v4047 = vsub.s32 5, %v4046
  %v4048 = vrot.slane %v4023, %v4047
  %v4049 = vlaneseq
  %v4050 = vshrl.u32 %v4049, 7
  %v4051 = vsub.s32 6, %v4050
  %v4052 = vrot.slane %v4023, %v4051
  %v4053 = vlaneseq
  %v4054 = vshrl.u32 %v4053, 7
  %v4055 = vsub.s32 7, %v4054
  %v4056 = vrot.slane %v4023, %v4055
  %v4065 = vmul.f32 %v3845, %v4028
  %v4066 = vmul.f32 %v3847, %v4028
  %v4067 = vmul.f32 %v3849, %v4032
  %v4068 = vmul.f32 %v3851, %v4032
  %v4069 = vmul.f32 %v3853, %v4036
  %v4070 = vmul.f32 %v3855, %v4036
  %v4071 = vmul.f32 %v3857, %v4040
  %v4072 = vmul.f32 %v3859, %v4040
  %v4073 = vmul.f32 %v3861, %v4044
  %v4074 = vmul.f32 %v3863, %v4044
  %v4075 = vmul.f32 %v3865, %v4048
  %v4076 = vmul.f32 %v3867, %v4048
  %v4077 = vmul.f32 %v3869, %v4052
  %v4078 = vmul.f32 %v3871, %v4052
  %v4079 = vmul.f32 %v3873, %v4056
  %v4080 = vmul.f32 %v3875, %v4056
  %4082 = vset.pattern.permute.xlu0 0
  %4083 = vperm.xlu0 %4082, %v4065
  %v4084 = vpop.permute.xlu0 %4083
  %4087 = vset.pattern.permute.xlu0 0
  %4088 = vperm.xlu0 %4087, %v4066
  %v4089 = vpop.permute.xlu0 %4088
  %4092 = vset.pattern.permute.xlu0 0
  %4093 = vperm.xlu0 %4092, %v4067
  %v4094 = vpop.permute.xlu0 %4093
  %4097 = vset.pattern.permute.xlu0 0
  %4098 = vperm.xlu0 %4097, %v4068
  %v4099 = vpop.permute.xlu0 %4098
  %4102 = vset.pattern.permute.xlu0 0
  %4103 = vperm.xlu0 %4102, %v4069
  %v4104 = vpop.permute.xlu0 %4103
  %4107 = vset.pattern.permute.xlu0 0
  %4108 = vperm.xlu0 %4107, %v4070
  %v4109 = vpop.permute.xlu0 %4108
  %4112 = vset.pattern.permute.xlu0 0
  %4113 = vperm.xlu0 %4112, %v4071
  %v4114 = vpop.permute.xlu0 %4113
  %4117 = vset.pattern.permute.xlu0 0
  %4118 = vperm.xlu0 %4117, %v4072
  %v4119 = vpop.permute.xlu0 %4118
  %4122 = vset.pattern.permute.xlu0 0
  %4123 = vperm.xlu0 %4122, %v4073
  %v4124 = vpop.permute.xlu0 %4123
  %4127 = vset.pattern.permute.xlu0 0
  %4128 = vperm.xlu0 %4127, %v4074
  %v4129 = vpop.permute.xlu0 %4128
  %4132 = vset.pattern.permute.xlu0 0
  %4133 = vperm.xlu0 %4132, %v4075
  %v4134 = vpop.permute.xlu0 %4133
  %4137 = vset.pattern.permute.xlu0 0
  %4138 = vperm.xlu0 %4137, %v4076
  %v4139 = vpop.permute.xlu0 %4138
  %4142 = vset.pattern.permute.xlu0 0
  %4143 = vperm.xlu0 %4142, %v4077
  %v4144 = vpop.permute.xlu0 %4143
  %4147 = vset.pattern.permute.xlu0 0
  %4148 = vperm.xlu0 %4147, %v4078
  %v4149 = vpop.permute.xlu0 %4148
  %4152 = vset.pattern.permute.xlu0 0
  %4153 = vperm.xlu0 %4152, %v4079
  %v4154 = vpop.permute.xlu0 %4153
  %4157 = vset.pattern.permute.xlu0 0
  %4158 = vperm.xlu0 %4157, %v4080
  %v4159 = vpop.permute.xlu0 %4158
  %v4161 = vmul.f32 %v4084, %v35
  %v4162 = vmul.f32 %v4089, %v36
  %v4163 = vmul.f32 %v4094, %v37
  %v4164 = vmul.f32 %v4099, %v38
  %v4165 = vmul.f32 %v4104, %v39
  %v4166 = vmul.f32 %v4109, %v40
  %v4167 = vmul.f32 %v4114, %v41
  %v4168 = vmul.f32 %v4119, %v42
  %v4169 = vmul.f32 %v4124, %v43
  %v4170 = vmul.f32 %v4129, %v44
  %v4171 = vmul.f32 %v4134, %v45
  %v4172 = vmul.f32 %v4139, %v46
  %v4173 = vmul.f32 %v4144, %v47
  %v4174 = vmul.f32 %v4149, %v48
  %v4175 = vmul.f32 %v4154, %v49
  %v4176 = vmul.f32 %v4159, %v50
  %v4177 = vsel %vm97, %v4161, 0.0
  %v4178 = vsel %vm97, %v4162, 0.0
  %v4179 = vadd.f32 %v4177, %v4178
  %v4180 = vrot.slane %v4179, 4
  %v4181 = vadd.f32 %v4179, %v4180
  %v4182 = vrot.slane %v4181, 2
  %v4183 = vadd.f32 %v4181, %v4182
  %v4184 = vrot.slane %v4183, 1
  %v4185 = vadd.f32 %v4183, %v4184
  %v4186 = vsel %vm97, %v4163, 0.0
  %v4187 = vsel %vm97, %v4164, 0.0
  %v4188 = vadd.f32 %v4186, %v4187
  %v4189 = vrot.slane %v4188, 4
  %v4190 = vadd.f32 %v4188, %v4189
  %v4191 = vrot.slane %v4190, 2
  %v4192 = vadd.f32 %v4190, %v4191
  %v4193 = vrot.slane %v4192, 1
  %v4194 = vadd.f32 %v4192, %v4193
  %v4195 = vsel %vm97, %v4165, 0.0
  %v4196 = vsel %vm97, %v4166, 0.0
  %v4197 = vadd.f32 %v4195, %v4196
  %v4198 = vrot.slane %v4197, 4
  %v4199 = vadd.f32 %v4197, %v4198
  %v4200 = vrot.slane %v4199, 2
  %v4201 = vadd.f32 %v4199, %v4200
  %v4202 = vrot.slane %v4201, 1
  %v4203 = vadd.f32 %v4201, %v4202
  %v4204 = vsel %vm97, %v4167, 0.0
  %v4205 = vsel %vm97, %v4168, 0.0
  %v4206 = vadd.f32 %v4204, %v4205
  %v4207 = vrot.slane %v4206, 4
  %v4208 = vadd.f32 %v4206, %v4207
  %v4209 = vrot.slane %v4208, 2
  %v4210 = vadd.f32 %v4208, %v4209
  %v4211 = vrot.slane %v4210, 1
  %v4212 = vadd.f32 %v4210, %v4211
  %v4213 = vsel %vm97, %v4169, 0.0
  %v4214 = vsel %vm97, %v4170, 0.0
  %v4215 = vadd.f32 %v4213, %v4214
  %v4216 = vrot.slane %v4215, 4
  %v4217 = vadd.f32 %v4215, %v4216
  %v4218 = vrot.slane %v4217, 2
  %v4219 = vadd.f32 %v4217, %v4218
  %v4220 = vrot.slane %v4219, 1
  %v4221 = vadd.f32 %v4219, %v4220
  %v4222 = vsel %vm97, %v4171, 0.0
  %v4223 = vsel %vm97, %v4172, 0.0
  %v4224 = vadd.f32 %v4222, %v4223
  %v4225 = vrot.slane %v4224, 4
  %v4226 = vadd.f32 %v4224, %v4225
  %v4227 = vrot.slane %v4226, 2
  %v4228 = vadd.f32 %v4226, %v4227
  %v4229 = vrot.slane %v4228, 1
  %v4230 = vadd.f32 %v4228, %v4229
  %v4231 = vsel %vm97, %v4173, 0.0
  %v4232 = vsel %vm97, %v4174, 0.0
  %v4233 = vadd.f32 %v4231, %v4232
  %v4234 = vrot.slane %v4233, 4
  %v4235 = vadd.f32 %v4233, %v4234
  %v4236 = vrot.slane %v4235, 2
  %v4237 = vadd.f32 %v4235, %v4236
  %v4238 = vrot.slane %v4237, 1
  %v4239 = vadd.f32 %v4237, %v4238
  %v4240 = vsel %vm97, %v4175, 0.0
  %v4241 = vsel %vm97, %v4176, 0.0
  %v4242 = vadd.f32 %v4240, %v4241
  %v4243 = vrot.slane %v4242, 4
  %v4244 = vadd.f32 %v4242, %v4243
  %v4245 = vrot.slane %v4244, 2
  %v4246 = vadd.f32 %v4244, %v4245
  %v4247 = vrot.slane %v4246, 1
  %v4248 = vadd.f32 %v4246, %v4247
  %v4257 = vsel %vm735, %v4194, %v4185
  %v4258 = vsel %vm737, %v4203, %v4257
  %v4259 = vsel %vm739, %v4212, %v4258
  %v4260 = vsel %vm741, %v4221, %v4259
  %v4261 = vsel %vm743, %v4230, %v4260
  %v4262 = vsel %vm745, %v4239, %v4261
  %v4263 = vsel %vm747, %v4248, %v4262
  %4264 = vrot.lane.b32.xlu0 %v4263, 32
  %v4265 = vpop.permute.xlu0 %4264
  %v4267 = vadd.f32 %v3359, %v4265
  %s4268 = scalar_lea.vmem %s0, 32
  %v4269 = vld [vmem:[%s4268] sm:$0xff]
  %4271 = vrot.lane.b32.xlu0 %v4267, 96
  %v4272 = vpop.permute.xlu0 %4271
  %v4273 = vsel %vm97, %v4272, 0
  %4275 = vmatprep.subr.mxu0 0.0
  %4276 = vmatpush1.msra.mxu0 %v68
  %4277 = vmatprep.subr.mxu0 0.0
  %4278 = vmatpush1.msra.mxu0 %v69
  %4279 = vmatprep.subr.mxu0 0.0
  %4280 = vmatpush1.msra.mxu0 %v70
  %4281 = vmatprep.subr.mxu0 0.0
  %4282 = vmatpush1.msra.mxu0 %v71
  %4283 = vmatprep.subr.mxu0 0.0
  %4284 = vmatpush1.msra.mxu0 0.0
  %4285 = vmatprep.subr.mxu0 0.0
  %4286 = vmatpush1.msra.mxu0 0.0
  %4287 = vmatprep.subr.mxu0 0.0
  %4288 = vmatpush1.msra.mxu0 0.0
  %4289 = vmatprep.subr.mxu0 0.0
  %4290 = vmatpush1.msra.mxu0 0.0
  %4291 = vmatprep.subr.mxu0 0.0
  %4292 = vmatpush1.msra.mxu0 0.0
  %4293 = vmatprep.subr.mxu0 0.0
  %4294 = vmatpush1.msra.mxu0 0.0
  %4295 = vmatprep.subr.mxu0 0.0
  %4296 = vmatpush1.msra.mxu0 0.0
  %4297 = vmatprep.subr.mxu0 0.0
  %4298 = vmatpush1.msra.mxu0 0.0
  %4299 = vmatprep.subr.mxu0 0.0
  %4300 = vmatpush1.msra.mxu0 0.0
  %4301 = vmatprep.subr.mxu0 0.0
  %4302 = vmatpush1.msra.mxu0 0.0
  %4303 = vmatprep.subr.mxu0 0.0
  %4304 = vmatpush1.msra.mxu0 0.0
  %4305 = vmatprep.subr.mxu0 0.0
  %4306 = vmatpush1.msra.mxu0 0.0
  %4307 = vmatprep.subr.mxu0 0.0
  %4308 = vmatpush1.msra.mxu0 0.0
  %4309 = vmatprep.subr.mxu0 0.0
  %4310 = vmatpush1.msra.mxu0 0.0
  %4311 = vmatprep.subr.mxu0 0.0
  %4312 = vmatpush1.msra.mxu0 0.0
  %4313 = vmatprep.subr.mxu0 0.0
  %4314 = vmatpush1.msra.mxu0 0.0
  %4315 = vmatprep.subr.mxu0 0.0
  %4316 = vmatpush1.msra.mxu0 0.0
  %4317 = vmatprep.subr.mxu0 0.0
  %4318 = vmatpush1.msra.mxu0 0.0
  %4319 = vmatprep.subr.mxu0 0.0
  %4320 = vmatpush1.msra.mxu0 0.0
  %4321 = vmatprep.subr.mxu0 0.0
  %4322 = vmatpush1.msra.mxu0 0.0
  %4323 = vmatprep.subr.mxu0 0.0
  %4324 = vmatpush1.msra.mxu0 0.0
  %4325 = vmatprep.subr.mxu0 0.0
  %4326 = vmatpush1.msra.mxu0 0.0
  %4327 = vmatprep.subr.mxu0 0.0
  %4328 = vmatpush1.msra.mxu0 0.0
  %4329 = vmatprep.subr.mxu0 0.0
  %4330 = vmatpush1.msra.mxu0 0.0
  %4331 = vmatprep.subr.mxu0 0.0
  %4332 = vmatpush1.msra.mxu0 0.0
  %4333 = vmatprep.subr.mxu0 0.0
  %4334 = vmatpush1.msra.mxu0 0.0
  %4335 = vmatprep.subr.mxu0 0.0
  %4336 = vmatpush1.msra.mxu0 0.0
  %4337 = vmatprep.subr.mxu0 0.0
  %4338 = vmatpush1.msra.mxu0 0.0
  %4339 = vmatprep.mubr.f32.mxu0 0.0
  %4340 = vmatmul.mubr.f32.gmra.mrb[0].mxu0 %v4273
  %v4341 = vpop.f32.mrb[0].mxu0
  %v4342 = vadd.f32 %v95, %v4341
  %v4343 = vpop.f32.mrb[0].mxu0
  %4344 = vdwg.mxu0
  %v4345 = vadd.f32 %v4269, %v4342
  %v4346 = vxor.u32 %v4345, 2147483648
  %v4347 = vmul.f32 %v4346, 1.442695
  %v4348 = vpow.pop %v4347
  %v4349 = vadd.f32 %v4348, 1.0
  %v4350 = vrcp.pop %v4349
  %v4351 = vmul.f32 1.0, %v4350
  %4353 = vrot.lane.b32.xlu0 %v4342, 64
  %v4354 = vpop.permute.xlu0 %4353
  %v4356 = vmul.f32 %v4351, %v4354
  %4358 = vrot.lane.b32.xlu0 %v4356, 64
  %v4359 = vpop.permute.xlu0 %4358
  %v4361 = vadd.f32 %v4269, %v4359
  %v4362 = vtanh.pop %v4361
  %v4363 = vsub.f32 1.0, %v4351
  %4365 = vrot.lane.b32.xlu0 %v4362, 96
  %v4366 = vpop.permute.xlu0 %4365
  %v4368 = vmul.f32 %v4363, %v4366
  %v4369 = vmul.f32 %v4351, %v4267
  %v4370 = vadd.f32 %v4368, %v4369
  %4372 = vrot.lane.b32.xlu0 %v4370, 96
  %v4373 = vpop.permute.xlu0 %4372
  %v4374 = vsel %vm97, %v4373, 0
  %4376 = vmatprep.subr.mxu0 %v74
  %4377 = vmatpush1.msra.mxu0 %v73
  %4378 = vmatprep.subr.mxu0 %v76
  %4379 = vmatpush1.msra.mxu0 %v75
  %4380 = vmatprep.subr.mxu0 %v78
  %4381 = vmatpush1.msra.mxu0 %v77
  %4382 = vmatprep.subr.mxu0 %v80
  %4383 = vmatpush1.msra.mxu0 %v79
  %4384 = vmatprep.subr.mxu0 0.0
  %4385 = vmatpush1.msra.mxu0 0.0
  %4386 = vmatprep.subr.mxu0 0.0
  %4387 = vmatpush1.msra.mxu0 0.0
  %4388 = vmatprep.subr.mxu0 0.0
  %4389 = vmatpush1.msra.mxu0 0.0
  %4390 = vmatprep.subr.mxu0 0.0
  %4391 = vmatpush1.msra.mxu0 0.0
  %4392 = vmatprep.subr.mxu0 0.0
  %4393 = vmatpush1.msra.mxu0 0.0
  %4394 = vmatprep.subr.mxu0 0.0
  %4395 = vmatpush1.msra.mxu0 0.0
  %4396 = vmatprep.subr.mxu0 0.0
  %4397 = vmatpush1.msra.mxu0 0.0
  %4398 = vmatprep.subr.mxu0 0.0
  %4399 = vmatpush1.msra.mxu0 0.0
  %4400 = vmatprep.subr.mxu0 0.0
  %4401 = vmatpush1.msra.mxu0 0.0
  %4402 = vmatprep.subr.mxu0 0.0
  %4403 = vmatpush1.msra.mxu0 0.0
  %4404 = vmatprep.subr.mxu0 0.0
  %4405 = vmatpush1.msra.mxu0 0.0
  %4406 = vmatprep.subr.mxu0 0.0
  %4407 = vmatpush1.msra.mxu0 0.0
  %4408 = vmatprep.subr.mxu0 0.0
  %4409 = vmatpush1.msra.mxu0 0.0
  %4410 = vmatprep.subr.mxu0 0.0
  %4411 = vmatpush1.msra.mxu0 0.0
  %4412 = vmatprep.subr.mxu0 0.0
  %4413 = vmatpush1.msra.mxu0 0.0
  %4414 = vmatprep.subr.mxu0 0.0
  %4415 = vmatpush1.msra.mxu0 0.0
  %4416 = vmatprep.subr.mxu0 0.0
  %4417 = vmatpush1.msra.mxu0 0.0
  %4418 = vmatprep.subr.mxu0 0.0
  %4419 = vmatpush1.msra.mxu0 0.0
  %4420 = vmatprep.subr.mxu0 0.0
  %4421 = vmatpush1.msra.mxu0 0.0
  %4422 = vmatprep.subr.mxu0 0.0
  %4423 = vmatpush1.msra.mxu0 0.0
  %4424 = vmatprep.subr.mxu0 0.0
  %4425 = vmatpush1.msra.mxu0 0.0
  %4426 = vmatprep.subr.mxu0 0.0
  %4427 = vmatpush1.msra.mxu0 0.0
  %4428 = vmatprep.subr.mxu0 0.0
  %4429 = vmatpush1.msra.mxu0 0.0
  %4430 = vmatprep.subr.mxu0 0.0
  %4431 = vmatpush1.msra.mxu0 0.0
  %4432 = vmatprep.subr.mxu0 0.0
  %4433 = vmatpush1.msra.mxu0 0.0
  %4434 = vmatprep.subr.mxu0 0.0
  %4435 = vmatpush1.msra.mxu0 0.0
  %4436 = vmatprep.subr.mxu0 0.0
  %4437 = vmatpush1.msra.mxu0 0.0
  %4438 = vmatprep.subr.mxu0 0.0
  %4439 = vmatpush1.msra.mxu0 0.0
  %4440 = vmatprep.mubr.f32.mxu0 0.0
  %4441 = vmatmul.mubr.f32.gmra.mrb[0].mxu0 %v4374
  %v4442 = vpop.f32.mrb[0].mxu0
  %v4443 = vadd.f32 %v204, %v4442
  %v4444 = vpop.f32.mrb[0].mxu0
  %v4445 = vadd.f32 %v208, %v4444
  %4446 = vdwg.mxu0
  %s4447 = scalar_lea.vmem %s10, 32
  %4448 = vst [vmem:[%s4447] sm:$0xff] %v4443
  %v4450 = vcombine.high %v4445, %v4445
  %v4452 = vunpack.c.l.s4 1966171168
  %v4453 = vunpack.c.0.s8 %v4452
  %v4454 = vlaneseq
  %v4455 = vshrl.u32 %v4454, 7
  %v4456 = vsub.s32 %v4453, %v4455
  %v4457 = vrot.slane %v4445, %v4456
  %v4459 = vunpack.c.l.s4 1966171168
  %v4460 = vunpack.c.0.s8 %v4459
  %v4461 = vlaneseq
  %v4462 = vshrl.u32 %v4461, 7
  %v4463 = vsub.s32 %v4460, %v4462
  %v4464 = vrot.slane %v4450, %v4463
  %v4465 = vcombine.high %v4457, %v4457
  %v4466 = vcombine.high %v4464, %v4464
  %v4468 = vunpack.c.l.s4 1966171168
  %v4469 = vunpack.c.0.s8 %v4468
  %v4470 = vlaneseq
  %v4471 = vshrl.u32 %v4470, 7
  %v4472 = vsub.s32 %v4469, %v4471
  %v4473 = vrot.slane %v4457, %v4472
  %v4475 = vunpack.c.l.s4 1966171168
  %v4476 = vunpack.c.0.s8 %v4475
  %v4477 = vlaneseq
  %v4478 = vshrl.u32 %v4477, 7
  %v4479 = vsub.s32 %v4476, %v4478
  %v4480 = vrot.slane %v4464, %v4479
  %v4482 = vunpack.c.l.s4 1966171168
  %v4483 = vunpack.c.0.s8 %v4482
  %v4484 = vlaneseq
  %v4485 = vshrl.u32 %v4484, 7
  %v4486 = vsub.s32 %v4483, %v4485
  %v4487 = vrot.slane %v4465, %v4486
  %v4489 = vunpack.c.l.s4 1966171168
  %v4490 = vunpack.c.0.s8 %v4489
  %v4491 = vlaneseq
  %v4492 = vshrl.u32 %v4491, 7
  %v4493 = vsub.s32 %v4490, %v4492
  %v4494 = vrot.slane %v4466, %v4493
  %v4495 = vcombine.high %v4473, %v4473
  %v4496 = vcombine.high %v4480, %v4480
  %v4497 = vcombine.high %v4487, %v4487
  %v4498 = vcombine.high %v4494, %v4494
  %v4499 = vlaneseq
  %v4500 = vshrl.u32 %v4499, 7
  %v4501 = vsub.s32 0, %v4500
  %v4502 = vrot.slane %v4473, %v4501
  %v4503 = vlaneseq
  %v4504 = vshrl.u32 %v4503, 7
  %v4505 = vsub.s32 0, %v4504
  %v4506 = vrot.slane %v4487, %v4505
  %v4507 = vlaneseq
  %v4508 = vshrl.u32 %v4507, 7
  %v4509 = vsub.s32 0, %v4508
  %v4510 = vrot.slane %v4495, %v4509
  %v4511 = vlaneseq
  %v4512 = vshrl.u32 %v4511, 7
  %v4513 = vsub.s32 0, %v4512
  %v4514 = vrot.slane %v4497, %v4513
  %v4515 = vlaneseq
  %v4516 = vshrl.u32 %v4515, 7
  %v4517 = vsub.s32 0, %v4516
  %v4518 = vrot.slane %v4480, %v4517
  %v4519 = vlaneseq
  %v4520 = vshrl.u32 %v4519, 7
  %v4521 = vsub.s32 0, %v4520
  %v4522 = vrot.slane %v4494, %v4521
  %v4523 = vlaneseq
  %v4524 = vshrl.u32 %v4523, 7
  %v4525 = vsub.s32 0, %v4524
  %v4526 = vrot.slane %v4496, %v4525
  %v4527 = vlaneseq
  %v4528 = vshrl.u32 %v4527, 7
  %v4529 = vsub.s32 0, %v4528
  %v4530 = vrot.slane %v4498, %v4529
  %v4539 = vadd.f32 %v51, %v4502
  %v4540 = vadd.f32 %v52, %v4502
  %v4541 = vadd.f32 %v53, %v4506
  %v4542 = vadd.f32 %v54, %v4506
  %v4543 = vadd.f32 %v55, %v4510
  %v4544 = vadd.f32 %v56, %v4510
  %v4545 = vadd.f32 %v57, %v4514
  %v4546 = vadd.f32 %v58, %v4514
  %v4547 = vadd.f32 %v59, %v4518
  %v4548 = vadd.f32 %v60, %v4518
  %v4549 = vadd.f32 %v61, %v4522
  %v4550 = vadd.f32 %v62, %v4522
  %v4551 = vadd.f32 %v63, %v4526
  %v4552 = vadd.f32 %v64, %v4526
  %v4553 = vadd.f32 %v65, %v4530
  %v4554 = vadd.f32 %v66, %v4530
  %v4555 = vtanh.pop %v4539
  %v4556 = vtanh.pop %v4540
  %v4557 = vtanh.pop %v4541
  %v4558 = vtanh.pop %v4542
  %v4559 = vtanh.pop %v4543
  %v4560 = vtanh.pop %v4544
  %v4561 = vtanh.pop %v4545
  %v4562 = vtanh.pop %v4546
  %v4563 = vtanh.pop %v4547
  %v4564 = vtanh.pop %v4548
  %v4565 = vtanh.pop %v4549
  %v4566 = vtanh.pop %v4550
  %v4567 = vtanh.pop %v4551
  %v4568 = vtanh.pop %v4552
  %v4569 = vtanh.pop %v4553
  %v4570 = vtanh.pop %v4554
  %v4571 = vmul.f32 %v4555, %v87
  %v4572 = vmul.f32 %v4556, %v87
  %v4573 = vmul.f32 %v4557, %v87
  %v4574 = vmul.f32 %v4558, %v87
  %v4575 = vmul.f32 %v4559, %v87
  %v4576 = vmul.f32 %v4560, %v87
  %v4577 = vmul.f32 %v4561, %v87
  %v4578 = vmul.f32 %v4562, %v87
  %v4579 = vmul.f32 %v4563, %v87
  %v4580 = vmul.f32 %v4564, %v87
  %v4581 = vmul.f32 %v4565, %v87
  %v4582 = vmul.f32 %v4566, %v87
  %v4583 = vmul.f32 %v4567, %v87
  %v4584 = vmul.f32 %v4568, %v87
  %v4585 = vmul.f32 %v4569, %v87
  %v4586 = vmul.f32 %v4570, %v87
  %v4587 = vsel %vm97, %v4571, 0.0
  %4588 = vadd.xlane.f32.xlu0 %v4587
  %v4589 = vpop.xlane.xlu0 %4588
  %v4590 = vsel %vm97, %v4572, 0.0
  %4591 = vadd.xlane.f32.xlu0 %v4590
  %v4592 = vpop.xlane.xlu0 %4591
  %v4593 = vsel %vm97, %v4573, 0.0
  %4594 = vadd.xlane.f32.xlu0 %v4593
  %v4595 = vpop.xlane.xlu0 %4594
  %v4596 = vsel %vm97, %v4574, 0.0
  %4597 = vadd.xlane.f32.xlu0 %v4596
  %v4598 = vpop.xlane.xlu0 %4597
  %v4599 = vsel %vm97, %v4575, 0.0
  %4600 = vadd.xlane.f32.xlu0 %v4599
  %v4601 = vpop.xlane.xlu0 %4600
  %v4602 = vsel %vm97, %v4576, 0.0
  %4603 = vadd.xlane.f32.xlu0 %v4602
  %v4604 = vpop.xlane.xlu0 %4603
  %v4605 = vsel %vm97, %v4577, 0.0
  %4606 = vadd.xlane.f32.xlu0 %v4605
  %v4607 = vpop.xlane.xlu0 %4606
  %v4608 = vsel %vm97, %v4578, 0.0
  %4609 = vadd.xlane.f32.xlu0 %v4608
  %v4610 = vpop.xlane.xlu0 %4609
  %v4611 = vsel %vm97, %v4579, 0.0
  %4612 = vadd.xlane.f32.xlu0 %v4611
  %v4613 = vpop.xlane.xlu0 %4612
  %v4614 = vsel %vm97, %v4580, 0.0
  %4615 = vadd.xlane.f32.xlu0 %v4614
  %v4616 = vpop.xlane.xlu0 %4615
  %v4617 = vsel %vm97, %v4581, 0.0
  %4618 = vadd.xlane.f32.xlu0 %v4617
  %v4619 = vpop.xlane.xlu0 %4618
  %v4620 = vsel %vm97, %v4582, 0.0
  %4621 = vadd.xlane.f32.xlu0 %v4620
  %v4622 = vpop.xlane.xlu0 %4621
  %v4623 = vsel %vm97, %v4583, 0.0
  %4624 = vadd.xlane.f32.xlu0 %v4623
  %v4625 = vpop.xlane.xlu0 %4624
  %v4626 = vsel %vm97, %v4584, 0.0
  %4627 = vadd.xlane.f32.xlu0 %v4626
  %v4628 = vpop.xlane.xlu0 %4627
  %v4629 = vsel %vm97, %v4585, 0.0
  %4630 = vadd.xlane.f32.xlu0 %v4629
  %v4631 = vpop.xlane.xlu0 %4630
  %v4632 = vsel %vm97, %v4586, 0.0
  %4633 = vadd.xlane.f32.xlu0 %v4632
  %v4634 = vpop.xlane.xlu0 %4633
  %v4635 = vadd.f32 %v4589, %v481
  %v4636 = vadd.f32 %v4592, %v485
  %v4637 = vadd.f32 %v4595, %v492
  %v4638 = vadd.f32 %v4598, %v496
  %v4639 = vadd.f32 %v4601, %v503
  %v4640 = vadd.f32 %v4604, %v507
  %v4641 = vadd.f32 %v4607, %v514
  %v4642 = vadd.f32 %v4610, %v518
  %v4643 = vadd.f32 %v4613, %v525
  %v4644 = vadd.f32 %v4616, %v529
  %v4645 = vadd.f32 %v4619, %v536
  %v4646 = vadd.f32 %v4622, %v540
  %v4647 = vadd.f32 %v4625, %v547
  %v4648 = vadd.f32 %v4628, %v551
  %v4649 = vadd.f32 %v4631, %v558
  %v4650 = vadd.f32 %v4634, %v562
  %4667 = vset.pattern.permute.xlu0 0
  %4668 = vperm.xlu0 %4667, %v4635
  %v4669 = vpop.permute.xlu0 %4668
  %4670 = vset.pattern.permute.xlu0 0
  %4671 = vperm.xlu0 %4670, %v4636
  %v4672 = vpop.permute.xlu0 %4671
  %4673 = vset.pattern.permute.xlu0 0
  %4674 = vperm.xlu0 %4673, %v4637
  %v4675 = vpop.permute.xlu0 %4674
  %4676 = vset.pattern.permute.xlu0 0
  %4677 = vperm.xlu0 %4676, %v4638
  %v4678 = vpop.permute.xlu0 %4677
  %4679 = vset.pattern.permute.xlu0 0
  %4680 = vperm.xlu0 %4679, %v4639
  %v4681 = vpop.permute.xlu0 %4680
  %4682 = vset.pattern.permute.xlu0 0
  %4683 = vperm.xlu0 %4682, %v4640
  %v4684 = vpop.permute.xlu0 %4683
  %4685 = vset.pattern.permute.xlu0 0
  %4686 = vperm.xlu0 %4685, %v4641
  %v4687 = vpop.permute.xlu0 %4686
  %4688 = vset.pattern.permute.xlu0 0
  %4689 = vperm.xlu0 %4688, %v4642
  %v4690 = vpop.permute.xlu0 %4689
  %4691 = vset.pattern.permute.xlu0 0
  %4692 = vperm.xlu0 %4691, %v4643
  %v4693 = vpop.permute.xlu0 %4692
  %4694 = vset.pattern.permute.xlu0 0
  %4695 = vperm.xlu0 %4694, %v4644
  %v4696 = vpop.permute.xlu0 %4695
  %4697 = vset.pattern.permute.xlu0 0
  %4698 = vperm.xlu0 %4697, %v4645
  %v4699 = vpop.permute.xlu0 %4698
  %4700 = vset.pattern.permute.xlu0 0
  %4701 = vperm.xlu0 %4700, %v4646
  %v4702 = vpop.permute.xlu0 %4701
  %4703 = vset.pattern.permute.xlu0 0
  %4704 = vperm.xlu0 %4703, %v4647
  %v4705 = vpop.permute.xlu0 %4704
  %4706 = vset.pattern.permute.xlu0 0
  %4707 = vperm.xlu0 %4706, %v4648
  %v4708 = vpop.permute.xlu0 %4707
  %4709 = vset.pattern.permute.xlu0 0
  %4710 = vperm.xlu0 %4709, %v4649
  %v4711 = vpop.permute.xlu0 %4710
  %4712 = vset.pattern.permute.xlu0 0
  %4713 = vperm.xlu0 %4712, %v4650
  %v4714 = vpop.permute.xlu0 %4713
  %v4715 = vlaneseq
  %v4716 = vshrl.u32 %v4715, 7
  %v4717 = vsub.s32 %v660, %v4716
  %v4718 = vrot.slane %v4669, %v4717
  %v4719 = vlaneseq
  %v4720 = vshrl.u32 %v4719, 7
  %v4721 = vsub.s32 %v665, %v4720
  %v4722 = vrot.slane %v4672, %v4721
  %v4723 = vsel %vm670, %v4722, %v4718
  %v4724 = vlaneseq
  %v4725 = vshrl.u32 %v4724, 7
  %v4726 = vsub.s32 %v660, %v4725
  %v4727 = vrot.slane %v4675, %v4726
  %v4728 = vlaneseq
  %v4729 = vshrl.u32 %v4728, 7
  %v4730 = vsub.s32 %v665, %v4729
  %v4731 = vrot.slane %v4678, %v4730
  %v4732 = vsel %vm670, %v4731, %v4727
  %v4733 = vlaneseq
  %v4734 = vshrl.u32 %v4733, 7
  %v4735 = vsub.s32 %v660, %v4734
  %v4736 = vrot.slane %v4681, %v4735
  %v4737 = vlaneseq
  %v4738 = vshrl.u32 %v4737, 7
  %v4739 = vsub.s32 %v665, %v4738
  %v4740 = vrot.slane %v4684, %v4739
  %v4741 = vsel %vm670, %v4740, %v4736
  %v4742 = vlaneseq
  %v4743 = vshrl.u32 %v4742, 7
  %v4744 = vsub.s32 %v660, %v4743
  %v4745 = vrot.slane %v4687, %v4744
  %v4746 = vlaneseq
  %v4747 = vshrl.u32 %v4746, 7
  %v4748 = vsub.s32 %v665, %v4747
  %v4749 = vrot.slane %v4690, %v4748
  %v4750 = vsel %vm670, %v4749, %v4745
  %v4751 = vlaneseq
  %v4752 = vshrl.u32 %v4751, 7
  %v4753 = vsub.s32 %v660, %v4752
  %v4754 = vrot.slane %v4693, %v4753
  %v4755 = vlaneseq
  %v4756 = vshrl.u32 %v4755, 7
  %v4757 = vsub.s32 %v665, %v4756
  %v4758 = vrot.slane %v4696, %v4757
  %v4759 = vsel %vm670, %v4758, %v4754
  %v4760 = vlaneseq
  %v4761 = vshrl.u32 %v4760, 7
  %v4762 = vsub.s32 %v660, %v4761
  %v4763 = vrot.slane %v4699, %v4762
  %v4764 = vlaneseq
  %v4765 = vshrl.u32 %v4764, 7
  %v4766 = vsub.s32 %v665, %v4765
  %v4767 = vrot.slane %v4702, %v4766
  %v4768 = vsel %vm670, %v4767, %v4763
  %v4769 = vlaneseq
  %v4770 = vshrl.u32 %v4769, 7
  %v4771 = vsub.s32 %v660, %v4770
  %v4772 = vrot.slane %v4705, %v4771
  %v4773 = vlaneseq
  %v4774 = vshrl.u32 %v4773, 7
  %v4775 = vsub.s32 %v665, %v4774
  %v4776 = vrot.slane %v4708, %v4775
  %v4777 = vsel %vm670, %v4776, %v4772
  %v4778 = vlaneseq
  %v4779 = vshrl.u32 %v4778, 7
  %v4780 = vsub.s32 %v660, %v4779
  %v4781 = vrot.slane %v4711, %v4780
  %v4782 = vlaneseq
  %v4783 = vshrl.u32 %v4782, 7
  %v4784 = vsub.s32 %v665, %v4783
  %v4785 = vrot.slane %v4714, %v4784
  %v4786 = vsel %vm670, %v4785, %v4781
  %v4787 = vsel %vm735, %v4732, %v4723
  %v4788 = vsel %vm737, %v4741, %v4787
  %v4789 = vsel %vm739, %v4750, %v4788
  %v4790 = vsel %vm741, %v4759, %v4789
  %v4791 = vsel %vm743, %v4768, %v4790
  %v4792 = vsel %vm745, %v4777, %v4791
  %v4793 = vsel %vm747, %v4786, %v4792
  %v4795 = vsel %vm750, %v4793, -inf
  %4796 = vmax.xlane.f32.xlu0 %v4795
  %v4797 = vpop.xlane.xlu0 %4796
  %v4799 = vlaneseq
  %v4800 = vshrl.u32 %v4799, 7
  %v4801 = vsub.s32 0, %v4800
  %v4802 = vrot.slane %v4797, %v4801
  %v4803 = vlaneseq
  %v4804 = vshrl.u32 %v4803, 7
  %v4805 = vsub.s32 1, %v4804
  %v4806 = vrot.slane %v4797, %v4805
  %v4807 = vlaneseq
  %v4808 = vshrl.u32 %v4807, 7
  %v4809 = vsub.s32 2, %v4808
  %v4810 = vrot.slane %v4797, %v4809
  %v4811 = vlaneseq
  %v4812 = vshrl.u32 %v4811, 7
  %v4813 = vsub.s32 3, %v4812
  %v4814 = vrot.slane %v4797, %v4813
  %v4815 = vlaneseq
  %v4816 = vshrl.u32 %v4815, 7
  %v4817 = vsub.s32 4, %v4816
  %v4818 = vrot.slane %v4797, %v4817
  %v4819 = vlaneseq
  %v4820 = vshrl.u32 %v4819, 7
  %v4821 = vsub.s32 5, %v4820
  %v4822 = vrot.slane %v4797, %v4821
  %v4823 = vlaneseq
  %v4824 = vshrl.u32 %v4823, 7
  %v4825 = vsub.s32 6, %v4824
  %v4826 = vrot.slane %v4797, %v4825
  %v4827 = vlaneseq
  %v4828 = vshrl.u32 %v4827, 7
  %v4829 = vsub.s32 7, %v4828
  %v4830 = vrot.slane %v4797, %v4829
  %v4839 = vsub.f32 %v4635, %v4802
  %v4840 = vsub.f32 %v4636, %v4802
  %v4841 = vsub.f32 %v4637, %v4806
  %v4842 = vsub.f32 %v4638, %v4806
  %v4843 = vsub.f32 %v4639, %v4810
  %v4844 = vsub.f32 %v4640, %v4810
  %v4845 = vsub.f32 %v4641, %v4814
  %v4846 = vsub.f32 %v4642, %v4814
  %v4847 = vsub.f32 %v4643, %v4818
  %v4848 = vsub.f32 %v4644, %v4818
  %v4849 = vsub.f32 %v4645, %v4822
  %v4850 = vsub.f32 %v4646, %v4822
  %v4851 = vsub.f32 %v4647, %v4826
  %v4852 = vsub.f32 %v4648, %v4826
  %v4853 = vsub.f32 %v4649, %v4830
  %v4854 = vsub.f32 %v4650, %v4830
  %v4855 = vmul.f32 %v4839, 1.442695
  %v4856 = vpow.pop %v4855
  %v4857 = vmul.f32 %v4840, 1.442695
  %v4858 = vpow.pop %v4857
  %v4859 = vmul.f32 %v4841, 1.442695
  %v4860 = vpow.pop %v4859
  %v4861 = vmul.f32 %v4842, 1.442695
  %v4862 = vpow.pop %v4861
  %v4863 = vmul.f32 %v4843, 1.442695
  %v4864 = vpow.pop %v4863
  %v4865 = vmul.f32 %v4844, 1.442695
  %v4866 = vpow.pop %v4865
  %v4867 = vmul.f32 %v4845, 1.442695
  %v4868 = vpow.pop %v4867
  %v4869 = vmul.f32 %v4846, 1.442695
  %v4870 = vpow.pop %v4869
  %v4871 = vmul.f32 %v4847, 1.442695
  %v4872 = vpow.pop %v4871
  %v4873 = vmul.f32 %v4848, 1.442695
  %v4874 = vpow.pop %v4873
  %v4875 = vmul.f32 %v4849, 1.442695
  %v4876 = vpow.pop %v4875
  %v4877 = vmul.f32 %v4850, 1.442695
  %v4878 = vpow.pop %v4877
  %v4879 = vmul.f32 %v4851, 1.442695
  %v4880 = vpow.pop %v4879
  %v4881 = vmul.f32 %v4852, 1.442695
  %v4882 = vpow.pop %v4881
  %v4883 = vmul.f32 %v4853, 1.442695
  %v4884 = vpow.pop %v4883
  %v4885 = vmul.f32 %v4854, 1.442695
  %v4886 = vpow.pop %v4885
  %4903 = vset.pattern.permute.xlu0 0
  %4904 = vperm.xlu0 %4903, %v4856
  %v4905 = vpop.permute.xlu0 %4904
  %4906 = vset.pattern.permute.xlu0 0
  %4907 = vperm.xlu0 %4906, %v4858
  %v4908 = vpop.permute.xlu0 %4907
  %4909 = vset.pattern.permute.xlu0 0
  %4910 = vperm.xlu0 %4909, %v4860
  %v4911 = vpop.permute.xlu0 %4910
  %4912 = vset.pattern.permute.xlu0 0
  %4913 = vperm.xlu0 %4912, %v4862
  %v4914 = vpop.permute.xlu0 %4913
  %4915 = vset.pattern.permute.xlu0 0
  %4916 = vperm.xlu0 %4915, %v4864
  %v4917 = vpop.permute.xlu0 %4916
  %4918 = vset.pattern.permute.xlu0 0
  %4919 = vperm.xlu0 %4918, %v4866
  %v4920 = vpop.permute.xlu0 %4919
  %4921 = vset.pattern.permute.xlu0 0
  %4922 = vperm.xlu0 %4921, %v4868
  %v4923 = vpop.permute.xlu0 %4922
  %4924 = vset.pattern.permute.xlu0 0
  %4925 = vperm.xlu0 %4924, %v4870
  %v4926 = vpop.permute.xlu0 %4925
  %4927 = vset.pattern.permute.xlu0 0
  %4928 = vperm.xlu0 %4927, %v4872
  %v4929 = vpop.permute.xlu0 %4928
  %4930 = vset.pattern.permute.xlu0 0
  %4931 = vperm.xlu0 %4930, %v4874
  %v4932 = vpop.permute.xlu0 %4931
  %4933 = vset.pattern.permute.xlu0 0
  %4934 = vperm.xlu0 %4933, %v4876
  %v4935 = vpop.permute.xlu0 %4934
  %4936 = vset.pattern.permute.xlu0 0
  %4937 = vperm.xlu0 %4936, %v4878
  %v4938 = vpop.permute.xlu0 %4937
  %4939 = vset.pattern.permute.xlu0 0
  %4940 = vperm.xlu0 %4939, %v4880
  %v4941 = vpop.permute.xlu0 %4940
  %4942 = vset.pattern.permute.xlu0 0
  %4943 = vperm.xlu0 %4942, %v4882
  %v4944 = vpop.permute.xlu0 %4943
  %4945 = vset.pattern.permute.xlu0 0
  %4946 = vperm.xlu0 %4945, %v4884
  %v4947 = vpop.permute.xlu0 %4946
  %4948 = vset.pattern.permute.xlu0 0
  %4949 = vperm.xlu0 %4948, %v4886
  %v4950 = vpop.permute.xlu0 %4949
  %v4951 = vlaneseq
  %v4952 = vshrl.u32 %v4951, 7
  %v4953 = vsub.s32 %v660, %v4952
  %v4954 = vrot.slane %v4905, %v4953
  %v4955 = vlaneseq
  %v4956 = vshrl.u32 %v4955, 7
  %v4957 = vsub.s32 %v665, %v4956
  %v4958 = vrot.slane %v4908, %v4957
  %v4959 = vsel %vm670, %v4958, %v4954
  %v4960 = vlaneseq
  %v4961 = vshrl.u32 %v4960, 7
  %v4962 = vsub.s32 %v660, %v4961
  %v4963 = vrot.slane %v4911, %v4962
  %v4964 = vlaneseq
  %v4965 = vshrl.u32 %v4964, 7
  %v4966 = vsub.s32 %v665, %v4965
  %v4967 = vrot.slane %v4914, %v4966
  %v4968 = vsel %vm670, %v4967, %v4963
  %v4969 = vlaneseq
  %v4970 = vshrl.u32 %v4969, 7
  %v4971 = vsub.s32 %v660, %v4970
  %v4972 = vrot.slane %v4917, %v4971
  %v4973 = vlaneseq
  %v4974 = vshrl.u32 %v4973, 7
  %v4975 = vsub.s32 %v665, %v4974
  %v4976 = vrot.slane %v4920, %v4975
  %v4977 = vsel %vm670, %v4976, %v4972
  %v4978 = vlaneseq
  %v4979 = vshrl.u32 %v4978, 7
  %v4980 = vsub.s32 %v660, %v4979
  %v4981 = vrot.slane %v4923, %v4980
  %v4982 = vlaneseq
  %v4983 = vshrl.u32 %v4982, 7
  %v4984 = vsub.s32 %v665, %v4983
  %v4985 = vrot.slane %v4926, %v4984
  %v4986 = vsel %vm670, %v4985, %v4981
  %v4987 = vlaneseq
  %v4988 = vshrl.u32 %v4987, 7
  %v4989 = vsub.s32 %v660, %v4988
  %v4990 = vrot.slane %v4929, %v4989
  %v4991 = vlaneseq
  %v4992 = vshrl.u32 %v4991, 7
  %v4993 = vsub.s32 %v665, %v4992
  %v4994 = vrot.slane %v4932, %v4993
  %v4995 = vsel %vm670, %v4994, %v4990
  %v4996 = vlaneseq
  %v4997 = vshrl.u32 %v4996, 7
  %v4998 = vsub.s32 %v660, %v4997
  %v4999 = vrot.slane %v4935, %v4998
  %v5000 = vlaneseq
  %v5001 = vshrl.u32 %v5000, 7
  %v5002 = vsub.s32 %v665, %v5001
  %v5003 = vrot.slane %v4938, %v5002
  %v5004 = vsel %vm670, %v5003, %v4999
  %v5005 = vlaneseq
  %v5006 = vshrl.u32 %v5005, 7
  %v5007 = vsub.s32 %v660, %v5006
  %v5008 = vrot.slane %v4941, %v5007
  %v5009 = vlaneseq
  %v5010 = vshrl.u32 %v5009, 7
  %v5011 = vsub.s32 %v665, %v5010
  %v5012 = vrot.slane %v4944, %v5011
  %v5013 = vsel %vm670, %v5012, %v5008
  %v5014 = vlaneseq
  %v5015 = vshrl.u32 %v5014, 7
  %v5016 = vsub.s32 %v660, %v5015
  %v5017 = vrot.slane %v4947, %v5016
  %v5018 = vlaneseq
  %v5019 = vshrl.u32 %v5018, 7
  %v5020 = vsub.s32 %v665, %v5019
  %v5021 = vrot.slane %v4950, %v5020
  %v5022 = vsel %vm670, %v5021, %v5017
  %v5023 = vsel %vm735, %v4968, %v4959
  %v5024 = vsel %vm737, %v4977, %v5023
  %v5025 = vsel %vm739, %v4986, %v5024
  %v5026 = vsel %vm741, %v4995, %v5025
  %v5027 = vsel %vm743, %v5004, %v5026
  %v5028 = vsel %vm745, %v5013, %v5027
  %v5029 = vsel %vm747, %v5022, %v5028
  %v5031 = vsel %vm750, %v5029, 0.0
  %5032 = vadd.xlane.f32.xlu0 %v5031
  %v5033 = vpop.xlane.xlu0 %5032
  %v5034 = vrcp.pop %v5033
  %v5036 = vlaneseq
  %v5037 = vshrl.u32 %v5036, 7
  %v5038 = vsub.s32 0, %v5037
  %v5039 = vrot.slane %v5034, %v5038
  %v5040 = vlaneseq
  %v5041 = vshrl.u32 %v5040, 7
  %v5042 = vsub.s32 1, %v5041
  %v5043 = vrot.slane %v5034, %v5042
  %v5044 = vlaneseq
  %v5045 = vshrl.u32 %v5044, 7
  %v5046 = vsub.s32 2, %v5045
  %v5047 = vrot.slane %v5034, %v5046
  %v5048 = vlaneseq
  %v5049 = vshrl.u32 %v5048, 7
  %v5050 = vsub.s32 3, %v5049
  %v5051 = vrot.slane %v5034, %v5050
  %v5052 = vlaneseq
  %v5053 = vshrl.u32 %v5052, 7
  %v5054 = vsub.s32 4, %v5053
  %v5055 = vrot.slane %v5034, %v5054
  %v5056 = vlaneseq
  %v5057 = vshrl.u32 %v5056, 7
  %v5058 = vsub.s32 5, %v5057
  %v5059 = vrot.slane %v5034, %v5058
  %v5060 = vlaneseq
  %v5061 = vshrl.u32 %v5060, 7
  %v5062 = vsub.s32 6, %v5061
  %v5063 = vrot.slane %v5034, %v5062
  %v5064 = vlaneseq
  %v5065 = vshrl.u32 %v5064, 7
  %v5066 = vsub.s32 7, %v5065
  %v5067 = vrot.slane %v5034, %v5066
  %v5076 = vmul.f32 %v4856, %v5039
  %v5077 = vmul.f32 %v4858, %v5039
  %v5078 = vmul.f32 %v4860, %v5043
  %v5079 = vmul.f32 %v4862, %v5043
  %v5080 = vmul.f32 %v4864, %v5047
  %v5081 = vmul.f32 %v4866, %v5047
  %v5082 = vmul.f32 %v4868, %v5051
  %v5083 = vmul.f32 %v4870, %v5051
  %v5084 = vmul.f32 %v4872, %v5055
  %v5085 = vmul.f32 %v4874, %v5055
  %v5086 = vmul.f32 %v4876, %v5059
  %v5087 = vmul.f32 %v4878, %v5059
  %v5088 = vmul.f32 %v4880, %v5063
  %v5089 = vmul.f32 %v4882, %v5063
  %v5090 = vmul.f32 %v4884, %v5067
  %v5091 = vmul.f32 %v4886, %v5067
  %5093 = vset.pattern.permute.xlu0 0
  %5094 = vperm.xlu0 %5093, %v5076
  %v5095 = vpop.permute.xlu0 %5094
  %5098 = vset.pattern.permute.xlu0 0
  %5099 = vperm.xlu0 %5098, %v5077
  %v5100 = vpop.permute.xlu0 %5099
  %5103 = vset.pattern.permute.xlu0 0
  %5104 = vperm.xlu0 %5103, %v5078
  %v5105 = vpop.permute.xlu0 %5104
  %5108 = vset.pattern.permute.xlu0 0
  %5109 = vperm.xlu0 %5108, %v5079
  %v5110 = vpop.permute.xlu0 %5109
  %5113 = vset.pattern.permute.xlu0 0
  %5114 = vperm.xlu0 %5113, %v5080
  %v5115 = vpop.permute.xlu0 %5114
  %5118 = vset.pattern.permute.xlu0 0
  %5119 = vperm.xlu0 %5118, %v5081
  %v5120 = vpop.permute.xlu0 %5119
  %5123 = vset.pattern.permute.xlu0 0
  %5124 = vperm.xlu0 %5123, %v5082
  %v5125 = vpop.permute.xlu0 %5124
  %5128 = vset.pattern.permute.xlu0 0
  %5129 = vperm.xlu0 %5128, %v5083
  %v5130 = vpop.permute.xlu0 %5129
  %5133 = vset.pattern.permute.xlu0 0
  %5134 = vperm.xlu0 %5133, %v5084
  %v5135 = vpop.permute.xlu0 %5134
  %5138 = vset.pattern.permute.xlu0 0
  %5139 = vperm.xlu0 %5138, %v5085
  %v5140 = vpop.permute.xlu0 %5139
  %5143 = vset.pattern.permute.xlu0 0
  %5144 = vperm.xlu0 %5143, %v5086
  %v5145 = vpop.permute.xlu0 %5144
  %5148 = vset.pattern.permute.xlu0 0
  %5149 = vperm.xlu0 %5148, %v5087
  %v5150 = vpop.permute.xlu0 %5149
  %5153 = vset.pattern.permute.xlu0 0
  %5154 = vperm.xlu0 %5153, %v5088
  %v5155 = vpop.permute.xlu0 %5154
  %5158 = vset.pattern.permute.xlu0 0
  %5159 = vperm.xlu0 %5158, %v5089
  %v5160 = vpop.permute.xlu0 %5159
  %5163 = vset.pattern.permute.xlu0 0
  %5164 = vperm.xlu0 %5163, %v5090
  %v5165 = vpop.permute.xlu0 %5164
  %5168 = vset.pattern.permute.xlu0 0
  %5169 = vperm.xlu0 %5168, %v5091
  %v5170 = vpop.permute.xlu0 %5169
  %v5172 = vmul.f32 %v5095, %v35
  %v5173 = vmul.f32 %v5100, %v36
  %v5174 = vmul.f32 %v5105, %v37
  %v5175 = vmul.f32 %v5110, %v38
  %v5176 = vmul.f32 %v5115, %v39
  %v5177 = vmul.f32 %v5120, %v40
  %v5178 = vmul.f32 %v5125, %v41
  %v5179 = vmul.f32 %v5130, %v42
  %v5180 = vmul.f32 %v5135, %v43
  %v5181 = vmul.f32 %v5140, %v44
  %v5182 = vmul.f32 %v5145, %v45
  %v5183 = vmul.f32 %v5150, %v46
  %v5184 = vmul.f32 %v5155, %v47
  %v5185 = vmul.f32 %v5160, %v48
  %v5186 = vmul.f32 %v5165, %v49
  %v5187 = vmul.f32 %v5170, %v50
  %v5188 = vsel %vm97, %v5172, 0.0
  %v5189 = vsel %vm97, %v5173, 0.0
  %v5190 = vadd.f32 %v5188, %v5189
  %v5191 = vrot.slane %v5190, 4
  %v5192 = vadd.f32 %v5190, %v5191
  %v5193 = vrot.slane %v5192, 2
  %v5194 = vadd.f32 %v5192, %v5193
  %v5195 = vrot.slane %v5194, 1
  %v5196 = vadd.f32 %v5194, %v5195
  %v5197 = vsel %vm97, %v5174, 0.0
  %v5198 = vsel %vm97, %v5175, 0.0
  %v5199 = vadd.f32 %v5197, %v5198
  %v5200 = vrot.slane %v5199, 4
  %v5201 = vadd.f32 %v5199, %v5200
  %v5202 = vrot.slane %v5201, 2
  %v5203 = vadd.f32 %v5201, %v5202
  %v5204 = vrot.slane %v5203, 1
  %v5205 = vadd.f32 %v5203, %v5204
  %v5206 = vsel %vm97, %v5176, 0.0
  %v5207 = vsel %vm97, %v5177, 0.0
  %v5208 = vadd.f32 %v5206, %v5207
  %v5209 = vrot.slane %v5208, 4
  %v5210 = vadd.f32 %v5208, %v5209
  %v5211 = vrot.slane %v5210, 2
  %v5212 = vadd.f32 %v5210, %v5211
  %v5213 = vrot.slane %v5212, 1
  %v5214 = vadd.f32 %v5212, %v5213
  %v5215 = vsel %vm97, %v5178, 0.0
  %v5216 = vsel %vm97, %v5179, 0.0
  %v5217 = vadd.f32 %v5215, %v5216
  %v5218 = vrot.slane %v5217, 4
  %v5219 = vadd.f32 %v5217, %v5218
  %v5220 = vrot.slane %v5219, 2
  %v5221 = vadd.f32 %v5219, %v5220
  %v5222 = vrot.slane %v5221, 1
  %v5223 = vadd.f32 %v5221, %v5222
  %v5224 = vsel %vm97, %v5180, 0.0
  %v5225 = vsel %vm97, %v5181, 0.0
  %v5226 = vadd.f32 %v5224, %v5225
  %v5227 = vrot.slane %v5226, 4
  %v5228 = vadd.f32 %v5226, %v5227
  %v5229 = vrot.slane %v5228, 2
  %v5230 = vadd.f32 %v5228, %v5229
  %v5231 = vrot.slane %v5230, 1
  %v5232 = vadd.f32 %v5230, %v5231
  %v5233 = vsel %vm97, %v5182, 0.0
  %v5234 = vsel %vm97, %v5183, 0.0
  %v5235 = vadd.f32 %v5233, %v5234
  %v5236 = vrot.slane %v5235, 4
  %v5237 = vadd.f32 %v5235, %v5236
  %v5238 = vrot.slane %v5237, 2
  %v5239 = vadd.f32 %v5237, %v5238
  %v5240 = vrot.slane %v5239, 1
  %v5241 = vadd.f32 %v5239, %v5240
  %v5242 = vsel %vm97, %v5184, 0.0
  %v5243 = vsel %vm97, %v5185, 0.0
  %v5244 = vadd.f32 %v5242, %v5243
  %v5245 = vrot.slane %v5244, 4
  %v5246 = vadd.f32 %v5244, %v5245
  %v5247 = vrot.slane %v5246, 2
  %v5248 = vadd.f32 %v5246, %v5247
  %v5249 = vrot.slane %v5248, 1
  %v5250 = vadd.f32 %v5248, %v5249
  %v5251 = vsel %vm97, %v5186, 0.0
  %v5252 = vsel %vm97, %v5187, 0.0
  %v5253 = vadd.f32 %v5251, %v5252
  %v5254 = vrot.slane %v5253, 4
  %v5255 = vadd.f32 %v5253, %v5254
  %v5256 = vrot.slane %v5255, 2
  %v5257 = vadd.f32 %v5255, %v5256
  %v5258 = vrot.slane %v5257, 1
  %v5259 = vadd.f32 %v5257, %v5258
  %v5268 = vsel %vm735, %v5205, %v5196
  %v5269 = vsel %vm737, %v5214, %v5268
  %v5270 = vsel %vm739, %v5223, %v5269
  %v5271 = vsel %vm741, %v5232, %v5270
  %v5272 = vsel %vm743, %v5241, %v5271
  %v5273 = vsel %vm745, %v5250, %v5272
  %v5274 = vsel %vm747, %v5259, %v5273
  %5275 = vrot.lane.b32.xlu0 %v5274, 32
  %v5276 = vpop.permute.xlu0 %5275
  %v5278 = vadd.f32 %v4370, %v5276
  %s5279 = scalar_lea.vmem %s0, 40
  %v5280 = vld [vmem:[%s5279] sm:$0xff]
  %5282 = vrot.lane.b32.xlu0 %v5278, 96
  %v5283 = vpop.permute.xlu0 %5282
  %v5284 = vsel %vm97, %v5283, 0
  %5286 = vmatprep.subr.mxu0 0.0
  %5287 = vmatpush1.msra.mxu0 %v68
  %5288 = vmatprep.subr.mxu0 0.0
  %5289 = vmatpush1.msra.mxu0 %v69
  %5290 = vmatprep.subr.mxu0 0.0
  %5291 = vmatpush1.msra.mxu0 %v70
  %5292 = vmatprep.subr.mxu0 0.0
  %5293 = vmatpush1.msra.mxu0 %v71
  %5294 = vmatprep.subr.mxu0 0.0
  %5295 = vmatpush1.msra.mxu0 0.0
  %5296 = vmatprep.subr.mxu0 0.0
  %5297 = vmatpush1.msra.mxu0 0.0
  %5298 = vmatprep.subr.mxu0 0.0
  %5299 = vmatpush1.msra.mxu0 0.0
  %5300 = vmatprep.subr.mxu0 0.0
  %5301 = vmatpush1.msra.mxu0 0.0
  %5302 = vmatprep.subr.mxu0 0.0
  %5303 = vmatpush1.msra.mxu0 0.0
  %5304 = vmatprep.subr.mxu0 0.0
  %5305 = vmatpush1.msra.mxu0 0.0
  %5306 = vmatprep.subr.mxu0 0.0
  %5307 = vmatpush1.msra.mxu0 0.0
  %5308 = vmatprep.subr.mxu0 0.0
  %5309 = vmatpush1.msra.mxu0 0.0
  %5310 = vmatprep.subr.mxu0 0.0
  %5311 = vmatpush1.msra.mxu0 0.0
  %5312 = vmatprep.subr.mxu0 0.0
  %5313 = vmatpush1.msra.mxu0 0.0
  %5314 = vmatprep.subr.mxu0 0.0
  %5315 = vmatpush1.msra.mxu0 0.0
  %5316 = vmatprep.subr.mxu0 0.0
  %5317 = vmatpush1.msra.mxu0 0.0
  %5318 = vmatprep.subr.mxu0 0.0
  %5319 = vmatpush1.msra.mxu0 0.0
  %5320 = vmatprep.subr.mxu0 0.0
  %5321 = vmatpush1.msra.mxu0 0.0
  %5322 = vmatprep.subr.mxu0 0.0
  %5323 = vmatpush1.msra.mxu0 0.0
  %5324 = vmatprep.subr.mxu0 0.0
  %5325 = vmatpush1.msra.mxu0 0.0
  %5326 = vmatprep.subr.mxu0 0.0
  %5327 = vmatpush1.msra.mxu0 0.0
  %5328 = vmatprep.subr.mxu0 0.0
  %5329 = vmatpush1.msra.mxu0 0.0
  %5330 = vmatprep.subr.mxu0 0.0
  %5331 = vmatpush1.msra.mxu0 0.0
  %5332 = vmatprep.subr.mxu0 0.0
  %5333 = vmatpush1.msra.mxu0 0.0
  %5334 = vmatprep.subr.mxu0 0.0
  %5335 = vmatpush1.msra.mxu0 0.0
  %5336 = vmatprep.subr.mxu0 0.0
  %5337 = vmatpush1.msra.mxu0 0.0
  %5338 = vmatprep.subr.mxu0 0.0
  %5339 = vmatpush1.msra.mxu0 0.0
  %5340 = vmatprep.subr.mxu0 0.0
  %5341 = vmatpush1.msra.mxu0 0.0
  %5342 = vmatprep.subr.mxu0 0.0
  %5343 = vmatpush1.msra.mxu0 0.0
  %5344 = vmatprep.subr.mxu0 0.0
  %5345 = vmatpush1.msra.mxu0 0.0
  %5346 = vmatprep.subr.mxu0 0.0
  %5347 = vmatpush1.msra.mxu0 0.0
  %5348 = vmatprep.subr.mxu0 0.0
  %5349 = vmatpush1.msra.mxu0 0.0
  %5350 = vmatprep.mubr.f32.mxu0 0.0
  %5351 = vmatmul.mubr.f32.gmra.mrb[0].mxu0 %v5284
  %v5352 = vpop.f32.mrb[0].mxu0
  %v5353 = vadd.f32 %v95, %v5352
  %v5354 = vpop.f32.mrb[0].mxu0
  %5355 = vdwg.mxu0
  %v5356 = vadd.f32 %v5280, %v5353
  %v5357 = vxor.u32 %v5356, 2147483648
  %v5358 = vmul.f32 %v5357, 1.442695
  %v5359 = vpow.pop %v5358
  %v5360 = vadd.f32 %v5359, 1.0
  %v5361 = vrcp.pop %v5360
  %v5362 = vmul.f32 1.0, %v5361
  %5364 = vrot.lane.b32.xlu0 %v5353, 64
  %v5365 = vpop.permute.xlu0 %5364
  %v5367 = vmul.f32 %v5362, %v5365
  %5369 = vrot.lane.b32.xlu0 %v5367, 64
  %v5370 = vpop.permute.xlu0 %5369
  %v5372 = vadd.f32 %v5280, %v5370
  %v5373 = vtanh.pop %v5372
  %v5374 = vsub.f32 1.0, %v5362
  %5376 = vrot.lane.b32.xlu0 %v5373, 96
  %v5377 = vpop.permute.xlu0 %5376
  %v5379 = vmul.f32 %v5374, %v5377
  %v5380 = vmul.f32 %v5362, %v5278
  %v5381 = vadd.f32 %v5379, %v5380
  %5383 = vrot.lane.b32.xlu0 %v5381, 96
  %v5384 = vpop.permute.xlu0 %5383
  %v5385 = vsel %vm97, %v5384, 0
  %5387 = vmatprep.subr.mxu0 %v74
  %5388 = vmatpush1.msra.mxu0 %v73
  %5389 = vmatprep.subr.mxu0 %v76
  %5390 = vmatpush1.msra.mxu0 %v75
  %5391 = vmatprep.subr.mxu0 %v78
  %5392 = vmatpush1.msra.mxu0 %v77
  %5393 = vmatprep.subr.mxu0 %v80
  %5394 = vmatpush1.msra.mxu0 %v79
  %5395 = vmatprep.subr.mxu0 0.0
  %5396 = vmatpush1.msra.mxu0 0.0
  %5397 = vmatprep.subr.mxu0 0.0
  %5398 = vmatpush1.msra.mxu0 0.0
  %5399 = vmatprep.subr.mxu0 0.0
  %5400 = vmatpush1.msra.mxu0 0.0
  %5401 = vmatprep.subr.mxu0 0.0
  %5402 = vmatpush1.msra.mxu0 0.0
  %5403 = vmatprep.subr.mxu0 0.0
  %5404 = vmatpush1.msra.mxu0 0.0
  %5405 = vmatprep.subr.mxu0 0.0
  %5406 = vmatpush1.msra.mxu0 0.0
  %5407 = vmatprep.subr.mxu0 0.0
  %5408 = vmatpush1.msra.mxu0 0.0
  %5409 = vmatprep.subr.mxu0 0.0
  %5410 = vmatpush1.msra.mxu0 0.0
  %5411 = vmatprep.subr.mxu0 0.0
  %5412 = vmatpush1.msra.mxu0 0.0
  %5413 = vmatprep.subr.mxu0 0.0
  %5414 = vmatpush1.msra.mxu0 0.0
  %5415 = vmatprep.subr.mxu0 0.0
  %5416 = vmatpush1.msra.mxu0 0.0
  %5417 = vmatprep.subr.mxu0 0.0
  %5418 = vmatpush1.msra.mxu0 0.0
  %5419 = vmatprep.subr.mxu0 0.0
  %5420 = vmatpush1.msra.mxu0 0.0
  %5421 = vmatprep.subr.mxu0 0.0
  %5422 = vmatpush1.msra.mxu0 0.0
  %5423 = vmatprep.subr.mxu0 0.0
  %5424 = vmatpush1.msra.mxu0 0.0
  %5425 = vmatprep.subr.mxu0 0.0
  %5426 = vmatpush1.msra.mxu0 0.0
  %5427 = vmatprep.subr.mxu0 0.0
  %5428 = vmatpush1.msra.mxu0 0.0
  %5429 = vmatprep.subr.mxu0 0.0
  %5430 = vmatpush1.msra.mxu0 0.0
  %5431 = vmatprep.subr.mxu0 0.0
  %5432 = vmatpush1.msra.mxu0 0.0
  %5433 = vmatprep.subr.mxu0 0.0
  %5434 = vmatpush1.msra.mxu0 0.0
  %5435 = vmatprep.subr.mxu0 0.0
  %5436 = vmatpush1.msra.mxu0 0.0
  %5437 = vmatprep.subr.mxu0 0.0
  %5438 = vmatpush1.msra.mxu0 0.0
  %5439 = vmatprep.subr.mxu0 0.0
  %5440 = vmatpush1.msra.mxu0 0.0
  %5441 = vmatprep.subr.mxu0 0.0
  %5442 = vmatpush1.msra.mxu0 0.0
  %5443 = vmatprep.subr.mxu0 0.0
  %5444 = vmatpush1.msra.mxu0 0.0
  %5445 = vmatprep.subr.mxu0 0.0
  %5446 = vmatpush1.msra.mxu0 0.0
  %5447 = vmatprep.subr.mxu0 0.0
  %5448 = vmatpush1.msra.mxu0 0.0
  %5449 = vmatprep.subr.mxu0 0.0
  %5450 = vmatpush1.msra.mxu0 0.0
  %5451 = vmatprep.mubr.f32.mxu0 0.0
  %5452 = vmatmul.mubr.f32.gmra.mrb[0].mxu0 %v5385
  %v5453 = vpop.f32.mrb[0].mxu0
  %v5454 = vadd.f32 %v204, %v5453
  %v5455 = vpop.f32.mrb[0].mxu0
  %5456 = vdwg.mxu0
  %s5457 = scalar_lea.vmem %s10, 40
  %5458 = vst [vmem:[%s5457] sm:$0xff] %v5454
  // Predicated region
  $region42: #{_lambda_.3} parent=0 // pred_check
    _
  $region43: #{_lambda_.3} parent=0 // pred_check_branch
    %5460 = sbr.rel (0) target = $region45
  $region44: #{_lambda_.3} parent=0 // pred_region
    _
  $region45: #{_lambda_.3} parent=0 // pred_fallthru
    _
  // Predicated region
  $region46: #{_lambda_.3} parent=0 // pred_check
    _
  $region47: #{_lambda_.3} parent=0 // pred_check_branch
    %5462 = sbr.rel (0) target = $region49
  $region48: #{_lambda_.3} parent=0 // pred_region
    _
  $region49: #{_lambda_.3} parent=0 // pred_fallthru
    _

</llo_original>
